<compile_context>
chip_gen: v7x
topology: tpu7x:2x2x1
jax: 0.10.0
libtpu: 0.0.40
codegen_flags: <defaults>
</compile_context>

<pallas_src>
import functools

import jax
import jax.numpy as jnp
from jax.experimental import pallas as pl
from jax.experimental.pallas import tpu as pltpu


def _round_up(x, m):
    return ((x + m - 1) // m) * m


def _pick_tile(padded_dim, candidates=(512, 384, 256, 128)):
    """Largest tile (multiple of 128) that divides the padded dimension."""
    for c in candidates:
        if padded_dim % c == 0:
            return c
    return 128  # unreachable: padded_dim is a multiple of 128


# ---------------------------------------------------------------------------
# Pallas kernel: tiled (M,K) @ (K,N) + bias, optional fused ReLU.
# Grid = (M tiles, N tiles, K tiles); K is the innermost reduction axis, the
# output block stays resident across it and is accumulated in VMEM (f32).
# A is f32 (cast to bf16 per tile), B is pre-cast bf16, accumulate in f32.
# ---------------------------------------------------------------------------
def _matmul_bias_act_kernel(a_ref, b_ref, bias_ref, o_ref, acc_ref, *, apply_relu):
    k = pl.program_id(2)

    @pl.when(k == 0)
    def _():
        acc_ref[...] = jnp.zeros_like(acc_ref)

    acc_ref[...] += jnp.dot(a_ref[...].astype(jnp.bfloat16), b_ref[...],
                            preferred_element_type=jnp.float32)

    @pl.when(k == pl.num_programs(2) - 1)
    def _():
        out = acc_ref[...] + bias_ref[...]
        if apply_relu:
            out = jnp.maximum(out, 0.0)
        o_ref[...] = out.astype(o_ref.dtype)


def matmul_bias_act(a, b_pad, bias, *, apply_relu):
    """a: (M, K) f32, b_pad: (Kp, Np) bf16 (pre-padded), bias: (N,) f32.

    Returns (M, N) f32 of relu(a @ b + bias) (relu optional).
    """
    M, K = a.shape
    Kp, Np = b_pad.shape
    N = bias.shape[0]
    assert Kp >= K and Np >= N

    tk = _pick_tile(Kp)
    tn = _pick_tile(Np)
    Mp = _round_up(M, 8)
    if Mp <= 512:
        tm = Mp
    else:
        tm = 512
        Mp = _round_up(M, tm)

    a_p = jnp.pad(a, ((0, Mp - M), (0, Kp - K)))
    bias_p = jnp.pad(bias, (0, Np - N)).reshape(1, Np)

    grid = (Mp // tm, Np // tn, Kp // tk)

    cost = pl.CostEstimate(
        flops=2 * Mp * Np * Kp,
        transcendentals=0,
        bytes_accessed=Mp * Kp * 4 + Kp * Np * 2 + Np * 4 + Mp * Np * 4,
    )

    out = pl.pallas_call(
        functools.partial(_matmul_bias_act_kernel, apply_relu=apply_relu),
        out_shape=jax.ShapeDtypeStruct((Mp, Np), jnp.float32),
        grid_spec=pltpu.PrefetchScalarGridSpec(
            num_scalar_prefetch=0,
            grid=grid,
            in_specs=[
                pl.BlockSpec((tm, tk), lambda m, n, k: (m, k)),   # A tile (f32)
                pl.BlockSpec((tk, tn), lambda m, n, k: (k, n)),   # B tile (bf16)
                pl.BlockSpec((1, tn), lambda m, n, k: (0, n)),    # bias tile
            ],
            out_specs=pl.BlockSpec((tm, tn), lambda m, n, k: (m, n)),
            scratch_shapes=[pltpu.VMEM((tm, tn), jnp.float32)],
        ),
        compiler_params=pltpu.CompilerParams(
            dimension_semantics=("parallel", "parallel", "arbitrary")),
        cost_estimate=cost,
    )(a_p, b_pad, bias_p)
    return out[:M, :N]


# ---------------------------------------------------------------------------
# Conv2d (NHWC) = channels-last patch extraction + Pallas matmul (+bias+ReLU)
# ---------------------------------------------------------------------------
# TODO(synk): fully fuse patch extraction into the kernel (per-tile window DMA)
# to avoid materializing the KH*KW-expanded patch matrix in HBM.
def _extract_patches_nhwc(x, kh, kw, stride, padding):
    N, H, W, C = x.shape
    xp = jnp.pad(x, ((0, 0), (padding, padding), (padding, padding), (0, 0)))
    Hp, Wp = H + 2 * padding, W + 2 * padding
    OH = (Hp - kh) // stride + 1
    OW = (Wp - kw) // stride + 1
    taps = []
    for i in range(kh):
        for j in range(kw):
            taps.append(xp[:, i:i + stride * (OH - 1) + 1:stride,
                           j:j + stride * (OW - 1) + 1:stride, :])
    # (N, OH, OW, KH*KW*C): K ordered (kh, kw, cin) — matches prepared weights.
    patches = jnp.concatenate(taps, axis=-1)
    return patches.reshape(N * OH * OW, kh * kw * C), OH, OW


def conv2d_bias_relu_nhwc(x, w_pad, bias, *, kh, kw, stride=1, padding=0,
                          apply_relu=True):
    N = x.shape[0]
    patches, OH, OW = _extract_patches_nhwc(x, kh, kw, stride, padding)
    out = matmul_bias_act(patches, w_pad, bias, apply_relu=apply_relu)
    return out.reshape(N, OH, OW, -1)          # stays NHWC


# ---------------------------------------------------------------------------
# Pooling glue (plain JAX, NHWC; tiny compared to the conv/fc matmuls)
# ---------------------------------------------------------------------------
def maxpool2d_nhwc(x, k=3, s=2):
    return jax.lax.reduce_window(x, -jnp.inf, jax.lax.max,
                                 (1, k, k, 1), (1, s, s, 1), 'VALID')


def adaptive_avg_pool_nhwc(x, out_h=6, out_w=6):
    """Matches torch.nn.AdaptiveAvgPool2d semantics (NHWC layout)."""
    N, H, W, C = x.shape
    if H == out_h and W == out_w:
        return x
    if H % out_h == 0 and W % out_w == 0:
        rh, rw = H // out_h, W // out_w
        return x.reshape(N, out_h, rh, out_w, rw, C).mean(axis=(2, 4))
    if out_h % H == 0 and out_w % W == 0:
        return jnp.repeat(jnp.repeat(x, out_h // H, axis=1), out_w // W, axis=2)
    # general fallback
    rows = []
    for i in range(out_h):
        h0 = (i * H) // out_h
        h1 = -(-((i + 1) * H) // out_h)
        cols = []
        for j in range(out_w):
            w0 = (j * W) // out_w
            w1 = -(-((j + 1) * W) // out_w)
            cols.append(jnp.mean(x[:, h0:h1, w0:w1, :], axis=(1, 2)))
        rows.append(jnp.stack(cols, axis=1))
    return jnp.stack(rows, axis=1)  # (N, out_h, out_w, C)


# ---------------------------------------------------------------------------
# Parameter construction (deterministic, fan-in scaled normal init) and
# one-time preparation: transpose/reshape to (K, N), pad to (Kp, Np), cast to
# bf16.  Done ONCE outside the jitted forward.
# ---------------------------------------------------------------------------
CONV_CFG = [  # (name, kh, kw, stride, padding)
    ("conv1", 11, 11, 4, 2),
    ("conv2", 5, 5, 1, 2),
    ("conv3", 3, 3, 1, 1),
    ("conv4", 3, 3, 1, 1),
    ("conv5", 3, 3, 1, 1),
]


def init_alexnet_params(key, num_classes=10):
    conv_shapes = [
        (64, 3, 11, 11),
        (192, 64, 5, 5),
        (384, 192, 3, 3),
        (256, 384, 3, 3),
        (256, 256, 3, 3),
    ]
    fc_shapes = [
        (4096, 256 * 6 * 6),
        (4096, 4096),
        (num_classes, 4096),
    ]
    params = {}
    keys = jax.random.split(key, len(conv_shapes) + len(fc_shapes))
    for idx, shp in enumerate(conv_shapes):
        fan_in = shp[1] * shp[2] * shp[3]
        scale = 1.0 / jnp.sqrt(jnp.float32(fan_in))
        params[f"conv{idx + 1}_w"] = (
            jax.random.normal(keys[idx], shp, jnp.float32) * scale)
        params[f"conv{idx + 1}_b"] = jnp.zeros((shp[0],), jnp.float32)
    for idx, shp in enumerate(fc_shapes):
        fan_in = shp[1]
        scale = 1.0 / jnp.sqrt(jnp.float32(fan_in))
        params[f"fc{idx + 1}_w"] = (
            jax.random.normal(keys[len(conv_shapes) + idx], shp, jnp.float32) * scale)
        params[f"fc{idx + 1}_b"] = jnp.zeros((shp[0],), jnp.float32)
    return params


def _prep_rhs(wmat):
    """(K, N) f32 -> padded (Kp, Np) bf16 matmul operand."""
    K, N = wmat.shape
    Kp, Np = _round_up(K, 128), _round_up(N, 128)
    return jnp.pad(wmat, ((0, Kp - K), (0, Np - N))).astype(jnp.bfloat16)


def prepare_params(params):
    prepped = {}
    for name, kh, kw, _, _ in CONV_CFG:
        w = params[f"{name}_w"]                       # (Cout, Cin, KH, KW)
        wmat = w.transpose(2, 3, 1, 0).reshape(kh * kw * w.shape[1], w.shape[0])
        prepped[f"{name}_w"] = _prep_rhs(wmat)        # (Kp, Np) bf16
        prepped[f"{name}_b"] = params[f"{name}_b"]    # (Cout,) f32
    for i in (1, 2, 3):
        prepped[f"fc{i}_w"] = _prep_rhs(params[f"fc{i}_w"].T)   # (Kp, Np) bf16
        prepped[f"fc{i}_b"] = params[f"fc{i}_b"]
    return prepped


# ---------------------------------------------------------------------------
# Full AlexNet forward (eval mode).  Input is NCHW (PyTorch convention);
# converted once to NHWC and kept channels-last through the feature stack.
# ---------------------------------------------------------------------------
def alexnet_forward(prepped, x_nchw):
    # quant stub -> identity (no qconfig)
    x = x_nchw.transpose(0, 2, 3, 1)                        # NCHW -> NHWC (once)

    # features (Gaussian g_* and Dropout are identity in eval mode)
    x = conv2d_bias_relu_nhwc(x, prepped["conv1_w"], prepped["conv1_b"],
                              kh=11, kw=11, stride=4, padding=2)
    x = maxpool2d_nhwc(x)
    x = conv2d_bias_relu_nhwc(x, prepped["conv2_w"], prepped["conv2_b"],
                              kh=5, kw=5, stride=1, padding=2)
    x = maxpool2d_nhwc(x)
    x = conv2d_bias_relu_nhwc(x, prepped["conv3_w"], prepped["conv3_b"],
                              kh=3, kw=3, stride=1, padding=1)
    x = conv2d_bias_relu_nhwc(x, prepped["conv4_w"], prepped["conv4_b"],
                              kh=3, kw=3, stride=1, padding=1)
    x = conv2d_bias_relu_nhwc(x, prepped["conv5_w"], prepped["conv5_b"],
                              kh=3, kw=3, stride=1, padding=1)
    x = maxpool2d_nhwc(x)

    # avgpool + flatten (flatten in NCHW order to match torch.flatten)
    x = adaptive_avg_pool_nhwc(x, 6, 6)                     # (N, 6, 6, 256)
    N = x.shape[0]
    x = x.transpose(0, 3, 1, 2).reshape(N, -1)              # (N, 256*6*6)

    # classifier
    x = matmul_bias_act(x, prepped["fc1_w"], prepped["fc1_b"], apply_relu=True)
    x = matmul_bias_act(x, prepped["fc2_w"], prepped["fc2_b"], apply_relu=True)
    x = matmul_bias_act(x, prepped["fc3_w"], prepped["fc3_b"], apply_relu=False)
    # dequant stub -> identity
    return x


if __name__ == "__main__":
    key = jax.random.PRNGKey(0)
    k_param, k_input = jax.random.split(key)

    params = init_alexnet_params(k_param, num_classes=10)
    prepped = prepare_params(params)          # one-time weight prep (outside jit)

    # Smallest convenient input that survives the AlexNet feature stack:
    # (2, 3, 64, 64) -> features output (2, 1, 1, 256) -> avgpool (2, 6, 6, 256).
    x = jax.random.normal(k_input, (2, 3, 64, 64), jnp.float32)

    fwd = jax.jit(alexnet_forward)
    out = fwd(prepped, x)
    out = jax.block_until_ready(out)
    assert out.shape == (2, 10), out.shape
    print("KERNEL_OK")
</pallas_src>

<mosaic_0001>
module attributes {stable_mosaic.version = 11 : i64} {
  func.func @_matmul_bias_act_kernel(%arg0: i32, %arg1: i32, %arg2: i32, %arg3: memref<456x384xf32, #tpu.memory_space<vmem>>, %arg4: memref<384x128xbf16, #tpu.memory_space<vmem>>, %arg5: memref<1x128xf32, #tpu.memory_space<vmem>>, %arg6: memref<456x128xf32, #tpu.memory_space<vmem>>, %arg7: memref<456x128xf32, #tpu.memory_space<vmem>>) attributes {dimension_semantics = [#tpu.dimension_semantics<parallel>, #tpu.dimension_semantics<parallel>, #tpu.dimension_semantics<arbitrary>], iteration_bounds = array<i64: 1, 1, 1>, scalar_prefetch = 0 : i64, scratch_operands = 1 : i64, tpu.core_type = #tpu.core_type<tc>, window_params = [{transform_indices = @transform_0, window_bounds = array<i64: 456, 384>}, {transform_indices = @transform_1, window_bounds = array<i64: 384, 128>}, {transform_indices = @transform_2, window_bounds = array<i64: 1, 128>}, {transform_indices = @transform_3, window_bounds = array<i64: 456, 128>}]} {
    %c0_i32 = arith.constant 0 : i32
    %0 = arith.cmpi eq, %arg2, %c0_i32 : i32
    %1 = arith.extui %0 : i1 to i32
    %c0_i32_0 = arith.constant 0 : i32
    %2 = arith.cmpi ne, %1, %c0_i32_0 : i32
    scf.if %2 {
      %cst_10 = arith.constant 0.000000e+00 : f32
      %13 = vector.broadcast %cst_10 : f32 to vector<456x128xf32>
      %c0_11 = arith.constant 0 : index
      %c0_12 = arith.constant 0 : index
      %14 = vector.load %arg7[%c0_11, %c0_12] : memref<456x128xf32, #tpu.memory_space<vmem>>, vector<456x128xf32>
      tpu.vector_store %arg7[%c0_11, %c0_12], %13 {strides = array<i32>} : memref<456x128xf32, #tpu.memory_space<vmem>>, vector<456x128xf32>,
    } else {
    }
    %c0 = arith.constant 0 : index
    %c0_1 = arith.constant 0 : index
    %3 = vector.load %arg7[%c0, %c0_1] : memref<456x128xf32, #tpu.memory_space<vmem>>, vector<456x128xf32>
    %c0_2 = arith.constant 0 : index
    %c0_3 = arith.constant 0 : index
    %4 = vector.load %arg3[%c0_2, %c0_3] : memref<456x384xf32, #tpu.memory_space<vmem>>, vector<456x384xf32>
    %5 = arith.truncf %4 : vector<456x384xf32> to vector<456x384xbf16>
    %c0_4 = arith.constant 0 : index
    %c0_5 = arith.constant 0 : index
    %6 = vector.load %arg4[%c0_4, %c0_5] : memref<384x128xbf16, #tpu.memory_space<vmem>>, vector<384x128xbf16>
    %cst = arith.constant dense<0.000000e+00> : vector<456x128xf32>
    %7 = tpu.matmul %5, %6, %cst {dimension_numbers = #tpu.dot_dimension_numbers<[1], [0], [0], [1], [0, 0, 1, 1], [], []>} : vector<456x384xbf16>, vector<384x128xbf16>, vector<456x128xf32> -> vector<456x128xf32>
    %8 = arith.addf %3, %7 : vector<456x128xf32>
    %c0_6 = arith.constant 0 : index
    %c0_7 = arith.constant 0 : index
    %9 = vector.load %arg7[%c0_6, %c0_7] : memref<456x128xf32, #tpu.memory_space<vmem>>, vector<456x128xf32>
    tpu.vector_store %arg7[%c0_6, %c0_7], %8 {strides = array<i32>} : memref<456x128xf32, #tpu.memory_space<vmem>>, vector<456x128xf32>,
    %c0_i32_8 = arith.constant 0 : i32
    %10 = arith.cmpi eq, %arg2, %c0_i32_8 : i32
    %11 = arith.extui %10 : i1 to i32
    %c0_i32_9 = arith.constant 0 : i32
    %12 = arith.cmpi ne, %11, %c0_i32_9 : i32
    scf.if %12 {
      %c0_10 = arith.constant 0 : index
      %c0_11 = arith.constant 0 : index
      %13 = vector.load %arg7[%c0_10, %c0_11] : memref<456x128xf32, #tpu.memory_space<vmem>>, vector<456x128xf32>
      %c0_12 = arith.constant 0 : index
      %c0_13 = arith.constant 0 : index
      %14 = vector.load %arg5[%c0_12, %c0_13] : memref<1x128xf32, #tpu.memory_space<vmem>>, vector<1x128xf32>
      %15 = vector.broadcast %14 : vector<1x128xf32> to vector<456x128xf32>
      %16 = arith.addf %13, %15 : vector<456x128xf32>
      %cst_14 = arith.constant 0.000000e+00 : f32
      %17 = vector.broadcast %cst_14 : f32 to vector<456x128xf32>
      %18 = arith.maximumf %16, %17 : vector<456x128xf32>
      %c0_15 = arith.constant 0 : index
      %c0_16 = arith.constant 0 : index
      %19 = vector.load %arg6[%c0_15, %c0_16] : memref<456x128xf32, #tpu.memory_space<vmem>>, vector<456x128xf32>
      tpu.vector_store %arg6[%c0_15, %c0_16], %18 {strides = array<i32>} : memref<456x128xf32, #tpu.memory_space<vmem>>, vector<456x128xf32>,
    } else {
    }
    return
  }
  func.func @transform_0(%arg0: i32, %arg1: i32, %arg2: i32) -> (i32, i32) {
    %c0_i32 = arith.constant 0 : i32
    return %arg0, %arg2 : i32, i32
  }
  func.func @transform_1(%arg0: i32, %arg1: i32, %arg2: i32) -> (i32, i32) {
    %c0_i32 = arith.constant 0 : i32
    return %arg2, %arg1 : i32, i32
  }
  func.func @transform_2(%arg0: i32, %arg1: i32, %arg2: i32) -> (i32, i32) {
    %c0_i32 = arith.constant 0 : i32
    %c0_i32_0 = arith.constant 0 : i32
    return %c0_i32, %arg1 : i32, i32
  }
  func.func @transform_3(%arg0: i32, %arg1: i32, %arg2: i32) -> (i32, i32) {
    %c0_i32 = arith.constant 0 : i32
    return %arg0, %arg1 : i32, i32
  }
}

module attributes {stable_mosaic.version = 11 : i64} {
  func.func @_matmul_bias_act_kernel(%arg0: i32, %arg1: i32, %arg2: i32, %arg3: memref<104x128xf32, #tpu.memory_space<vmem>>, %arg4: memref<128x256xbf16, #tpu.memory_space<vmem>>, %arg5: memref<1x256xf32, #tpu.memory_space<vmem>>, %arg6: memref<104x256xf32, #tpu.memory_space<vmem>>, %arg7: memref<104x256xf32, #tpu.memory_space<vmem>>) attributes {dimension_semantics = [#tpu.dimension_semantics<parallel>, #tpu.dimension_semantics<parallel>, #tpu.dimension_semantics<arbitrary>], iteration_bounds = array<i64: 1, 1, 13>, scalar_prefetch = 0 : i64, scratch_operands = 1 : i64, tpu.core_type = #tpu.core_type<tc>, window_params = [{transform_indices = @transform_0, window_bounds = array<i64: 104, 128>}, {transform_indices = @transform_1, window_bounds = array<i64: 128, 256>}, {transform_indices = @transform_2, window_bounds = array<i64: 1, 256>}, {transform_indices = @transform_3, window_bounds = array<i64: 104, 256>}]} {
    %c0_i32 = arith.constant 0 : i32
    %0 = arith.cmpi eq, %arg2, %c0_i32 : i32
    %1 = arith.extui %0 : i1 to i32
    %c0_i32_0 = arith.constant 0 : i32
    %2 = arith.cmpi ne, %1, %c0_i32_0 : i32
    scf.if %2 {
      %cst_9 = arith.constant 0.000000e+00 : f32
      %13 = vector.broadcast %cst_9 : f32 to vector<104x256xf32>
      %c0_10 = arith.constant 0 : index
      %c0_11 = arith.constant 0 : index
      %14 = vector.load %arg7[%c0_10, %c0_11] : memref<104x256xf32, #tpu.memory_space<vmem>>, vector<104x256xf32>
      tpu.vector_store %arg7[%c0_10, %c0_11], %13 {strides = array<i32>} : memref<104x256xf32, #tpu.memory_space<vmem>>, vector<104x256xf32>,
    } else {
    }
    %c0 = arith.constant 0 : index
    %c0_1 = arith.constant 0 : index
    %3 = vector.load %arg7[%c0, %c0_1] : memref<104x256xf32, #tpu.memory_space<vmem>>, vector<104x256xf32>
    %c0_2 = arith.constant 0 : index
    %c0_3 = arith.constant 0 : index
    %4 = vector.load %arg3[%c0_2, %c0_3] : memref<104x128xf32, #tpu.memory_space<vmem>>, vector<104x128xf32>
    %5 = arith.truncf %4 : vector<104x128xf32> to vector<104x128xbf16>
    %c0_4 = arith.constant 0 : index
    %c0_5 = arith.constant 0 : index
    %6 = vector.load %arg4[%c0_4, %c0_5] : memref<128x256xbf16, #tpu.memory_space<vmem>>, vector<128x256xbf16>
    %cst = arith.constant dense<0.000000e+00> : vector<104x256xf32>
    %7 = tpu.matmul %5, %6, %cst {dimension_numbers = #tpu.dot_dimension_numbers<[1], [0], [0], [1], [0, 0, 1, 1], [], []>} : vector<104x128xbf16>, vector<128x256xbf16>, vector<104x256xf32> -> vector<104x256xf32>
    %8 = arith.addf %3, %7 : vector<104x256xf32>
    %c0_6 = arith.constant 0 : index
    %c0_7 = arith.constant 0 : index
    %9 = vector.load %arg7[%c0_6, %c0_7] : memref<104x256xf32, #tpu.memory_space<vmem>>, vector<104x256xf32>
    tpu.vector_store %arg7[%c0_6, %c0_7], %8 {strides = array<i32>} : memref<104x256xf32, #tpu.memory_space<vmem>>, vector<104x256xf32>,
    %c12_i32 = arith.constant 12 : i32
    %10 = arith.cmpi eq, %arg2, %c12_i32 : i32
    %11 = arith.extui %10 : i1 to i32
    %c0_i32_8 = arith.constant 0 : i32
    %12 = arith.cmpi ne, %11, %c0_i32_8 : i32
    scf.if %12 {
      %c0_9 = arith.constant 0 : index
      %c0_10 = arith.constant 0 : index
      %13 = vector.load %arg7[%c0_9, %c0_10] : memref<104x256xf32, #tpu.memory_space<vmem>>, vector<104x256xf32>
      %c0_11 = arith.constant 0 : index
      %c0_12 = arith.constant 0 : index
      %14 = vector.load %arg5[%c0_11, %c0_12] : memref<1x256xf32, #tpu.memory_space<vmem>>, vector<1x256xf32>
      %15 = vector.broadcast %14 : vector<1x256xf32> to vector<104x256xf32>
      %16 = arith.addf %13, %15 : vector<104x256xf32>
      %cst_13 = arith.constant 0.000000e+00 : f32
      %17 = vector.broadcast %cst_13 : f32 to vector<104x256xf32>
      %18 = arith.maximumf %16, %17 : vector<104x256xf32>
      %c0_14 = arith.constant 0 : index
      %c0_15 = arith.constant 0 : index
      %19 = vector.load %arg6[%c0_14, %c0_15] : memref<104x256xf32, #tpu.memory_space<vmem>>, vector<104x256xf32>
      tpu.vector_store %arg6[%c0_14, %c0_15], %18 {strides = array<i32>} : memref<104x256xf32, #tpu.memory_space<vmem>>, vector<104x256xf32>,
    } else {
    }
    return
  }
  func.func @transform_0(%arg0: i32, %arg1: i32, %arg2: i32) -> (i32, i32) {
    %c0_i32 = arith.constant 0 : i32
    return %arg0, %arg2 : i32, i32
  }
  func.func @transform_1(%arg0: i32, %arg1: i32, %arg2: i32) -> (i32, i32) {
    %c0_i32 = arith.constant 0 : i32
    return %arg2, %arg1 : i32, i32
  }
  func.func @transform_2(%arg0: i32, %arg1: i32, %arg2: i32) -> (i32, i32) {
    %c0_i32 = arith.constant 0 : i32
    %c0_i32_0 = arith.constant 0 : i32
    return %c0_i32, %arg1 : i32, i32
  }
  func.func @transform_3(%arg0: i32, %arg1: i32, %arg2: i32) -> (i32, i32) {
    %c0_i32 = arith.constant 0 : i32
    return %arg0, %arg1 : i32, i32
  }
}

module attributes {stable_mosaic.version = 11 : i64} {
  func.func @_matmul_bias_act_kernel(%arg0: i32, %arg1: i32, %arg2: i32, %arg3: memref<24x256xf32, #tpu.memory_space<vmem>>, %arg4: memref<256x384xbf16, #tpu.memory_space<vmem>>, %arg5: memref<1x384xf32, #tpu.memory_space<vmem>>, %arg6: memref<24x384xf32, #tpu.memory_space<vmem>>, %arg7: memref<24x384xf32, #tpu.memory_space<vmem>>) attributes {dimension_semantics = [#tpu.dimension_semantics<parallel>, #tpu.dimension_semantics<parallel>, #tpu.dimension_semantics<arbitrary>], iteration_bounds = array<i64: 1, 1, 7>, scalar_prefetch = 0 : i64, scratch_operands = 1 : i64, tpu.core_type = #tpu.core_type<tc>, window_params = [{transform_indices = @transform_0, window_bounds = array<i64: 24, 256>}, {transform_indices = @transform_1, window_bounds = array<i64: 256, 384>}, {transform_indices = @transform_2, window_bounds = array<i64: 1, 384>}, {transform_indices = @transform_3, window_bounds = array<i64: 24, 384>}]} {
    %c0_i32 = arith.constant 0 : i32
    %0 = arith.cmpi eq, %arg2, %c0_i32 : i32
    %1 = arith.extui %0 : i1 to i32
    %c0_i32_0 = arith.constant 0 : i32
    %2 = arith.cmpi ne, %1, %c0_i32_0 : i32
    scf.if %2 {
      %cst_9 = arith.constant 0.000000e+00 : f32
      %13 = vector.broadcast %cst_9 : f32 to vector<24x384xf32>
      %c0_10 = arith.constant 0 : index
      %c0_11 = arith.constant 0 : index
      %14 = vector.load %arg7[%c0_10, %c0_11] : memref<24x384xf32, #tpu.memory_space<vmem>>, vector<24x384xf32>
      tpu.vector_store %arg7[%c0_10, %c0_11], %13 {strides = array<i32>} : memref<24x384xf32, #tpu.memory_space<vmem>>, vector<24x384xf32>,
    } else {
    }
    %c0 = arith.constant 0 : index
    %c0_1 = arith.constant 0 : index
    %3 = vector.load %arg7[%c0, %c0_1] : memref<24x384xf32, #tpu.memory_space<vmem>>, vector<24x384xf32>
    %c0_2 = arith.constant 0 : index
    %c0_3 = arith.constant 0 : index
    %4 = vector.load %arg3[%c0_2, %c0_3] : memref<24x256xf32, #tpu.memory_space<vmem>>, vector<24x256xf32>
    %5 = arith.truncf %4 : vector<24x256xf32> to vector<24x256xbf16>
    %c0_4 = arith.constant 0 : index
    %c0_5 = arith.constant 0 : index
    %6 = vector.load %arg4[%c0_4, %c0_5] : memref<256x384xbf16, #tpu.memory_space<vmem>>, vector<256x384xbf16>
    %cst = arith.constant dense<0.000000e+00> : vector<24x384xf32>
    %7 = tpu.matmul %5, %6, %cst {dimension_numbers = #tpu.dot_dimension_numbers<[1], [0], [0], [1], [0, 0, 1, 1], [], []>} : vector<24x256xbf16>, vector<256x384xbf16>, vector<24x384xf32> -> vector<24x384xf32>
    %8 = arith.addf %3, %7 : vector<24x384xf32>
    %c0_6 = arith.constant 0 : index
    %c0_7 = arith.constant 0 : index
    %9 = vector.load %arg7[%c0_6, %c0_7] : memref<24x384xf32, #tpu.memory_space<vmem>>, vector<24x384xf32>
    tpu.vector_store %arg7[%c0_6, %c0_7], %8 {strides = array<i32>} : memref<24x384xf32, #tpu.memory_space<vmem>>, vector<24x384xf32>,
    %c6_i32 = arith.constant 6 : i32
    %10 = arith.cmpi eq, %arg2, %c6_i32 : i32
    %11 = arith.extui %10 : i1 to i32
    %c0_i32_8 = arith.constant 0 : i32
    %12 = arith.cmpi ne, %11, %c0_i32_8 : i32
    scf.if %12 {
      %c0_9 = arith.constant 0 : index
      %c0_10 = arith.constant 0 : index
      %13 = vector.load %arg7[%c0_9, %c0_10] : memref<24x384xf32, #tpu.memory_space<vmem>>, vector<24x384xf32>
      %c0_11 = arith.constant 0 : index
      %c0_12 = arith.constant 0 : index
      %14 = vector.load %arg5[%c0_11, %c0_12] : memref<1x384xf32, #tpu.memory_space<vmem>>, vector<1x384xf32>
      %15 = vector.broadcast %14 : vector<1x384xf32> to vector<24x384xf32>
      %16 = arith.addf %13, %15 : vector<24x384xf32>
      %cst_13 = arith.constant 0.000000e+00 : f32
      %17 = vector.broadcast %cst_13 : f32 to vector<24x384xf32>
      %18 = arith.maximumf %16, %17 : vector<24x384xf32>
      %c0_14 = arith.constant 0 : index
      %c0_15 = arith.constant 0 : index
      %19 = vector.load %arg6[%c0_14, %c0_15] : memref<24x384xf32, #tpu.memory_space<vmem>>, vector<24x384xf32>
      tpu.vector_store %arg6[%c0_14, %c0_15], %18 {strides = array<i32>} : memref<24x384xf32, #tpu.memory_space<vmem>>, vector<24x384xf32>,
    } else {
    }
    return
  }
  func.func @transform_0(%arg0: i32, %arg1: i32, %arg2: i32) -> (i32, i32) {
    %c0_i32 = arith.constant 0 : i32
    return %arg0, %arg2 : i32, i32
  }
  func.func @transform_1(%arg0: i32, %arg1: i32, %arg2: i32) -> (i32, i32) {
    %c0_i32 = arith.constant 0 : i32
    return %arg2, %arg1 : i32, i32
  }
  func.func @transform_2(%arg0: i32, %arg1: i32, %arg2: i32) -> (i32, i32) {
    %c0_i32 = arith.constant 0 : i32
    %c0_i32_0 = arith.constant 0 : i32
    return %c0_i32, %arg1 : i32, i32
  }
  func.func @transform_3(%arg0: i32, %arg1: i32, %arg2: i32) -> (i32, i32) {
    %c0_i32 = arith.constant 0 : i32
    return %arg0, %arg1 : i32, i32
  }
}

module attributes {stable_mosaic.version = 11 : i64} {
  func.func @_matmul_bias_act_kernel(%arg0: i32, %arg1: i32, %arg2: i32, %arg3: memref<24x384xf32, #tpu.memory_space<vmem>>, %arg4: memref<384x256xbf16, #tpu.memory_space<vmem>>, %arg5: memref<1x256xf32, #tpu.memory_space<vmem>>, %arg6: memref<24x256xf32, #tpu.memory_space<vmem>>, %arg7: memref<24x256xf32, #tpu.memory_space<vmem>>) attributes {dimension_semantics = [#tpu.dimension_semantics<parallel>, #tpu.dimension_semantics<parallel>, #tpu.dimension_semantics<arbitrary>], iteration_bounds = array<i64: 1, 1, 9>, scalar_prefetch = 0 : i64, scratch_operands = 1 : i64, tpu.core_type = #tpu.core_type<tc>, window_params = [{transform_indices = @transform_0, window_bounds = array<i64: 24, 384>}, {transform_indices = @transform_1, window_bounds = array<i64: 384, 256>}, {transform_indices = @transform_2, window_bounds = array<i64: 1, 256>}, {transform_indices = @transform_3, window_bounds = array<i64: 24, 256>}]} {
    %c0_i32 = arith.constant 0 : i32
    %0 = arith.cmpi eq, %arg2, %c0_i32 : i32
    %1 = arith.extui %0 : i1 to i32
    %c0_i32_0 = arith.constant 0 : i32
    %2 = arith.cmpi ne, %1, %c0_i32_0 : i32
    scf.if %2 {
      %cst_9 = arith.constant 0.000000e+00 : f32
      %13 = vector.broadcast %cst_9 : f32 to vector<24x256xf32>
      %c0_10 = arith.constant 0 : index
      %c0_11 = arith.constant 0 : index
      %14 = vector.load %arg7[%c0_10, %c0_11] : memref<24x256xf32, #tpu.memory_space<vmem>>, vector<24x256xf32>
      tpu.vector_store %arg7[%c0_10, %c0_11], %13 {strides = array<i32>} : memref<24x256xf32, #tpu.memory_space<vmem>>, vector<24x256xf32>,
    } else {
    }
    %c0 = arith.constant 0 : index
    %c0_1 = arith.constant 0 : index
    %3 = vector.load %arg7[%c0, %c0_1] : memref<24x256xf32, #tpu.memory_space<vmem>>, vector<24x256xf32>
    %c0_2 = arith.constant 0 : index
    %c0_3 = arith.constant 0 : index
    %4 = vector.load %arg3[%c0_2, %c0_3] : memref<24x384xf32, #tpu.memory_space<vmem>>, vector<24x384xf32>
    %5 = arith.truncf %4 : vector<24x384xf32> to vector<24x384xbf16>
    %c0_4 = arith.constant 0 : index
    %c0_5 = arith.constant 0 : index
    %6 = vector.load %arg4[%c0_4, %c0_5] : memref<384x256xbf16, #tpu.memory_space<vmem>>, vector<384x256xbf16>
    %cst = arith.constant dense<0.000000e+00> : vector<24x256xf32>
    %7 = tpu.matmul %5, %6, %cst {dimension_numbers = #tpu.dot_dimension_numbers<[1], [0], [0], [1], [0, 0, 1, 1], [], []>} : vector<24x384xbf16>, vector<384x256xbf16>, vector<24x256xf32> -> vector<24x256xf32>
    %8 = arith.addf %3, %7 : vector<24x256xf32>
    %c0_6 = arith.constant 0 : index
    %c0_7 = arith.constant 0 : index
    %9 = vector.load %arg7[%c0_6, %c0_7] : memref<24x256xf32, #tpu.memory_space<vmem>>, vector<24x256xf32>
    tpu.vector_store %arg7[%c0_6, %c0_7], %8 {strides = array<i32>} : memref<24x256xf32, #tpu.memory_space<vmem>>, vector<24x256xf32>,
    %c8_i32 = arith.constant 8 : i32
    %10 = arith.cmpi eq, %arg2, %c8_i32 : i32
    %11 = arith.extui %10 : i1 to i32
    %c0_i32_8 = arith.constant 0 : i32
    %12 = arith.cmpi ne, %11, %c0_i32_8 : i32
    scf.if %12 {
      %c0_9 = arith.constant 0 : index
      %c0_10 = arith.constant 0 : index
      %13 = vector.load %arg7[%c0_9, %c0_10] : memref<24x256xf32, #tpu.memory_space<vmem>>, vector<24x256xf32>
      %c0_11 = arith.constant 0 : index
      %c0_12 = arith.constant 0 : index
      %14 = vector.load %arg5[%c0_11, %c0_12] : memref<1x256xf32, #tpu.memory_space<vmem>>, vector<1x256xf32>
      %15 = vector.broadcast %14 : vector<1x256xf32> to vector<24x256xf32>
      %16 = arith.addf %13, %15 : vector<24x256xf32>
      %cst_13 = arith.constant 0.000000e+00 : f32
      %17 = vector.broadcast %cst_13 : f32 to vector<24x256xf32>
      %18 = arith.maximumf %16, %17 : vector<24x256xf32>
      %c0_14 = arith.constant 0 : index
      %c0_15 = arith.constant 0 : index
      %19 = vector.load %arg6[%c0_14, %c0_15] : memref<24x256xf32, #tpu.memory_space<vmem>>, vector<24x256xf32>
      tpu.vector_store %arg6[%c0_14, %c0_15], %18 {strides = array<i32>} : memref<24x256xf32, #tpu.memory_space<vmem>>, vector<24x256xf32>,
    } else {
    }
    return
  }
  func.func @transform_0(%arg0: i32, %arg1: i32, %arg2: i32) -> (i32, i32) {
    %c0_i32 = arith.constant 0 : i32
    return %arg0, %arg2 : i32, i32
  }
  func.func @transform_1(%arg0: i32, %arg1: i32, %arg2: i32) -> (i32, i32) {
    %c0_i32 = arith.constant 0 : i32
    return %arg2, %arg1 : i32, i32
  }
  func.func @transform_2(%arg0: i32, %arg1: i32, %arg2: i32) -> (i32, i32) {
    %c0_i32 = arith.constant 0 : i32
    %c0_i32_0 = arith.constant 0 : i32
    return %c0_i32, %arg1 : i32, i32
  }
  func.func @transform_3(%arg0: i32, %arg1: i32, %arg2: i32) -> (i32, i32) {
    %c0_i32 = arith.constant 0 : i32
    return %arg0, %arg1 : i32, i32
  }
}

module attributes {stable_mosaic.version = 11 : i64} {
  func.func @_matmul_bias_act_kernel(%arg0: i32, %arg1: i32, %arg2: i32, %arg3: memref<24x384xf32, #tpu.memory_space<vmem>>, %arg4: memref<384x256xbf16, #tpu.memory_space<vmem>>, %arg5: memref<1x256xf32, #tpu.memory_space<vmem>>, %arg6: memref<24x256xf32, #tpu.memory_space<vmem>>, %arg7: memref<24x256xf32, #tpu.memory_space<vmem>>) attributes {dimension_semantics = [#tpu.dimension_semantics<parallel>, #tpu.dimension_semantics<parallel>, #tpu.dimension_semantics<arbitrary>], iteration_bounds = array<i64: 1, 1, 6>, scalar_prefetch = 0 : i64, scratch_operands = 1 : i64, tpu.core_type = #tpu.core_type<tc>, window_params = [{transform_indices = @transform_0, window_bounds = array<i64: 24, 384>}, {transform_indices = @transform_1, window_bounds = array<i64: 384, 256>}, {transform_indices = @transform_2, window_bounds = array<i64: 1, 256>}, {transform_indices = @transform_3, window_bounds = array<i64: 24, 256>}]} {
    %c0_i32 = arith.constant 0 : i32
    %0 = arith.cmpi eq, %arg2, %c0_i32 : i32
    %1 = arith.extui %0 : i1 to i32
    %c0_i32_0 = arith.constant 0 : i32
    %2 = arith.cmpi ne, %1, %c0_i32_0 : i32
    scf.if %2 {
      %cst_9 = arith.constant 0.000000e+00 : f32
      %13 = vector.broadcast %cst_9 : f32 to vector<24x256xf32>
      %c0_10 = arith.constant 0 : index
      %c0_11 = arith.constant 0 : index
      %14 = vector.load %arg7[%c0_10, %c0_11] : memref<24x256xf32, #tpu.memory_space<vmem>>, vector<24x256xf32>
      tpu.vector_store %arg7[%c0_10, %c0_11], %13 {strides = array<i32>} : memref<24x256xf32, #tpu.memory_space<vmem>>, vector<24x256xf32>,
    } else {
    }
    %c0 = arith.constant 0 : index
    %c0_1 = arith.constant 0 : index
    %3 = vector.load %arg7[%c0, %c0_1] : memref<24x256xf32, #tpu.memory_space<vmem>>, vector<24x256xf32>
    %c0_2 = arith.constant 0 : index
    %c0_3 = arith.constant 0 : index
    %4 = vector.load %arg3[%c0_2, %c0_3] : memref<24x384xf32, #tpu.memory_space<vmem>>, vector<24x384xf32>
    %5 = arith.truncf %4 : vector<24x384xf32> to vector<24x384xbf16>
    %c0_4 = arith.constant 0 : index
    %c0_5 = arith.constant 0 : index
    %6 = vector.load %arg4[%c0_4, %c0_5] : memref<384x256xbf16, #tpu.memory_space<vmem>>, vector<384x256xbf16>
    %cst = arith.constant dense<0.000000e+00> : vector<24x256xf32>
    %7 = tpu.matmul %5, %6, %cst {dimension_numbers = #tpu.dot_dimension_numbers<[1], [0], [0], [1], [0, 0, 1, 1], [], []>} : vector<24x384xbf16>, vector<384x256xbf16>, vector<24x256xf32> -> vector<24x256xf32>
    %8 = arith.addf %3, %7 : vector<24x256xf32>
    %c0_6 = arith.constant 0 : index
    %c0_7 = arith.constant 0 : index
    %9 = vector.load %arg7[%c0_6, %c0_7] : memref<24x256xf32, #tpu.memory_space<vmem>>, vector<24x256xf32>
    tpu.vector_store %arg7[%c0_6, %c0_7], %8 {strides = array<i32>} : memref<24x256xf32, #tpu.memory_space<vmem>>, vector<24x256xf32>,
    %c5_i32 = arith.constant 5 : i32
    %10 = arith.cmpi eq, %arg2, %c5_i32 : i32
    %11 = arith.extui %10 : i1 to i32
    %c0_i32_8 = arith.constant 0 : i32
    %12 = arith.cmpi ne, %11, %c0_i32_8 : i32
    scf.if %12 {
      %c0_9 = arith.constant 0 : index
      %c0_10 = arith.constant 0 : index
      %13 = vector.load %arg7[%c0_9, %c0_10] : memref<24x256xf32, #tpu.memory_space<vmem>>, vector<24x256xf32>
      %c0_11 = arith.constant 0 : index
      %c0_12 = arith.constant 0 : index
      %14 = vector.load %arg5[%c0_11, %c0_12] : memref<1x256xf32, #tpu.memory_space<vmem>>, vector<1x256xf32>
      %15 = vector.broadcast %14 : vector<1x256xf32> to vector<24x256xf32>
      %16 = arith.addf %13, %15 : vector<24x256xf32>
      %cst_13 = arith.constant 0.000000e+00 : f32
      %17 = vector.broadcast %cst_13 : f32 to vector<24x256xf32>
      %18 = arith.maximumf %16, %17 : vector<24x256xf32>
      %c0_14 = arith.constant 0 : index
      %c0_15 = arith.constant 0 : index
      %19 = vector.load %arg6[%c0_14, %c0_15] : memref<24x256xf32, #tpu.memory_space<vmem>>, vector<24x256xf32>
      tpu.vector_store %arg6[%c0_14, %c0_15], %18 {strides = array<i32>} : memref<24x256xf32, #tpu.memory_space<vmem>>, vector<24x256xf32>,
    } else {
    }
    return
  }
  func.func @transform_0(%arg0: i32, %arg1: i32, %arg2: i32) -> (i32, i32) {
    %c0_i32 = arith.constant 0 : i32
    return %arg0, %arg2 : i32, i32
  }
  func.func @transform_1(%arg0: i32, %arg1: i32, %arg2: i32) -> (i32, i32) {
    %c0_i32 = arith.constant 0 : i32
    return %arg2, %arg1 : i32, i32
  }
  func.func @transform_2(%arg0: i32, %arg1: i32, %arg2: i32) -> (i32, i32) {
    %c0_i32 = arith.constant 0 : i32
    %c0_i32_0 = arith.constant 0 : i32
    return %c0_i32, %arg1 : i32, i32
  }
  func.func @transform_3(%arg0: i32, %arg1: i32, %arg2: i32) -> (i32, i32) {
    %c0_i32 = arith.constant 0 : i32
    return %arg0, %arg1 : i32, i32
  }
}

module attributes {stable_mosaic.version = 11 : i64} {
  func.func @_matmul_bias_act_kernel(%arg0: i32, %arg1: i32, %arg2: i32, %arg3: memref<8x512xf32, #tpu.memory_space<vmem>>, %arg4: memref<512x512xbf16, #tpu.memory_space<vmem>>, %arg5: memref<1x512xf32, #tpu.memory_space<vmem>>, %arg6: memref<8x512xf32, #tpu.memory_space<vmem>>, %arg7: memref<8x512xf32, #tpu.memory_space<vmem>>) attributes {dimension_semantics = [#tpu.dimension_semantics<parallel>, #tpu.dimension_semantics<parallel>, #tpu.dimension_semantics<arbitrary>], iteration_bounds = array<i64: 1, 8, 18>, scalar_prefetch = 0 : i64, scratch_operands = 1 : i64, tpu.core_type = #tpu.core_type<tc>, window_params = [{transform_indices = @transform_0, window_bounds = array<i64: 8, 512>}, {transform_indices = @transform_1, window_bounds = array<i64: 512, 512>}, {transform_indices = @transform_2, window_bounds = array<i64: 1, 512>}, {transform_indices = @transform_3, window_bounds = array<i64: 8, 512>}]} {
    %c0_i32 = arith.constant 0 : i32
    %0 = arith.cmpi eq, %arg2, %c0_i32 : i32
    %1 = arith.extui %0 : i1 to i32
    %c0_i32_0 = arith.constant 0 : i32
    %2 = arith.cmpi ne, %1, %c0_i32_0 : i32
    scf.if %2 {
      %cst_9 = arith.constant 0.000000e+00 : f32
      %13 = vector.broadcast %cst_9 : f32 to vector<8x512xf32>
      %c0_10 = arith.constant 0 : index
      %c0_11 = arith.constant 0 : index
      %14 = vector.load %arg7[%c0_10, %c0_11] : memref<8x512xf32, #tpu.memory_space<vmem>>, vector<8x512xf32>
      tpu.vector_store %arg7[%c0_10, %c0_11], %13 {strides = array<i32>} : memref<8x512xf32, #tpu.memory_space<vmem>>, vector<8x512xf32>,
    } else {
    }
    %c0 = arith.constant 0 : index
    %c0_1 = arith.constant 0 : index
    %3 = vector.load %arg7[%c0, %c0_1] : memref<8x512xf32, #tpu.memory_space<vmem>>, vector<8x512xf32>
    %c0_2 = arith.constant 0 : index
    %c0_3 = arith.constant 0 : index
    %4 = vector.load %arg3[%c0_2, %c0_3] : memref<8x512xf32, #tpu.memory_space<vmem>>, vector<8x512xf32>
    %5 = arith.truncf %4 : vector<8x512xf32> to vector<8x512xbf16>
    %c0_4 = arith.constant 0 : index
    %c0_5 = arith.constant 0 : index
    %6 = vector.load %arg4[%c0_4, %c0_5] : memref<512x512xbf16, #tpu.memory_space<vmem>>, vector<512x512xbf16>
    %cst = arith.constant dense<0.000000e+00> : vector<8x512xf32>
    %7 = tpu.matmul %5, %6, %cst {dimension_numbers = #tpu.dot_dimension_numbers<[1], [0], [0], [1], [0, 0, 1, 1], [], []>} : vector<8x512xbf16>, vector<512x512xbf16>, vector<8x512xf32> -> vector<8x512xf32>
    %8 = arith.addf %3, %7 : vector<8x512xf32>
    %c0_6 = arith.constant 0 : index
    %c0_7 = arith.constant 0 : index
    %9 = vector.load %arg7[%c0_6, %c0_7] : memref<8x512xf32, #tpu.memory_space<vmem>>, vector<8x512xf32>
    tpu.vector_store %arg7[%c0_6, %c0_7], %8 {strides = array<i32>} : memref<8x512xf32, #tpu.memory_space<vmem>>, vector<8x512xf32>,
    %c17_i32 = arith.constant 17 : i32
    %10 = arith.cmpi eq, %arg2, %c17_i32 : i32
    %11 = arith.extui %10 : i1 to i32
    %c0_i32_8 = arith.constant 0 : i32
    %12 = arith.cmpi ne, %11, %c0_i32_8 : i32
    scf.if %12 {
      %c0_9 = arith.constant 0 : index
      %c0_10 = arith.constant 0 : index
      %13 = vector.load %arg7[%c0_9, %c0_10] : memref<8x512xf32, #tpu.memory_space<vmem>>, vector<8x512xf32>
      %c0_11 = arith.constant 0 : index
      %c0_12 = arith.constant 0 : index
      %14 = vector.load %arg5[%c0_11, %c0_12] : memref<1x512xf32, #tpu.memory_space<vmem>>, vector<1x512xf32>
      %15 = vector.broadcast %14 : vector<1x512xf32> to vector<8x512xf32>
      %16 = arith.addf %13, %15 : vector<8x512xf32>
      %cst_13 = arith.constant 0.000000e+00 : f32
      %17 = vector.broadcast %cst_13 : f32 to vector<8x512xf32>
      %18 = arith.maximumf %16, %17 : vector<8x512xf32>
      %c0_14 = arith.constant 0 : index
      %c0_15 = arith.constant 0 : index
      %19 = vector.load %arg6[%c0_14, %c0_15] : memref<8x512xf32, #tpu.memory_space<vmem>>, vector<8x512xf32>
      tpu.vector_store %arg6[%c0_14, %c0_15], %18 {strides = array<i32>} : memref<8x512xf32, #tpu.memory_space<vmem>>, vector<8x512xf32>,
    } else {
    }
    return
  }
  func.func @transform_0(%arg0: i32, %arg1: i32, %arg2: i32) -> (i32, i32) {
    %c0_i32 = arith.constant 0 : i32
    return %arg0, %arg2 : i32, i32
  }
  func.func @transform_1(%arg0: i32, %arg1: i32, %arg2: i32) -> (i32, i32) {
    %c0_i32 = arith.constant 0 : i32
    return %arg2, %arg1 : i32, i32
  }
  func.func @transform_2(%arg0: i32, %arg1: i32, %arg2: i32) -> (i32, i32) {
    %c0_i32 = arith.constant 0 : i32
    %c0_i32_0 = arith.constant 0 : i32
    return %c0_i32, %arg1 : i32, i32
  }
  func.func @transform_3(%arg0: i32, %arg1: i32, %arg2: i32) -> (i32, i32) {
    %c0_i32 = arith.constant 0 : i32
    return %arg0, %arg1 : i32, i32
  }
}

module attributes {stable_mosaic.version = 11 : i64} {
  func.func @_matmul_bias_act_kernel(%arg0: i32, %arg1: i32, %arg2: i32, %arg3: memref<8x512xf32, #tpu.memory_space<vmem>>, %arg4: memref<512x512xbf16, #tpu.memory_space<vmem>>, %arg5: memref<1x512xf32, #tpu.memory_space<vmem>>, %arg6: memref<8x512xf32, #tpu.memory_space<vmem>>, %arg7: memref<8x512xf32, #tpu.memory_space<vmem>>) attributes {dimension_semantics = [#tpu.dimension_semantics<parallel>, #tpu.dimension_semantics<parallel>, #tpu.dimension_semantics<arbitrary>], iteration_bounds = array<i64: 1, 8, 8>, scalar_prefetch = 0 : i64, scratch_operands = 1 : i64, tpu.core_type = #tpu.core_type<tc>, window_params = [{transform_indices = @transform_0, window_bounds = array<i64: 8, 512>}, {transform_indices = @transform_1, window_bounds = array<i64: 512, 512>}, {transform_indices = @transform_2, window_bounds = array<i64: 1, 512>}, {transform_indices = @transform_3, window_bounds = array<i64: 8, 512>}]} {
    %c0_i32 = arith.constant 0 : i32
    %0 = arith.cmpi eq, %arg2, %c0_i32 : i32
    %1 = arith.extui %0 : i1 to i32
    %c0_i32_0 = arith.constant 0 : i32
    %2 = arith.cmpi ne, %1, %c0_i32_0 : i32
    scf.if %2 {
      %cst_9 = arith.constant 0.000000e+00 : f32
      %13 = vector.broadcast %cst_9 : f32 to vector<8x512xf32>
      %c0_10 = arith.constant 0 : index
      %c0_11 = arith.constant 0 : index
      %14 = vector.load %arg7[%c0_10, %c0_11] : memref<8x512xf32, #tpu.memory_space<vmem>>, vector<8x512xf32>
      tpu.vector_store %arg7[%c0_10, %c0_11], %13 {strides = array<i32>} : memref<8x512xf32, #tpu.memory_space<vmem>>, vector<8x512xf32>,
    } else {
    }
    %c0 = arith.constant 0 : index
    %c0_1 = arith.constant 0 : index
    %3 = vector.load %arg7[%c0, %c0_1] : memref<8x512xf32, #tpu.memory_space<vmem>>, vector<8x512xf32>
    %c0_2 = arith.constant 0 : index
    %c0_3 = arith.constant 0 : index
    %4 = vector.load %arg3[%c0_2, %c0_3] : memref<8x512xf32, #tpu.memory_space<vmem>>, vector<8x512xf32>
    %5 = arith.truncf %4 : vector<8x512xf32> to vector<8x512xbf16>
    %c0_4 = arith.constant 0 : index
    %c0_5 = arith.constant 0 : index
    %6 = vector.load %arg4[%c0_4, %c0_5] : memref<512x512xbf16, #tpu.memory_space<vmem>>, vector<512x512xbf16>
    %cst = arith.constant dense<0.000000e+00> : vector<8x512xf32>
    %7 = tpu.matmul %5, %6, %cst {dimension_numbers = #tpu.dot_dimension_numbers<[1], [0], [0], [1], [0, 0, 1, 1], [], []>} : vector<8x512xbf16>, vector<512x512xbf16>, vector<8x512xf32> -> vector<8x512xf32>
    %8 = arith.addf %3, %7 : vector<8x512xf32>
    %c0_6 = arith.constant 0 : index
    %c0_7 = arith.constant 0 : index
    %9 = vector.load %arg7[%c0_6, %c0_7] : memref<8x512xf32, #tpu.memory_space<vmem>>, vector<8x512xf32>
    tpu.vector_store %arg7[%c0_6, %c0_7], %8 {strides = array<i32>} : memref<8x512xf32, #tpu.memory_space<vmem>>, vector<8x512xf32>,
    %c7_i32 = arith.constant 7 : i32
    %10 = arith.cmpi eq, %arg2, %c7_i32 : i32
    %11 = arith.extui %10 : i1 to i32
    %c0_i32_8 = arith.constant 0 : i32
    %12 = arith.cmpi ne, %11, %c0_i32_8 : i32
    scf.if %12 {
      %c0_9 = arith.constant 0 : index
      %c0_10 = arith.constant 0 : index
      %13 = vector.load %arg7[%c0_9, %c0_10] : memref<8x512xf32, #tpu.memory_space<vmem>>, vector<8x512xf32>
      %c0_11 = arith.constant 0 : index
      %c0_12 = arith.constant 0 : index
      %14 = vector.load %arg5[%c0_11, %c0_12] : memref<1x512xf32, #tpu.memory_space<vmem>>, vector<1x512xf32>
      %15 = vector.broadcast %14 : vector<1x512xf32> to vector<8x512xf32>
      %16 = arith.addf %13, %15 : vector<8x512xf32>
      %cst_13 = arith.constant 0.000000e+00 : f32
      %17 = vector.broadcast %cst_13 : f32 to vector<8x512xf32>
      %18 = arith.maximumf %16, %17 : vector<8x512xf32>
      %c0_14 = arith.constant 0 : index
      %c0_15 = arith.constant 0 : index
      %19 = vector.load %arg6[%c0_14, %c0_15] : memref<8x512xf32, #tpu.memory_space<vmem>>, vector<8x512xf32>
      tpu.vector_store %arg6[%c0_14, %c0_15], %18 {strides = array<i32>} : memref<8x512xf32, #tpu.memory_space<vmem>>, vector<8x512xf32>,
    } else {
    }
    return
  }
  func.func @transform_0(%arg0: i32, %arg1: i32, %arg2: i32) -> (i32, i32) {
    %c0_i32 = arith.constant 0 : i32
    return %arg0, %arg2 : i32, i32
  }
  func.func @transform_1(%arg0: i32, %arg1: i32, %arg2: i32) -> (i32, i32) {
    %c0_i32 = arith.constant 0 : i32
    return %arg2, %arg1 : i32, i32
  }
  func.func @transform_2(%arg0: i32, %arg1: i32, %arg2: i32) -> (i32, i32) {
    %c0_i32 = arith.constant 0 : i32
    %c0_i32_0 = arith.constant 0 : i32
    return %c0_i32, %arg1 : i32, i32
  }
  func.func @transform_3(%arg0: i32, %arg1: i32, %arg2: i32) -> (i32, i32) {
    %c0_i32 = arith.constant 0 : i32
    return %arg0, %arg1 : i32, i32
  }
}

module attributes {stable_mosaic.version = 11 : i64} {
  func.func @_matmul_bias_act_kernel(%arg0: i32, %arg1: i32, %arg2: i32, %arg3: memref<8x512xf32, #tpu.memory_space<vmem>>, %arg4: memref<512x128xbf16, #tpu.memory_space<vmem>>, %arg5: memref<1x128xf32, #tpu.memory_space<vmem>>, %arg6: memref<8x128xf32, #tpu.memory_space<vmem>>, %arg7: memref<8x128xf32, #tpu.memory_space<vmem>>) attributes {dimension_semantics = [#tpu.dimension_semantics<parallel>, #tpu.dimension_semantics<parallel>, #tpu.dimension_semantics<arbitrary>], iteration_bounds = array<i64: 1, 1, 8>, scalar_prefetch = 0 : i64, scratch_operands = 1 : i64, tpu.core_type = #tpu.core_type<tc>, window_params = [{transform_indices = @transform_0, window_bounds = array<i64: 8, 512>}, {transform_indices = @transform_1, window_bounds = array<i64: 512, 128>}, {transform_indices = @transform_2, window_bounds = array<i64: 1, 128>}, {transform_indices = @transform_3, window_bounds = array<i64: 8, 128>}]} {
    %c0_i32 = arith.constant 0 : i32
    %0 = arith.cmpi eq, %arg2, %c0_i32 : i32
    %1 = arith.extui %0 : i1 to i32
    %c0_i32_0 = arith.constant 0 : i32
    %2 = arith.cmpi ne, %1, %c0_i32_0 : i32
    scf.if %2 {
      %cst_9 = arith.constant 0.000000e+00 : f32
      %13 = vector.broadcast %cst_9 : f32 to vector<8x128xf32>
      %c0_10 = arith.constant 0 : index
      %c0_11 = arith.constant 0 : index
      %14 = vector.load %arg7[%c0_10, %c0_11] : memref<8x128xf32, #tpu.memory_space<vmem>>, vector<8x128xf32>
      tpu.vector_store %arg7[%c0_10, %c0_11], %13 {strides = array<i32>} : memref<8x128xf32, #tpu.memory_space<vmem>>, vector<8x128xf32>,
    } else {
    }
    %c0 = arith.constant 0 : index
    %c0_1 = arith.constant 0 : index
    %3 = vector.load %arg7[%c0, %c0_1] : memref<8x128xf32, #tpu.memory_space<vmem>>, vector<8x128xf32>
    %c0_2 = arith.constant 0 : index
    %c0_3 = arith.constant 0 : index
    %4 = vector.load %arg3[%c0_2, %c0_3] : memref<8x512xf32, #tpu.memory_space<vmem>>, vector<8x512xf32>
    %5 = arith.truncf %4 : vector<8x512xf32> to vector<8x512xbf16>
    %c0_4 = arith.constant 0 : index
    %c0_5 = arith.constant 0 : index
    %6 = vector.load %arg4[%c0_4, %c0_5] : memref<512x128xbf16, #tpu.memory_space<vmem>>, vector<512x128xbf16>
    %cst = arith.constant dense<0.000000e+00> : vector<8x128xf32>
    %7 = tpu.matmul %5, %6, %cst {dimension_numbers = #tpu.dot_dimension_numbers<[1], [0], [0], [1], [0, 0, 1, 1], [], []>} : vector<8x512xbf16>, vector<512x128xbf16>, vector<8x128xf32> -> vector<8x128xf32>
    %8 = arith.addf %3, %7 : vector<8x128xf32>
    %c0_6 = arith.constant 0 : index
    %c0_7 = arith.constant 0 : index
    %9 = vector.load %arg7[%c0_6, %c0_7] : memref<8x128xf32, #tpu.memory_space<vmem>>, vector<8x128xf32>
    tpu.vector_store %arg7[%c0_6, %c0_7], %8 {strides = array<i32>} : memref<8x128xf32, #tpu.memory_space<vmem>>, vector<8x128xf32>,
    %c7_i32 = arith.constant 7 : i32
    %10 = arith.cmpi eq, %arg2, %c7_i32 : i32
    %11 = arith.extui %10 : i1 to i32
    %c0_i32_8 = arith.constant 0 : i32
    %12 = arith.cmpi ne, %11, %c0_i32_8 : i32
    scf.if %12 {
      %c0_9 = arith.constant 0 : index
      %c0_10 = arith.constant 0 : index
      %13 = vector.load %arg7[%c0_9, %c0_10] : memref<8x128xf32, #tpu.memory_space<vmem>>, vector<8x128xf32>
      %c0_11 = arith.constant 0 : index
      %c0_12 = arith.constant 0 : index
      %14 = vector.load %arg5[%c0_11, %c0_12] : memref<1x128xf32, #tpu.memory_space<vmem>>, vector<1x128xf32>
      %15 = vector.broadcast %14 : vector<1x128xf32> to vector<8x128xf32>
      %16 = arith.addf %13, %15 : vector<8x128xf32>
      %c0_13 = arith.constant 0 : index
      %c0_14 = arith.constant 0 : index
      %17 = vector.load %arg6[%c0_13, %c0_14] : memref<8x128xf32, #tpu.memory_space<vmem>>, vector<8x128xf32>
      tpu.vector_store %arg6[%c0_13, %c0_14], %16 {strides = array<i32>} : memref<8x128xf32, #tpu.memory_space<vmem>>, vector<8x128xf32>,
    } else {
    }
    return
  }
  func.func @transform_0(%arg0: i32, %arg1: i32, %arg2: i32) -> (i32, i32) {
    %c0_i32 = arith.constant 0 : i32
    return %arg0, %arg2 : i32, i32
  }
  func.func @transform_1(%arg0: i32, %arg1: i32, %arg2: i32) -> (i32, i32) {
    %c0_i32 = arith.constant 0 : i32
    return %arg2, %arg1 : i32, i32
  }
  func.func @transform_2(%arg0: i32, %arg1: i32, %arg2: i32) -> (i32, i32) {
    %c0_i32 = arith.constant 0 : i32
    %c0_i32_0 = arith.constant 0 : i32
    return %c0_i32, %arg1 : i32, i32
  }
  func.func @transform_3(%arg0: i32, %arg1: i32, %arg2: i32) -> (i32, i32) {
    %c0_i32 = arith.constant 0 : i32
    return %arg0, %arg1 : i32, i32
  }
}

</mosaic_0001>

<llo_original>
// kernel: alexnet_forward.8
$region0: #{alexnet_forward.8}
  #allocation0 [shape = 'u32[]', space=smem, size = 0x4, offset = 0x4, fixed_abs, tag = 'smem constant byte address 0x4 - core index']
  #allocation1 [shape = 'u32[144,128]{1,0:T(1,128)}', space=vmem, size = 0x12000, scoped, tag = 'internal scratch']
  #allocation2 [shape = 'f32[456,128]{1,0:T(8,128)}', space=vmem, size = 0x39000, scoped, tag = 'scratch operand']
  %s0 = inlined_call_operand.vmem [shape: f32[456,384], index: 0, kind: input, shape index: {}]
  %s1 = inlined_call_operand.vmem [shape: bf16[384,128], index: 1, kind: input, shape index: {}]
  %s2 = inlined_call_operand.vmem [shape: f32[1,128], index: 2, kind: input, shape index: {}]
  %s3 = inlined_call_operand.vmem [shape: f32[456,128], index: 3, kind: output, shape index: {}]
  %s4 = sld [smem:[#allocation0]]
  $region30: #{alexnet_forward.8} parent=0
    _
  %s6 = ssub.s32 1, %s4
  %s7 = scalar_select 0, %s6, %s4
  // Predicated region
  $region2: #{alexnet_forward.8} parent=0 // pred_check
    _
  $region3: #{alexnet_forward.8} parent=0 // pred_check_branch
    %9 = sbr.rel (0) target = $region5
  $region4: #{alexnet_forward.8} parent=0 // pred_region
    _
  $region5: #{alexnet_forward.8} parent=0 // pred_fallthru
    _
  // Predicated region
  $region6: #{alexnet_forward.8} parent=0 // pred_check
    _
  $region7: #{alexnet_forward.8} parent=0 // pred_check_branch
    %11 = sbr.rel (0) target = $region9
  $region8: #{alexnet_forward.8} parent=0 // pred_region
    _
  $region9: #{alexnet_forward.8} parent=0 // pred_fallthru
    _
  // Predicated region
  $region10: #{alexnet_forward.8} parent=0 // pred_check
    _
  $region11: #{alexnet_forward.8} parent=0 // pred_check_branch
    %13 = sbr.rel (0) target = $region13
  $region12: #{alexnet_forward.8} parent=0 // pred_region
    _
  $region13: #{alexnet_forward.8} parent=0 // pred_fallthru
    _
  %p15 = scmp.eq.s32.totalorder 0, 0
  // Predicated region
  $region14: #{alexnet_forward.8} parent=0 // pred_check
    %p16 = pneg %p15
  $region15: #{alexnet_forward.8} parent=0 // pred_check_branch
    %18 = sbr.rel (%p16) target = $region17
  $region16: #{alexnet_forward.8} parent=0 // pred_region
    %19 = vst [vmem:[#allocation2] sm:$0xff] 0.0
    %20 = vst [vmem:[#allocation2 + $0x8] sm:$0xff] 0.0
    %21 = vst [vmem:[#allocation2 + $0x10] sm:$0xff] 0.0
    %22 = vst [vmem:[#allocation2 + $0x18] sm:$0xff] 0.0
    %23 = vst [vmem:[#allocation2 + $0x20] sm:$0xff] 0.0
    %24 = vst [vmem:[#allocation2 + $0x28] sm:$0xff] 0.0
    %25 = vst [vmem:[#allocation2 + $0x30] sm:$0xff] 0.0
    %26 = vst [vmem:[#allocation2 + $0x38] sm:$0xff] 0.0
    %27 = vst [vmem:[#allocation2 + $0x40] sm:$0xff] 0.0
    %28 = vst [vmem:[#allocation2 + $0x48] sm:$0xff] 0.0
    %29 = vst [vmem:[#allocation2 + $0x50] sm:$0xff] 0.0
    %30 = vst [vmem:[#allocation2 + $0x58] sm:$0xff] 0.0
    %31 = vst [vmem:[#allocation2 + $0x60] sm:$0xff] 0.0
    %32 = vst [vmem:[#allocation2 + $0x68] sm:$0xff] 0.0
    %33 = vst [vmem:[#allocation2 + $0x70] sm:$0xff] 0.0
    %34 = vst [vmem:[#allocation2 + $0x78] sm:$0xff] 0.0
    %35 = vst [vmem:[#allocation2 + $0x80] sm:$0xff] 0.0
    %36 = vst [vmem:[#allocation2 + $0x88] sm:$0xff] 0.0
    %37 = vst [vmem:[#allocation2 + $0x90] sm:$0xff] 0.0
    %38 = vst [vmem:[#allocation2 + $0x98] sm:$0xff] 0.0
    %39 = vst [vmem:[#allocation2 + $0xa0] sm:$0xff] 0.0
    %40 = vst [vmem:[#allocation2 + $0xa8] sm:$0xff] 0.0
    %41 = vst [vmem:[#allocation2 + $0xb0] sm:$0xff] 0.0
    %42 = vst [vmem:[#allocation2 + $0xb8] sm:$0xff] 0.0
    %43 = vst [vmem:[#allocation2 + $0xc0] sm:$0xff] 0.0
    %44 = vst [vmem:[#allocation2 + $0xc8] sm:$0xff] 0.0
    %45 = vst [vmem:[#allocation2 + $0xd0] sm:$0xff] 0.0
    %46 = vst [vmem:[#allocation2 + $0xd8] sm:$0xff] 0.0
    %47 = vst [vmem:[#allocation2 + $0xe0] sm:$0xff] 0.0
    %48 = vst [vmem:[#allocation2 + $0xe8] sm:$0xff] 0.0
    %49 = vst [vmem:[#allocation2 + $0xf0] sm:$0xff] 0.0
    %50 = vst [vmem:[#allocation2 + $0xf8] sm:$0xff] 0.0
    %51 = vst [vmem:[#allocation2 + $0x100] sm:$0xff] 0.0
    %52 = vst [vmem:[#allocation2 + $0x108] sm:$0xff] 0.0
    %53 = vst [vmem:[#allocation2 + $0x110] sm:$0xff] 0.0
    %54 = vst [vmem:[#allocation2 + $0x118] sm:$0xff] 0.0
    %55 = vst [vmem:[#allocation2 + $0x120] sm:$0xff] 0.0
    %56 = vst [vmem:[#allocation2 + $0x128] sm:$0xff] 0.0
    %57 = vst [vmem:[#allocation2 + $0x130] sm:$0xff] 0.0
    %58 = vst [vmem:[#allocation2 + $0x138] sm:$0xff] 0.0
    %59 = vst [vmem:[#allocation2 + $0x140] sm:$0xff] 0.0
    %60 = vst [vmem:[#allocation2 + $0x148] sm:$0xff] 0.0
    %61 = vst [vmem:[#allocation2 + $0x150] sm:$0xff] 0.0
    %62 = vst [vmem:[#allocation2 + $0x158] sm:$0xff] 0.0
    %63 = vst [vmem:[#allocation2 + $0x160] sm:$0xff] 0.0
    %64 = vst [vmem:[#allocation2 + $0x168] sm:$0xff] 0.0
    %65 = vst [vmem:[#allocation2 + $0x170] sm:$0xff] 0.0
    %66 = vst [vmem:[#allocation2 + $0x178] sm:$0xff] 0.0
    %67 = vst [vmem:[#allocation2 + $0x180] sm:$0xff] 0.0
    %68 = vst [vmem:[#allocation2 + $0x188] sm:$0xff] 0.0
    %69 = vst [vmem:[#allocation2 + $0x190] sm:$0xff] 0.0
    %70 = vst [vmem:[#allocation2 + $0x198] sm:$0xff] 0.0
    %71 = vst [vmem:[#allocation2 + $0x1a0] sm:$0xff] 0.0
    %72 = vst [vmem:[#allocation2 + $0x1a8] sm:$0xff] 0.0
    %73 = vst [vmem:[#allocation2 + $0x1b0] sm:$0xff] 0.0
    %74 = vst [vmem:[#allocation2 + $0x1b8] sm:$0xff] 0.0
    %75 = vst [vmem:[#allocation2 + $0x1c0] sm:$0xff] 0.0
  $region17: #{alexnet_forward.8} parent=0 // pred_fallthru
    _
  %v76 = vld [vmem:[#allocation2] sm:$0xff]
  %v77 = vld [vmem:[#allocation2 + $0x8] sm:$0xff]
  %v78 = vld [vmem:[#allocation2 + $0x10] sm:$0xff]
  %v79 = vld [vmem:[#allocation2 + $0x18] sm:$0xff]
  %v80 = vld [vmem:[#allocation2 + $0x20] sm:$0xff]
  %v81 = vld [vmem:[#allocation2 + $0x28] sm:$0xff]
  %v82 = vld [vmem:[#allocation2 + $0x30] sm:$0xff]
  %v83 = vld [vmem:[#allocation2 + $0x38] sm:$0xff]
  %v84 = vld [vmem:[#allocation2 + $0x40] sm:$0xff]
  %v85 = vld [vmem:[#allocation2 + $0x48] sm:$0xff]
  %v86 = vld [vmem:[#allocation2 + $0x50] sm:$0xff]
  %v87 = vld [vmem:[#allocation2 + $0x58] sm:$0xff]
  %v88 = vld [vmem:[#allocation2 + $0x60] sm:$0xff]
  %v89 = vld [vmem:[#allocation2 + $0x68] sm:$0xff]
  %v90 = vld [vmem:[#allocation2 + $0x70] sm:$0xff]
  %v91 = vld [vmem:[#allocation2 + $0x78] sm:$0xff]
  %v92 = vld [vmem:[#allocation2 + $0x80] sm:$0xff]
  %v93 = vld [vmem:[#allocation2 + $0x88] sm:$0xff]
  %v94 = vld [vmem:[#allocation2 + $0x90] sm:$0xff]
  %v95 = vld [vmem:[#allocation2 + $0x98] sm:$0xff]
  %v96 = vld [vmem:[#allocation2 + $0xa0] sm:$0xff]
  %v97 = vld [vmem:[#allocation2 + $0xa8] sm:$0xff]
  %v98 = vld [vmem:[#allocation2 + $0xb0] sm:$0xff]
  %v99 = vld [vmem:[#allocation2 + $0xb8] sm:$0xff]
  %v100 = vld [vmem:[#allocation2 + $0xc0] sm:$0xff]
  %v101 = vld [vmem:[#allocation2 + $0xc8] sm:$0xff]
  %v102 = vld [vmem:[#allocation2 + $0xd0] sm:$0xff]
  %v103 = vld [vmem:[#allocation2 + $0xd8] sm:$0xff]
  %v104 = vld [vmem:[#allocation2 + $0xe0] sm:$0xff]
  %v105 = vld [vmem:[#allocation2 + $0xe8] sm:$0xff]
  %v106 = vld [vmem:[#allocation2 + $0xf0] sm:$0xff]
  %v107 = vld [vmem:[#allocation2 + $0xf8] sm:$0xff]
  %v108 = vld [vmem:[#allocation2 + $0x100] sm:$0xff]
  %v109 = vld [vmem:[#allocation2 + $0x108] sm:$0xff]
  %v110 = vld [vmem:[#allocation2 + $0x110] sm:$0xff]
  %v111 = vld [vmem:[#allocation2 + $0x118] sm:$0xff]
  %v112 = vld [vmem:[#allocation2 + $0x120] sm:$0xff]
  %v113 = vld [vmem:[#allocation2 + $0x128] sm:$0xff]
  %v114 = vld [vmem:[#allocation2 + $0x130] sm:$0xff]
  %v115 = vld [vmem:[#allocation2 + $0x138] sm:$0xff]
  %v116 = vld [vmem:[#allocation2 + $0x140] sm:$0xff]
  %v117 = vld [vmem:[#allocation2 + $0x148] sm:$0xff]
  %v118 = vld [vmem:[#allocation2 + $0x150] sm:$0xff]
  %v119 = vld [vmem:[#allocation2 + $0x158] sm:$0xff]
  %v120 = vld [vmem:[#allocation2 + $0x160] sm:$0xff]
  %v121 = vld [vmem:[#allocation2 + $0x168] sm:$0xff]
  %v122 = vld [vmem:[#allocation2 + $0x170] sm:$0xff]
  %v123 = vld [vmem:[#allocation2 + $0x178] sm:$0xff]
  %v124 = vld [vmem:[#allocation2 + $0x180] sm:$0xff]
  %v125 = vld [vmem:[#allocation2 + $0x188] sm:$0xff]
  %v126 = vld [vmem:[#allocation2 + $0x190] sm:$0xff]
  %v127 = vld [vmem:[#allocation2 + $0x198] sm:$0xff]
  %v128 = vld [vmem:[#allocation2 + $0x1a0] sm:$0xff]
  %v129 = vld [vmem:[#allocation2 + $0x1a8] sm:$0xff]
  %v130 = vld [vmem:[#allocation2 + $0x1b0] sm:$0xff]
  %v131 = vld [vmem:[#allocation2 + $0x1b8] sm:$0xff]
  %v132 = vld [vmem:[#allocation2 + $0x1c0] sm:$0xff]
  %v133 = vld [vmem:[%s0] sm:$0xff]
  %v134 = vld [vmem:[%s0 + $0x8] sm:$0xff]
  %v135 = vld [vmem:[%s0 + $0x10] sm:$0xff]
  %v136 = vld [vmem:[%s0 + $0x18] sm:$0xff]
  %v137 = vld [vmem:[%s0 + $0x20] sm:$0xff]
  %v138 = vld [vmem:[%s0 + $0x28] sm:$0xff]
  %v139 = vld [vmem:[%s0 + $0x30] sm:$0xff]
  %v140 = vld [vmem:[%s0 + $0x38] sm:$0xff]
  %v141 = vld [vmem:[%s0 + $0x40] sm:$0xff]
  %v142 = vld [vmem:[%s0 + $0x48] sm:$0xff]
  %v143 = vld [vmem:[%s0 + $0x50] sm:$0xff]
  %v144 = vld [vmem:[%s0 + $0x58] sm:$0xff]
  %v145 = vld [vmem:[%s0 + $0x60] sm:$0xff]
  %v146 = vld [vmem:[%s0 + $0x68] sm:$0xff]
  %v147 = vld [vmem:[%s0 + $0x70] sm:$0xff]
  %v148 = vld [vmem:[%s0 + $0x78] sm:$0xff]
  %v149 = vld [vmem:[%s0 + $0x80] sm:$0xff]
  %v150 = vld [vmem:[%s0 + $0x88] sm:$0xff]
  %v151 = vld [vmem:[%s0 + $0x90] sm:$0xff]
  %v152 = vld [vmem:[%s0 + $0x98] sm:$0xff]
  %v153 = vld [vmem:[%s0 + $0xa0] sm:$0xff]
  %v154 = vld [vmem:[%s0 + $0xa8] sm:$0xff]
  %v155 = vld [vmem:[%s0 + $0xb0] sm:$0xff]
  %v156 = vld [vmem:[%s0 + $0xb8] sm:$0xff]
  %v157 = vld [vmem:[%s0 + $0xc0] sm:$0xff]
  %v158 = vld [vmem:[%s0 + $0xc8] sm:$0xff]
  %v159 = vld [vmem:[%s0 + $0xd0] sm:$0xff]
  %v160 = vld [vmem:[%s0 + $0xd8] sm:$0xff]
  %v161 = vld [vmem:[%s0 + $0xe0] sm:$0xff]
  %v162 = vld [vmem:[%s0 + $0xe8] sm:$0xff]
  %v163 = vld [vmem:[%s0 + $0xf0] sm:$0xff]
  %v164 = vld [vmem:[%s0 + $0xf8] sm:$0xff]
  %v165 = vld [vmem:[%s0 + $0x100] sm:$0xff]
  %v166 = vld [vmem:[%s0 + $0x108] sm:$0xff]
  %v167 = vld [vmem:[%s0 + $0x110] sm:$0xff]
  %v168 = vld [vmem:[%s0 + $0x118] sm:$0xff]
  %v169 = vld [vmem:[%s0 + $0x120] sm:$0xff]
  %v170 = vld [vmem:[%s0 + $0x128] sm:$0xff]
  %v171 = vld [vmem:[%s0 + $0x130] sm:$0xff]
  %v172 = vld [vmem:[%s0 + $0x138] sm:$0xff]
  %v173 = vld [vmem:[%s0 + $0x140] sm:$0xff]
  %v174 = vld [vmem:[%s0 + $0x148] sm:$0xff]
  %v175 = vld [vmem:[%s0 + $0x150] sm:$0xff]
  %v176 = vld [vmem:[%s0 + $0x158] sm:$0xff]
  %v177 = vld [vmem:[%s0 + $0x160] sm:$0xff]
  %v178 = vld [vmem:[%s0 + $0x168] sm:$0xff]
  %v179 = vld [vmem:[%s0 + $0x170] sm:$0xff]
  %v180 = vld [vmem:[%s0 + $0x178] sm:$0xff]
  %v181 = vld [vmem:[%s0 + $0x180] sm:$0xff]
  %v182 = vld [vmem:[%s0 + $0x188] sm:$0xff]
  %v183 = vld [vmem:[%s0 + $0x190] sm:$0xff]
  %v184 = vld [vmem:[%s0 + $0x198] sm:$0xff]
  %v185 = vld [vmem:[%s0 + $0x1a0] sm:$0xff]
  %v186 = vld [vmem:[%s0 + $0x1a8] sm:$0xff]
  %v187 = vld [vmem:[%s0 + $0x1b0] sm:$0xff]
  %v188 = vld [vmem:[%s0 + $0x1b8] sm:$0xff]
  %v189 = vld [vmem:[%s0 + $0x1c0] sm:$0xff]
  %v190 = vld [vmem:[%s0 + $0x1c8] sm:$0xff]
  %v191 = vld [vmem:[%s0 + $0x1d0] sm:$0xff]
  %v192 = vld [vmem:[%s0 + $0x1d8] sm:$0xff]
  %v193 = vld [vmem:[%s0 + $0x1e0] sm:$0xff]
  %v194 = vld [vmem:[%s0 + $0x1e8] sm:$0xff]
  %v195 = vld [vmem:[%s0 + $0x1f0] sm:$0xff]
  %v196 = vld [vmem:[%s0 + $0x1f8] sm:$0xff]
  %v197 = vld [vmem:[%s0 + $0x200] sm:$0xff]
  %v198 = vld [vmem:[%s0 + $0x208] sm:$0xff]
  %v199 = vld [vmem:[%s0 + $0x210] sm:$0xff]
  %v200 = vld [vmem:[%s0 + $0x218] sm:$0xff]
  %v201 = vld [vmem:[%s0 + $0x220] sm:$0xff]
  %v202 = vld [vmem:[%s0 + $0x228] sm:$0xff]
  %v203 = vld [vmem:[%s0 + $0x230] sm:$0xff]
  %v204 = vld [vmem:[%s0 + $0x238] sm:$0xff]
  %v205 = vld [vmem:[%s0 + $0x240] sm:$0xff]
  %v206 = vld [vmem:[%s0 + $0x248] sm:$0xff]
  %v207 = vld [vmem:[%s0 + $0x250] sm:$0xff]
  %v208 = vld [vmem:[%s0 + $0x258] sm:$0xff]
  %v209 = vld [vmem:[%s0 + $0x260] sm:$0xff]
  %v210 = vld [vmem:[%s0 + $0x268] sm:$0xff]
  %v211 = vld [vmem:[%s0 + $0x270] sm:$0xff]
  %v212 = vld [vmem:[%s0 + $0x278] sm:$0xff]
  %v213 = vld [vmem:[%s0 + $0x280] sm:$0xff]
  %v214 = vld [vmem:[%s0 + $0x288] sm:$0xff]
  %v215 = vld [vmem:[%s0 + $0x290] sm:$0xff]
  %v216 = vld [vmem:[%s0 + $0x298] sm:$0xff]
  %v217 = vld [vmem:[%s0 + $0x2a0] sm:$0xff]
  %v218 = vld [vmem:[%s0 + $0x2a8] sm:$0xff]
  %v219 = vld [vmem:[%s0 + $0x2b0] sm:$0xff]
  %v220 = vld [vmem:[%s0 + $0x2b8] sm:$0xff]
  %v221 = vld [vmem:[%s0 + $0x2c0] sm:$0xff]
  %v222 = vld [vmem:[%s0 + $0x2c8] sm:$0xff]
  %v223 = vld [vmem:[%s0 + $0x2d0] sm:$0xff]
  %v224 = vld [vmem:[%s0 + $0x2d8] sm:$0xff]
  %v225 = vld [vmem:[%s0 + $0x2e0] sm:$0xff]
  %v226 = vld [vmem:[%s0 + $0x2e8] sm:$0xff]
  %v227 = vld [vmem:[%s0 + $0x2f0] sm:$0xff]
  %v228 = vld [vmem:[%s0 + $0x2f8] sm:$0xff]
  %v229 = vld [vmem:[%s0 + $0x300] sm:$0xff]
  %v230 = vld [vmem:[%s0 + $0x308] sm:$0xff]
  %v231 = vld [vmem:[%s0 + $0x310] sm:$0xff]
  %v232 = vld [vmem:[%s0 + $0x318] sm:$0xff]
  %v233 = vld [vmem:[%s0 + $0x320] sm:$0xff]
  %v234 = vld [vmem:[%s0 + $0x328] sm:$0xff]
  %v235 = vld [vmem:[%s0 + $0x330] sm:$0xff]
  %v236 = vld [vmem:[%s0 + $0x338] sm:$0xff]
  %v237 = vld [vmem:[%s0 + $0x340] sm:$0xff]
  %v238 = vld [vmem:[%s0 + $0x348] sm:$0xff]
  %v239 = vld [vmem:[%s0 + $0x350] sm:$0xff]
  %v240 = vld [vmem:[%s0 + $0x358] sm:$0xff]
  %v241 = vld [vmem:[%s0 + $0x360] sm:$0xff]
  %v242 = vld [vmem:[%s0 + $0x368] sm:$0xff]
  %v243 = vld [vmem:[%s0 + $0x370] sm:$0xff]
  %v244 = vld [vmem:[%s0 + $0x378] sm:$0xff]
  %v245 = vld [vmem:[%s0 + $0x380] sm:$0xff]
  %v246 = vld [vmem:[%s0 + $0x388] sm:$0xff]
  %v247 = vld [vmem:[%s0 + $0x390] sm:$0xff]
  %v248 = vld [vmem:[%s0 + $0x398] sm:$0xff]
  %v249 = vld [vmem:[%s0 + $0x3a0] sm:$0xff]
  %v250 = vld [vmem:[%s0 + $0x3a8] sm:$0xff]
  %v251 = vld [vmem:[%s0 + $0x3b0] sm:$0xff]
  %v252 = vld [vmem:[%s0 + $0x3b8] sm:$0xff]
  %v253 = vld [vmem:[%s0 + $0x3c0] sm:$0xff]
  %v254 = vld [vmem:[%s0 + $0x3c8] sm:$0xff]
  %v255 = vld [vmem:[%s0 + $0x3d0] sm:$0xff]
  %v256 = vld [vmem:[%s0 + $0x3d8] sm:$0xff]
  %v257 = vld [vmem:[%s0 + $0x3e0] sm:$0xff]
  %v258 = vld [vmem:[%s0 + $0x3e8] sm:$0xff]
  %v259 = vld [vmem:[%s0 + $0x3f0] sm:$0xff]
  %v260 = vld [vmem:[%s0 + $0x3f8] sm:$0xff]
  %v261 = vld [vmem:[%s0 + $0x400] sm:$0xff]
  %v262 = vld [vmem:[%s0 + $0x408] sm:$0xff]
  %v263 = vld [vmem:[%s0 + $0x410] sm:$0xff]
  %v264 = vld [vmem:[%s0 + $0x418] sm:$0xff]
  %v265 = vld [vmem:[%s0 + $0x420] sm:$0xff]
  %v266 = vld [vmem:[%s0 + $0x428] sm:$0xff]
  %v267 = vld [vmem:[%s0 + $0x430] sm:$0xff]
  %v268 = vld [vmem:[%s0 + $0x438] sm:$0xff]
  %v269 = vld [vmem:[%s0 + $0x440] sm:$0xff]
  %v270 = vld [vmem:[%s0 + $0x448] sm:$0xff]
  %v271 = vld [vmem:[%s0 + $0x450] sm:$0xff]
  %v272 = vld [vmem:[%s0 + $0x458] sm:$0xff]
  %v273 = vld [vmem:[%s0 + $0x460] sm:$0xff]
  %v274 = vld [vmem:[%s0 + $0x468] sm:$0xff]
  %v275 = vld [vmem:[%s0 + $0x470] sm:$0xff]
  %v276 = vld [vmem:[%s0 + $0x478] sm:$0xff]
  %v277 = vld [vmem:[%s0 + $0x480] sm:$0xff]
  %v278 = vld [vmem:[%s0 + $0x488] sm:$0xff]
  %v279 = vld [vmem:[%s0 + $0x490] sm:$0xff]
  %v280 = vld [vmem:[%s0 + $0x498] sm:$0xff]
  %v281 = vld [vmem:[%s0 + $0x4a0] sm:$0xff]
  %v282 = vld [vmem:[%s0 + $0x4a8] sm:$0xff]
  %v283 = vld [vmem:[%s0 + $0x4b0] sm:$0xff]
  %v284 = vld [vmem:[%s0 + $0x4b8] sm:$0xff]
  %v285 = vld [vmem:[%s0 + $0x4c0] sm:$0xff]
  %v286 = vld [vmem:[%s0 + $0x4c8] sm:$0xff]
  %v287 = vld [vmem:[%s0 + $0x4d0] sm:$0xff]
  %v288 = vld [vmem:[%s0 + $0x4d8] sm:$0xff]
  %v289 = vld [vmem:[%s0 + $0x4e0] sm:$0xff]
  %v290 = vld [vmem:[%s0 + $0x4e8] sm:$0xff]
  %v291 = vld [vmem:[%s0 + $0x4f0] sm:$0xff]
  %v292 = vld [vmem:[%s0 + $0x4f8] sm:$0xff]
  %v293 = vld [vmem:[%s0 + $0x500] sm:$0xff]
  %v294 = vld [vmem:[%s0 + $0x508] sm:$0xff]
  %v295 = vld [vmem:[%s0 + $0x510] sm:$0xff]
  %v296 = vld [vmem:[%s0 + $0x518] sm:$0xff]
  %v297 = vld [vmem:[%s0 + $0x520] sm:$0xff]
  %v298 = vld [vmem:[%s0 + $0x528] sm:$0xff]
  %v299 = vld [vmem:[%s0 + $0x530] sm:$0xff]
  %v300 = vld [vmem:[%s0 + $0x538] sm:$0xff]
  %v301 = vld [vmem:[%s0 + $0x540] sm:$0xff]
  %v302 = vld [vmem:[%s0 + $0x548] sm:$0xff]
  %v303 = vld [vmem:[%s0 + $0x550] sm:$0xff]
  %v304 = vpack.c.bf16 %v136, %v133
  %v305 = vpack.c.bf16 %v137, %v134
  %v306 = vpack.c.bf16 %v138, %v135
  %v307 = vpack.c.bf16 %v142, %v139
  %v308 = vpack.c.bf16 %v143, %v140
  %v309 = vpack.c.bf16 %v144, %v141
  %v310 = vpack.c.bf16 %v148, %v145
  %v311 = vpack.c.bf16 %v149, %v146
  %v312 = vpack.c.bf16 %v150, %v147
  %v313 = vpack.c.bf16 %v154, %v151
  %v314 = vpack.c.bf16 %v155, %v152
  %v315 = vpack.c.bf16 %v156, %v153
  %v316 = vpack.c.bf16 %v160, %v157
  %v317 = vpack.c.bf16 %v161, %v158
  %v318 = vpack.c.bf16 %v162, %v159
  %v319 = vpack.c.bf16 %v166, %v163
  %v320 = vpack.c.bf16 %v167, %v164
  %v321 = vpack.c.bf16 %v168, %v165
  %v322 = vpack.c.bf16 %v172, %v169
  %v323 = vpack.c.bf16 %v173, %v170
  %v324 = vpack.c.bf16 %v174, %v171
  %v325 = vpack.c.bf16 %v178, %v175
  %v326 = vpack.c.bf16 %v179, %v176
  %v327 = vpack.c.bf16 %v180, %v177
  %v328 = vpack.c.bf16 %v184, %v181
  %v329 = vpack.c.bf16 %v185, %v182
  %v330 = vpack.c.bf16 %v186, %v183
  %v331 = vpack.c.bf16 %v190, %v187
  %v332 = vpack.c.bf16 %v191, %v188
  %v333 = vpack.c.bf16 %v192, %v189
  %v334 = vpack.c.bf16 %v196, %v193
  %v335 = vpack.c.bf16 %v197, %v194
  %v336 = vpack.c.bf16 %v198, %v195
  %v337 = vpack.c.bf16 %v202, %v199
  %v338 = vpack.c.bf16 %v203, %v200
  %v339 = vpack.c.bf16 %v204, %v201
  %v340 = vpack.c.bf16 %v208, %v205
  %v341 = vpack.c.bf16 %v209, %v206
  %v342 = vpack.c.bf16 %v210, %v207
  %v343 = vpack.c.bf16 %v214, %v211
  %v344 = vpack.c.bf16 %v215, %v212
  %v345 = vpack.c.bf16 %v216, %v213
  %v346 = vpack.c.bf16 %v220, %v217
  %v347 = vpack.c.bf16 %v221, %v218
  %v348 = vpack.c.bf16 %v222, %v219
  %v349 = vpack.c.bf16 %v226, %v223
  %v350 = vpack.c.bf16 %v227, %v224
  %v351 = vpack.c.bf16 %v228, %v225
  %v352 = vpack.c.bf16 %v232, %v229
  %v353 = vpack.c.bf16 %v233, %v230
  %v354 = vpack.c.bf16 %v234, %v231
  %v355 = vpack.c.bf16 %v238, %v235
  %v356 = vpack.c.bf16 %v239, %v236
  %v357 = vpack.c.bf16 %v240, %v237
  %v358 = vpack.c.bf16 %v244, %v241
  %v359 = vpack.c.bf16 %v245, %v242
  %v360 = vpack.c.bf16 %v246, %v243
  %v361 = vpack.c.bf16 %v250, %v247
  %v362 = vpack.c.bf16 %v251, %v248
  %v363 = vpack.c.bf16 %v252, %v249
  %v364 = vpack.c.bf16 %v256, %v253
  %v365 = vpack.c.bf16 %v257, %v254
  %v366 = vpack.c.bf16 %v258, %v255
  %v367 = vpack.c.bf16 %v262, %v259
  %v368 = vpack.c.bf16 %v263, %v260
  %v369 = vpack.c.bf16 %v264, %v261
  %v370 = vpack.c.bf16 %v268, %v265
  %v371 = vpack.c.bf16 %v269, %v266
  %v372 = vpack.c.bf16 %v270, %v267
  %v373 = vpack.c.bf16 %v274, %v271
  %v374 = vpack.c.bf16 %v275, %v272
  %v375 = vpack.c.bf16 %v276, %v273
  %v376 = vpack.c.bf16 %v280, %v277
  %v377 = vpack.c.bf16 %v281, %v278
  %v378 = vpack.c.bf16 %v282, %v279
  %v379 = vpack.c.bf16 %v286, %v283
  %v380 = vpack.c.bf16 %v287, %v284
  %v381 = vpack.c.bf16 %v288, %v285
  %v382 = vpack.c.bf16 %v292, %v289
  %v383 = vpack.c.bf16 %v293, %v290
  %v384 = vpack.c.bf16 %v294, %v291
  %v385 = vpack.c.bf16 %v298, %v295
  %v386 = vpack.c.bf16 %v299, %v296
  %v387 = vpack.c.bf16 %v300, %v297
  %v388 = vpack.c.bf16 %v301, %v301
  %v389 = vpack.c.bf16 %v302, %v302
  %v390 = vpack.c.bf16 %v303, %v303
  %v391 = vld [vmem:[%s1] sm:$0xf]
  %v392 = vld [vmem:[%s1 + $0x4] sm:$0xf]
  %v393 = vld [vmem:[%s1 + $0x8] sm:$0xf]
  %v394 = vld [vmem:[%s1 + $0xc] sm:$0xf]
  %v395 = vld [vmem:[%s1 + $0x10] sm:$0xf]
  %v396 = vld [vmem:[%s1 + $0x14] sm:$0xf]
  %v397 = vld [vmem:[%s1 + $0x18] sm:$0xf]
  %v398 = vld [vmem:[%s1 + $0x1c] sm:$0xf]
  %v399 = vld [vmem:[%s1 + $0x20] sm:$0xf]
  %v400 = vld [vmem:[%s1 + $0x24] sm:$0xf]
  %v401 = vld [vmem:[%s1 + $0x28] sm:$0xf]
  %v402 = vld [vmem:[%s1 + $0x2c] sm:$0xf]
  %v403 = vld [vmem:[%s1 + $0x30] sm:$0xf]
  %v404 = vld [vmem:[%s1 + $0x34] sm:$0xf]
  %v405 = vld [vmem:[%s1 + $0x38] sm:$0xf]
  %v406 = vld [vmem:[%s1 + $0x3c] sm:$0xf]
  %v407 = vld [vmem:[%s1 + $0x40] sm:$0xf]
  %v408 = vld [vmem:[%s1 + $0x44] sm:$0xf]
  %v409 = vld [vmem:[%s1 + $0x48] sm:$0xf]
  %v410 = vld [vmem:[%s1 + $0x4c] sm:$0xf]
  %v411 = vld [vmem:[%s1 + $0x50] sm:$0xf]
  %v412 = vld [vmem:[%s1 + $0x54] sm:$0xf]
  %v413 = vld [vmem:[%s1 + $0x58] sm:$0xf]
  %v414 = vld [vmem:[%s1 + $0x5c] sm:$0xf]
  %v415 = vld [vmem:[%s1 + $0x60] sm:$0xf]
  %v416 = vld [vmem:[%s1 + $0x64] sm:$0xf]
  %v417 = vld [vmem:[%s1 + $0x68] sm:$0xf]
  %v418 = vld [vmem:[%s1 + $0x6c] sm:$0xf]
  %v419 = vld [vmem:[%s1 + $0x70] sm:$0xf]
  %v420 = vld [vmem:[%s1 + $0x74] sm:$0xf]
  %v421 = vld [vmem:[%s1 + $0x78] sm:$0xf]
  %v422 = vld [vmem:[%s1 + $0x7c] sm:$0xf]
  %v423 = vld [vmem:[%s1 + $0x80] sm:$0xf]
  %v424 = vld [vmem:[%s1 + $0x84] sm:$0xf]
  %v425 = vld [vmem:[%s1 + $0x88] sm:$0xf]
  %v426 = vld [vmem:[%s1 + $0x8c] sm:$0xf]
  %v427 = vld [vmem:[%s1 + $0x90] sm:$0xf]
  %v428 = vld [vmem:[%s1 + $0x94] sm:$0xf]
  %v429 = vld [vmem:[%s1 + $0x98] sm:$0xf]
  %v430 = vld [vmem:[%s1 + $0x9c] sm:$0xf]
  %v431 = vld [vmem:[%s1 + $0xa0] sm:$0xf]
  %v432 = vld [vmem:[%s1 + $0xa4] sm:$0xf]
  %v433 = vld [vmem:[%s1 + $0xa8] sm:$0xf]
  %v434 = vld [vmem:[%s1 + $0xac] sm:$0xf]
  %v435 = vld [vmem:[%s1 + $0xb0] sm:$0xf]
  %v436 = vld [vmem:[%s1 + $0xb4] sm:$0xf]
  %v437 = vld [vmem:[%s1 + $0xb8] sm:$0xf]
  %v438 = vld [vmem:[%s1 + $0xbc] sm:$0xf]
  %v487 = vunpack.c.l.b16 %v391
  %v488 = vunpack.c.l.b16 %v392
  %v489 = vunpack.c.l.b16 %v393
  %v490 = vunpack.c.l.b16 %v394
  %v491 = vunpack.c.l.b16 %v395
  %v492 = vunpack.c.l.b16 %v396
  %v493 = vunpack.c.l.b16 %v397
  %v494 = vunpack.c.l.b16 %v398
  %v495 = vunpack.c.l.b16 %v399
  %v496 = vunpack.c.l.b16 %v400
  %v497 = vunpack.c.l.b16 %v401
  %v498 = vunpack.c.l.b16 %v402
  %v499 = vunpack.c.l.b16 %v403
  %v500 = vunpack.c.l.b16 %v404
  %v501 = vunpack.c.l.b16 %v405
  %v502 = vunpack.c.l.b16 %v406
  %v503 = vunpack.c.l.b16 %v407
  %v504 = vunpack.c.l.b16 %v408
  %v505 = vunpack.c.l.b16 %v409
  %v506 = vunpack.c.l.b16 %v410
  %v507 = vunpack.c.l.b16 %v411
  %v508 = vunpack.c.l.b16 %v412
  %v509 = vunpack.c.l.b16 %v413
  %v510 = vunpack.c.l.b16 %v414
  %v511 = vunpack.c.l.b16 %v415
  %v512 = vunpack.c.l.b16 %v416
  %v513 = vunpack.c.l.b16 %v417
  %v514 = vunpack.c.l.b16 %v418
  %v515 = vunpack.c.l.b16 %v419
  %v516 = vunpack.c.l.b16 %v420
  %v517 = vunpack.c.l.b16 %v421
  %v518 = vunpack.c.l.b16 %v422
  %v519 = vunpack.c.l.b16 %v423
  %v520 = vunpack.c.l.b16 %v424
  %v521 = vunpack.c.l.b16 %v425
  %v522 = vunpack.c.l.b16 %v426
  %v523 = vunpack.c.l.b16 %v427
  %v524 = vunpack.c.l.b16 %v428
  %v525 = vunpack.c.l.b16 %v429
  %v526 = vunpack.c.l.b16 %v430
  %v527 = vunpack.c.l.b16 %v431
  %v528 = vunpack.c.l.b16 %v432
  %v529 = vunpack.c.l.b16 %v433
  %v530 = vunpack.c.l.b16 %v434
  %v531 = vunpack.c.l.b16 %v435
  %v532 = vunpack.c.l.b16 %v436
  %v533 = vunpack.c.l.b16 %v437
  %v534 = vunpack.c.l.b16 %v438
  %v535 = vpack.c.b16 %v488, %v487
  %v536 = vpack.c.b16 %v490, %v489
  %v537 = vpack.c.b16 %v492, %v491
  %v538 = vpack.c.b16 %v494, %v493
  %v539 = vpack.c.b16 %v496, %v495
  %v540 = vpack.c.b16 %v498, %v497
  %v541 = vpack.c.b16 %v500, %v499
  %v542 = vpack.c.b16 %v502, %v501
  %v543 = vpack.c.b16 %v504, %v503
  %v544 = vpack.c.b16 %v506, %v505
  %v545 = vpack.c.b16 %v508, %v507
  %v546 = vpack.c.b16 %v510, %v509
  %v547 = vpack.c.b16 %v512, %v511
  %v548 = vpack.c.b16 %v514, %v513
  %v549 = vpack.c.b16 %v516, %v515
  %v550 = vpack.c.b16 %v518, %v517
  %v551 = vpack.c.b16 %v520, %v519
  %v552 = vpack.c.b16 %v522, %v521
  %v553 = vpack.c.b16 %v524, %v523
  %v554 = vpack.c.b16 %v526, %v525
  %v555 = vpack.c.b16 %v528, %v527
  %v556 = vpack.c.b16 %v530, %v529
  %v557 = vpack.c.b16 %v532, %v531
  %v558 = vpack.c.b16 %v534, %v533
  %583 = vmatprep.subr.bf16.mxu0 0
  %584 = vmatpush1.bf16.msra.mxu0 %v535
  %585 = vmatprep.subr.bf16.mxu0 0
  %586 = vmatpush1.bf16.msra.mxu0 %v536
  %587 = vmatprep.subr.bf16.mxu0 0
  %588 = vmatpush1.bf16.msra.mxu0 %v537
  %589 = vmatprep.subr.bf16.mxu0 0
  %590 = vmatpush1.bf16.msra.mxu0 %v538
  %591 = vmatprep.subr.bf16.mxu0 0
  %592 = vmatpush1.bf16.msra.mxu0 %v539
  %593 = vmatprep.subr.bf16.mxu0 0
  %594 = vmatpush1.bf16.msra.mxu0 %v540
  %595 = vmatprep.subr.bf16.mxu0 0
  %596 = vmatpush1.bf16.msra.mxu0 %v541
  %597 = vmatprep.subr.bf16.mxu0 0
  %598 = vmatpush1.bf16.msra.mxu0 %v542
  %599 = vmatprep.subr.bf16.mxu0 0
  %600 = vmatpush1.bf16.msra.mxu0 %v543
  %601 = vmatprep.subr.bf16.mxu0 0
  %602 = vmatpush1.bf16.msra.mxu0 %v544
  %603 = vmatprep.subr.bf16.mxu0 0
  %604 = vmatpush1.bf16.msra.mxu0 %v545
  %605 = vmatprep.subr.bf16.mxu0 0
  %606 = vmatpush1.bf16.msra.mxu0 %v546
  %607 = vmatprep.subr.bf16.mxu0 0
  %608 = vmatpush1.bf16.msra.mxu0 %v547
  %609 = vmatprep.subr.bf16.mxu0 0
  %610 = vmatpush1.bf16.msra.mxu0 %v548
  %611 = vmatprep.subr.bf16.mxu0 0
  %612 = vmatpush1.bf16.msra.mxu0 %v549
  %613 = vmatprep.subr.bf16.mxu0 0
  %614 = vmatpush1.bf16.msra.mxu0 %v550
  %615 = vmatprep.mubr.bf16.mxu0 %v305
  %616 = vmatmul.mubr.bf16.gmra.mrb[0].mxu0 %v304
  %v617 = vpop.f32.mrb[0].mxu0
  %v618 = vadd.f32 0.0, %v617
  %v619 = vpop.f32.mrb[0].mxu0
  %v620 = vpop.f32.mrb[0].mxu0
  %v621 = vadd.f32 0.0, %v620
  %v622 = vpop.f32.mrb[0].mxu0
  %623 = vmatprep.mubr.bf16.mxu0 %v308
  %624 = vmatmul.mubr.bf16.gmra.mrb[0].mxu0 %v307
  %v625 = vpop.f32.mrb[0].mxu0
  %v626 = vadd.f32 0.0, %v625
  %v627 = vpop.f32.mrb[0].mxu0
  %v628 = vpop.f32.mrb[0].mxu0
  %v629 = vadd.f32 0.0, %v628
  %v630 = vpop.f32.mrb[0].mxu0
  %631 = vmatprep.mubr.bf16.mxu0 %v311
  %632 = vmatmul.mubr.bf16.gmra.mrb[0].mxu0 %v310
  %v633 = vpop.f32.mrb[0].mxu0
  %v634 = vadd.f32 0.0, %v633
  %v635 = vpop.f32.mrb[0].mxu0
  %v636 = vpop.f32.mrb[0].mxu0
  %v637 = vadd.f32 0.0, %v636
  %v638 = vpop.f32.mrb[0].mxu0
  %639 = vmatprep.mubr.bf16.mxu0 %v314
  %640 = vmatmul.mubr.bf16.gmra.mrb[0].mxu0 %v313
  %v641 = vpop.f32.mrb[0].mxu0
  %v642 = vadd.f32 0.0, %v641
  %v643 = vpop.f32.mrb[0].mxu0
  %v644 = vpop.f32.mrb[0].mxu0
  %v645 = vadd.f32 0.0, %v644
  %v646 = vpop.f32.mrb[0].mxu0
  %647 = vmatprep.mubr.bf16.mxu0 %v317
  %648 = vmatmul.mubr.bf16.gmra.mrb[0].mxu0 %v316
  %v649 = vpop.f32.mrb[0].mxu0
  %v650 = vadd.f32 0.0, %v649
  %v651 = vpop.f32.mrb[0].mxu0
  %v652 = vpop.f32.mrb[0].mxu0
  %v653 = vadd.f32 0.0, %v652
  %v654 = vpop.f32.mrb[0].mxu0
  %655 = vmatprep.mubr.bf16.mxu0 %v320
  %656 = vmatmul.mubr.bf16.gmra.mrb[0].mxu0 %v319
  %v657 = vpop.f32.mrb[0].mxu0
  %v658 = vadd.f32 0.0, %v657
  %v659 = vpop.f32.mrb[0].mxu0
  %v660 = vpop.f32.mrb[0].mxu0
  %v661 = vadd.f32 0.0, %v660
  %v662 = vpop.f32.mrb[0].mxu0
  %663 = vmatprep.mubr.bf16.mxu0 %v323
  %664 = vmatmul.mubr.bf16.gmra.mrb[0].mxu0 %v322
  %v665 = vpop.f32.mrb[0].mxu0
  %v666 = vadd.f32 0.0, %v665
  %v667 = vpop.f32.mrb[0].mxu0
  %v668 = vpop.f32.mrb[0].mxu0
  %v669 = vadd.f32 0.0, %v668
  %v670 = vpop.f32.mrb[0].mxu0
  %671 = vmatprep.mubr.bf16.mxu0 %v326
  %672 = vmatmul.mubr.bf16.gmra.mrb[0].mxu0 %v325
  %v673 = vpop.f32.mrb[0].mxu0
  %v674 = vadd.f32 0.0, %v673
  %v675 = vpop.f32.mrb[0].mxu0
  %v676 = vpop.f32.mrb[0].mxu0
  %v677 = vadd.f32 0.0, %v676
  %v678 = vpop.f32.mrb[0].mxu0
  %679 = vmatprep.mubr.bf16.mxu0 %v329
  %680 = vmatmul.mubr.bf16.gmra.mrb[0].mxu0 %v328
  %v681 = vpop.f32.mrb[0].mxu0
  %v682 = vadd.f32 0.0, %v681
  %v683 = vpop.f32.mrb[0].mxu0
  %v684 = vpop.f32.mrb[0].mxu0
  %v685 = vadd.f32 0.0, %v684
  %v686 = vpop.f32.mrb[0].mxu0
  %687 = vmatprep.mubr.bf16.mxu0 %v332
  %688 = vmatmul.mubr.bf16.gmra.mrb[0].mxu0 %v331
  %v689 = vpop.f32.mrb[0].mxu0
  %v690 = vadd.f32 0.0, %v689
  %v691 = vpop.f32.mrb[0].mxu0
  %v692 = vpop.f32.mrb[0].mxu0
  %v693 = vadd.f32 0.0, %v692
  %v694 = vpop.f32.mrb[0].mxu0
  %695 = vmatprep.mubr.bf16.mxu0 %v335
  %696 = vmatmul.mubr.bf16.gmra.mrb[0].mxu0 %v334
  %v697 = vpop.f32.mrb[0].mxu0
  %v698 = vadd.f32 0.0, %v697
  %v699 = vpop.f32.mrb[0].mxu0
  %v700 = vpop.f32.mrb[0].mxu0
  %v701 = vadd.f32 0.0, %v700
  %v702 = vpop.f32.mrb[0].mxu0
  %703 = vmatprep.mubr.bf16.mxu0 %v338
  %704 = vmatmul.mubr.bf16.gmra.mrb[0].mxu0 %v337
  %v705 = vpop.f32.mrb[0].mxu0
  %v706 = vadd.f32 0.0, %v705
  %v707 = vpop.f32.mrb[0].mxu0
  %v708 = vpop.f32.mrb[0].mxu0
  %v709 = vadd.f32 0.0, %v708
  %v710 = vpop.f32.mrb[0].mxu0
  %711 = vmatprep.mubr.bf16.mxu0 %v341
  %712 = vmatmul.mubr.bf16.gmra.mrb[0].mxu0 %v340
  %v713 = vpop.f32.mrb[0].mxu0
  %v714 = vadd.f32 0.0, %v713
  %v715 = vpop.f32.mrb[0].mxu0
  %v716 = vpop.f32.mrb[0].mxu0
  %v717 = vadd.f32 0.0, %v716
  %v718 = vpop.f32.mrb[0].mxu0
  %719 = vmatprep.mubr.bf16.mxu0 %v344
  %720 = vmatmul.mubr.bf16.gmra.mrb[0].mxu0 %v343
  %v721 = vpop.f32.mrb[0].mxu0
  %v722 = vadd.f32 0.0, %v721
  %v723 = vpop.f32.mrb[0].mxu0
  %v724 = vpop.f32.mrb[0].mxu0
  %v725 = vadd.f32 0.0, %v724
  %v726 = vpop.f32.mrb[0].mxu0
  %727 = vmatprep.mubr.bf16.mxu0 %v347
  %728 = vmatmul.mubr.bf16.gmra.mrb[0].mxu0 %v346
  %v729 = vpop.f32.mrb[0].mxu0
  %v730 = vadd.f32 0.0, %v729
  %v731 = vpop.f32.mrb[0].mxu0
  %v732 = vpop.f32.mrb[0].mxu0
  %v733 = vadd.f32 0.0, %v732
  %v734 = vpop.f32.mrb[0].mxu0
  %735 = vmatprep.mubr.bf16.mxu0 %v350
  %736 = vmatmul.mubr.bf16.gmra.mrb[0].mxu0 %v349
  %v737 = vpop.f32.mrb[0].mxu0
  %v738 = vadd.f32 0.0, %v737
  %v739 = vpop.f32.mrb[0].mxu0
  %v740 = vpop.f32.mrb[0].mxu0
  %v741 = vadd.f32 0.0, %v740
  %v742 = vpop.f32.mrb[0].mxu0
  %743 = vmatprep.mubr.bf16.mxu0 %v353
  %744 = vmatmul.mubr.bf16.gmra.mrb[0].mxu0 %v352
  %v745 = vpop.f32.mrb[0].mxu0
  %v746 = vadd.f32 0.0, %v745
  %v747 = vpop.f32.mrb[0].mxu0
  %v748 = vpop.f32.mrb[0].mxu0
  %v749 = vadd.f32 0.0, %v748
  %v750 = vpop.f32.mrb[0].mxu0
  %751 = vmatprep.mubr.bf16.mxu0 %v356
  %752 = vmatmul.mubr.bf16.gmra.mrb[0].mxu0 %v355
  %v753 = vpop.f32.mrb[0].mxu0
  %v754 = vadd.f32 0.0, %v753
  %v755 = vpop.f32.mrb[0].mxu0
  %v756 = vpop.f32.mrb[0].mxu0
  %v757 = vadd.f32 0.0, %v756
  %v758 = vpop.f32.mrb[0].mxu0
  %759 = vmatprep.mubr.bf16.mxu0 %v359
  %760 = vmatmul.mubr.bf16.gmra.mrb[0].mxu0 %v358
  %v761 = vpop.f32.mrb[0].mxu0
  %v762 = vadd.f32 0.0, %v761
  %v763 = vpop.f32.mrb[0].mxu0
  %v764 = vpop.f32.mrb[0].mxu0
  %v765 = vadd.f32 0.0, %v764
  %v766 = vpop.f32.mrb[0].mxu0
  %767 = vmatprep.mubr.bf16.mxu0 %v362
  %768 = vmatmul.mubr.bf16.gmra.mrb[0].mxu0 %v361
  %v769 = vpop.f32.mrb[0].mxu0
  %v770 = vadd.f32 0.0, %v769
  %v771 = vpop.f32.mrb[0].mxu0
  %v772 = vpop.f32.mrb[0].mxu0
  %v773 = vadd.f32 0.0, %v772
  %v774 = vpop.f32.mrb[0].mxu0
  %775 = vmatprep.mubr.bf16.mxu0 %v365
  %776 = vmatmul.mubr.bf16.gmra.mrb[0].mxu0 %v364
  %v777 = vpop.f32.mrb[0].mxu0
  %v778 = vadd.f32 0.0, %v777
  %v779 = vpop.f32.mrb[0].mxu0
  %v780 = vpop.f32.mrb[0].mxu0
  %v781 = vadd.f32 0.0, %v780
  %v782 = vpop.f32.mrb[0].mxu0
  %783 = vmatprep.mubr.bf16.mxu0 %v368
  %784 = vmatmul.mubr.bf16.gmra.mrb[0].mxu0 %v367
  %v785 = vpop.f32.mrb[0].mxu0
  %v786 = vadd.f32 0.0, %v785
  %v787 = vpop.f32.mrb[0].mxu0
  %v788 = vpop.f32.mrb[0].mxu0
  %v789 = vadd.f32 0.0, %v788
  %v790 = vpop.f32.mrb[0].mxu0
  %791 = vmatprep.mubr.bf16.mxu0 %v371
  %792 = vmatmul.mubr.bf16.gmra.mrb[0].mxu0 %v370
  %v793 = vpop.f32.mrb[0].mxu0
  %v794 = vadd.f32 0.0, %v793
  %v795 = vpop.f32.mrb[0].mxu0
  %v796 = vpop.f32.mrb[0].mxu0
  %v797 = vadd.f32 0.0, %v796
  %v798 = vpop.f32.mrb[0].mxu0
  %799 = vmatprep.mubr.bf16.mxu0 %v374
  %800 = vmatmul.mubr.bf16.gmra.mrb[0].mxu0 %v373
  %v801 = vpop.f32.mrb[0].mxu0
  %v802 = vadd.f32 0.0, %v801
  %v803 = vpop.f32.mrb[0].mxu0
  %v804 = vpop.f32.mrb[0].mxu0
  %v805 = vadd.f32 0.0, %v804
  %v806 = vpop.f32.mrb[0].mxu0
  %807 = vmatprep.mubr.bf16.mxu0 %v377
  %808 = vmatmul.mubr.bf16.gmra.mrb[0].mxu0 %v376
  %v809 = vpop.f32.mrb[0].mxu0
  %v810 = vadd.f32 0.0, %v809
  %v811 = vpop.f32.mrb[0].mxu0
  %v812 = vpop.f32.mrb[0].mxu0
  %v813 = vadd.f32 0.0, %v812
  %v814 = vpop.f32.mrb[0].mxu0
  %815 = vmatprep.mubr.bf16.mxu0 %v380
  %816 = vmatmul.mubr.bf16.gmra.mrb[0].mxu0 %v379
  %v817 = vpop.f32.mrb[0].mxu0
  %v818 = vadd.f32 0.0, %v817
  %v819 = vpop.f32.mrb[0].mxu0
  %v820 = vpop.f32.mrb[0].mxu0
  %v821 = vadd.f32 0.0, %v820
  %v822 = vpop.f32.mrb[0].mxu0
  %823 = vmatprep.mubr.bf16.mxu0 %v383
  %824 = vmatmul.mubr.bf16.gmra.mrb[0].mxu0 %v382
  %v825 = vpop.f32.mrb[0].mxu0
  %v826 = vadd.f32 0.0, %v825
  %v827 = vpop.f32.mrb[0].mxu0
  %v828 = vpop.f32.mrb[0].mxu0
  %v829 = vadd.f32 0.0, %v828
  %v830 = vpop.f32.mrb[0].mxu0
  %831 = vmatprep.mubr.bf16.mxu0 %v386
  %832 = vmatmul.mubr.bf16.gmra.mrb[0].mxu0 %v385
  %v833 = vpop.f32.mrb[0].mxu0
  %v834 = vadd.f32 0.0, %v833
  %v835 = vpop.f32.mrb[0].mxu0
  %v836 = vpop.f32.mrb[0].mxu0
  %v837 = vadd.f32 0.0, %v836
  %v838 = vpop.f32.mrb[0].mxu0
  %839 = vmatprep.mubr.bf16.mxu0 %v389
  %840 = vmatmul.mubr.bf16.gmra.mrb[0].mxu0 %v388
  %v841 = vpop.f32.mrb[0].mxu0
  %v842 = vadd.f32 0.0, %v841
  %v843 = vpop.f32.mrb[0].mxu0
  %v844 = vpop.f32.mrb[0].mxu0
  %v845 = vpop.f32.mrb[0].mxu0
  %846 = vdwg.mxu0
  %847 = vmatprep.subr.bf16.mxu0 0
  %848 = vmatpush1.bf16.msra.mxu0 %v551
  %849 = vmatprep.subr.bf16.mxu0 0
  %850 = vmatpush1.bf16.msra.mxu0 %v552
  %851 = vmatprep.subr.bf16.mxu0 0
  %852 = vmatpush1.bf16.msra.mxu0 %v553
  %853 = vmatprep.subr.bf16.mxu0 0
  %854 = vmatpush1.bf16.msra.mxu0 %v554
  %855 = vmatprep.subr.bf16.mxu0 0
  %856 = vmatpush1.bf16.msra.mxu0 %v555
  %857 = vmatprep.subr.bf16.mxu0 0
  %858 = vmatpush1.bf16.msra.mxu0 %v556
  %859 = vmatprep.subr.bf16.mxu0 0
  %860 = vmatpush1.bf16.msra.mxu0 %v557
  %861 = vmatprep.subr.bf16.mxu0 0
  %862 = vmatpush1.bf16.msra.mxu0 %v558
  %863 = vmatprep.subr.bf16.mxu0 0
  %864 = vmatpush1.bf16.msra.mxu0 0
  %865 = vmatprep.subr.bf16.mxu0 0
  %866 = vmatpush1.bf16.msra.mxu0 0
  %867 = vmatprep.subr.bf16.mxu0 0
  %868 = vmatpush1.bf16.msra.mxu0 0
  %869 = vmatprep.subr.bf16.mxu0 0
  %870 = vmatpush1.bf16.msra.mxu0 0
  %871 = vmatprep.subr.bf16.mxu0 0
  %872 = vmatpush1.bf16.msra.mxu0 0
  %873 = vmatprep.subr.bf16.mxu0 0
  %874 = vmatpush1.bf16.msra.mxu0 0
  %875 = vmatprep.subr.bf16.mxu0 0
  %876 = vmatpush1.bf16.msra.mxu0 0
  %877 = vmatprep.subr.bf16.mxu0 0
  %878 = vmatpush1.bf16.msra.mxu0 0
  %879 = vmatprep.mubr.bf16.mxu0 0
  %880 = vmatmul.mubr.bf16.gmra.mrb[0].mxu0 %v306
  %v881 = vpop.f32.mrb[0].mxu0
  %v882 = vadd.f32 %v618, %v881
  %v883 = vpop.f32.mrb[0].mxu0
  %v884 = vpop.f32.mrb[0].mxu0
  %v885 = vadd.f32 %v621, %v884
  %v886 = vpop.f32.mrb[0].mxu0
  %887 = vmatprep.mubr.bf16.mxu0 0
  %888 = vmatmul.mubr.bf16.gmra.mrb[0].mxu0 %v309
  %v889 = vpop.f32.mrb[0].mxu0
  %v890 = vadd.f32 %v626, %v889
  %v891 = vpop.f32.mrb[0].mxu0
  %v892 = vpop.f32.mrb[0].mxu0
  %v893 = vadd.f32 %v629, %v892
  %v894 = vpop.f32.mrb[0].mxu0
  %895 = vmatprep.mubr.bf16.mxu0 0
  %896 = vmatmul.mubr.bf16.gmra.mrb[0].mxu0 %v312
  %v897 = vpop.f32.mrb[0].mxu0
  %v898 = vadd.f32 %v634, %v897
  %v899 = vpop.f32.mrb[0].mxu0
  %v900 = vpop.f32.mrb[0].mxu0
  %v901 = vadd.f32 %v637, %v900
  %v902 = vpop.f32.mrb[0].mxu0
  %903 = vmatprep.mubr.bf16.mxu0 0
  %904 = vmatmul.mubr.bf16.gmra.mrb[0].mxu0 %v315
  %v905 = vpop.f32.mrb[0].mxu0
  %v906 = vadd.f32 %v642, %v905
  %v907 = vpop.f32.mrb[0].mxu0
  %v908 = vpop.f32.mrb[0].mxu0
  %v909 = vadd.f32 %v645, %v908
  %v910 = vpop.f32.mrb[0].mxu0
  %911 = vmatprep.mubr.bf16.mxu0 0
  %912 = vmatmul.mubr.bf16.gmra.mrb[0].mxu0 %v318
  %v913 = vpop.f32.mrb[0].mxu0
  %v914 = vadd.f32 %v650, %v913
  %v915 = vpop.f32.mrb[0].mxu0
  %v916 = vpop.f32.mrb[0].mxu0
  %v917 = vadd.f32 %v653, %v916
  %v918 = vpop.f32.mrb[0].mxu0
  %919 = vmatprep.mubr.bf16.mxu0 0
  %920 = vmatmul.mubr.bf16.gmra.mrb[0].mxu0 %v321
  %v921 = vpop.f32.mrb[0].mxu0
  %v922 = vadd.f32 %v658, %v921
  %v923 = vpop.f32.mrb[0].mxu0
  %v924 = vpop.f32.mrb[0].mxu0
  %v925 = vadd.f32 %v661, %v924
  %v926 = vpop.f32.mrb[0].mxu0
  %927 = vmatprep.mubr.bf16.mxu0 0
  %928 = vmatmul.mubr.bf16.gmra.mrb[0].mxu0 %v324
  %v929 = vpop.f32.mrb[0].mxu0
  %v930 = vadd.f32 %v666, %v929
  %v931 = vpop.f32.mrb[0].mxu0
  %v932 = vpop.f32.mrb[0].mxu0
  %v933 = vadd.f32 %v669, %v932
  %v934 = vpop.f32.mrb[0].mxu0
  %935 = vmatprep.mubr.bf16.mxu0 0
  %936 = vmatmul.mubr.bf16.gmra.mrb[0].mxu0 %v327
  %v937 = vpop.f32.mrb[0].mxu0
  %v938 = vadd.f32 %v674, %v937
  %v939 = vpop.f32.mrb[0].mxu0
  %v940 = vpop.f32.mrb[0].mxu0
  %v941 = vadd.f32 %v677, %v940
  %v942 = vpop.f32.mrb[0].mxu0
  %943 = vmatprep.mubr.bf16.mxu0 0
  %944 = vmatmul.mubr.bf16.gmra.mrb[0].mxu0 %v330
  %v945 = vpop.f32.mrb[0].mxu0
  %v946 = vadd.f32 %v682, %v945
  %v947 = vpop.f32.mrb[0].mxu0
  %v948 = vpop.f32.mrb[0].mxu0
  %v949 = vadd.f32 %v685, %v948
  %v950 = vpop.f32.mrb[0].mxu0
  %951 = vmatprep.mubr.bf16.mxu0 0
  %952 = vmatmul.mubr.bf16.gmra.mrb[0].mxu0 %v333
  %v953 = vpop.f32.mrb[0].mxu0
  %v954 = vadd.f32 %v690, %v953
  %v955 = vpop.f32.mrb[0].mxu0
  %v956 = vpop.f32.mrb[0].mxu0
  %v957 = vadd.f32 %v693, %v956
  %v958 = vpop.f32.mrb[0].mxu0
  %959 = vmatprep.mubr.bf16.mxu0 0
  %960 = vmatmul.mubr.bf16.gmra.mrb[0].mxu0 %v336
  %v961 = vpop.f32.mrb[0].mxu0
  %v962 = vadd.f32 %v698, %v961
  %v963 = vpop.f32.mrb[0].mxu0
  %v964 = vpop.f32.mrb[0].mxu0
  %v965 = vadd.f32 %v701, %v964
  %v966 = vpop.f32.mrb[0].mxu0
  %967 = vmatprep.mubr.bf16.mxu0 0
  %968 = vmatmul.mubr.bf16.gmra.mrb[0].mxu0 %v339
  %v969 = vpop.f32.mrb[0].mxu0
  %v970 = vadd.f32 %v706, %v969
  %v971 = vpop.f32.mrb[0].mxu0
  %v972 = vpop.f32.mrb[0].mxu0
  %v973 = vadd.f32 %v709, %v972
  %v974 = vpop.f32.mrb[0].mxu0
  %975 = vmatprep.mubr.bf16.mxu0 0
  %976 = vmatmul.mubr.bf16.gmra.mrb[0].mxu0 %v342
  %v977 = vpop.f32.mrb[0].mxu0
  %v978 = vadd.f32 %v714, %v977
  %v979 = vpop.f32.mrb[0].mxu0
  %v980 = vpop.f32.mrb[0].mxu0
  %v981 = vadd.f32 %v717, %v980
  %v982 = vpop.f32.mrb[0].mxu0
  %983 = vmatprep.mubr.bf16.mxu0 0
  %984 = vmatmul.mubr.bf16.gmra.mrb[0].mxu0 %v345
  %v985 = vpop.f32.mrb[0].mxu0
  %v986 = vadd.f32 %v722, %v985
  %v987 = vpop.f32.mrb[0].mxu0
  %v988 = vpop.f32.mrb[0].mxu0
  %v989 = vadd.f32 %v725, %v988
  %v990 = vpop.f32.mrb[0].mxu0
  %991 = vmatprep.mubr.bf16.mxu0 0
  %992 = vmatmul.mubr.bf16.gmra.mrb[0].mxu0 %v348
  %v993 = vpop.f32.mrb[0].mxu0
  %v994 = vadd.f32 %v730, %v993
  %v995 = vpop.f32.mrb[0].mxu0
  %v996 = vpop.f32.mrb[0].mxu0
  %v997 = vadd.f32 %v733, %v996
  %v998 = vpop.f32.mrb[0].mxu0
  %999 = vmatprep.mubr.bf16.mxu0 0
  %1000 = vmatmul.mubr.bf16.gmra.mrb[0].mxu0 %v351
  %v1001 = vpop.f32.mrb[0].mxu0
  %v1002 = vadd.f32 %v738, %v1001
  %v1003 = vpop.f32.mrb[0].mxu0
  %v1004 = vpop.f32.mrb[0].mxu0
  %v1005 = vadd.f32 %v741, %v1004
  %v1006 = vpop.f32.mrb[0].mxu0
  %1007 = vmatprep.mubr.bf16.mxu0 0
  %1008 = vmatmul.mubr.bf16.gmra.mrb[0].mxu0 %v354
  %v1009 = vpop.f32.mrb[0].mxu0
  %v1010 = vadd.f32 %v746, %v1009
  %v1011 = vpop.f32.mrb[0].mxu0
  %v1012 = vpop.f32.mrb[0].mxu0
  %v1013 = vadd.f32 %v749, %v1012
  %v1014 = vpop.f32.mrb[0].mxu0
  %1015 = vmatprep.mubr.bf16.mxu0 0
  %1016 = vmatmul.mubr.bf16.gmra.mrb[0].mxu0 %v357
  %v1017 = vpop.f32.mrb[0].mxu0
  %v1018 = vadd.f32 %v754, %v1017
  %v1019 = vpop.f32.mrb[0].mxu0
  %v1020 = vpop.f32.mrb[0].mxu0
  %v1021 = vadd.f32 %v757, %v1020
  %v1022 = vpop.f32.mrb[0].mxu0
  %1023 = vmatprep.mubr.bf16.mxu0 0
  %1024 = vmatmul.mubr.bf16.gmra.mrb[0].mxu0 %v360
  %v1025 = vpop.f32.mrb[0].mxu0
  %v1026 = vadd.f32 %v762, %v1025
  %v1027 = vpop.f32.mrb[0].mxu0
  %v1028 = vpop.f32.mrb[0].mxu0
  %v1029 = vadd.f32 %v765, %v1028
  %v1030 = vpop.f32.mrb[0].mxu0
  %1031 = vmatprep.mubr.bf16.mxu0 0
  %1032 = vmatmul.mubr.bf16.gmra.mrb[0].mxu0 %v363
  %v1033 = vpop.f32.mrb[0].mxu0
  %v1034 = vadd.f32 %v770, %v1033
  %v1035 = vpop.f32.mrb[0].mxu0
  %v1036 = vpop.f32.mrb[0].mxu0
  %v1037 = vadd.f32 %v773, %v1036
  %v1038 = vpop.f32.mrb[0].mxu0
  %1039 = vmatprep.mubr.bf16.mxu0 0
  %1040 = vmatmul.mubr.bf16.gmra.mrb[0].mxu0 %v366
  %v1041 = vpop.f32.mrb[0].mxu0
  %v1042 = vadd.f32 %v778, %v1041
  %v1043 = vpop.f32.mrb[0].mxu0
  %v1044 = vpop.f32.mrb[0].mxu0
  %v1045 = vadd.f32 %v781, %v1044
  %v1046 = vpop.f32.mrb[0].mxu0
  %1047 = vmatprep.mubr.bf16.mxu0 0
  %1048 = vmatmul.mubr.bf16.gmra.mrb[0].mxu0 %v369
  %v1049 = vpop.f32.mrb[0].mxu0
  %v1050 = vadd.f32 %v786, %v1049
  %v1051 = vpop.f32.mrb[0].mxu0
  %v1052 = vpop.f32.mrb[0].mxu0
  %v1053 = vadd.f32 %v789, %v1052
  %v1054 = vpop.f32.mrb[0].mxu0
  %1055 = vmatprep.mubr.bf16.mxu0 0
  %1056 = vmatmul.mubr.bf16.gmra.mrb[0].mxu0 %v372
  %v1057 = vpop.f32.mrb[0].mxu0
  %v1058 = vadd.f32 %v794, %v1057
  %v1059 = vpop.f32.mrb[0].mxu0
  %v1060 = vpop.f32.mrb[0].mxu0
  %v1061 = vadd.f32 %v797, %v1060
  %v1062 = vpop.f32.mrb[0].mxu0
  %1063 = vmatprep.mubr.bf16.mxu0 0
  %1064 = vmatmul.mubr.bf16.gmra.mrb[0].mxu0 %v375
  %v1065 = vpop.f32.mrb[0].mxu0
  %v1066 = vadd.f32 %v802, %v1065
  %v1067 = vpop.f32.mrb[0].mxu0
  %v1068 = vpop.f32.mrb[0].mxu0
  %v1069 = vadd.f32 %v805, %v1068
  %v1070 = vpop.f32.mrb[0].mxu0
  %1071 = vmatprep.mubr.bf16.mxu0 0
  %1072 = vmatmul.mubr.bf16.gmra.mrb[0].mxu0 %v378
  %v1073 = vpop.f32.mrb[0].mxu0
  %v1074 = vadd.f32 %v810, %v1073
  %v1075 = vpop.f32.mrb[0].mxu0
  %v1076 = vpop.f32.mrb[0].mxu0
  %v1077 = vadd.f32 %v813, %v1076
  %v1078 = vpop.f32.mrb[0].mxu0
  %1079 = vmatprep.mubr.bf16.mxu0 0
  %1080 = vmatmul.mubr.bf16.gmra.mrb[0].mxu0 %v381
  %v1081 = vpop.f32.mrb[0].mxu0
  %v1082 = vadd.f32 %v818, %v1081
  %v1083 = vpop.f32.mrb[0].mxu0
  %v1084 = vpop.f32.mrb[0].mxu0
  %v1085 = vadd.f32 %v821, %v1084
  %v1086 = vpop.f32.mrb[0].mxu0
  %1087 = vmatprep.mubr.bf16.mxu0 0
  %1088 = vmatmul.mubr.bf16.gmra.mrb[0].mxu0 %v384
  %v1089 = vpop.f32.mrb[0].mxu0
  %v1090 = vadd.f32 %v826, %v1089
  %v1091 = vpop.f32.mrb[0].mxu0
  %v1092 = vpop.f32.mrb[0].mxu0
  %v1093 = vadd.f32 %v829, %v1092
  %v1094 = vpop.f32.mrb[0].mxu0
  %1095 = vmatprep.mubr.bf16.mxu0 0
  %1096 = vmatmul.mubr.bf16.gmra.mrb[0].mxu0 %v387
  %v1097 = vpop.f32.mrb[0].mxu0
  %v1098 = vadd.f32 %v834, %v1097
  %v1099 = vpop.f32.mrb[0].mxu0
  %v1100 = vpop.f32.mrb[0].mxu0
  %v1101 = vadd.f32 %v837, %v1100
  %v1102 = vpop.f32.mrb[0].mxu0
  %1103 = vmatprep.mubr.bf16.mxu0 0
  %1104 = vmatmul.mubr.bf16.gmra.mrb[0].mxu0 %v390
  %v1105 = vpop.f32.mrb[0].mxu0
  %v1106 = vadd.f32 %v842, %v1105
  %v1107 = vpop.f32.mrb[0].mxu0
  %v1108 = vpop.f32.mrb[0].mxu0
  %v1109 = vpop.f32.mrb[0].mxu0
  %1110 = vdwg.mxu0
  %v1111 = vadd.f32 %v76, %v882
  %v1112 = vadd.f32 %v77, %v885
  %v1113 = vadd.f32 %v78, %v890
  %v1114 = vadd.f32 %v79, %v893
  %v1115 = vadd.f32 %v80, %v898
  %v1116 = vadd.f32 %v81, %v901
  %v1117 = vadd.f32 %v82, %v906
  %v1118 = vadd.f32 %v83, %v909
  %v1119 = vadd.f32 %v84, %v914
  %v1120 = vadd.f32 %v85, %v917
  %v1121 = vadd.f32 %v86, %v922
  %v1122 = vadd.f32 %v87, %v925
  %v1123 = vadd.f32 %v88, %v930
  %v1124 = vadd.f32 %v89, %v933
  %v1125 = vadd.f32 %v90, %v938
  %v1126 = vadd.f32 %v91, %v941
  %v1127 = vadd.f32 %v92, %v946
  %v1128 = vadd.f32 %v93, %v949
  %v1129 = vadd.f32 %v94, %v954
  %v1130 = vadd.f32 %v95, %v957
  %v1131 = vadd.f32 %v96, %v962
  %v1132 = vadd.f32 %v97, %v965
  %v1133 = vadd.f32 %v98, %v970
  %v1134 = vadd.f32 %v99, %v973
  %v1135 = vadd.f32 %v100, %v978
  %v1136 = vadd.f32 %v101, %v981
  %v1137 = vadd.f32 %v102, %v986
  %v1138 = vadd.f32 %v103, %v989
  %v1139 = vadd.f32 %v104, %v994
  %v1140 = vadd.f32 %v105, %v997
  %v1141 = vadd.f32 %v106, %v1002
  %v1142 = vadd.f32 %v107, %v1005
  %v1143 = vadd.f32 %v108, %v1010
  %v1144 = vadd.f32 %v109, %v1013
  %v1145 = vadd.f32 %v110, %v1018
  %v1146 = vadd.f32 %v111, %v1021
  %v1147 = vadd.f32 %v112, %v1026
  %v1148 = vadd.f32 %v113, %v1029
  %v1149 = vadd.f32 %v114, %v1034
  %v1150 = vadd.f32 %v115, %v1037
  %v1151 = vadd.f32 %v116, %v1042
  %v1152 = vadd.f32 %v117, %v1045
  %v1153 = vadd.f32 %v118, %v1050
  %v1154 = vadd.f32 %v119, %v1053
  %v1155 = vadd.f32 %v120, %v1058
  %v1156 = vadd.f32 %v121, %v1061
  %v1157 = vadd.f32 %v122, %v1066
  %v1158 = vadd.f32 %v123, %v1069
  %v1159 = vadd.f32 %v124, %v1074
  %v1160 = vadd.f32 %v125, %v1077
  %v1161 = vadd.f32 %v126, %v1082
  %v1162 = vadd.f32 %v127, %v1085
  %v1163 = vadd.f32 %v128, %v1090
  %v1164 = vadd.f32 %v129, %v1093
  %v1165 = vadd.f32 %v130, %v1098
  %v1166 = vadd.f32 %v131, %v1101
  %v1167 = vadd.f32 %v132, %v1106
  %1168 = vst [vmem:[#allocation2] sm:$0xff] %v1111
  %1169 = vst [vmem:[#allocation2 + $0x8] sm:$0xff] %v1112
  %1170 = vst [vmem:[#allocation2 + $0x10] sm:$0xff] %v1113
  %1171 = vst [vmem:[#allocation2 + $0x18] sm:$0xff] %v1114
  %1172 = vst [vmem:[#allocation2 + $0x20] sm:$0xff] %v1115
  %1173 = vst [vmem:[#allocation2 + $0x28] sm:$0xff] %v1116
  %1174 = vst [vmem:[#allocation2 + $0x30] sm:$0xff] %v1117
  %1175 = vst [vmem:[#allocation2 + $0x38] sm:$0xff] %v1118
  %1176 = vst [vmem:[#allocation2 + $0x40] sm:$0xff] %v1119
  %1177 = vst [vmem:[#allocation2 + $0x48] sm:$0xff] %v1120
  %1178 = vst [vmem:[#allocation2 + $0x50] sm:$0xff] %v1121
  %1179 = vst [vmem:[#allocation2 + $0x58] sm:$0xff] %v1122
  %1180 = vst [vmem:[#allocation2 + $0x60] sm:$0xff] %v1123
  %1181 = vst [vmem:[#allocation2 + $0x68] sm:$0xff] %v1124
  %1182 = vst [vmem:[#allocation2 + $0x70] sm:$0xff] %v1125
  %1183 = vst [vmem:[#allocation2 + $0x78] sm:$0xff] %v1126
  %1184 = vst [vmem:[#allocation2 + $0x80] sm:$0xff] %v1127
  %1185 = vst [vmem:[#allocation2 + $0x88] sm:$0xff] %v1128
  %1186 = vst [vmem:[#allocation2 + $0x90] sm:$0xff] %v1129
  %1187 = vst [vmem:[#allocation2 + $0x98] sm:$0xff] %v1130
  %1188 = vst [vmem:[#allocation2 + $0xa0] sm:$0xff] %v1131
  %1189 = vst [vmem:[#allocation2 + $0xa8] sm:$0xff] %v1132
  %1190 = vst [vmem:[#allocation2 + $0xb0] sm:$0xff] %v1133
  %1191 = vst [vmem:[#allocation2 + $0xb8] sm:$0xff] %v1134
  %1192 = vst [vmem:[#allocation2 + $0xc0] sm:$0xff] %v1135
  %1193 = vst [vmem:[#allocation2 + $0xc8] sm:$0xff] %v1136
  %1194 = vst [vmem:[#allocation2 + $0xd0] sm:$0xff] %v1137
  %1195 = vst [vmem:[#allocation2 + $0xd8] sm:$0xff] %v1138
  %1196 = vst [vmem:[#allocation2 + $0xe0] sm:$0xff] %v1139
  %1197 = vst [vmem:[#allocation2 + $0xe8] sm:$0xff] %v1140
  %1198 = vst [vmem:[#allocation2 + $0xf0] sm:$0xff] %v1141
  %1199 = vst [vmem:[#allocation2 + $0xf8] sm:$0xff] %v1142
  %1200 = vst [vmem:[#allocation2 + $0x100] sm:$0xff] %v1143
  %1201 = vst [vmem:[#allocation2 + $0x108] sm:$0xff] %v1144
  %1202 = vst [vmem:[#allocation2 + $0x110] sm:$0xff] %v1145
  %1203 = vst [vmem:[#allocation2 + $0x118] sm:$0xff] %v1146
  %1204 = vst [vmem:[#allocation2 + $0x120] sm:$0xff] %v1147
  %1205 = vst [vmem:[#allocation2 + $0x128] sm:$0xff] %v1148
  %1206 = vst [vmem:[#allocation2 + $0x130] sm:$0xff] %v1149
  %1207 = vst [vmem:[#allocation2 + $0x138] sm:$0xff] %v1150
  %1208 = vst [vmem:[#allocation2 + $0x140] sm:$0xff] %v1151
  %1209 = vst [vmem:[#allocation2 + $0x148] sm:$0xff] %v1152
  %1210 = vst [vmem:[#allocation2 + $0x150] sm:$0xff] %v1153
  %1211 = vst [vmem:[#allocation2 + $0x158] sm:$0xff] %v1154
  %1212 = vst [vmem:[#allocation2 + $0x160] sm:$0xff] %v1155
  %1213 = vst [vmem:[#allocation2 + $0x168] sm:$0xff] %v1156
  %1214 = vst [vmem:[#allocation2 + $0x170] sm:$0xff] %v1157
  %1215 = vst [vmem:[#allocation2 + $0x178] sm:$0xff] %v1158
  %1216 = vst [vmem:[#allocation2 + $0x180] sm:$0xff] %v1159
  %1217 = vst [vmem:[#allocation2 + $0x188] sm:$0xff] %v1160
  %1218 = vst [vmem:[#allocation2 + $0x190] sm:$0xff] %v1161
  %1219 = vst [vmem:[#allocation2 + $0x198] sm:$0xff] %v1162
  %1220 = vst [vmem:[#allocation2 + $0x1a0] sm:$0xff] %v1163
  %1221 = vst [vmem:[#allocation2 + $0x1a8] sm:$0xff] %v1164
  %1222 = vst [vmem:[#allocation2 + $0x1b0] sm:$0xff] %v1165
  %1223 = vst [vmem:[#allocation2 + $0x1b8] sm:$0xff] %v1166
  %1224 = vst [vmem:[#allocation2 + $0x1c0] sm:$0xff] %v1167
  // Predicated region
  $region18: #{alexnet_forward.8} parent=0 // pred_check
    %p1225 = pneg %p15
  $region19: #{alexnet_forward.8} parent=0 // pred_check_branch
    %1227 = sbr.rel (%p1225) target = $region21
  $region20: #{alexnet_forward.8} parent=0 // pred_region
    %v1228 = vld [vmem:[#allocation2] sm:$0xff]
    %v1229 = vld [vmem:[#allocation2 + $0x8] sm:$0xff]
    %v1230 = vld [vmem:[#allocation2 + $0x10] sm:$0xff]
    %v1231 = vld [vmem:[#allocation2 + $0x18] sm:$0xff]
    %v1232 = vld [vmem:[#allocation2 + $0x20] sm:$0xff]
    %v1233 = vld [vmem:[#allocation2 + $0x28] sm:$0xff]
    %v1234 = vld [vmem:[#allocation2 + $0x30] sm:$0xff]
    %v1235 = vld [vmem:[#allocation2 + $0x38] sm:$0xff]
    %v1236 = vld [vmem:[#allocation2 + $0x40] sm:$0xff]
    %v1237 = vld [vmem:[#allocation2 + $0x48] sm:$0xff]
    %v1238 = vld [vmem:[#allocation2 + $0x50] sm:$0xff]
    %v1239 = vld [vmem:[#allocation2 + $0x58] sm:$0xff]
    %v1240 = vld [vmem:[#allocation2 + $0x60] sm:$0xff]
    %v1241 = vld [vmem:[#allocation2 + $0x68] sm:$0xff]
    %v1242 = vld [vmem:[#allocation2 + $0x70] sm:$0xff]
    %v1243 = vld [vmem:[#allocation2 + $0x78] sm:$0xff]
    %v1244 = vld [vmem:[#allocation2 + $0x80] sm:$0xff]
    %v1245 = vld [vmem:[#allocation2 + $0x88] sm:$0xff]
    %v1246 = vld [vmem:[#allocation2 + $0x90] sm:$0xff]
    %v1247 = vld [vmem:[#allocation2 + $0x98] sm:$0xff]
    %v1248 = vld [vmem:[#allocation2 + $0xa0] sm:$0xff]
    %v1249 = vld [vmem:[#allocation2 + $0xa8] sm:$0xff]
    %v1250 = vld [vmem:[#allocation2 + $0xb0] sm:$0xff]
    %v1251 = vld [vmem:[#allocation2 + $0xb8] sm:$0xff]
    %v1252 = vld [vmem:[#allocation2 + $0xc0] sm:$0xff]
    %v1253 = vld [vmem:[#allocation2 + $0xc8] sm:$0xff]
    %v1254 = vld [vmem:[#allocation2 + $0xd0] sm:$0xff]
    %v1255 = vld [vmem:[#allocation2 + $0xd8] sm:$0xff]
    %v1256 = vld [vmem:[#allocation2 + $0xe0] sm:$0xff]
    %v1257 = vld [vmem:[#allocation2 + $0xe8] sm:$0xff]
    %v1258 = vld [vmem:[#allocation2 + $0xf0] sm:$0xff]
    %v1259 = vld [vmem:[#allocation2 + $0xf8] sm:$0xff]
    %v1260 = vld [vmem:[#allocation2 + $0x100] sm:$0xff]
    %v1261 = vld [vmem:[#allocation2 + $0x108] sm:$0xff]
    %v1262 = vld [vmem:[#allocation2 + $0x110] sm:$0xff]
    %v1263 = vld [vmem:[#allocation2 + $0x118] sm:$0xff]
    %v1264 = vld [vmem:[#allocation2 + $0x120] sm:$0xff]
    %v1265 = vld [vmem:[#allocation2 + $0x128] sm:$0xff]
    %v1266 = vld [vmem:[#allocation2 + $0x130] sm:$0xff]
    %v1267 = vld [vmem:[#allocation2 + $0x138] sm:$0xff]
    %v1268 = vld [vmem:[#allocation2 + $0x140] sm:$0xff]
    %v1269 = vld [vmem:[#allocation2 + $0x148] sm:$0xff]
    %v1270 = vld [vmem:[#allocation2 + $0x150] sm:$0xff]
    %v1271 = vld [vmem:[#allocation2 + $0x158] sm:$0xff]
    %v1272 = vld [vmem:[#allocation2 + $0x160] sm:$0xff]
    %v1273 = vld [vmem:[#allocation2 + $0x168] sm:$0xff]
    %v1274 = vld [vmem:[#allocation2 + $0x170] sm:$0xff]
    %v1275 = vld [vmem:[#allocation2 + $0x178] sm:$0xff]
    %v1276 = vld [vmem:[#allocation2 + $0x180] sm:$0xff]
    %v1277 = vld [vmem:[#allocation2 + $0x188] sm:$0xff]
    %v1278 = vld [vmem:[#allocation2 + $0x190] sm:$0xff]
    %v1279 = vld [vmem:[#allocation2 + $0x198] sm:$0xff]
    %v1280 = vld [vmem:[#allocation2 + $0x1a0] sm:$0xff]
    %v1281 = vld [vmem:[#allocation2 + $0x1a8] sm:$0xff]
    %v1282 = vld [vmem:[#allocation2 + $0x1b0] sm:$0xff]
    %v1283 = vld [vmem:[#allocation2 + $0x1b8] sm:$0xff]
    %v1284 = vld [vmem:[#allocation2 + $0x1c0] sm:$0xff]
    %v1285 = vld [vmem:[%s2] sm:$0x1]
    %v1287 = vlaneseq
    %v1288 = vshrl.u32 %v1287, 7
    %v1289 = vsub.s32 0, %v1288
    %v1290 = vrot.slane %v1285, %v1289
    %v1292 = vadd.f32 %v1228, %v1290
    %v1293 = vadd.f32 %v1229, %v1290
    %v1294 = vadd.f32 %v1230, %v1290
    %v1295 = vadd.f32 %v1231, %v1290
    %v1296 = vadd.f32 %v1232, %v1290
    %v1297 = vadd.f32 %v1233, %v1290
    %v1298 = vadd.f32 %v1234, %v1290
    %v1299 = vadd.f32 %v1235, %v1290
    %v1300 = vadd.f32 %v1236, %v1290
    %v1301 = vadd.f32 %v1237, %v1290
    %v1302 = vadd.f32 %v1238, %v1290
    %v1303 = vadd.f32 %v1239, %v1290
    %v1304 = vadd.f32 %v1240, %v1290
    %v1305 = vadd.f32 %v1241, %v1290
    %v1306 = vadd.f32 %v1242, %v1290
    %v1307 = vadd.f32 %v1243, %v1290
    %v1308 = vadd.f32 %v1244, %v1290
    %v1309 = vadd.f32 %v1245, %v1290
    %v1310 = vadd.f32 %v1246, %v1290
    %v1311 = vadd.f32 %v1247, %v1290
    %v1312 = vadd.f32 %v1248, %v1290
    %v1313 = vadd.f32 %v1249, %v1290
    %v1314 = vadd.f32 %v1250, %v1290
    %v1315 = vadd.f32 %v1251, %v1290
    %v1316 = vadd.f32 %v1252, %v1290
    %v1317 = vadd.f32 %v1253, %v1290
    %v1318 = vadd.f32 %v1254, %v1290
    %v1319 = vadd.f32 %v1255, %v1290
    %v1320 = vadd.f32 %v1256, %v1290
    %v1321 = vadd.f32 %v1257, %v1290
    %v1322 = vadd.f32 %v1258, %v1290
    %v1323 = vadd.f32 %v1259, %v1290
    %v1324 = vadd.f32 %v1260, %v1290
    %v1325 = vadd.f32 %v1261, %v1290
    %v1326 = vadd.f32 %v1262, %v1290
    %v1327 = vadd.f32 %v1263, %v1290
    %v1328 = vadd.f32 %v1264, %v1290
    %v1329 = vadd.f32 %v1265, %v1290
    %v1330 = vadd.f32 %v1266, %v1290
    %v1331 = vadd.f32 %v1267, %v1290
    %v1332 = vadd.f32 %v1268, %v1290
    %v1333 = vadd.f32 %v1269, %v1290
    %v1334 = vadd.f32 %v1270, %v1290
    %v1335 = vadd.f32 %v1271, %v1290
    %v1336 = vadd.f32 %v1272, %v1290
    %v1337 = vadd.f32 %v1273, %v1290
    %v1338 = vadd.f32 %v1274, %v1290
    %v1339 = vadd.f32 %v1275, %v1290
    %v1340 = vadd.f32 %v1276, %v1290
    %v1341 = vadd.f32 %v1277, %v1290
    %v1342 = vadd.f32 %v1278, %v1290
    %v1343 = vadd.f32 %v1279, %v1290
    %v1344 = vadd.f32 %v1280, %v1290
    %v1345 = vadd.f32 %v1281, %v1290
    %v1346 = vadd.f32 %v1282, %v1290
    %v1347 = vadd.f32 %v1283, %v1290
    %v1348 = vadd.f32 %v1284, %v1290
    %v1349 = vmax.f32 %v1292, 0.0
    %v1350 = vmax.f32 %v1293, 0.0
    %v1351 = vmax.f32 %v1294, 0.0
    %v1352 = vmax.f32 %v1295, 0.0
    %v1353 = vmax.f32 %v1296, 0.0
    %v1354 = vmax.f32 %v1297, 0.0
    %v1355 = vmax.f32 %v1298, 0.0
    %v1356 = vmax.f32 %v1299, 0.0
    %v1357 = vmax.f32 %v1300, 0.0
    %v1358 = vmax.f32 %v1301, 0.0
    %v1359 = vmax.f32 %v1302, 0.0
    %v1360 = vmax.f32 %v1303, 0.0
    %v1361 = vmax.f32 %v1304, 0.0
    %v1362 = vmax.f32 %v1305, 0.0
    %v1363 = vmax.f32 %v1306, 0.0
    %v1364 = vmax.f32 %v1307, 0.0
    %v1365 = vmax.f32 %v1308, 0.0
    %v1366 = vmax.f32 %v1309, 0.0
    %v1367 = vmax.f32 %v1310, 0.0
    %v1368 = vmax.f32 %v1311, 0.0
    %v1369 = vmax.f32 %v1312, 0.0
    %v1370 = vmax.f32 %v1313, 0.0
    %v1371 = vmax.f32 %v1314, 0.0
    %v1372 = vmax.f32 %v1315, 0.0
    %v1373 = vmax.f32 %v1316, 0.0
    %v1374 = vmax.f32 %v1317, 0.0
    %v1375 = vmax.f32 %v1318, 0.0
    %v1376 = vmax.f32 %v1319, 0.0
    %v1377 = vmax.f32 %v1320, 0.0
    %v1378 = vmax.f32 %v1321, 0.0
    %v1379 = vmax.f32 %v1322, 0.0
    %v1380 = vmax.f32 %v1323, 0.0
    %v1381 = vmax.f32 %v1324, 0.0
    %v1382 = vmax.f32 %v1325, 0.0
    %v1383 = vmax.f32 %v1326, 0.0
    %v1384 = vmax.f32 %v1327, 0.0
    %v1385 = vmax.f32 %v1328, 0.0
    %v1386 = vmax.f32 %v1329, 0.0
    %v1387 = vmax.f32 %v1330, 0.0
    %v1388 = vmax.f32 %v1331, 0.0
    %v1389 = vmax.f32 %v1332, 0.0
    %v1390 = vmax.f32 %v1333, 0.0
    %v1391 = vmax.f32 %v1334, 0.0
    %v1392 = vmax.f32 %v1335, 0.0
    %v1393 = vmax.f32 %v1336, 0.0
    %v1394 = vmax.f32 %v1337, 0.0
    %v1395 = vmax.f32 %v1338, 0.0
    %v1396 = vmax.f32 %v1339, 0.0
    %v1397 = vmax.f32 %v1340, 0.0
    %v1398 = vmax.f32 %v1341, 0.0
    %v1399 = vmax.f32 %v1342, 0.0
    %v1400 = vmax.f32 %v1343, 0.0
    %v1401 = vmax.f32 %v1344, 0.0
    %v1402 = vmax.f32 %v1345, 0.0
    %v1403 = vmax.f32 %v1346, 0.0
    %v1404 = vmax.f32 %v1347, 0.0
    %v1405 = vmax.f32 %v1348, 0.0
    %1406 = vst [vmem:[%s3] sm:$0xff] %v1349
    %1407 = vst [vmem:[%s3 + $0x8] sm:$0xff] %v1350
    %1408 = vst [vmem:[%s3 + $0x10] sm:$0xff] %v1351
    %1409 = vst [vmem:[%s3 + $0x18] sm:$0xff] %v1352
    %1410 = vst [vmem:[%s3 + $0x20] sm:$0xff] %v1353
    %1411 = vst [vmem:[%s3 + $0x28] sm:$0xff] %v1354
    %1412 = vst [vmem:[%s3 + $0x30] sm:$0xff] %v1355
    %1413 = vst [vmem:[%s3 + $0x38] sm:$0xff] %v1356
    %1414 = vst [vmem:[%s3 + $0x40] sm:$0xff] %v1357
    %1415 = vst [vmem:[%s3 + $0x48] sm:$0xff] %v1358
    %1416 = vst [vmem:[%s3 + $0x50] sm:$0xff] %v1359
    %1417 = vst [vmem:[%s3 + $0x58] sm:$0xff] %v1360
    %1418 = vst [vmem:[%s3 + $0x60] sm:$0xff] %v1361
    %1419 = vst [vmem:[%s3 + $0x68] sm:$0xff] %v1362
    %1420 = vst [vmem:[%s3 + $0x70] sm:$0xff] %v1363
    %1421 = vst [vmem:[%s3 + $0x78] sm:$0xff] %v1364
    %1422 = vst [vmem:[%s3 + $0x80] sm:$0xff] %v1365
    %1423 = vst [vmem:[%s3 + $0x88] sm:$0xff] %v1366
    %1424 = vst [vmem:[%s3 + $0x90] sm:$0xff] %v1367
    %1425 = vst [vmem:[%s3 + $0x98] sm:$0xff] %v1368
    %1426 = vst [vmem:[%s3 + $0xa0] sm:$0xff] %v1369
    %1427 = vst [vmem:[%s3 + $0xa8] sm:$0xff] %v1370
    %1428 = vst [vmem:[%s3 + $0xb0] sm:$0xff] %v1371
    %1429 = vst [vmem:[%s3 + $0xb8] sm:$0xff] %v1372
    %1430 = vst [vmem:[%s3 + $0xc0] sm:$0xff] %v1373
    %1431 = vst [vmem:[%s3 + $0xc8] sm:$0xff] %v1374
    %1432 = vst [vmem:[%s3 + $0xd0] sm:$0xff] %v1375
    %1433 = vst [vmem:[%s3 + $0xd8] sm:$0xff] %v1376
    %1434 = vst [vmem:[%s3 + $0xe0] sm:$0xff] %v1377
    %1435 = vst [vmem:[%s3 + $0xe8] sm:$0xff] %v1378
    %1436 = vst [vmem:[%s3 + $0xf0] sm:$0xff] %v1379
    %1437 = vst [vmem:[%s3 + $0xf8] sm:$0xff] %v1380
    %1438 = vst [vmem:[%s3 + $0x100] sm:$0xff] %v1381
    %1439 = vst [vmem:[%s3 + $0x108] sm:$0xff] %v1382
    %1440 = vst [vmem:[%s3 + $0x110] sm:$0xff] %v1383
    %1441 = vst [vmem:[%s3 + $0x118] sm:$0xff] %v1384
    %1442 = vst [vmem:[%s3 + $0x120] sm:$0xff] %v1385
    %1443 = vst [vmem:[%s3 + $0x128] sm:$0xff] %v1386
    %1444 = vst [vmem:[%s3 + $0x130] sm:$0xff] %v1387
    %1445 = vst [vmem:[%s3 + $0x138] sm:$0xff] %v1388
    %1446 = vst [vmem:[%s3 + $0x140] sm:$0xff] %v1389
    %1447 = vst [vmem:[%s3 + $0x148] sm:$0xff] %v1390
    %1448 = vst [vmem:[%s3 + $0x150] sm:$0xff] %v1391
    %1449 = vst [vmem:[%s3 + $0x158] sm:$0xff] %v1392
    %1450 = vst [vmem:[%s3 + $0x160] sm:$0xff] %v1393
    %1451 = vst [vmem:[%s3 + $0x168] sm:$0xff] %v1394
    %1452 = vst [vmem:[%s3 + $0x170] sm:$0xff] %v1395
    %1453 = vst [vmem:[%s3 + $0x178] sm:$0xff] %v1396
    %1454 = vst [vmem:[%s3 + $0x180] sm:$0xff] %v1397
    %1455 = vst [vmem:[%s3 + $0x188] sm:$0xff] %v1398
    %1456 = vst [vmem:[%s3 + $0x190] sm:$0xff] %v1399
    %1457 = vst [vmem:[%s3 + $0x198] sm:$0xff] %v1400
    %1458 = vst [vmem:[%s3 + $0x1a0] sm:$0xff] %v1401
    %1459 = vst [vmem:[%s3 + $0x1a8] sm:$0xff] %v1402
    %1460 = vst [vmem:[%s3 + $0x1b0] sm:$0xff] %v1403
    %1461 = vst [vmem:[%s3 + $0x1b8] sm:$0xff] %v1404
    %1462 = vst [vmem:[%s3 + $0x1c0] sm:$0xff] %v1405
  $region21: #{alexnet_forward.8} parent=0 // pred_fallthru
    _
  // Predicated region
  $region22: #{alexnet_forward.8} parent=0 // pred_check
    _
  $region23: #{alexnet_forward.8} parent=0 // pred_check_branch
    %1464 = sbr.rel (0) target = $region25
  $region24: #{alexnet_forward.8} parent=0 // pred_region
    _
  $region25: #{alexnet_forward.8} parent=0 // pred_fallthru
    _
  // Predicated region
  $region26: #{alexnet_forward.8} parent=0 // pred_check
    _
  $region27: #{alexnet_forward.8} parent=0 // pred_check_branch
    %1466 = sbr.rel (0) target = $region29
  $region28: #{alexnet_forward.8} parent=0 // pred_region
    _
  $region29: #{alexnet_forward.8} parent=0 // pred_fallthru
    _

// kernel: alexnet_forward.9
$region0: #{alexnet_forward.9}
  #allocation0 [shape = 'u32[]', space=smem, size = 0x4, offset = 0x4, fixed_abs, tag = 'smem constant byte address 0x4 - core index']
  #allocation1 [shape = 'u32[144,128]{1,0:T(1,128)}', space=vmem, size = 0x12000, scoped, tag = 'internal scratch']
  #allocation2 [shape = 'f32[104,256]{1,0:T(8,128)}', space=vmem, size = 0x1a000, scoped, tag = 'scratch operand']
  %s0 = inlined_call_operand.vmem [shape: f32[104,1664], index: 0, kind: input, shape index: {}]
  %s1 = inlined_call_operand.vmem [shape: bf16[1664,256], index: 1, kind: input, shape index: {}]
  %s2 = inlined_call_operand.vmem [shape: f32[1,256], index: 2, kind: input, shape index: {}]
  %s3 = inlined_call_operand.vmem [shape: f32[104,256], index: 3, kind: output, shape index: {}]
  %s4 = sld [smem:[#allocation0]]
  $region91: #{alexnet_forward.9} parent=0
    _
  %s6 = ssub.s32 1, %s4
  %s7 = scalar_select 0, %s6, %s4
  $region1: #{alexnet_forward.9} parent=0
    #allocation3 [shape = 'u8[106496]{0}', space=vmem, size = 0x1a000, scoped, tag = 'input window, operand 0']
    loop: start=0, step=1, limit=15
    $region2: #{alexnet_forward.9} parent=1 // loop_pre_header
      _
    $region3: #{alexnet_forward.9} parent=1 // loop_header
      %s9 = sphi 0, %s13
      %p10 = scmp.ge.s32.totalorder %s9, 15
      %s16 = sphi 0, %s35
      %s17 = sphi 0, %s31
      %s18 = sphi 0, %s27
      %s19 = sphi 0, %s16
      %s20 = sphi 0, %s17
      %s21 = sphi 0, %s18
      %s22 = sphi 0, %s19
      %s23 = sphi 0, %s20
      %s24 = sphi 0, %s21
      %s40 = sphi 0, %s42
      %s43 = sphi 0, %s40
      %s44 = sphi 0, %s43
      %s60 = sphi 0, %s44
      %s68 = sphi 0, %s70
      %s71 = sphi 0, %s68
      %s72 = sphi 0, %s71
      %s88 = sphi 0, %s72
      %s94 = sphi 0, %s96
      %s97 = sphi 0, %s94
      %s98 = sphi 0, %s97
      %s114 = sphi 0, %s98
      %s122 = sphi 0, %s124
      %s125 = sphi 0, %s122
      %s126 = sphi 0, %s125
      %s142 = sphi 0, %s126
    $region4: #{alexnet_forward.9} parent=1 // loop_header_branch
      %12 = sbr.rel (%p10) target = $region8
    $region5: #{alexnet_forward.9} parent=1 // loop_body
      %s14 = ssub.s32 %s9, 1
      %s15 = ssub.s32 %s9, 2
      %s25 = sadd.s32 1, %s18
      %p26 = scmp.ge.s32.totalorder %s25, 13
      %s27 = scalar_select %p26, 0, %s25
      %s28 = sadd.s32 1, %s17
      %s29 = scalar_select %p26, %s28, %s17
      %p30 = scmp.ge.s32.totalorder %s29, 1
      %s31 = scalar_select %p30, 0, %s29
      %s32 = sadd.s32 1, %s16
      %s33 = scalar_select %p30, %s32, %s16
      %p34 = scmp.ge.s32.totalorder %s33, 1
      %s35 = scalar_select %p34, 0, %s33
      %s36 = ssub.s32 %s16, %s35
      %s37 = ssub.s32 %s18, %s27
      %s38 = sor.u32 %s36, %s37
      %p39 = scmp.eq.s32.totalorder %s38, 0
      %s41 = sadd.s32 %s40, 1
      %s42 = scalar_select %p39, %s40, %s41
      %p45 = pneg %p39
      %p46 = scmp.eq.s32.totalorder %s9, 12
      %p47 = por %p45, %p46
      %p48 = scmp.ne.s32.totalorder %s40, %s43
      %p49 = scmp.eq.s32.totalorder %s9, 0
      %p50 = por %p48, %p49
      %p51 = scmp.ne.s32.totalorder %s40, %s43
      %p52 = scmp.eq.s32.totalorder %s14, 12
      %p53 = por %p51, %p52
      %p54 = scmp.ne.s32.totalorder %s43, %s44
      %p55 = scmp.eq.s32.totalorder %s14, 0
      %p56 = por %p54, %p55
      %p57 = scmp.ne.s32.totalorder %s43, %s44
      %p58 = scmp.eq.s32.totalorder %s15, 12
      %p59 = por %p57, %p58
      %p61 = scmp.ne.s32.totalorder %s44, %s60
      %p62 = scmp.eq.s32.totalorder %s15, 0
      %p63 = por %p61, %p62
      %s64 = ssub.s32 %s18, %s27
      %s65 = ssub.s32 %s17, %s31
      %s66 = sor.u32 %s64, %s65
      %p67 = scmp.eq.s32.totalorder %s66, 0
      %s69 = sadd.s32 %s68, 1
      %s70 = scalar_select %p67, %s68, %s69
      %p73 = pneg %p67
      %p74 = scmp.eq.s32.totalorder %s9, 12
      %p75 = por %p73, %p74
      %p76 = scmp.ne.s32.totalorder %s68, %s71
      %p77 = scmp.eq.s32.totalorder %s9, 0
      %p78 = por %p76, %p77
      %p79 = scmp.ne.s32.totalorder %s68, %s71
      %p80 = scmp.eq.s32.totalorder %s14, 12
      %p81 = por %p79, %p80
      %p82 = scmp.ne.s32.totalorder %s71, %s72
      %p83 = scmp.eq.s32.totalorder %s14, 0
      %p84 = por %p82, %p83
      %p85 = scmp.ne.s32.totalorder %s71, %s72
      %p86 = scmp.eq.s32.totalorder %s15, 12
      %p87 = por %p85, %p86
      %p89 = scmp.ne.s32.totalorder %s72, %s88
      %p90 = scmp.eq.s32.totalorder %s15, 0
      %p91 = por %p89, %p90
      %s92 = ssub.s32 %s17, %s31
      %p93 = scmp.eq.s32.totalorder %s92, 0
      %s95 = sadd.s32 %s94, 1
      %s96 = scalar_select %p93, %s94, %s95
      %p99 = pneg %p93
      %p100 = scmp.eq.s32.totalorder %s9, 12
      %p101 = por %p99, %p100
      %p102 = scmp.ne.s32.totalorder %s94, %s97
      %p103 = scmp.eq.s32.totalorder %s9, 0
      %p104 = por %p102, %p103
      %p105 = scmp.ne.s32.totalorder %s94, %s97
      %p106 = scmp.eq.s32.totalorder %s14, 12
      %p107 = por %p105, %p106
      %p108 = scmp.ne.s32.totalorder %s97, %s98
      %p109 = scmp.eq.s32.totalorder %s14, 0
      %p110 = por %p108, %p109
      %p111 = scmp.ne.s32.totalorder %s97, %s98
      %p112 = scmp.eq.s32.totalorder %s15, 12
      %p113 = por %p111, %p112
      %p115 = scmp.ne.s32.totalorder %s98, %s114
      %p116 = scmp.eq.s32.totalorder %s15, 0
      %p117 = por %p115, %p116
      %s118 = ssub.s32 %s16, %s35
      %s119 = ssub.s32 %s17, %s31
      %s120 = sor.u32 %s118, %s119
      %p121 = scmp.eq.s32.totalorder %s120, 0
      %s123 = sadd.s32 %s122, 1
      %s124 = scalar_select %p121, %s122, %s123
      %p127 = pneg %p121
      %p128 = scmp.eq.s32.totalorder %s9, 12
      %p129 = por %p127, %p128
      %p130 = scmp.ne.s32.totalorder %s122, %s125
      %p131 = scmp.eq.s32.totalorder %s9, 0
      %p132 = por %p130, %p131
      %p133 = scmp.ne.s32.totalorder %s122, %s125
      %p134 = scmp.eq.s32.totalorder %s14, 12
      %p135 = por %p133, %p134
      %p136 = scmp.ne.s32.totalorder %s125, %s126
      %p137 = scmp.eq.s32.totalorder %s14, 0
      %p138 = por %p136, %p137
      %p139 = scmp.ne.s32.totalorder %s125, %s126
      %p140 = scmp.eq.s32.totalorder %s15, 12
      %p141 = por %p139, %p140
      %p143 = scmp.ne.s32.totalorder %s126, %s142
      %p144 = scmp.eq.s32.totalorder %s15, 0
      %p145 = por %p143, %p144
      %p146 = scmp.le.s32.totalorder 1, %s9
      %p147 = scmp.lt.s32.totalorder %s9, 14
      %p148 = pnand %p146, %p147
      %p149 = pneg %p148
      // Predicated region
      $region9: #{alexnet_forward.9} parent=5 // pred_check
        _
      $region10: #{alexnet_forward.9} parent=5 // pred_check_branch
        %151 = sbr.rel (%p148) target = $region12
      $region11: #{alexnet_forward.9} parent=5 // pred_region
        %s152 = ssub.s32 %s9, 1
        // Predicated region
        $region13: #{alexnet_forward.9} parent=11 // pred_check
          %p153 = pneg %p110
        $region14: #{alexnet_forward.9} parent=11 // pred_check_branch
          %155 = sbr.rel (%p153) target = $region16
        $region15: #{alexnet_forward.9} parent=11 // pred_region
          %s156 = smul.u32 2, %s20
          %p157 = scmp.lt.s32.totalorder %s156, 1
          %s158 = scalar_select %p157, %s156, 1
          %s159 = scalar_lea.vmem %s2, %s158
          %s160 = smul.u32 2, %s20
        $region16: #{alexnet_forward.9} parent=11 // pred_fallthru
          _
      $region12: #{alexnet_forward.9} parent=5 // pred_fallthru
        _
      %p161 = scmp.lt.s32.totalorder %s9, 13
      // Predicated region
      $region17: #{alexnet_forward.9} parent=5 // pred_check
        %p162 = pneg %p161
      $region18: #{alexnet_forward.9} parent=5 // pred_check_branch
        %164 = sbr.rel (%p162) target = $region20
      $region19: #{alexnet_forward.9} parent=5 // pred_region
        // Predicated region
        $region21: #{alexnet_forward.9} parent=19 // pred_check
          %p165 = pneg %p50
        $region22: #{alexnet_forward.9} parent=19 // pred_check_branch
          %167 = sbr.rel (%p165) target = $region24
        $region23: #{alexnet_forward.9} parent=19 // pred_region
          %s168 = sand.u32 %s40, 1
          %s169 = sand.u32 %s40, 1
          %s170 = smul.addr %s169, 104
          %s171 = scalar_lea.vmem [#allocation3], %s170
          %s172 = smul.u32 13, %s16
          %s173 = smul.addr %s172, 13
          %s174 = sadd.s32 %s18, %s173
          %s175 = smul.addr %s174, 8
          %s176 = scalar_lea.vmem %s0, %s175
          // Predicated region
          $region25: #{alexnet_forward.9} parent=23 // pred_check
            _
          $region26: #{alexnet_forward.9} parent=23 // pred_check_branch
            %178 = sbr.rel (0) target = $region28
          $region27: #{alexnet_forward.9} parent=23 // pred_region
            // Predicated region
            $region29: #{alexnet_forward.9} parent=27 // pred_check
              _
            $region30: #{alexnet_forward.9} parent=27 // pred_check_branch
              %180 = sbr.rel (0) target = $region32
            $region31: #{alexnet_forward.9} parent=27 // pred_region
              // Predicated region
              $region44: #{alexnet_forward.9} parent=31 // pred_check
                _
              $region45: #{alexnet_forward.9} parent=31 // pred_check_branch
                %219 = sbr.rel (0) target = $region47
              $region46: #{alexnet_forward.9} parent=31 // pred_region
                loop: start=0, step=1, limit=1
                $region48: #{alexnet_forward.9} parent=46 // loop_pre_header
                  _
                $region49: #{alexnet_forward.9} parent=46 // loop_header
                  %s221 = sphi 0, %s225
                  %p222 = scmp.ge.s32.totalorder %s221, 1
                  %s226 = sphi %s176, %s176
                  %s227 = sphi %s171, %s171
                $region50: #{alexnet_forward.9} parent=46 // loop_header_branch
                  %224 = sbr.rel (%p222) target = $region54
                $region51: #{alexnet_forward.9} parent=46 // loop_body
                  %v228 = vld [vmem:[%s226] sm:$0xff]
                  %229 = vst [vmem:[%s227] sm:$0xff] %v228
                  %v230 = vld [vmem:[%s226 + $0x68] sm:$0xff]
                  %231 = vst [vmem:[%s227 + $0x8] sm:$0xff] %v230
                  %v232 = vld [vmem:[%s226 + $0xd0] sm:$0xff]
                  %233 = vst [vmem:[%s227 + $0x10] sm:$0xff] %v232
                  %v234 = vld [vmem:[%s226 + $0x138] sm:$0xff]
                  %235 = vst [vmem:[%s227 + $0x18] sm:$0xff] %v234
                  %v236 = vld [vmem:[%s226 + $0x1a0] sm:$0xff]
                  %237 = vst [vmem:[%s227 + $0x20] sm:$0xff] %v236
                  %v238 = vld [vmem:[%s226 + $0x208] sm:$0xff]
                  %239 = vst [vmem:[%s227 + $0x28] sm:$0xff] %v238
                  %v240 = vld [vmem:[%s226 + $0x270] sm:$0xff]
                  %241 = vst [vmem:[%s227 + $0x30] sm:$0xff] %v240
                  %v242 = vld [vmem:[%s226 + $0x2d8] sm:$0xff]
                  %243 = vst [vmem:[%s227 + $0x38] sm:$0xff] %v242
                  %v244 = vld [vmem:[%s226 + $0x340] sm:$0xff]
                  %245 = vst [vmem:[%s227 + $0x40] sm:$0xff] %v244
                  %v246 = vld [vmem:[%s226 + $0x3a8] sm:$0xff]
                  %247 = vst [vmem:[%s227 + $0x48] sm:$0xff] %v246
                  %v248 = vld [vmem:[%s226 + $0x410] sm:$0xff]
                  %249 = vst [vmem:[%s227 + $0x50] sm:$0xff] %v248
                  %v250 = vld [vmem:[%s226 + $0x478] sm:$0xff]
                  %251 = vst [vmem:[%s227 + $0x58] sm:$0xff] %v250
                  %v252 = vld [vmem:[%s226 + $0x4e0] sm:$0xff]
                  %253 = vst [vmem:[%s227 + $0x60] sm:$0xff] %v252
                $region52: #{alexnet_forward.9} parent=46 // loop_footer
                  %s225 = sadd.s32 1, %s221
                $region53: #{alexnet_forward.9} parent=46 // loop_footer_branch
                  %220 = sbr.rel target = $region49
                $region54: #{alexnet_forward.9} parent=46 // loop_exit
                  _
              $region47: #{alexnet_forward.9} parent=31 // pred_fallthru
                _
              // Predicated region
              $region55: #{alexnet_forward.9} parent=31 // pred_check
                _
              $region56: #{alexnet_forward.9} parent=31 // pred_check_branch
                %255 = sbr.rel target = $region58
              $region57: #{alexnet_forward.9} parent=31 // pred_region
                _
              $region58: #{alexnet_forward.9} parent=31 // pred_fallthru
                _
            $region32: #{alexnet_forward.9} parent=27 // pred_fallthru
              _
            // Predicated region
            $region33: #{alexnet_forward.9} parent=27 // pred_check
              _
            $region34: #{alexnet_forward.9} parent=27 // pred_check_branch
              %182 = sbr.rel target = $region36
            $region35: #{alexnet_forward.9} parent=27 // pred_region
              loop: start=0, step=1, limit=1
              $region37: #{alexnet_forward.9} parent=35 // loop_pre_header
                _
              $region38: #{alexnet_forward.9} parent=35 // loop_header
                %s185 = sphi 0, %s189
                %p186 = scmp.ge.s32.totalorder %s185, 1
                %s190 = sphi %s176, %s176
                %s191 = sphi %s171, %s171
              $region39: #{alexnet_forward.9} parent=35 // loop_header_branch
                %188 = sbr.rel (%p186) target = $region43
              $region40: #{alexnet_forward.9} parent=35 // loop_body
                %v192 = vld [vmem:[%s190] sm:$0xff]
                %193 = vst [vmem:[%s191] sm:$0xff] %v192
                %v194 = vld [vmem:[%s190 + $0x68] sm:$0xff]
                %195 = vst [vmem:[%s191 + $0x8] sm:$0xff] %v194
                %v196 = vld [vmem:[%s190 + $0xd0] sm:$0xff]
                %197 = vst [vmem:[%s191 + $0x10] sm:$0xff] %v196
                %v198 = vld [vmem:[%s190 + $0x138] sm:$0xff]
                %199 = vst [vmem:[%s191 + $0x18] sm:$0xff] %v198
                %v200 = vld [vmem:[%s190 + $0x1a0] sm:$0xff]
                %201 = vst [vmem:[%s191 + $0x20] sm:$0xff] %v200
                %v202 = vld [vmem:[%s190 + $0x208] sm:$0xff]
                %203 = vst [vmem:[%s191 + $0x28] sm:$0xff] %v202
                %v204 = vld [vmem:[%s190 + $0x270] sm:$0xff]
                %205 = vst [vmem:[%s191 + $0x30] sm:$0xff] %v204
                %v206 = vld [vmem:[%s190 + $0x2d8] sm:$0xff]
                %207 = vst [vmem:[%s191 + $0x38] sm:$0xff] %v206
                %v208 = vld [vmem:[%s190 + $0x340] sm:$0xff]
                %209 = vst [vmem:[%s191 + $0x40] sm:$0xff] %v208
                %v210 = vld [vmem:[%s190 + $0x3a8] sm:$0xff]
                %211 = vst [vmem:[%s191 + $0x48] sm:$0xff] %v210
                %v212 = vld [vmem:[%s190 + $0x410] sm:$0xff]
                %213 = vst [vmem:[%s191 + $0x50] sm:$0xff] %v212
                %v214 = vld [vmem:[%s190 + $0x478] sm:$0xff]
                %215 = vst [vmem:[%s191 + $0x58] sm:$0xff] %v214
                %v216 = vld [vmem:[%s190 + $0x4e0] sm:$0xff]
                %217 = vst [vmem:[%s191 + $0x60] sm:$0xff] %v216
              $region41: #{alexnet_forward.9} parent=35 // loop_footer
                %s189 = sadd.s32 1, %s185
              $region42: #{alexnet_forward.9} parent=35 // loop_footer_branch
                %184 = sbr.rel target = $region38
              $region43: #{alexnet_forward.9} parent=35 // loop_exit
                _
            $region36: #{alexnet_forward.9} parent=27 // pred_fallthru
              _
          $region28: #{alexnet_forward.9} parent=23 // pred_fallthru
            _
          %256 = vnop
        $region24: #{alexnet_forward.9} parent=19 // pred_fallthru
          _
        // Predicated region
        $region59: #{alexnet_forward.9} parent=19 // pred_check
          %p257 = pneg %p78
        $region60: #{alexnet_forward.9} parent=19 // pred_check_branch
          %259 = sbr.rel (%p257) target = $region62
        $region61: #{alexnet_forward.9} parent=19 // pred_region
          %s260 = smul.u32 16, %s18
          %s261 = smul.u32 2, %s17
          %p262 = scmp.lt.s32.totalorder %s260, 207
          %s263 = scalar_select %p262, %s260, 207
          %p264 = scmp.lt.s32.totalorder %s261, 1
          %s265 = scalar_select %p264, %s261, 1
          %s266 = smul.addr %s263, 2
          %s267 = sadd.s32 %s265, %s266
          %s268 = smul.addr %s267, 4
          %s269 = scalar_lea.vmem %s1, %s268
          %s270 = smul.u32 16, %s18
          %s271 = smul.u32 2, %s17
        $region62: #{alexnet_forward.9} parent=19 // pred_fallthru
          _
      $region20: #{alexnet_forward.9} parent=5 // pred_fallthru
        _
      %p272 = scmp.le.s32.totalorder 1, %s9
      %p273 = scmp.lt.s32.totalorder %s9, 14
      %p274 = pnand %p272, %p273
      %p275 = pneg %p274
      // Predicated region
      $region63: #{alexnet_forward.9} parent=5 // pred_check
        _
      $region64: #{alexnet_forward.9} parent=5 // pred_check_branch
        %277 = sbr.rel (%p274) target = $region66
      $region65: #{alexnet_forward.9} parent=5 // pred_region
        %s278 = ssub.s32 %s9, 1
        %s279 = sand.u32 %s43, 1
        %s280 = sand.u32 %s43, 1
        %s281 = smul.addr %s280, 104
        %s282 = scalar_lea.vmem [#allocation3], %s281
        // Predicated region
        $region67: #{alexnet_forward.9} parent=65 // pred_check
          %p283 = pneg %p56
        $region68: #{alexnet_forward.9} parent=65 // pred_check_branch
          %285 = sbr.rel (%p283) target = $region70
        $region69: #{alexnet_forward.9} parent=65 // pred_region
          _
        $region70: #{alexnet_forward.9} parent=65 // pred_fallthru
          _
        %s286 = sand.u32 %s43, 1
        %s287 = sand.u32 %s43, 1
        %s288 = smul.addr %s287, 104
        %s289 = scalar_lea.vmem [#allocation3], %s288
        %p290 = pneg %p56
        %p291 = pneg %p53
        %s292 = smul.u32 16, %s21
        %s293 = smul.u32 2, %s20
        %p294 = scmp.lt.s32.totalorder %s292, 207
        %s295 = scalar_select %p294, %s292, 207
        %p296 = scmp.lt.s32.totalorder %s293, 1
        %s297 = scalar_select %p296, %s293, 1
        %s298 = smul.addr %s295, 2
        %s299 = sadd.s32 %s297, %s298
        %s300 = smul.addr %s299, 4
        %s301 = scalar_lea.vmem %s1, %s300
        %p302 = pneg %p84
        %p303 = pneg %p81
        %s304 = smul.u32 2, %s20
        %p305 = scmp.lt.s32.totalorder %s304, 1
        %s306 = scalar_select %p305, %s304, 1
        %s307 = scalar_lea.vmem %s2, %s306
        %p308 = pneg %p110
        %p309 = pneg %p107
        %p310 = pneg %p138
        %p311 = pneg %p135
        %s312 = smul.u32 13, %s19
        %s313 = smul.u32 2, %s20
        %p314 = scmp.lt.s32.totalorder %s312, 12
        %s315 = scalar_select %p314, %s312, 12
        %p316 = scmp.lt.s32.totalorder %s313, 1
        %s317 = scalar_select %p316, %s313, 1
        %s318 = smul.addr %s315, 2
        %s319 = sadd.s32 %s317, %s318
        %s320 = smul.addr %s319, 8
        %s321 = scalar_lea.vmem %s3, %s320
        %s322 = smul.u32 13, %s19
        %s323 = smul.u32 16, %s21
        %s324 = smul.u32 2, %s20
        %p325 = scmp.lt.s32.totalorder %s323, 207
        %s326 = scalar_select %p325, %s323, 207
        %p327 = scmp.lt.s32.totalorder %s324, 1
        %s328 = scalar_select %p327, %s324, 1
        %s329 = smul.addr %s326, 2
        %s330 = sadd.s32 %s328, %s329
        %s331 = smul.addr %s330, 4
        %s332 = scalar_lea.vmem %s1, %s331
        %s333 = smul.u32 16, %s21
        %s334 = smul.u32 2, %s20
        %s335 = smul.u32 2, %s20
        %p336 = scmp.lt.s32.totalorder %s335, 1
        %s337 = scalar_select %p336, %s335, 1
        %s338 = scalar_lea.vmem %s2, %s337
        %s339 = smul.u32 2, %s20
        %s340 = smul.u32 13, %s19
        %s341 = smul.u32 2, %s20
        %p342 = scmp.lt.s32.totalorder %s340, 12
        %s343 = scalar_select %p342, %s340, 12
        %p344 = scmp.lt.s32.totalorder %s341, 1
        %s345 = scalar_select %p344, %s341, 1
        %s346 = smul.addr %s343, 2
        %s347 = sadd.s32 %s345, %s346
        %s348 = smul.addr %s347, 8
        %s349 = scalar_lea.vmem %s3, %s348
        %s350 = smul.u32 13, %s19
        %s351 = smul.u32 2, %s20
        %p353 = scmp.eq.s32.totalorder %s21, 0
        // Predicated region
        $region71: #{alexnet_forward.9} parent=65 // pred_check
          %p354 = pneg %p353
        $region72: #{alexnet_forward.9} parent=65 // pred_check_branch
          %356 = sbr.rel (%p354) target = $region74
        $region73: #{alexnet_forward.9} parent=65 // pred_region
          %357 = vst [vmem:[#allocation2] sm:$0xff] 0.0
          %358 = vst [vmem:[#allocation2 + $0x8] sm:$0xff] 0.0
          %359 = vst [vmem:[#allocation2 + $0x10] sm:$0xff] 0.0
          %360 = vst [vmem:[#allocation2 + $0x18] sm:$0xff] 0.0
          %361 = vst [vmem:[#allocation2 + $0x20] sm:$0xff] 0.0
          %362 = vst [vmem:[#allocation2 + $0x28] sm:$0xff] 0.0
          %363 = vst [vmem:[#allocation2 + $0x30] sm:$0xff] 0.0
          %364 = vst [vmem:[#allocation2 + $0x38] sm:$0xff] 0.0
          %365 = vst [vmem:[#allocation2 + $0x40] sm:$0xff] 0.0
          %366 = vst [vmem:[#allocation2 + $0x48] sm:$0xff] 0.0
          %367 = vst [vmem:[#allocation2 + $0x50] sm:$0xff] 0.0
          %368 = vst [vmem:[#allocation2 + $0x58] sm:$0xff] 0.0
          %369 = vst [vmem:[#allocation2 + $0x60] sm:$0xff] 0.0
          %370 = vst [vmem:[#allocation2 + $0x68] sm:$0xff] 0.0
          %371 = vst [vmem:[#allocation2 + $0x70] sm:$0xff] 0.0
          %372 = vst [vmem:[#allocation2 + $0x78] sm:$0xff] 0.0
          %373 = vst [vmem:[#allocation2 + $0x80] sm:$0xff] 0.0
          %374 = vst [vmem:[#allocation2 + $0x88] sm:$0xff] 0.0
          %375 = vst [vmem:[#allocation2 + $0x90] sm:$0xff] 0.0
          %376 = vst [vmem:[#allocation2 + $0x98] sm:$0xff] 0.0
          %377 = vst [vmem:[#allocation2 + $0xa0] sm:$0xff] 0.0
          %378 = vst [vmem:[#allocation2 + $0xa8] sm:$0xff] 0.0
          %379 = vst [vmem:[#allocation2 + $0xb0] sm:$0xff] 0.0
          %380 = vst [vmem:[#allocation2 + $0xb8] sm:$0xff] 0.0
          %381 = vst [vmem:[#allocation2 + $0xc0] sm:$0xff] 0.0
          %382 = vst [vmem:[#allocation2 + $0xc8] sm:$0xff] 0.0
        $region74: #{alexnet_forward.9} parent=65 // pred_fallthru
          _
        %v383 = vld [vmem:[#allocation2] sm:$0xff]
        %v384 = vld [vmem:[#allocation2 + $0x8] sm:$0xff]
        %v385 = vld [vmem:[#allocation2 + $0x10] sm:$0xff]
        %v386 = vld [vmem:[#allocation2 + $0x18] sm:$0xff]
        %v387 = vld [vmem:[#allocation2 + $0x20] sm:$0xff]
        %v388 = vld [vmem:[#allocation2 + $0x28] sm:$0xff]
        %v389 = vld [vmem:[#allocation2 + $0x30] sm:$0xff]
        %v390 = vld [vmem:[#allocation2 + $0x38] sm:$0xff]
        %v391 = vld [vmem:[#allocation2 + $0x40] sm:$0xff]
        %v392 = vld [vmem:[#allocation2 + $0x48] sm:$0xff]
        %v393 = vld [vmem:[#allocation2 + $0x50] sm:$0xff]
        %v394 = vld [vmem:[#allocation2 + $0x58] sm:$0xff]
        %v395 = vld [vmem:[#allocation2 + $0x60] sm:$0xff]
        %v396 = vld [vmem:[#allocation2 + $0x68] sm:$0xff]
        %v397 = vld [vmem:[#allocation2 + $0x70] sm:$0xff]
        %v398 = vld [vmem:[#allocation2 + $0x78] sm:$0xff]
        %v399 = vld [vmem:[#allocation2 + $0x80] sm:$0xff]
        %v400 = vld [vmem:[#allocation2 + $0x88] sm:$0xff]
        %v401 = vld [vmem:[#allocation2 + $0x90] sm:$0xff]
        %v402 = vld [vmem:[#allocation2 + $0x98] sm:$0xff]
        %v403 = vld [vmem:[#allocation2 + $0xa0] sm:$0xff]
        %v404 = vld [vmem:[#allocation2 + $0xa8] sm:$0xff]
        %v405 = vld [vmem:[#allocation2 + $0xb0] sm:$0xff]
        %v406 = vld [vmem:[#allocation2 + $0xb8] sm:$0xff]
        %v407 = vld [vmem:[#allocation2 + $0xc0] sm:$0xff]
        %v408 = vld [vmem:[#allocation2 + $0xc8] sm:$0xff]
        %v409 = vld [vmem:[%s282] sm:$0xff]
        %v410 = vld [vmem:[%s282 + $0x8] sm:$0xff]
        %v411 = vld [vmem:[%s282 + $0x10] sm:$0xff]
        %v412 = vld [vmem:[%s282 + $0x18] sm:$0xff]
        %v413 = vld [vmem:[%s282 + $0x20] sm:$0xff]
        %v414 = vld [vmem:[%s282 + $0x28] sm:$0xff]
        %v415 = vld [vmem:[%s282 + $0x30] sm:$0xff]
        %v416 = vld [vmem:[%s282 + $0x38] sm:$0xff]
        %v417 = vld [vmem:[%s282 + $0x40] sm:$0xff]
        %v418 = vld [vmem:[%s282 + $0x48] sm:$0xff]
        %v419 = vld [vmem:[%s282 + $0x50] sm:$0xff]
        %v420 = vld [vmem:[%s282 + $0x58] sm:$0xff]
        %v421 = vld [vmem:[%s282 + $0x60] sm:$0xff]
        %v422 = vpack.c.bf16 %v410, %v409
        %v423 = vpack.c.bf16 %v412, %v411
        %v424 = vpack.c.bf16 %v414, %v413
        %v425 = vpack.c.bf16 %v416, %v415
        %v426 = vpack.c.bf16 %v418, %v417
        %v427 = vpack.c.bf16 %v420, %v419
        %v428 = vpack.c.bf16 %v421, %v421
        %v429 = vld [vmem:[%s332] sm:$0xff]
        %v430 = vld [vmem:[%s332 + $0x8] sm:$0xff]
        %v431 = vld [vmem:[%s332 + $0x10] sm:$0xff]
        %v432 = vld [vmem:[%s332 + $0x18] sm:$0xff]
        %v433 = vld [vmem:[%s332 + $0x20] sm:$0xff]
        %v434 = vld [vmem:[%s332 + $0x28] sm:$0xff]
        %v435 = vld [vmem:[%s332 + $0x30] sm:$0xff]
        %v436 = vld [vmem:[%s332 + $0x38] sm:$0xff]
        %v437 = vld [vmem:[%s332 + $0x40] sm:$0xff]
        %v438 = vld [vmem:[%s332 + $0x48] sm:$0xff]
        %v439 = vld [vmem:[%s332 + $0x50] sm:$0xff]
        %v440 = vld [vmem:[%s332 + $0x58] sm:$0xff]
        %v441 = vld [vmem:[%s332 + $0x60] sm:$0xff]
        %v442 = vld [vmem:[%s332 + $0x68] sm:$0xff]
        %v443 = vld [vmem:[%s332 + $0x70] sm:$0xff]
        %v444 = vld [vmem:[%s332 + $0x78] sm:$0xff]
        %v461 = vunpack.c.l.b16 %v429
        %v462 = vunpack.c.h.b16 %v429
        %v463 = vunpack.c.l.b16 %v430
        %v464 = vunpack.c.h.b16 %v430
        %v465 = vunpack.c.l.b16 %v431
        %v466 = vunpack.c.h.b16 %v431
        %v467 = vunpack.c.l.b16 %v432
        %v468 = vunpack.c.h.b16 %v432
        %v469 = vunpack.c.l.b16 %v433
        %v470 = vunpack.c.h.b16 %v433
        %v471 = vunpack.c.l.b16 %v434
        %v472 = vunpack.c.h.b16 %v434
        %v473 = vunpack.c.l.b16 %v435
        %v474 = vunpack.c.h.b16 %v435
        %v475 = vunpack.c.l.b16 %v436
        %v476 = vunpack.c.h.b16 %v436
        %v477 = vunpack.c.l.b16 %v437
        %v478 = vunpack.c.h.b16 %v437
        %v479 = vunpack.c.l.b16 %v438
        %v480 = vunpack.c.h.b16 %v438
        %v481 = vunpack.c.l.b16 %v439
        %v482 = vunpack.c.h.b16 %v439
        %v483 = vunpack.c.l.b16 %v440
        %v484 = vunpack.c.h.b16 %v440
        %v485 = vunpack.c.l.b16 %v441
        %v486 = vunpack.c.h.b16 %v441
        %v487 = vunpack.c.l.b16 %v442
        %v488 = vunpack.c.h.b16 %v442
        %v489 = vunpack.c.l.b16 %v443
        %v490 = vunpack.c.h.b16 %v443
        %v491 = vunpack.c.l.b16 %v444
        %v492 = vunpack.c.h.b16 %v444
        %v493 = vpack.c.b16 %v463, %v461
        %v494 = vpack.c.b16 %v464, %v462
        %v495 = vpack.c.b16 %v467, %v465
        %v496 = vpack.c.b16 %v468, %v466
        %v497 = vpack.c.b16 %v471, %v469
        %v498 = vpack.c.b16 %v472, %v470
        %v499 = vpack.c.b16 %v475, %v473
        %v500 = vpack.c.b16 %v476, %v474
        %v501 = vpack.c.b16 %v479, %v477
        %v502 = vpack.c.b16 %v480, %v478
        %v503 = vpack.c.b16 %v483, %v481
        %v504 = vpack.c.b16 %v484, %v482
        %v505 = vpack.c.b16 %v487, %v485
        %v506 = vpack.c.b16 %v488, %v486
        %v507 = vpack.c.b16 %v491, %v489
        %v508 = vpack.c.b16 %v492, %v490
        %525 = vmatprep.subr.bf16.mxu0 %v494
        %526 = vmatpush1.bf16.msra.mxu0 %v493
        %527 = vmatprep.subr.bf16.mxu0 %v496
        %528 = vmatpush1.bf16.msra.mxu0 %v495
        %529 = vmatprep.subr.bf16.mxu0 %v498
        %530 = vmatpush1.bf16.msra.mxu0 %v497
        %531 = vmatprep.subr.bf16.mxu0 %v500
        %532 = vmatpush1.bf16.msra.mxu0 %v499
        %533 = vmatprep.subr.bf16.mxu0 %v502
        %534 = vmatpush1.bf16.msra.mxu0 %v501
        %535 = vmatprep.subr.bf16.mxu0 %v504
        %536 = vmatpush1.bf16.msra.mxu0 %v503
        %537 = vmatprep.subr.bf16.mxu0 %v506
        %538 = vmatpush1.bf16.msra.mxu0 %v505
        %539 = vmatprep.subr.bf16.mxu0 %v508
        %540 = vmatpush1.bf16.msra.mxu0 %v507
        %541 = vmatprep.subr.bf16.mxu0 0
        %542 = vmatpush1.bf16.msra.mxu0 0
        %543 = vmatprep.subr.bf16.mxu0 0
        %544 = vmatpush1.bf16.msra.mxu0 0
        %545 = vmatprep.subr.bf16.mxu0 0
        %546 = vmatpush1.bf16.msra.mxu0 0
        %547 = vmatprep.subr.bf16.mxu0 0
        %548 = vmatpush1.bf16.msra.mxu0 0
        %549 = vmatprep.subr.bf16.mxu0 0
        %550 = vmatpush1.bf16.msra.mxu0 0
        %551 = vmatprep.subr.bf16.mxu0 0
        %552 = vmatpush1.bf16.msra.mxu0 0
        %553 = vmatprep.subr.bf16.mxu0 0
        %554 = vmatpush1.bf16.msra.mxu0 0
        %555 = vmatprep.subr.bf16.mxu0 0
        %556 = vmatpush1.bf16.msra.mxu0 0
        %557 = vmatprep.mubr.bf16.mxu0 0
        %558 = vmatmul.mubr.bf16.gmra.mrb[0].mxu0 %v422
        %v559 = vpop.f32.mrb[0].mxu0
        %v560 = vadd.f32 0.0, %v559
        %v561 = vpop.f32.mrb[0].mxu0
        %v562 = vadd.f32 0.0, %v561
        %v563 = vpop.f32.mrb[0].mxu0
        %v564 = vadd.f32 0.0, %v563
        %v565 = vpop.f32.mrb[0].mxu0
        %v566 = vadd.f32 0.0, %v565
        %567 = vmatprep.mubr.bf16.mxu0 0
        %568 = vmatmul.mubr.bf16.gmra.mrb[0].mxu0 %v423
        %v569 = vpop.f32.mrb[0].mxu0
        %v570 = vadd.f32 0.0, %v569
        %v571 = vpop.f32.mrb[0].mxu0
        %v572 = vadd.f32 0.0, %v571
        %v573 = vpop.f32.mrb[0].mxu0
        %v574 = vadd.f32 0.0, %v573
        %v575 = vpop.f32.mrb[0].mxu0
        %v576 = vadd.f32 0.0, %v575
        %577 = vmatprep.mubr.bf16.mxu0 0
        %578 = vmatmul.mubr.bf16.gmra.mrb[0].mxu0 %v424
        %v579 = vpop.f32.mrb[0].mxu0
        %v580 = vadd.f32 0.0, %v579
        %v581 = vpop.f32.mrb[0].mxu0
        %v582 = vadd.f32 0.0, %v581
        %v583 = vpop.f32.mrb[0].mxu0
        %v584 = vadd.f32 0.0, %v583
        %v585 = vpop.f32.mrb[0].mxu0
        %v586 = vadd.f32 0.0, %v585
        %587 = vmatprep.mubr.bf16.mxu0 0
        %588 = vmatmul.mubr.bf16.gmra.mrb[0].mxu0 %v425
        %v589 = vpop.f32.mrb[0].mxu0
        %v590 = vadd.f32 0.0, %v589
        %v591 = vpop.f32.mrb[0].mxu0
        %v592 = vadd.f32 0.0, %v591
        %v593 = vpop.f32.mrb[0].mxu0
        %v594 = vadd.f32 0.0, %v593
        %v595 = vpop.f32.mrb[0].mxu0
        %v596 = vadd.f32 0.0, %v595
        %597 = vmatprep.mubr.bf16.mxu0 0
        %598 = vmatmul.mubr.bf16.gmra.mrb[0].mxu0 %v426
        %v599 = vpop.f32.mrb[0].mxu0
        %v600 = vadd.f32 0.0, %v599
        %v601 = vpop.f32.mrb[0].mxu0
        %v602 = vadd.f32 0.0, %v601
        %v603 = vpop.f32.mrb[0].mxu0
        %v604 = vadd.f32 0.0, %v603
        %v605 = vpop.f32.mrb[0].mxu0
        %v606 = vadd.f32 0.0, %v605
        %607 = vmatprep.mubr.bf16.mxu0 0
        %608 = vmatmul.mubr.bf16.gmra.mrb[0].mxu0 %v427
        %v609 = vpop.f32.mrb[0].mxu0
        %v610 = vadd.f32 0.0, %v609
        %v611 = vpop.f32.mrb[0].mxu0
        %v612 = vadd.f32 0.0, %v611
        %v613 = vpop.f32.mrb[0].mxu0
        %v614 = vadd.f32 0.0, %v613
        %v615 = vpop.f32.mrb[0].mxu0
        %v616 = vadd.f32 0.0, %v615
        %617 = vmatprep.mubr.bf16.mxu0 0
        %618 = vmatmul.mubr.bf16.gmra.mrb[0].mxu0 %v428
        %v619 = vpop.f32.mrb[0].mxu0
        %v620 = vadd.f32 0.0, %v619
        %v621 = vpop.f32.mrb[0].mxu0
        %v622 = vadd.f32 0.0, %v621
        %v623 = vpop.f32.mrb[0].mxu0
        %v624 = vpop.f32.mrb[0].mxu0
        %625 = vdwg.mxu0
        %v626 = vadd.f32 %v383, %v560
        %v627 = vadd.f32 %v384, %v562
        %v628 = vadd.f32 %v385, %v564
        %v629 = vadd.f32 %v386, %v566
        %v630 = vadd.f32 %v387, %v570
        %v631 = vadd.f32 %v388, %v572
        %v632 = vadd.f32 %v389, %v574
        %v633 = vadd.f32 %v390, %v576
        %v634 = vadd.f32 %v391, %v580
        %v635 = vadd.f32 %v392, %v582
        %v636 = vadd.f32 %v393, %v584
        %v637 = vadd.f32 %v394, %v586
        %v638 = vadd.f32 %v395, %v590
        %v639 = vadd.f32 %v396, %v592
        %v640 = vadd.f32 %v397, %v594
        %v641 = vadd.f32 %v398, %v596
        %v642 = vadd.f32 %v399, %v600
        %v643 = vadd.f32 %v400, %v602
        %v644 = vadd.f32 %v401, %v604
        %v645 = vadd.f32 %v402, %v606
        %v646 = vadd.f32 %v403, %v610
        %v647 = vadd.f32 %v404, %v612
        %v648 = vadd.f32 %v405, %v614
        %v649 = vadd.f32 %v406, %v616
        %v650 = vadd.f32 %v407, %v620
        %v651 = vadd.f32 %v408, %v622
        %652 = vst [vmem:[#allocation2] sm:$0xff] %v626
        %653 = vst [vmem:[#allocation2 + $0x8] sm:$0xff] %v627
        %654 = vst [vmem:[#allocation2 + $0x10] sm:$0xff] %v628
        %655 = vst [vmem:[#allocation2 + $0x18] sm:$0xff] %v629
        %656 = vst [vmem:[#allocation2 + $0x20] sm:$0xff] %v630
        %657 = vst [vmem:[#allocation2 + $0x28] sm:$0xff] %v631
        %658 = vst [vmem:[#allocation2 + $0x30] sm:$0xff] %v632
        %659 = vst [vmem:[#allocation2 + $0x38] sm:$0xff] %v633
        %660 = vst [vmem:[#allocation2 + $0x40] sm:$0xff] %v634
        %661 = vst [vmem:[#allocation2 + $0x48] sm:$0xff] %v635
        %662 = vst [vmem:[#allocation2 + $0x50] sm:$0xff] %v636
        %663 = vst [vmem:[#allocation2 + $0x58] sm:$0xff] %v637
        %664 = vst [vmem:[#allocation2 + $0x60] sm:$0xff] %v638
        %665 = vst [vmem:[#allocation2 + $0x68] sm:$0xff] %v639
        %666 = vst [vmem:[#allocation2 + $0x70] sm:$0xff] %v640
        %667 = vst [vmem:[#allocation2 + $0x78] sm:$0xff] %v641
        %668 = vst [vmem:[#allocation2 + $0x80] sm:$0xff] %v642
        %669 = vst [vmem:[#allocation2 + $0x88] sm:$0xff] %v643
        %670 = vst [vmem:[#allocation2 + $0x90] sm:$0xff] %v644
        %671 = vst [vmem:[#allocation2 + $0x98] sm:$0xff] %v645
        %672 = vst [vmem:[#allocation2 + $0xa0] sm:$0xff] %v646
        %673 = vst [vmem:[#allocation2 + $0xa8] sm:$0xff] %v647
        %674 = vst [vmem:[#allocation2 + $0xb0] sm:$0xff] %v648
        %675 = vst [vmem:[#allocation2 + $0xb8] sm:$0xff] %v649
        %676 = vst [vmem:[#allocation2 + $0xc0] sm:$0xff] %v650
        %677 = vst [vmem:[#allocation2 + $0xc8] sm:$0xff] %v651
        %p678 = scmp.eq.s32.totalorder %s21, 12
        // Predicated region
        $region75: #{alexnet_forward.9} parent=65 // pred_check
          %p679 = pneg %p678
        $region76: #{alexnet_forward.9} parent=65 // pred_check_branch
          %681 = sbr.rel (%p679) target = $region78
        $region77: #{alexnet_forward.9} parent=65 // pred_region
          %v682 = vld [vmem:[#allocation2] sm:$0xff]
          %v683 = vld [vmem:[#allocation2 + $0x8] sm:$0xff]
          %v684 = vld [vmem:[#allocation2 + $0x10] sm:$0xff]
          %v685 = vld [vmem:[#allocation2 + $0x18] sm:$0xff]
          %v686 = vld [vmem:[#allocation2 + $0x20] sm:$0xff]
          %v687 = vld [vmem:[#allocation2 + $0x28] sm:$0xff]
          %v688 = vld [vmem:[#allocation2 + $0x30] sm:$0xff]
          %v689 = vld [vmem:[#allocation2 + $0x38] sm:$0xff]
          %v690 = vld [vmem:[#allocation2 + $0x40] sm:$0xff]
          %v691 = vld [vmem:[#allocation2 + $0x48] sm:$0xff]
          %v692 = vld [vmem:[#allocation2 + $0x50] sm:$0xff]
          %v693 = vld [vmem:[#allocation2 + $0x58] sm:$0xff]
          %v694 = vld [vmem:[#allocation2 + $0x60] sm:$0xff]
          %v695 = vld [vmem:[#allocation2 + $0x68] sm:$0xff]
          %v696 = vld [vmem:[#allocation2 + $0x70] sm:$0xff]
          %v697 = vld [vmem:[#allocation2 + $0x78] sm:$0xff]
          %v698 = vld [vmem:[#allocation2 + $0x80] sm:$0xff]
          %v699 = vld [vmem:[#allocation2 + $0x88] sm:$0xff]
          %v700 = vld [vmem:[#allocation2 + $0x90] sm:$0xff]
          %v701 = vld [vmem:[#allocation2 + $0x98] sm:$0xff]
          %v702 = vld [vmem:[#allocation2 + $0xa0] sm:$0xff]
          %v703 = vld [vmem:[#allocation2 + $0xa8] sm:$0xff]
          %v704 = vld [vmem:[#allocation2 + $0xb0] sm:$0xff]
          %v705 = vld [vmem:[#allocation2 + $0xb8] sm:$0xff]
          %v706 = vld [vmem:[#allocation2 + $0xc0] sm:$0xff]
          %v707 = vld [vmem:[#allocation2 + $0xc8] sm:$0xff]
          %v708 = vld [vmem:[%s338] sm:$0x3]
          %v710 = vlaneseq
          %v711 = vshrl.u32 %v710, 7
          %v712 = vsub.s32 0, %v711
          %v713 = vrot.slane %v708, %v712
          %v714 = vlaneseq
          %v715 = vshrl.u32 %v714, 7
          %v716 = vsub.s32 1, %v715
          %v717 = vrot.slane %v708, %v716
          %v720 = vadd.f32 %v682, %v713
          %v721 = vadd.f32 %v683, %v717
          %v722 = vadd.f32 %v684, %v713
          %v723 = vadd.f32 %v685, %v717
          %v724 = vadd.f32 %v686, %v713
          %v725 = vadd.f32 %v687, %v717
          %v726 = vadd.f32 %v688, %v713
          %v727 = vadd.f32 %v689, %v717
          %v728 = vadd.f32 %v690, %v713
          %v729 = vadd.f32 %v691, %v717
          %v730 = vadd.f32 %v692, %v713
          %v731 = vadd.f32 %v693, %v717
          %v732 = vadd.f32 %v694, %v713
          %v733 = vadd.f32 %v695, %v717
          %v734 = vadd.f32 %v696, %v713
          %v735 = vadd.f32 %v697, %v717
          %v736 = vadd.f32 %v698, %v713
          %v737 = vadd.f32 %v699, %v717
          %v738 = vadd.f32 %v700, %v713
          %v739 = vadd.f32 %v701, %v717
          %v740 = vadd.f32 %v702, %v713
          %v741 = vadd.f32 %v703, %v717
          %v742 = vadd.f32 %v704, %v713
          %v743 = vadd.f32 %v705, %v717
          %v744 = vadd.f32 %v706, %v713
          %v745 = vadd.f32 %v707, %v717
          %v746 = vmax.f32 %v720, 0.0
          %v747 = vmax.f32 %v721, 0.0
          %v748 = vmax.f32 %v722, 0.0
          %v749 = vmax.f32 %v723, 0.0
          %v750 = vmax.f32 %v724, 0.0
          %v751 = vmax.f32 %v725, 0.0
          %v752 = vmax.f32 %v726, 0.0
          %v753 = vmax.f32 %v727, 0.0
          %v754 = vmax.f32 %v728, 0.0
          %v755 = vmax.f32 %v729, 0.0
          %v756 = vmax.f32 %v730, 0.0
          %v757 = vmax.f32 %v731, 0.0
          %v758 = vmax.f32 %v732, 0.0
          %v759 = vmax.f32 %v733, 0.0
          %v760 = vmax.f32 %v734, 0.0
          %v761 = vmax.f32 %v735, 0.0
          %v762 = vmax.f32 %v736, 0.0
          %v763 = vmax.f32 %v737, 0.0
          %v764 = vmax.f32 %v738, 0.0
          %v765 = vmax.f32 %v739, 0.0
          %v766 = vmax.f32 %v740, 0.0
          %v767 = vmax.f32 %v741, 0.0
          %v768 = vmax.f32 %v742, 0.0
          %v769 = vmax.f32 %v743, 0.0
          %v770 = vmax.f32 %v744, 0.0
          %v771 = vmax.f32 %v745, 0.0
          %772 = vst [vmem:[%s349] sm:$0xff] %v746
          %773 = vst [vmem:[%s349 + $0x8] sm:$0xff] %v747
          %774 = vst [vmem:[%s349 + $0x10] sm:$0xff] %v748
          %775 = vst [vmem:[%s349 + $0x18] sm:$0xff] %v749
          %776 = vst [vmem:[%s349 + $0x20] sm:$0xff] %v750
          %777 = vst [vmem:[%s349 + $0x28] sm:$0xff] %v751
          %778 = vst [vmem:[%s349 + $0x30] sm:$0xff] %v752
          %779 = vst [vmem:[%s349 + $0x38] sm:$0xff] %v753
          %780 = vst [vmem:[%s349 + $0x40] sm:$0xff] %v754
          %781 = vst [vmem:[%s349 + $0x48] sm:$0xff] %v755
          %782 = vst [vmem:[%s349 + $0x50] sm:$0xff] %v756
          %783 = vst [vmem:[%s349 + $0x58] sm:$0xff] %v757
          %784 = vst [vmem:[%s349 + $0x60] sm:$0xff] %v758
          %785 = vst [vmem:[%s349 + $0x68] sm:$0xff] %v759
          %786 = vst [vmem:[%s349 + $0x70] sm:$0xff] %v760
          %787 = vst [vmem:[%s349 + $0x78] sm:$0xff] %v761
          %788 = vst [vmem:[%s349 + $0x80] sm:$0xff] %v762
          %789 = vst [vmem:[%s349 + $0x88] sm:$0xff] %v763
          %790 = vst [vmem:[%s349 + $0x90] sm:$0xff] %v764
          %791 = vst [vmem:[%s349 + $0x98] sm:$0xff] %v765
          %792 = vst [vmem:[%s349 + $0xa0] sm:$0xff] %v766
          %793 = vst [vmem:[%s349 + $0xa8] sm:$0xff] %v767
          %794 = vst [vmem:[%s349 + $0xb0] sm:$0xff] %v768
          %795 = vst [vmem:[%s349 + $0xb8] sm:$0xff] %v769
          %796 = vst [vmem:[%s349 + $0xc0] sm:$0xff] %v770
          %797 = vst [vmem:[%s349 + $0xc8] sm:$0xff] %v771
        $region78: #{alexnet_forward.9} parent=65 // pred_fallthru
          _
        %s798 = smul.u32 13, %s19
        %s799 = smul.u32 2, %s20
        %p800 = scmp.lt.s32.totalorder %s798, 12
        %s801 = scalar_select %p800, %s798, 12
        %p802 = scmp.lt.s32.totalorder %s799, 1
        %s803 = scalar_select %p802, %s799, 1
        %s804 = smul.addr %s801, 2
        %s805 = sadd.s32 %s803, %s804
        %s806 = smul.addr %s805, 8
        %s807 = scalar_lea.vmem %s3, %s806
        // Predicated region
        $region79: #{alexnet_forward.9} parent=65 // pred_check
          %p808 = pneg %p135
        $region80: #{alexnet_forward.9} parent=65 // pred_check_branch
          %810 = sbr.rel (%p808) target = $region82
        $region81: #{alexnet_forward.9} parent=65 // pred_region
          %s811 = smul.u32 13, %s19
          %s812 = smul.u32 2, %s20
        $region82: #{alexnet_forward.9} parent=65 // pred_fallthru
          _
        // Predicated region
        $region83: #{alexnet_forward.9} parent=65 // pred_check
          %p813 = pneg %p135
        $region84: #{alexnet_forward.9} parent=65 // pred_check_branch
          %815 = sbr.rel (%p813) target = $region86
        $region85: #{alexnet_forward.9} parent=65 // pred_region
          %s816 = smul.u32 13, %s19
          %s817 = smul.u32 2, %s20
          %p818 = scmp.lt.s32.totalorder %s816, 12
          %s819 = scalar_select %p818, %s816, 12
          %p820 = scmp.lt.s32.totalorder %s817, 1
          %s821 = scalar_select %p820, %s817, 1
          %s822 = smul.addr %s819, 2
          %s823 = sadd.s32 %s821, %s822
          %s824 = smul.addr %s823, 8
          %s825 = scalar_lea.vmem %s3, %s824
        $region86: #{alexnet_forward.9} parent=65 // pred_fallthru
          _
      $region66: #{alexnet_forward.9} parent=5 // pred_fallthru
        _
      %p826 = scmp.le.s32.totalorder 2, %s9
      // Predicated region
      $region87: #{alexnet_forward.9} parent=5 // pred_check
        %p827 = pneg %p826
      $region88: #{alexnet_forward.9} parent=5 // pred_check_branch
        %829 = sbr.rel (%p827) target = $region90
      $region89: #{alexnet_forward.9} parent=5 // pred_region
        %s830 = ssub.s32 %s9, 2
      $region90: #{alexnet_forward.9} parent=5 // pred_fallthru
        _
    $region6: #{alexnet_forward.9} parent=1 // loop_footer
      %s13 = sadd.s32 1, %s9
    $region7: #{alexnet_forward.9} parent=1 // loop_footer_branch
      %8 = sbr.rel target = $region3
    $region8: #{alexnet_forward.9} parent=1 // loop_exit
      _

// kernel: alexnet_forward.10
$region0: #{alexnet_forward.10}
  #allocation0 [shape = 'u32[]', space=smem, size = 0x4, offset = 0x4, fixed_abs, tag = 'smem constant byte address 0x4 - core index']
  #allocation1 [shape = 'u32[144,128]{1,0:T(1,128)}', space=vmem, size = 0x12000, scoped, tag = 'internal scratch']
  #allocation2 [shape = 'f32[24,384]{1,0:T(8,128)}', space=vmem, size = 0x9000, scoped, tag = 'scratch operand']
  %s0 = inlined_call_operand.vmem [shape: f32[24,1792], index: 0, kind: input, shape index: {}]
  %s1 = inlined_call_operand.vmem [shape: bf16[1792,384], index: 1, kind: input, shape index: {}]
  %s2 = inlined_call_operand.vmem [shape: f32[1,384], index: 2, kind: input, shape index: {}]
  %s3 = inlined_call_operand.vmem [shape: f32[24,384], index: 3, kind: output, shape index: {}]
  %s4 = sld [smem:[#allocation0]]
  $region76: #{alexnet_forward.10} parent=0
    _
  %s6 = ssub.s32 1, %s4
  %s7 = scalar_select 0, %s6, %s4
  $region1: #{alexnet_forward.10} parent=0
    #allocation3 [shape = 'u8[49152]{0}', space=vmem, size = 0xc000, scoped, tag = 'input window, operand 0']
    loop: start=0, step=1, limit=9
    $region2: #{alexnet_forward.10} parent=1 // loop_pre_header
      _
    $region3: #{alexnet_forward.10} parent=1 // loop_header
      %s9 = sphi 0, %s13
      %p10 = scmp.ge.s32.totalorder %s9, 9
      %s16 = sphi 0, %s35
      %s17 = sphi 0, %s31
      %s18 = sphi 0, %s27
      %s19 = sphi 0, %s16
      %s20 = sphi 0, %s17
      %s21 = sphi 0, %s18
      %s22 = sphi 0, %s19
      %s23 = sphi 0, %s20
      %s24 = sphi 0, %s21
      %s40 = sphi 0, %s42
      %s43 = sphi 0, %s40
      %s44 = sphi 0, %s43
      %s60 = sphi 0, %s44
      %s68 = sphi 0, %s70
      %s71 = sphi 0, %s68
      %s72 = sphi 0, %s71
      %s88 = sphi 0, %s72
      %s94 = sphi 0, %s96
      %s97 = sphi 0, %s94
      %s98 = sphi 0, %s97
      %s114 = sphi 0, %s98
      %s122 = sphi 0, %s124
      %s125 = sphi 0, %s122
      %s126 = sphi 0, %s125
      %s142 = sphi 0, %s126
    $region4: #{alexnet_forward.10} parent=1 // loop_header_branch
      %12 = sbr.rel (%p10) target = $region8
    $region5: #{alexnet_forward.10} parent=1 // loop_body
      %s14 = ssub.s32 %s9, 1
      %s15 = ssub.s32 %s9, 2
      %s25 = sadd.s32 1, %s18
      %p26 = scmp.ge.s32.totalorder %s25, 7
      %s27 = scalar_select %p26, 0, %s25
      %s28 = sadd.s32 1, %s17
      %s29 = scalar_select %p26, %s28, %s17
      %p30 = scmp.ge.s32.totalorder %s29, 1
      %s31 = scalar_select %p30, 0, %s29
      %s32 = sadd.s32 1, %s16
      %s33 = scalar_select %p30, %s32, %s16
      %p34 = scmp.ge.s32.totalorder %s33, 1
      %s35 = scalar_select %p34, 0, %s33
      %s36 = ssub.s32 %s16, %s35
      %s37 = ssub.s32 %s18, %s27
      %s38 = sor.u32 %s36, %s37
      %p39 = scmp.eq.s32.totalorder %s38, 0
      %s41 = sadd.s32 %s40, 1
      %s42 = scalar_select %p39, %s40, %s41
      %p45 = pneg %p39
      %p46 = scmp.eq.s32.totalorder %s9, 6
      %p47 = por %p45, %p46
      %p48 = scmp.ne.s32.totalorder %s40, %s43
      %p49 = scmp.eq.s32.totalorder %s9, 0
      %p50 = por %p48, %p49
      %p51 = scmp.ne.s32.totalorder %s40, %s43
      %p52 = scmp.eq.s32.totalorder %s14, 6
      %p53 = por %p51, %p52
      %p54 = scmp.ne.s32.totalorder %s43, %s44
      %p55 = scmp.eq.s32.totalorder %s14, 0
      %p56 = por %p54, %p55
      %p57 = scmp.ne.s32.totalorder %s43, %s44
      %p58 = scmp.eq.s32.totalorder %s15, 6
      %p59 = por %p57, %p58
      %p61 = scmp.ne.s32.totalorder %s44, %s60
      %p62 = scmp.eq.s32.totalorder %s15, 0
      %p63 = por %p61, %p62
      %s64 = ssub.s32 %s18, %s27
      %s65 = ssub.s32 %s17, %s31
      %s66 = sor.u32 %s64, %s65
      %p67 = scmp.eq.s32.totalorder %s66, 0
      %s69 = sadd.s32 %s68, 1
      %s70 = scalar_select %p67, %s68, %s69
      %p73 = pneg %p67
      %p74 = scmp.eq.s32.totalorder %s9, 6
      %p75 = por %p73, %p74
      %p76 = scmp.ne.s32.totalorder %s68, %s71
      %p77 = scmp.eq.s32.totalorder %s9, 0
      %p78 = por %p76, %p77
      %p79 = scmp.ne.s32.totalorder %s68, %s71
      %p80 = scmp.eq.s32.totalorder %s14, 6
      %p81 = por %p79, %p80
      %p82 = scmp.ne.s32.totalorder %s71, %s72
      %p83 = scmp.eq.s32.totalorder %s14, 0
      %p84 = por %p82, %p83
      %p85 = scmp.ne.s32.totalorder %s71, %s72
      %p86 = scmp.eq.s32.totalorder %s15, 6
      %p87 = por %p85, %p86
      %p89 = scmp.ne.s32.totalorder %s72, %s88
      %p90 = scmp.eq.s32.totalorder %s15, 0
      %p91 = por %p89, %p90
      %s92 = ssub.s32 %s17, %s31
      %p93 = scmp.eq.s32.totalorder %s92, 0
      %s95 = sadd.s32 %s94, 1
      %s96 = scalar_select %p93, %s94, %s95
      %p99 = pneg %p93
      %p100 = scmp.eq.s32.totalorder %s9, 6
      %p101 = por %p99, %p100
      %p102 = scmp.ne.s32.totalorder %s94, %s97
      %p103 = scmp.eq.s32.totalorder %s9, 0
      %p104 = por %p102, %p103
      %p105 = scmp.ne.s32.totalorder %s94, %s97
      %p106 = scmp.eq.s32.totalorder %s14, 6
      %p107 = por %p105, %p106
      %p108 = scmp.ne.s32.totalorder %s97, %s98
      %p109 = scmp.eq.s32.totalorder %s14, 0
      %p110 = por %p108, %p109
      %p111 = scmp.ne.s32.totalorder %s97, %s98
      %p112 = scmp.eq.s32.totalorder %s15, 6
      %p113 = por %p111, %p112
      %p115 = scmp.ne.s32.totalorder %s98, %s114
      %p116 = scmp.eq.s32.totalorder %s15, 0
      %p117 = por %p115, %p116
      %s118 = ssub.s32 %s16, %s35
      %s119 = ssub.s32 %s17, %s31
      %s120 = sor.u32 %s118, %s119
      %p121 = scmp.eq.s32.totalorder %s120, 0
      %s123 = sadd.s32 %s122, 1
      %s124 = scalar_select %p121, %s122, %s123
      %p127 = pneg %p121
      %p128 = scmp.eq.s32.totalorder %s9, 6
      %p129 = por %p127, %p128
      %p130 = scmp.ne.s32.totalorder %s122, %s125
      %p131 = scmp.eq.s32.totalorder %s9, 0
      %p132 = por %p130, %p131
      %p133 = scmp.ne.s32.totalorder %s122, %s125
      %p134 = scmp.eq.s32.totalorder %s14, 6
      %p135 = por %p133, %p134
      %p136 = scmp.ne.s32.totalorder %s125, %s126
      %p137 = scmp.eq.s32.totalorder %s14, 0
      %p138 = por %p136, %p137
      %p139 = scmp.ne.s32.totalorder %s125, %s126
      %p140 = scmp.eq.s32.totalorder %s15, 6
      %p141 = por %p139, %p140
      %p143 = scmp.ne.s32.totalorder %s126, %s142
      %p144 = scmp.eq.s32.totalorder %s15, 0
      %p145 = por %p143, %p144
      %p146 = scmp.le.s32.totalorder 1, %s9
      %p147 = scmp.lt.s32.totalorder %s9, 8
      %p148 = pnand %p146, %p147
      %p149 = pneg %p148
      // Predicated region
      $region9: #{alexnet_forward.10} parent=5 // pred_check
        _
      $region10: #{alexnet_forward.10} parent=5 // pred_check_branch
        %151 = sbr.rel (%p148) target = $region12
      $region11: #{alexnet_forward.10} parent=5 // pred_region
        %s152 = ssub.s32 %s9, 1
        // Predicated region
        $region13: #{alexnet_forward.10} parent=11 // pred_check
          %p153 = pneg %p110
        $region14: #{alexnet_forward.10} parent=11 // pred_check_branch
          %155 = sbr.rel (%p153) target = $region16
        $region15: #{alexnet_forward.10} parent=11 // pred_region
          %s156 = smul.u32 3, %s20
          %p157 = scmp.lt.s32.totalorder %s156, 2
          %s158 = scalar_select %p157, %s156, 2
          %s159 = scalar_lea.vmem %s2, %s158
          %s160 = smul.u32 3, %s20
        $region16: #{alexnet_forward.10} parent=11 // pred_fallthru
          _
      $region12: #{alexnet_forward.10} parent=5 // pred_fallthru
        _
      %p161 = scmp.lt.s32.totalorder %s9, 7
      // Predicated region
      $region17: #{alexnet_forward.10} parent=5 // pred_check
        %p162 = pneg %p161
      $region18: #{alexnet_forward.10} parent=5 // pred_check_branch
        %164 = sbr.rel (%p162) target = $region20
      $region19: #{alexnet_forward.10} parent=5 // pred_region
        // Predicated region
        $region21: #{alexnet_forward.10} parent=19 // pred_check
          %p165 = pneg %p50
        $region22: #{alexnet_forward.10} parent=19 // pred_check_branch
          %167 = sbr.rel (%p165) target = $region24
        $region23: #{alexnet_forward.10} parent=19 // pred_region
          %s168 = sand.u32 %s40, 1
          %s169 = sand.u32 %s40, 1
          %s170 = smul.addr %s169, 48
          %s171 = scalar_lea.vmem [#allocation3], %s170
          %s172 = smul.u32 3, %s16
          %s173 = smul.u32 2, %s18
          %s174 = smul.addr %s172, 14
          %s175 = sadd.s32 %s173, %s174
          %s176 = smul.addr %s175, 8
          %s177 = scalar_lea.vmem %s0, %s176
          // Predicated region
          $region25: #{alexnet_forward.10} parent=23 // pred_check
            _
          $region26: #{alexnet_forward.10} parent=23 // pred_check_branch
            %179 = sbr.rel (0) target = $region28
          $region27: #{alexnet_forward.10} parent=23 // pred_region
            // Predicated region
            $region29: #{alexnet_forward.10} parent=27 // pred_check
              _
            $region30: #{alexnet_forward.10} parent=27 // pred_check_branch
              %181 = sbr.rel (0) target = $region32
            $region31: #{alexnet_forward.10} parent=27 // pred_region
              loop: start=0, step=1, limit=1
              $region33: #{alexnet_forward.10} parent=31 // loop_pre_header
                _
              $region34: #{alexnet_forward.10} parent=31 // loop_header
                %s183 = sphi 0, %s187
                %p184 = scmp.ge.s32.totalorder %s183, 1
                %s188 = sphi %s177, %s177
                %s189 = sphi %s171, %s171
              $region35: #{alexnet_forward.10} parent=31 // loop_header_branch
                %186 = sbr.rel (%p184) target = $region39
              $region36: #{alexnet_forward.10} parent=31 // loop_body
                %v190 = vld [vmem:[%s188] sm:$0xff]
                %191 = vst [vmem:[%s189] sm:$0xff] %v190
                %v192 = vld [vmem:[%s188 + $0x8] sm:$0xff]
                %193 = vst [vmem:[%s189 + $0x8] sm:$0xff] %v192
                %v194 = vld [vmem:[%s188 + $0x70] sm:$0xff]
                %195 = vst [vmem:[%s189 + $0x10] sm:$0xff] %v194
                %v196 = vld [vmem:[%s188 + $0x78] sm:$0xff]
                %197 = vst [vmem:[%s189 + $0x18] sm:$0xff] %v196
                %v198 = vld [vmem:[%s188 + $0xe0] sm:$0xff]
                %199 = vst [vmem:[%s189 + $0x20] sm:$0xff] %v198
                %v200 = vld [vmem:[%s188 + $0xe8] sm:$0xff]
                %201 = vst [vmem:[%s189 + $0x28] sm:$0xff] %v200
              $region37: #{alexnet_forward.10} parent=31 // loop_footer
                %s187 = sadd.s32 1, %s183
              $region38: #{alexnet_forward.10} parent=31 // loop_footer_branch
                %182 = sbr.rel target = $region34
              $region39: #{alexnet_forward.10} parent=31 // loop_exit
                _
            $region32: #{alexnet_forward.10} parent=27 // pred_fallthru
              _
            // Predicated region
            $region40: #{alexnet_forward.10} parent=27 // pred_check
              _
            $region41: #{alexnet_forward.10} parent=27 // pred_check_branch
              %203 = sbr.rel target = $region43
            $region42: #{alexnet_forward.10} parent=27 // pred_region
              _
            $region43: #{alexnet_forward.10} parent=27 // pred_fallthru
              _
          $region28: #{alexnet_forward.10} parent=23 // pred_fallthru
            _
          %204 = vnop
        $region24: #{alexnet_forward.10} parent=19 // pred_fallthru
          _
        // Predicated region
        $region44: #{alexnet_forward.10} parent=19 // pred_check
          %p205 = pneg %p78
        $region45: #{alexnet_forward.10} parent=19 // pred_check_branch
          %207 = sbr.rel (%p205) target = $region47
        $region46: #{alexnet_forward.10} parent=19 // pred_region
          %s208 = smul.u32 32, %s18
          %s209 = smul.u32 3, %s17
          %p210 = scmp.lt.s32.totalorder %s208, 223
          %s211 = scalar_select %p210, %s208, 223
          %p212 = scmp.lt.s32.totalorder %s209, 2
          %s213 = scalar_select %p212, %s209, 2
          %s214 = smul.addr %s211, 3
          %s215 = sadd.s32 %s213, %s214
          %s216 = smul.addr %s215, 4
          %s217 = scalar_lea.vmem %s1, %s216
          %s218 = smul.u32 32, %s18
          %s219 = smul.u32 3, %s17
        $region47: #{alexnet_forward.10} parent=19 // pred_fallthru
          _
      $region20: #{alexnet_forward.10} parent=5 // pred_fallthru
        _
      %p220 = scmp.le.s32.totalorder 1, %s9
      %p221 = scmp.lt.s32.totalorder %s9, 8
      %p222 = pnand %p220, %p221
      %p223 = pneg %p222
      // Predicated region
      $region48: #{alexnet_forward.10} parent=5 // pred_check
        _
      $region49: #{alexnet_forward.10} parent=5 // pred_check_branch
        %225 = sbr.rel (%p222) target = $region51
      $region50: #{alexnet_forward.10} parent=5 // pred_region
        %s226 = ssub.s32 %s9, 1
        %s227 = sand.u32 %s43, 1
        %s228 = sand.u32 %s43, 1
        %s229 = smul.addr %s228, 48
        %s230 = scalar_lea.vmem [#allocation3], %s229
        // Predicated region
        $region52: #{alexnet_forward.10} parent=50 // pred_check
          %p231 = pneg %p56
        $region53: #{alexnet_forward.10} parent=50 // pred_check_branch
          %233 = sbr.rel (%p231) target = $region55
        $region54: #{alexnet_forward.10} parent=50 // pred_region
          _
        $region55: #{alexnet_forward.10} parent=50 // pred_fallthru
          _
        %s234 = sand.u32 %s43, 1
        %s235 = sand.u32 %s43, 1
        %s236 = smul.addr %s235, 48
        %s237 = scalar_lea.vmem [#allocation3], %s236
        %p238 = pneg %p56
        %p239 = pneg %p53
        %s240 = smul.u32 32, %s21
        %s241 = smul.u32 3, %s20
        %p242 = scmp.lt.s32.totalorder %s240, 223
        %s243 = scalar_select %p242, %s240, 223
        %p244 = scmp.lt.s32.totalorder %s241, 2
        %s245 = scalar_select %p244, %s241, 2
        %s246 = smul.addr %s243, 3
        %s247 = sadd.s32 %s245, %s246
        %s248 = smul.addr %s247, 4
        %s249 = scalar_lea.vmem %s1, %s248
        %p250 = pneg %p84
        %p251 = pneg %p81
        %s252 = smul.u32 3, %s20
        %p253 = scmp.lt.s32.totalorder %s252, 2
        %s254 = scalar_select %p253, %s252, 2
        %s255 = scalar_lea.vmem %s2, %s254
        %p256 = pneg %p110
        %p257 = pneg %p107
        %p258 = pneg %p138
        %p259 = pneg %p135
        %s260 = smul.u32 3, %s19
        %s261 = smul.u32 3, %s20
        %p262 = scmp.lt.s32.totalorder %s260, 2
        %s263 = scalar_select %p262, %s260, 2
        %p264 = scmp.lt.s32.totalorder %s261, 2
        %s265 = scalar_select %p264, %s261, 2
        %s266 = smul.addr %s263, 3
        %s267 = sadd.s32 %s265, %s266
        %s268 = smul.addr %s267, 8
        %s269 = scalar_lea.vmem %s3, %s268
        %s270 = smul.u32 3, %s19
        %s271 = smul.u32 2, %s21
        %s272 = smul.u32 32, %s21
        %s273 = smul.u32 3, %s20
        %p274 = scmp.lt.s32.totalorder %s272, 223
        %s275 = scalar_select %p274, %s272, 223
        %p276 = scmp.lt.s32.totalorder %s273, 2
        %s277 = scalar_select %p276, %s273, 2
        %s278 = smul.addr %s275, 3
        %s279 = sadd.s32 %s277, %s278
        %s280 = smul.addr %s279, 4
        %s281 = scalar_lea.vmem %s1, %s280
        %s282 = smul.u32 32, %s21
        %s283 = smul.u32 3, %s20
        %s284 = smul.u32 3, %s20
        %p285 = scmp.lt.s32.totalorder %s284, 2
        %s286 = scalar_select %p285, %s284, 2
        %s287 = scalar_lea.vmem %s2, %s286
        %s288 = smul.u32 3, %s20
        %s289 = smul.u32 3, %s19
        %s290 = smul.u32 3, %s20
        %p291 = scmp.lt.s32.totalorder %s289, 2
        %s292 = scalar_select %p291, %s289, 2
        %p293 = scmp.lt.s32.totalorder %s290, 2
        %s294 = scalar_select %p293, %s290, 2
        %s295 = smul.addr %s292, 3
        %s296 = sadd.s32 %s294, %s295
        %s297 = smul.addr %s296, 8
        %s298 = scalar_lea.vmem %s3, %s297
        %s299 = smul.u32 3, %s19
        %s300 = smul.u32 3, %s20
        %p302 = scmp.eq.s32.totalorder %s21, 0
        // Predicated region
        $region56: #{alexnet_forward.10} parent=50 // pred_check
          %p303 = pneg %p302
        $region57: #{alexnet_forward.10} parent=50 // pred_check_branch
          %305 = sbr.rel (%p303) target = $region59
        $region58: #{alexnet_forward.10} parent=50 // pred_region
          %306 = vst [vmem:[#allocation2] sm:$0xff] 0.0
          %307 = vst [vmem:[#allocation2 + $0x8] sm:$0xff] 0.0
          %308 = vst [vmem:[#allocation2 + $0x10] sm:$0xff] 0.0
          %309 = vst [vmem:[#allocation2 + $0x18] sm:$0xff] 0.0
          %310 = vst [vmem:[#allocation2 + $0x20] sm:$0xff] 0.0
          %311 = vst [vmem:[#allocation2 + $0x28] sm:$0xff] 0.0
          %312 = vst [vmem:[#allocation2 + $0x30] sm:$0xff] 0.0
          %313 = vst [vmem:[#allocation2 + $0x38] sm:$0xff] 0.0
          %314 = vst [vmem:[#allocation2 + $0x40] sm:$0xff] 0.0
        $region59: #{alexnet_forward.10} parent=50 // pred_fallthru
          _
        %v315 = vld [vmem:[#allocation2] sm:$0xff]
        %v316 = vld [vmem:[#allocation2 + $0x8] sm:$0xff]
        %v317 = vld [vmem:[#allocation2 + $0x10] sm:$0xff]
        %v318 = vld [vmem:[#allocation2 + $0x18] sm:$0xff]
        %v319 = vld [vmem:[#allocation2 + $0x20] sm:$0xff]
        %v320 = vld [vmem:[#allocation2 + $0x28] sm:$0xff]
        %v321 = vld [vmem:[#allocation2 + $0x30] sm:$0xff]
        %v322 = vld [vmem:[#allocation2 + $0x38] sm:$0xff]
        %v323 = vld [vmem:[#allocation2 + $0x40] sm:$0xff]
        %v324 = vld [vmem:[%s230] sm:$0xff]
        %v325 = vld [vmem:[%s230 + $0x8] sm:$0xff]
        %v326 = vld [vmem:[%s230 + $0x10] sm:$0xff]
        %v327 = vld [vmem:[%s230 + $0x18] sm:$0xff]
        %v328 = vld [vmem:[%s230 + $0x20] sm:$0xff]
        %v329 = vld [vmem:[%s230 + $0x28] sm:$0xff]
        %v330 = vpack.c.bf16 %v326, %v324
        %v331 = vpack.c.bf16 %v327, %v325
        %v332 = vpack.c.bf16 %v328, %v328
        %v333 = vpack.c.bf16 %v329, %v329
        %v334 = vld [vmem:[%s281] sm:$0xff]
        %v335 = vld [vmem:[%s281 + $0x8] sm:$0xf]
        %v336 = vld [vmem:[%s281 + $0xc] sm:$0xff]
        %v337 = vld [vmem:[%s281 + $0x14] sm:$0xf]
        %v338 = vld [vmem:[%s281 + $0x18] sm:$0xff]
        %v339 = vld [vmem:[%s281 + $0x20] sm:$0xf]
        %v340 = vld [vmem:[%s281 + $0x24] sm:$0xff]
        %v341 = vld [vmem:[%s281 + $0x2c] sm:$0xf]
        %v342 = vld [vmem:[%s281 + $0x30] sm:$0xff]
        %v343 = vld [vmem:[%s281 + $0x38] sm:$0xf]
        %v344 = vld [vmem:[%s281 + $0x3c] sm:$0xff]
        %v345 = vld [vmem:[%s281 + $0x44] sm:$0xf]
        %v346 = vld [vmem:[%s281 + $0x48] sm:$0xff]
        %v347 = vld [vmem:[%s281 + $0x50] sm:$0xf]
        %v348 = vld [vmem:[%s281 + $0x54] sm:$0xff]
        %v349 = vld [vmem:[%s281 + $0x5c] sm:$0xf]
        %v350 = vld [vmem:[%s281 + $0x60] sm:$0xff]
        %v351 = vld [vmem:[%s281 + $0x68] sm:$0xf]
        %v352 = vld [vmem:[%s281 + $0x6c] sm:$0xff]
        %v353 = vld [vmem:[%s281 + $0x74] sm:$0xf]
        %v354 = vld [vmem:[%s281 + $0x78] sm:$0xff]
        %v355 = vld [vmem:[%s281 + $0x80] sm:$0xf]
        %v356 = vld [vmem:[%s281 + $0x84] sm:$0xff]
        %v357 = vld [vmem:[%s281 + $0x8c] sm:$0xf]
        %v358 = vld [vmem:[%s281 + $0x90] sm:$0xff]
        %v359 = vld [vmem:[%s281 + $0x98] sm:$0xf]
        %v360 = vld [vmem:[%s281 + $0x9c] sm:$0xff]
        %v361 = vld [vmem:[%s281 + $0xa4] sm:$0xf]
        %v362 = vld [vmem:[%s281 + $0xa8] sm:$0xff]
        %v363 = vld [vmem:[%s281 + $0xb0] sm:$0xf]
        %v364 = vld [vmem:[%s281 + $0xb4] sm:$0xff]
        %v365 = vld [vmem:[%s281 + $0xbc] sm:$0xf]
        %v366 = vld [vmem:[%s281 + $0xc0] sm:$0xff]
        %v367 = vld [vmem:[%s281 + $0xc8] sm:$0xf]
        %v368 = vld [vmem:[%s281 + $0xcc] sm:$0xff]
        %v369 = vld [vmem:[%s281 + $0xd4] sm:$0xf]
        %v370 = vld [vmem:[%s281 + $0xd8] sm:$0xff]
        %v371 = vld [vmem:[%s281 + $0xe0] sm:$0xf]
        %v372 = vld [vmem:[%s281 + $0xe4] sm:$0xff]
        %v373 = vld [vmem:[%s281 + $0xec] sm:$0xf]
        %v374 = vld [vmem:[%s281 + $0xf0] sm:$0xff]
        %v375 = vld [vmem:[%s281 + $0xf8] sm:$0xf]
        %v376 = vld [vmem:[%s281 + $0xfc] sm:$0xff]
        %v377 = vld [vmem:[%s281 + $0x104] sm:$0xf]
        %v378 = vld [vmem:[%s281 + $0x108] sm:$0xff]
        %v379 = vld [vmem:[%s281 + $0x110] sm:$0xf]
        %v380 = vld [vmem:[%s281 + $0x114] sm:$0xff]
        %v381 = vld [vmem:[%s281 + $0x11c] sm:$0xf]
        %v382 = vld [vmem:[%s281 + $0x120] sm:$0xff]
        %v383 = vld [vmem:[%s281 + $0x128] sm:$0xf]
        %v384 = vld [vmem:[%s281 + $0x12c] sm:$0xff]
        %v385 = vld [vmem:[%s281 + $0x134] sm:$0xf]
        %v386 = vld [vmem:[%s281 + $0x138] sm:$0xff]
        %v387 = vld [vmem:[%s281 + $0x140] sm:$0xf]
        %v388 = vld [vmem:[%s281 + $0x144] sm:$0xff]
        %v389 = vld [vmem:[%s281 + $0x14c] sm:$0xf]
        %v390 = vld [vmem:[%s281 + $0x150] sm:$0xff]
        %v391 = vld [vmem:[%s281 + $0x158] sm:$0xf]
        %v392 = vld [vmem:[%s281 + $0x15c] sm:$0xff]
        %v393 = vld [vmem:[%s281 + $0x164] sm:$0xf]
        %v394 = vld [vmem:[%s281 + $0x168] sm:$0xff]
        %v395 = vld [vmem:[%s281 + $0x170] sm:$0xf]
        %v396 = vld [vmem:[%s281 + $0x174] sm:$0xff]
        %v397 = vld [vmem:[%s281 + $0x17c] sm:$0xf]
        %v462 = vunpack.c.l.b16 %v334
        %v463 = vunpack.c.h.b16 %v334
        %v464 = vunpack.c.l.b16 %v335
        %v465 = vunpack.c.l.b16 %v336
        %v466 = vunpack.c.h.b16 %v336
        %v467 = vunpack.c.l.b16 %v337
        %v468 = vunpack.c.l.b16 %v338
        %v469 = vunpack.c.h.b16 %v338
        %v470 = vunpack.c.l.b16 %v339
        %v471 = vunpack.c.l.b16 %v340
        %v472 = vunpack.c.h.b16 %v340
        %v473 = vunpack.c.l.b16 %v341
        %v474 = vunpack.c.l.b16 %v342
        %v475 = vunpack.c.h.b16 %v342
        %v476 = vunpack.c.l.b16 %v343
        %v477 = vunpack.c.l.b16 %v344
        %v478 = vunpack.c.h.b16 %v344
        %v479 = vunpack.c.l.b16 %v345
        %v480 = vunpack.c.l.b16 %v346
        %v481 = vunpack.c.h.b16 %v346
        %v482 = vunpack.c.l.b16 %v347
        %v483 = vunpack.c.l.b16 %v348
        %v484 = vunpack.c.h.b16 %v348
        %v485 = vunpack.c.l.b16 %v349
        %v486 = vunpack.c.l.b16 %v350
        %v487 = vunpack.c.h.b16 %v350
        %v488 = vunpack.c.l.b16 %v351
        %v489 = vunpack.c.l.b16 %v352
        %v490 = vunpack.c.h.b16 %v352
        %v491 = vunpack.c.l.b16 %v353
        %v492 = vunpack.c.l.b16 %v354
        %v493 = vunpack.c.h.b16 %v354
        %v494 = vunpack.c.l.b16 %v355
        %v495 = vunpack.c.l.b16 %v356
        %v496 = vunpack.c.h.b16 %v356
        %v497 = vunpack.c.l.b16 %v357
        %v498 = vunpack.c.l.b16 %v358
        %v499 = vunpack.c.h.b16 %v358
        %v500 = vunpack.c.l.b16 %v359
        %v501 = vunpack.c.l.b16 %v360
        %v502 = vunpack.c.h.b16 %v360
        %v503 = vunpack.c.l.b16 %v361
        %v504 = vunpack.c.l.b16 %v362
        %v505 = vunpack.c.h.b16 %v362
        %v506 = vunpack.c.l.b16 %v363
        %v507 = vunpack.c.l.b16 %v364
        %v508 = vunpack.c.h.b16 %v364
        %v509 = vunpack.c.l.b16 %v365
        %v510 = vunpack.c.l.b16 %v366
        %v511 = vunpack.c.h.b16 %v366
        %v512 = vunpack.c.l.b16 %v367
        %v513 = vunpack.c.l.b16 %v368
        %v514 = vunpack.c.h.b16 %v368
        %v515 = vunpack.c.l.b16 %v369
        %v516 = vunpack.c.l.b16 %v370
        %v517 = vunpack.c.h.b16 %v370
        %v518 = vunpack.c.l.b16 %v371
        %v519 = vunpack.c.l.b16 %v372
        %v520 = vunpack.c.h.b16 %v372
        %v521 = vunpack.c.l.b16 %v373
        %v522 = vunpack.c.l.b16 %v374
        %v523 = vunpack.c.h.b16 %v374
        %v524 = vunpack.c.l.b16 %v375
        %v525 = vunpack.c.l.b16 %v376
        %v526 = vunpack.c.h.b16 %v376
        %v527 = vunpack.c.l.b16 %v377
        %v528 = vunpack.c.l.b16 %v378
        %v529 = vunpack.c.h.b16 %v378
        %v530 = vunpack.c.l.b16 %v379
        %v531 = vunpack.c.l.b16 %v380
        %v532 = vunpack.c.h.b16 %v380
        %v533 = vunpack.c.l.b16 %v381
        %v534 = vunpack.c.l.b16 %v382
        %v535 = vunpack.c.h.b16 %v382
        %v536 = vunpack.c.l.b16 %v383
        %v537 = vunpack.c.l.b16 %v384
        %v538 = vunpack.c.h.b16 %v384
        %v539 = vunpack.c.l.b16 %v385
        %v540 = vunpack.c.l.b16 %v386
        %v541 = vunpack.c.h.b16 %v386
        %v542 = vunpack.c.l.b16 %v387
        %v543 = vunpack.c.l.b16 %v388
        %v544 = vunpack.c.h.b16 %v388
        %v545 = vunpack.c.l.b16 %v389
        %v546 = vunpack.c.l.b16 %v390
        %v547 = vunpack.c.h.b16 %v390
        %v548 = vunpack.c.l.b16 %v391
        %v549 = vunpack.c.l.b16 %v392
        %v550 = vunpack.c.h.b16 %v392
        %v551 = vunpack.c.l.b16 %v393
        %v552 = vunpack.c.l.b16 %v394
        %v553 = vunpack.c.h.b16 %v394
        %v554 = vunpack.c.l.b16 %v395
        %v555 = vunpack.c.l.b16 %v396
        %v556 = vunpack.c.h.b16 %v396
        %v557 = vunpack.c.l.b16 %v397
        %v558 = vpack.c.b16 %v465, %v462
        %v559 = vpack.c.b16 %v466, %v463
        %v560 = vpack.c.b16 %v467, %v464
        %v561 = vpack.c.b16 %v471, %v468
        %v562 = vpack.c.b16 %v472, %v469
        %v563 = vpack.c.b16 %v473, %v470
        %v564 = vpack.c.b16 %v477, %v474
        %v565 = vpack.c.b16 %v478, %v475
        %v566 = vpack.c.b16 %v479, %v476
        %v567 = vpack.c.b16 %v483, %v480
        %v568 = vpack.c.b16 %v484, %v481
        %v569 = vpack.c.b16 %v485, %v482
        %v570 = vpack.c.b16 %v489, %v486
        %v571 = vpack.c.b16 %v490, %v487
        %v572 = vpack.c.b16 %v491, %v488
        %v573 = vpack.c.b16 %v495, %v492
        %v574 = vpack.c.b16 %v496, %v493
        %v575 = vpack.c.b16 %v497, %v494
        %v576 = vpack.c.b16 %v501, %v498
        %v577 = vpack.c.b16 %v502, %v499
        %v578 = vpack.c.b16 %v503, %v500
        %v579 = vpack.c.b16 %v507, %v504
        %v580 = vpack.c.b16 %v508, %v505
        %v581 = vpack.c.b16 %v509, %v506
        %v582 = vpack.c.b16 %v513, %v510
        %v583 = vpack.c.b16 %v514, %v511
        %v584 = vpack.c.b16 %v515, %v512
        %v585 = vpack.c.b16 %v519, %v516
        %v586 = vpack.c.b16 %v520, %v517
        %v587 = vpack.c.b16 %v521, %v518
        %v588 = vpack.c.b16 %v525, %v522
        %v589 = vpack.c.b16 %v526, %v523
        %v590 = vpack.c.b16 %v527, %v524
        %v591 = vpack.c.b16 %v531, %v528
        %v592 = vpack.c.b16 %v532, %v529
        %v593 = vpack.c.b16 %v533, %v530
        %v594 = vpack.c.b16 %v537, %v534
        %v595 = vpack.c.b16 %v538, %v535
        %v596 = vpack.c.b16 %v539, %v536
        %v597 = vpack.c.b16 %v543, %v540
        %v598 = vpack.c.b16 %v544, %v541
        %v599 = vpack.c.b16 %v545, %v542
        %v600 = vpack.c.b16 %v549, %v546
        %v601 = vpack.c.b16 %v550, %v547
        %v602 = vpack.c.b16 %v551, %v548
        %v603 = vpack.c.b16 %v555, %v552
        %v604 = vpack.c.b16 %v556, %v553
        %v605 = vpack.c.b16 %v557, %v554
        %654 = vmatprep.subr.bf16.mxu0 %v559
        %655 = vmatpush1.bf16.msra.mxu0 %v558
        %656 = vmatprep.subr.bf16.mxu0 %v562
        %657 = vmatpush1.bf16.msra.mxu0 %v561
        %658 = vmatprep.subr.bf16.mxu0 %v565
        %659 = vmatpush1.bf16.msra.mxu0 %v564
        %660 = vmatprep.subr.bf16.mxu0 %v568
        %661 = vmatpush1.bf16.msra.mxu0 %v567
        %662 = vmatprep.subr.bf16.mxu0 %v571
        %663 = vmatpush1.bf16.msra.mxu0 %v570
        %664 = vmatprep.subr.bf16.mxu0 %v574
        %665 = vmatpush1.bf16.msra.mxu0 %v573
        %666 = vmatprep.subr.bf16.mxu0 %v577
        %667 = vmatpush1.bf16.msra.mxu0 %v576
        %668 = vmatprep.subr.bf16.mxu0 %v580
        %669 = vmatpush1.bf16.msra.mxu0 %v579
        %670 = vmatprep.subr.bf16.mxu0 %v583
        %671 = vmatpush1.bf16.msra.mxu0 %v582
        %672 = vmatprep.subr.bf16.mxu0 %v586
        %673 = vmatpush1.bf16.msra.mxu0 %v585
        %674 = vmatprep.subr.bf16.mxu0 %v589
        %675 = vmatpush1.bf16.msra.mxu0 %v588
        %676 = vmatprep.subr.bf16.mxu0 %v592
        %677 = vmatpush1.bf16.msra.mxu0 %v591
        %678 = vmatprep.subr.bf16.mxu0 %v595
        %679 = vmatpush1.bf16.msra.mxu0 %v594
        %680 = vmatprep.subr.bf16.mxu0 %v598
        %681 = vmatpush1.bf16.msra.mxu0 %v597
        %682 = vmatprep.subr.bf16.mxu0 %v601
        %683 = vmatpush1.bf16.msra.mxu0 %v600
        %684 = vmatprep.subr.bf16.mxu0 %v604
        %685 = vmatpush1.bf16.msra.mxu0 %v603
        %686 = vmatprep.mubr.bf16.mxu0 %v331
        %687 = vmatmul.mubr.bf16.gmra.mrb[0].mxu0 %v330
        %v688 = vpop.f32.mrb[0].mxu0
        %v689 = vadd.f32 0.0, %v688
        %v690 = vpop.f32.mrb[0].mxu0
        %v691 = vadd.f32 0.0, %v690
        %v692 = vpop.f32.mrb[0].mxu0
        %v693 = vadd.f32 0.0, %v692
        %v694 = vpop.f32.mrb[0].mxu0
        %v695 = vadd.f32 0.0, %v694
        %696 = vmatprep.mubr.bf16.mxu0 %v333
        %697 = vmatmul.mubr.bf16.gmra.mrb[0].mxu0 %v332
        %v698 = vpop.f32.mrb[0].mxu0
        %v699 = vadd.f32 0.0, %v698
        %v700 = vpop.f32.mrb[0].mxu0
        %v701 = vadd.f32 0.0, %v700
        %v702 = vpop.f32.mrb[0].mxu0
        %v703 = vpop.f32.mrb[0].mxu0
        %704 = vdwg.mxu0
        %705 = vmatprep.subr.bf16.mxu0 0
        %706 = vmatpush1.bf16.msra.mxu0 %v560
        %707 = vmatprep.subr.bf16.mxu0 0
        %708 = vmatpush1.bf16.msra.mxu0 %v563
        %709 = vmatprep.subr.bf16.mxu0 0
        %710 = vmatpush1.bf16.msra.mxu0 %v566
        %711 = vmatprep.subr.bf16.mxu0 0
        %712 = vmatpush1.bf16.msra.mxu0 %v569
        %713 = vmatprep.subr.bf16.mxu0 0
        %714 = vmatpush1.bf16.msra.mxu0 %v572
        %715 = vmatprep.subr.bf16.mxu0 0
        %716 = vmatpush1.bf16.msra.mxu0 %v575
        %717 = vmatprep.subr.bf16.mxu0 0
        %718 = vmatpush1.bf16.msra.mxu0 %v578
        %719 = vmatprep.subr.bf16.mxu0 0
        %720 = vmatpush1.bf16.msra.mxu0 %v581
        %721 = vmatprep.subr.bf16.mxu0 0
        %722 = vmatpush1.bf16.msra.mxu0 %v584
        %723 = vmatprep.subr.bf16.mxu0 0
        %724 = vmatpush1.bf16.msra.mxu0 %v587
        %725 = vmatprep.subr.bf16.mxu0 0
        %726 = vmatpush1.bf16.msra.mxu0 %v590
        %727 = vmatprep.subr.bf16.mxu0 0
        %728 = vmatpush1.bf16.msra.mxu0 %v593
        %729 = vmatprep.subr.bf16.mxu0 0
        %730 = vmatpush1.bf16.msra.mxu0 %v596
        %731 = vmatprep.subr.bf16.mxu0 0
        %732 = vmatpush1.bf16.msra.mxu0 %v599
        %733 = vmatprep.subr.bf16.mxu0 0
        %734 = vmatpush1.bf16.msra.mxu0 %v602
        %735 = vmatprep.subr.bf16.mxu0 0
        %736 = vmatpush1.bf16.msra.mxu0 %v605
        %737 = vmatprep.mubr.bf16.mxu0 %v331
        %738 = vmatmul.mubr.bf16.gmra.mrb[0].mxu0 %v330
        %v739 = vpop.f32.mrb[0].mxu0
        %v740 = vadd.f32 0.0, %v739
        %v741 = vpop.f32.mrb[0].mxu0
        %v742 = vpop.f32.mrb[0].mxu0
        %v743 = vadd.f32 0.0, %v742
        %v744 = vpop.f32.mrb[0].mxu0
        %745 = vmatprep.mubr.bf16.mxu0 %v333
        %746 = vmatmul.mubr.bf16.gmra.mrb[0].mxu0 %v332
        %v747 = vpop.f32.mrb[0].mxu0
        %v748 = vadd.f32 0.0, %v747
        %v749 = vpop.f32.mrb[0].mxu0
        %v750 = vpop.f32.mrb[0].mxu0
        %v751 = vpop.f32.mrb[0].mxu0
        %752 = vdwg.mxu0
        %v753 = vadd.f32 %v315, %v689
        %v754 = vadd.f32 %v316, %v691
        %v755 = vadd.f32 %v317, %v740
        %v756 = vadd.f32 %v318, %v693
        %v757 = vadd.f32 %v319, %v695
        %v758 = vadd.f32 %v320, %v743
        %v759 = vadd.f32 %v321, %v699
        %v760 = vadd.f32 %v322, %v701
        %v761 = vadd.f32 %v323, %v748
        %762 = vst [vmem:[#allocation2] sm:$0xff] %v753
        %763 = vst [vmem:[#allocation2 + $0x8] sm:$0xff] %v754
        %764 = vst [vmem:[#allocation2 + $0x10] sm:$0xff] %v755
        %765 = vst [vmem:[#allocation2 + $0x18] sm:$0xff] %v756
        %766 = vst [vmem:[#allocation2 + $0x20] sm:$0xff] %v757
        %767 = vst [vmem:[#allocation2 + $0x28] sm:$0xff] %v758
        %768 = vst [vmem:[#allocation2 + $0x30] sm:$0xff] %v759
        %769 = vst [vmem:[#allocation2 + $0x38] sm:$0xff] %v760
        %770 = vst [vmem:[#allocation2 + $0x40] sm:$0xff] %v761
        %p771 = scmp.eq.s32.totalorder %s21, 6
        // Predicated region
        $region60: #{alexnet_forward.10} parent=50 // pred_check
          %p772 = pneg %p771
        $region61: #{alexnet_forward.10} parent=50 // pred_check_branch
          %774 = sbr.rel (%p772) target = $region63
        $region62: #{alexnet_forward.10} parent=50 // pred_region
          %v775 = vld [vmem:[#allocation2] sm:$0xff]
          %v776 = vld [vmem:[#allocation2 + $0x8] sm:$0xff]
          %v777 = vld [vmem:[#allocation2 + $0x10] sm:$0xff]
          %v778 = vld [vmem:[#allocation2 + $0x18] sm:$0xff]
          %v779 = vld [vmem:[#allocation2 + $0x20] sm:$0xff]
          %v780 = vld [vmem:[#allocation2 + $0x28] sm:$0xff]
          %v781 = vld [vmem:[#allocation2 + $0x30] sm:$0xff]
          %v782 = vld [vmem:[#allocation2 + $0x38] sm:$0xff]
          %v783 = vld [vmem:[#allocation2 + $0x40] sm:$0xff]
          %v784 = vld [vmem:[%s287] sm:$0x7]
          %v786 = vlaneseq
          %v787 = vshrl.u32 %v786, 7
          %v788 = vsub.s32 0, %v787
          %v789 = vrot.slane %v784, %v788
          %v790 = vlaneseq
          %v791 = vshrl.u32 %v790, 7
          %v792 = vsub.s32 1, %v791
          %v793 = vrot.slane %v784, %v792
          %v794 = vlaneseq
          %v795 = vshrl.u32 %v794, 7
          %v796 = vsub.s32 2, %v795
          %v797 = vrot.slane %v784, %v796
          %v801 = vadd.f32 %v775, %v789
          %v802 = vadd.f32 %v776, %v793
          %v803 = vadd.f32 %v777, %v797
          %v804 = vadd.f32 %v778, %v789
          %v805 = vadd.f32 %v779, %v793
          %v806 = vadd.f32 %v780, %v797
          %v807 = vadd.f32 %v781, %v789
          %v808 = vadd.f32 %v782, %v793
          %v809 = vadd.f32 %v783, %v797
          %v810 = vmax.f32 %v801, 0.0
          %v811 = vmax.f32 %v802, 0.0
          %v812 = vmax.f32 %v803, 0.0
          %v813 = vmax.f32 %v804, 0.0
          %v814 = vmax.f32 %v805, 0.0
          %v815 = vmax.f32 %v806, 0.0
          %v816 = vmax.f32 %v807, 0.0
          %v817 = vmax.f32 %v808, 0.0
          %v818 = vmax.f32 %v809, 0.0
          %819 = vst [vmem:[%s298] sm:$0xff] %v810
          %820 = vst [vmem:[%s298 + $0x8] sm:$0xff] %v811
          %821 = vst [vmem:[%s298 + $0x10] sm:$0xff] %v812
          %822 = vst [vmem:[%s298 + $0x18] sm:$0xff] %v813
          %823 = vst [vmem:[%s298 + $0x20] sm:$0xff] %v814
          %824 = vst [vmem:[%s298 + $0x28] sm:$0xff] %v815
          %825 = vst [vmem:[%s298 + $0x30] sm:$0xff] %v816
          %826 = vst [vmem:[%s298 + $0x38] sm:$0xff] %v817
          %827 = vst [vmem:[%s298 + $0x40] sm:$0xff] %v818
        $region63: #{alexnet_forward.10} parent=50 // pred_fallthru
          _
        %s828 = smul.u32 3, %s19
        %s829 = smul.u32 3, %s20
        %p830 = scmp.lt.s32.totalorder %s828, 2
        %s831 = scalar_select %p830, %s828, 2
        %p832 = scmp.lt.s32.totalorder %s829, 2
        %s833 = scalar_select %p832, %s829, 2
        %s834 = smul.addr %s831, 3
        %s835 = sadd.s32 %s833, %s834
        %s836 = smul.addr %s835, 8
        %s837 = scalar_lea.vmem %s3, %s836
        // Predicated region
        $region64: #{alexnet_forward.10} parent=50 // pred_check
          %p838 = pneg %p135
        $region65: #{alexnet_forward.10} parent=50 // pred_check_branch
          %840 = sbr.rel (%p838) target = $region67
        $region66: #{alexnet_forward.10} parent=50 // pred_region
          %s841 = smul.u32 3, %s19
          %s842 = smul.u32 3, %s20
        $region67: #{alexnet_forward.10} parent=50 // pred_fallthru
          _
        // Predicated region
        $region68: #{alexnet_forward.10} parent=50 // pred_check
          %p843 = pneg %p135
        $region69: #{alexnet_forward.10} parent=50 // pred_check_branch
          %845 = sbr.rel (%p843) target = $region71
        $region70: #{alexnet_forward.10} parent=50 // pred_region
          %s846 = smul.u32 3, %s19
          %s847 = smul.u32 3, %s20
          %p848 = scmp.lt.s32.totalorder %s846, 2
          %s849 = scalar_select %p848, %s846, 2
          %p850 = scmp.lt.s32.totalorder %s847, 2
          %s851 = scalar_select %p850, %s847, 2
          %s852 = smul.addr %s849, 3
          %s853 = sadd.s32 %s851, %s852
          %s854 = smul.addr %s853, 8
          %s855 = scalar_lea.vmem %s3, %s854
        $region71: #{alexnet_forward.10} parent=50 // pred_fallthru
          _
      $region51: #{alexnet_forward.10} parent=5 // pred_fallthru
        _
      %p856 = scmp.le.s32.totalorder 2, %s9
      // Predicated region
      $region72: #{alexnet_forward.10} parent=5 // pred_check
        %p857 = pneg %p856
      $region73: #{alexnet_forward.10} parent=5 // pred_check_branch
        %859 = sbr.rel (%p857) target = $region75
      $region74: #{alexnet_forward.10} parent=5 // pred_region
        %s860 = ssub.s32 %s9, 2
      $region75: #{alexnet_forward.10} parent=5 // pred_fallthru
        _
    $region6: #{alexnet_forward.10} parent=1 // loop_footer
      %s13 = sadd.s32 1, %s9
    $region7: #{alexnet_forward.10} parent=1 // loop_footer_branch
      %8 = sbr.rel target = $region3
    $region8: #{alexnet_forward.10} parent=1 // loop_exit
      _

// kernel: alexnet_forward.11
$region0: #{alexnet_forward.11}
  #allocation0 [shape = 'u32[]', space=smem, size = 0x4, offset = 0x4, fixed_abs, tag = 'smem constant byte address 0x4 - core index']
  #allocation1 [shape = 'u32[144,128]{1,0:T(1,128)}', space=vmem, size = 0x12000, scoped, tag = 'internal scratch']
  #allocation2 [shape = 'f32[24,256]{1,0:T(8,128)}', space=vmem, size = 0x6000, scoped, tag = 'scratch operand']
  %s0 = inlined_call_operand.vmem [shape: f32[24,3456], index: 0, kind: input, shape index: {}]
  %s1 = inlined_call_operand.vmem [shape: bf16[3456,256], index: 1, kind: input, shape index: {}]
  %s2 = inlined_call_operand.vmem [shape: f32[1,256], index: 2, kind: input, shape index: {}]
  %s3 = inlined_call_operand.vmem [shape: f32[24,256], index: 3, kind: output, shape index: {}]
  %s4 = sld [smem:[#allocation0]]
  $region76: #{alexnet_forward.11} parent=0
    _
  %s6 = ssub.s32 1, %s4
  %s7 = scalar_select 0, %s6, %s4
  $region1: #{alexnet_forward.11} parent=0
    #allocation3 [shape = 'u8[73728]{0}', space=vmem, size = 0x12000, scoped, tag = 'input window, operand 0']
    loop: start=0, step=1, limit=11
    $region2: #{alexnet_forward.11} parent=1 // loop_pre_header
      _
    $region3: #{alexnet_forward.11} parent=1 // loop_header
      %s9 = sphi 0, %s13
      %p10 = scmp.ge.s32.totalorder %s9, 11
      %s16 = sphi 0, %s35
      %s17 = sphi 0, %s31
      %s18 = sphi 0, %s27
      %s19 = sphi 0, %s16
      %s20 = sphi 0, %s17
      %s21 = sphi 0, %s18
      %s22 = sphi 0, %s19
      %s23 = sphi 0, %s20
      %s24 = sphi 0, %s21
      %s40 = sphi 0, %s42
      %s43 = sphi 0, %s40
      %s44 = sphi 0, %s43
      %s60 = sphi 0, %s44
      %s68 = sphi 0, %s70
      %s71 = sphi 0, %s68
      %s72 = sphi 0, %s71
      %s88 = sphi 0, %s72
      %s94 = sphi 0, %s96
      %s97 = sphi 0, %s94
      %s98 = sphi 0, %s97
      %s114 = sphi 0, %s98
      %s122 = sphi 0, %s124
      %s125 = sphi 0, %s122
      %s126 = sphi 0, %s125
      %s142 = sphi 0, %s126
    $region4: #{alexnet_forward.11} parent=1 // loop_header_branch
      %12 = sbr.rel (%p10) target = $region8
    $region5: #{alexnet_forward.11} parent=1 // loop_body
      %s14 = ssub.s32 %s9, 1
      %s15 = ssub.s32 %s9, 2
      %s25 = sadd.s32 1, %s18
      %p26 = scmp.ge.s32.totalorder %s25, 9
      %s27 = scalar_select %p26, 0, %s25
      %s28 = sadd.s32 1, %s17
      %s29 = scalar_select %p26, %s28, %s17
      %p30 = scmp.ge.s32.totalorder %s29, 1
      %s31 = scalar_select %p30, 0, %s29
      %s32 = sadd.s32 1, %s16
      %s33 = scalar_select %p30, %s32, %s16
      %p34 = scmp.ge.s32.totalorder %s33, 1
      %s35 = scalar_select %p34, 0, %s33
      %s36 = ssub.s32 %s16, %s35
      %s37 = ssub.s32 %s18, %s27
      %s38 = sor.u32 %s36, %s37
      %p39 = scmp.eq.s32.totalorder %s38, 0
      %s41 = sadd.s32 %s40, 1
      %s42 = scalar_select %p39, %s40, %s41
      %p45 = pneg %p39
      %p46 = scmp.eq.s32.totalorder %s9, 8
      %p47 = por %p45, %p46
      %p48 = scmp.ne.s32.totalorder %s40, %s43
      %p49 = scmp.eq.s32.totalorder %s9, 0
      %p50 = por %p48, %p49
      %p51 = scmp.ne.s32.totalorder %s40, %s43
      %p52 = scmp.eq.s32.totalorder %s14, 8
      %p53 = por %p51, %p52
      %p54 = scmp.ne.s32.totalorder %s43, %s44
      %p55 = scmp.eq.s32.totalorder %s14, 0
      %p56 = por %p54, %p55
      %p57 = scmp.ne.s32.totalorder %s43, %s44
      %p58 = scmp.eq.s32.totalorder %s15, 8
      %p59 = por %p57, %p58
      %p61 = scmp.ne.s32.totalorder %s44, %s60
      %p62 = scmp.eq.s32.totalorder %s15, 0
      %p63 = por %p61, %p62
      %s64 = ssub.s32 %s18, %s27
      %s65 = ssub.s32 %s17, %s31
      %s66 = sor.u32 %s64, %s65
      %p67 = scmp.eq.s32.totalorder %s66, 0
      %s69 = sadd.s32 %s68, 1
      %s70 = scalar_select %p67, %s68, %s69
      %p73 = pneg %p67
      %p74 = scmp.eq.s32.totalorder %s9, 8
      %p75 = por %p73, %p74
      %p76 = scmp.ne.s32.totalorder %s68, %s71
      %p77 = scmp.eq.s32.totalorder %s9, 0
      %p78 = por %p76, %p77
      %p79 = scmp.ne.s32.totalorder %s68, %s71
      %p80 = scmp.eq.s32.totalorder %s14, 8
      %p81 = por %p79, %p80
      %p82 = scmp.ne.s32.totalorder %s71, %s72
      %p83 = scmp.eq.s32.totalorder %s14, 0
      %p84 = por %p82, %p83
      %p85 = scmp.ne.s32.totalorder %s71, %s72
      %p86 = scmp.eq.s32.totalorder %s15, 8
      %p87 = por %p85, %p86
      %p89 = scmp.ne.s32.totalorder %s72, %s88
      %p90 = scmp.eq.s32.totalorder %s15, 0
      %p91 = por %p89, %p90
      %s92 = ssub.s32 %s17, %s31
      %p93 = scmp.eq.s32.totalorder %s92, 0
      %s95 = sadd.s32 %s94, 1
      %s96 = scalar_select %p93, %s94, %s95
      %p99 = pneg %p93
      %p100 = scmp.eq.s32.totalorder %s9, 8
      %p101 = por %p99, %p100
      %p102 = scmp.ne.s32.totalorder %s94, %s97
      %p103 = scmp.eq.s32.totalorder %s9, 0
      %p104 = por %p102, %p103
      %p105 = scmp.ne.s32.totalorder %s94, %s97
      %p106 = scmp.eq.s32.totalorder %s14, 8
      %p107 = por %p105, %p106
      %p108 = scmp.ne.s32.totalorder %s97, %s98
      %p109 = scmp.eq.s32.totalorder %s14, 0
      %p110 = por %p108, %p109
      %p111 = scmp.ne.s32.totalorder %s97, %s98
      %p112 = scmp.eq.s32.totalorder %s15, 8
      %p113 = por %p111, %p112
      %p115 = scmp.ne.s32.totalorder %s98, %s114
      %p116 = scmp.eq.s32.totalorder %s15, 0
      %p117 = por %p115, %p116
      %s118 = ssub.s32 %s16, %s35
      %s119 = ssub.s32 %s17, %s31
      %s120 = sor.u32 %s118, %s119
      %p121 = scmp.eq.s32.totalorder %s120, 0
      %s123 = sadd.s32 %s122, 1
      %s124 = scalar_select %p121, %s122, %s123
      %p127 = pneg %p121
      %p128 = scmp.eq.s32.totalorder %s9, 8
      %p129 = por %p127, %p128
      %p130 = scmp.ne.s32.totalorder %s122, %s125
      %p131 = scmp.eq.s32.totalorder %s9, 0
      %p132 = por %p130, %p131
      %p133 = scmp.ne.s32.totalorder %s122, %s125
      %p134 = scmp.eq.s32.totalorder %s14, 8
      %p135 = por %p133, %p134
      %p136 = scmp.ne.s32.totalorder %s125, %s126
      %p137 = scmp.eq.s32.totalorder %s14, 0
      %p138 = por %p136, %p137
      %p139 = scmp.ne.s32.totalorder %s125, %s126
      %p140 = scmp.eq.s32.totalorder %s15, 8
      %p141 = por %p139, %p140
      %p143 = scmp.ne.s32.totalorder %s126, %s142
      %p144 = scmp.eq.s32.totalorder %s15, 0
      %p145 = por %p143, %p144
      %p146 = scmp.le.s32.totalorder 1, %s9
      %p147 = scmp.lt.s32.totalorder %s9, 10
      %p148 = pnand %p146, %p147
      %p149 = pneg %p148
      // Predicated region
      $region9: #{alexnet_forward.11} parent=5 // pred_check
        _
      $region10: #{alexnet_forward.11} parent=5 // pred_check_branch
        %151 = sbr.rel (%p148) target = $region12
      $region11: #{alexnet_forward.11} parent=5 // pred_region
        %s152 = ssub.s32 %s9, 1
        // Predicated region
        $region13: #{alexnet_forward.11} parent=11 // pred_check
          %p153 = pneg %p110
        $region14: #{alexnet_forward.11} parent=11 // pred_check_branch
          %155 = sbr.rel (%p153) target = $region16
        $region15: #{alexnet_forward.11} parent=11 // pred_region
          %s156 = smul.u32 2, %s20
          %p157 = scmp.lt.s32.totalorder %s156, 1
          %s158 = scalar_select %p157, %s156, 1
          %s159 = scalar_lea.vmem %s2, %s158
          %s160 = smul.u32 2, %s20
        $region16: #{alexnet_forward.11} parent=11 // pred_fallthru
          _
      $region12: #{alexnet_forward.11} parent=5 // pred_fallthru
        _
      %p161 = scmp.lt.s32.totalorder %s9, 9
      // Predicated region
      $region17: #{alexnet_forward.11} parent=5 // pred_check
        %p162 = pneg %p161
      $region18: #{alexnet_forward.11} parent=5 // pred_check_branch
        %164 = sbr.rel (%p162) target = $region20
      $region19: #{alexnet_forward.11} parent=5 // pred_region
        // Predicated region
        $region21: #{alexnet_forward.11} parent=19 // pred_check
          %p165 = pneg %p50
        $region22: #{alexnet_forward.11} parent=19 // pred_check_branch
          %167 = sbr.rel (%p165) target = $region24
        $region23: #{alexnet_forward.11} parent=19 // pred_region
          %s168 = sand.u32 %s40, 1
          %s169 = sand.u32 %s40, 1
          %s170 = smul.addr %s169, 72
          %s171 = scalar_lea.vmem [#allocation3], %s170
          %s172 = smul.u32 3, %s16
          %s173 = smul.u32 3, %s18
          %s174 = smul.addr %s172, 27
          %s175 = sadd.s32 %s173, %s174
          %s176 = smul.addr %s175, 8
          %s177 = scalar_lea.vmem %s0, %s176
          // Predicated region
          $region25: #{alexnet_forward.11} parent=23 // pred_check
            _
          $region26: #{alexnet_forward.11} parent=23 // pred_check_branch
            %179 = sbr.rel (0) target = $region28
          $region27: #{alexnet_forward.11} parent=23 // pred_region
            // Predicated region
            $region29: #{alexnet_forward.11} parent=27 // pred_check
              _
            $region30: #{alexnet_forward.11} parent=27 // pred_check_branch
              %181 = sbr.rel (0) target = $region32
            $region31: #{alexnet_forward.11} parent=27 // pred_region
              loop: start=0, step=1, limit=1
              $region33: #{alexnet_forward.11} parent=31 // loop_pre_header
                _
              $region34: #{alexnet_forward.11} parent=31 // loop_header
                %s183 = sphi 0, %s187
                %p184 = scmp.ge.s32.totalorder %s183, 1
                %s188 = sphi %s177, %s177
                %s189 = sphi %s171, %s171
              $region35: #{alexnet_forward.11} parent=31 // loop_header_branch
                %186 = sbr.rel (%p184) target = $region39
              $region36: #{alexnet_forward.11} parent=31 // loop_body
                %v190 = vld [vmem:[%s188] sm:$0xff]
                %191 = vst [vmem:[%s189] sm:$0xff] %v190
                %v192 = vld [vmem:[%s188 + $0x8] sm:$0xff]
                %193 = vst [vmem:[%s189 + $0x8] sm:$0xff] %v192
                %v194 = vld [vmem:[%s188 + $0x10] sm:$0xff]
                %195 = vst [vmem:[%s189 + $0x10] sm:$0xff] %v194
                %v196 = vld [vmem:[%s188 + $0xd8] sm:$0xff]
                %197 = vst [vmem:[%s189 + $0x18] sm:$0xff] %v196
                %v198 = vld [vmem:[%s188 + $0xe0] sm:$0xff]
                %199 = vst [vmem:[%s189 + $0x20] sm:$0xff] %v198
                %v200 = vld [vmem:[%s188 + $0xe8] sm:$0xff]
                %201 = vst [vmem:[%s189 + $0x28] sm:$0xff] %v200
                %v202 = vld [vmem:[%s188 + $0x1b0] sm:$0xff]
                %203 = vst [vmem:[%s189 + $0x30] sm:$0xff] %v202
                %v204 = vld [vmem:[%s188 + $0x1b8] sm:$0xff]
                %205 = vst [vmem:[%s189 + $0x38] sm:$0xff] %v204
                %v206 = vld [vmem:[%s188 + $0x1c0] sm:$0xff]
                %207 = vst [vmem:[%s189 + $0x40] sm:$0xff] %v206
              $region37: #{alexnet_forward.11} parent=31 // loop_footer
                %s187 = sadd.s32 1, %s183
              $region38: #{alexnet_forward.11} parent=31 // loop_footer_branch
                %182 = sbr.rel target = $region34
              $region39: #{alexnet_forward.11} parent=31 // loop_exit
                _
            $region32: #{alexnet_forward.11} parent=27 // pred_fallthru
              _
            // Predicated region
            $region40: #{alexnet_forward.11} parent=27 // pred_check
              _
            $region41: #{alexnet_forward.11} parent=27 // pred_check_branch
              %209 = sbr.rel target = $region43
            $region42: #{alexnet_forward.11} parent=27 // pred_region
              _
            $region43: #{alexnet_forward.11} parent=27 // pred_fallthru
              _
          $region28: #{alexnet_forward.11} parent=23 // pred_fallthru
            _
          %210 = vnop
        $region24: #{alexnet_forward.11} parent=19 // pred_fallthru
          _
        // Predicated region
        $region44: #{alexnet_forward.11} parent=19 // pred_check
          %p211 = pneg %p78
        $region45: #{alexnet_forward.11} parent=19 // pred_check_branch
          %213 = sbr.rel (%p211) target = $region47
        $region46: #{alexnet_forward.11} parent=19 // pred_region
          %s214 = smul.u32 48, %s18
          %s215 = smul.u32 2, %s17
          %p216 = scmp.lt.s32.totalorder %s214, 431
          %s217 = scalar_select %p216, %s214, 431
          %p218 = scmp.lt.s32.totalorder %s215, 1
          %s219 = scalar_select %p218, %s215, 1
          %s220 = smul.addr %s217, 2
          %s221 = sadd.s32 %s219, %s220
          %s222 = smul.addr %s221, 4
          %s223 = scalar_lea.vmem %s1, %s222
          %s224 = smul.u32 48, %s18
          %s225 = smul.u32 2, %s17
        $region47: #{alexnet_forward.11} parent=19 // pred_fallthru
          _
      $region20: #{alexnet_forward.11} parent=5 // pred_fallthru
        _
      %p226 = scmp.le.s32.totalorder 1, %s9
      %p227 = scmp.lt.s32.totalorder %s9, 10
      %p228 = pnand %p226, %p227
      %p229 = pneg %p228
      // Predicated region
      $region48: #{alexnet_forward.11} parent=5 // pred_check
        _
      $region49: #{alexnet_forward.11} parent=5 // pred_check_branch
        %231 = sbr.rel (%p228) target = $region51
      $region50: #{alexnet_forward.11} parent=5 // pred_region
        %s232 = ssub.s32 %s9, 1
        %s233 = sand.u32 %s43, 1
        %s234 = sand.u32 %s43, 1
        %s235 = smul.addr %s234, 72
        %s236 = scalar_lea.vmem [#allocation3], %s235
        // Predicated region
        $region52: #{alexnet_forward.11} parent=50 // pred_check
          %p237 = pneg %p56
        $region53: #{alexnet_forward.11} parent=50 // pred_check_branch
          %239 = sbr.rel (%p237) target = $region55
        $region54: #{alexnet_forward.11} parent=50 // pred_region
          _
        $region55: #{alexnet_forward.11} parent=50 // pred_fallthru
          _
        %s240 = sand.u32 %s43, 1
        %s241 = sand.u32 %s43, 1
        %s242 = smul.addr %s241, 72
        %s243 = scalar_lea.vmem [#allocation3], %s242
        %p244 = pneg %p56
        %p245 = pneg %p53
        %s246 = smul.u32 48, %s21
        %s247 = smul.u32 2, %s20
        %p248 = scmp.lt.s32.totalorder %s246, 431
        %s249 = scalar_select %p248, %s246, 431
        %p250 = scmp.lt.s32.totalorder %s247, 1
        %s251 = scalar_select %p250, %s247, 1
        %s252 = smul.addr %s249, 2
        %s253 = sadd.s32 %s251, %s252
        %s254 = smul.addr %s253, 4
        %s255 = scalar_lea.vmem %s1, %s254
        %p256 = pneg %p84
        %p257 = pneg %p81
        %s258 = smul.u32 2, %s20
        %p259 = scmp.lt.s32.totalorder %s258, 1
        %s260 = scalar_select %p259, %s258, 1
        %s261 = scalar_lea.vmem %s2, %s260
        %p262 = pneg %p110
        %p263 = pneg %p107
        %p264 = pneg %p138
        %p265 = pneg %p135
        %s266 = smul.u32 3, %s19
        %s267 = smul.u32 2, %s20
        %p268 = scmp.lt.s32.totalorder %s266, 2
        %s269 = scalar_select %p268, %s266, 2
        %p270 = scmp.lt.s32.totalorder %s267, 1
        %s271 = scalar_select %p270, %s267, 1
        %s272 = smul.addr %s269, 2
        %s273 = sadd.s32 %s271, %s272
        %s274 = smul.addr %s273, 8
        %s275 = scalar_lea.vmem %s3, %s274
        %s276 = smul.u32 3, %s19
        %s277 = smul.u32 3, %s21
        %s278 = smul.u32 48, %s21
        %s279 = smul.u32 2, %s20
        %p280 = scmp.lt.s32.totalorder %s278, 431
        %s281 = scalar_select %p280, %s278, 431
        %p282 = scmp.lt.s32.totalorder %s279, 1
        %s283 = scalar_select %p282, %s279, 1
        %s284 = smul.addr %s281, 2
        %s285 = sadd.s32 %s283, %s284
        %s286 = smul.addr %s285, 4
        %s287 = scalar_lea.vmem %s1, %s286
        %s288 = smul.u32 48, %s21
        %s289 = smul.u32 2, %s20
        %s290 = smul.u32 2, %s20
        %p291 = scmp.lt.s32.totalorder %s290, 1
        %s292 = scalar_select %p291, %s290, 1
        %s293 = scalar_lea.vmem %s2, %s292
        %s294 = smul.u32 2, %s20
        %s295 = smul.u32 3, %s19
        %s296 = smul.u32 2, %s20
        %p297 = scmp.lt.s32.totalorder %s295, 2
        %s298 = scalar_select %p297, %s295, 2
        %p299 = scmp.lt.s32.totalorder %s296, 1
        %s300 = scalar_select %p299, %s296, 1
        %s301 = smul.addr %s298, 2
        %s302 = sadd.s32 %s300, %s301
        %s303 = smul.addr %s302, 8
        %s304 = scalar_lea.vmem %s3, %s303
        %s305 = smul.u32 3, %s19
        %s306 = smul.u32 2, %s20
        %p308 = scmp.eq.s32.totalorder %s21, 0
        // Predicated region
        $region56: #{alexnet_forward.11} parent=50 // pred_check
          %p309 = pneg %p308
        $region57: #{alexnet_forward.11} parent=50 // pred_check_branch
          %311 = sbr.rel (%p309) target = $region59
        $region58: #{alexnet_forward.11} parent=50 // pred_region
          %312 = vst [vmem:[#allocation2] sm:$0xff] 0.0
          %313 = vst [vmem:[#allocation2 + $0x8] sm:$0xff] 0.0
          %314 = vst [vmem:[#allocation2 + $0x10] sm:$0xff] 0.0
          %315 = vst [vmem:[#allocation2 + $0x18] sm:$0xff] 0.0
          %316 = vst [vmem:[#allocation2 + $0x20] sm:$0xff] 0.0
          %317 = vst [vmem:[#allocation2 + $0x28] sm:$0xff] 0.0
        $region59: #{alexnet_forward.11} parent=50 // pred_fallthru
          _
        %v318 = vld [vmem:[#allocation2] sm:$0xff]
        %v319 = vld [vmem:[#allocation2 + $0x8] sm:$0xff]
        %v320 = vld [vmem:[#allocation2 + $0x10] sm:$0xff]
        %v321 = vld [vmem:[#allocation2 + $0x18] sm:$0xff]
        %v322 = vld [vmem:[#allocation2 + $0x20] sm:$0xff]
        %v323 = vld [vmem:[#allocation2 + $0x28] sm:$0xff]
        %v324 = vld [vmem:[%s236] sm:$0xff]
        %v325 = vld [vmem:[%s236 + $0x8] sm:$0xff]
        %v326 = vld [vmem:[%s236 + $0x10] sm:$0xff]
        %v327 = vld [vmem:[%s236 + $0x18] sm:$0xff]
        %v328 = vld [vmem:[%s236 + $0x20] sm:$0xff]
        %v329 = vld [vmem:[%s236 + $0x28] sm:$0xff]
        %v330 = vld [vmem:[%s236 + $0x30] sm:$0xff]
        %v331 = vld [vmem:[%s236 + $0x38] sm:$0xff]
        %v332 = vld [vmem:[%s236 + $0x40] sm:$0xff]
        %v333 = vpack.c.bf16 %v327, %v324
        %v334 = vpack.c.bf16 %v328, %v325
        %v335 = vpack.c.bf16 %v329, %v326
        %v336 = vpack.c.bf16 %v330, %v330
        %v337 = vpack.c.bf16 %v331, %v331
        %v338 = vpack.c.bf16 %v332, %v332
        %v339 = vld [vmem:[%s287] sm:$0xff]
        %v340 = vld [vmem:[%s287 + $0x8] sm:$0xff]
        %v341 = vld [vmem:[%s287 + $0x10] sm:$0xff]
        %v342 = vld [vmem:[%s287 + $0x18] sm:$0xff]
        %v343 = vld [vmem:[%s287 + $0x20] sm:$0xff]
        %v344 = vld [vmem:[%s287 + $0x28] sm:$0xff]
        %v345 = vld [vmem:[%s287 + $0x30] sm:$0xff]
        %v346 = vld [vmem:[%s287 + $0x38] sm:$0xff]
        %v347 = vld [vmem:[%s287 + $0x40] sm:$0xff]
        %v348 = vld [vmem:[%s287 + $0x48] sm:$0xff]
        %v349 = vld [vmem:[%s287 + $0x50] sm:$0xff]
        %v350 = vld [vmem:[%s287 + $0x58] sm:$0xff]
        %v351 = vld [vmem:[%s287 + $0x60] sm:$0xff]
        %v352 = vld [vmem:[%s287 + $0x68] sm:$0xff]
        %v353 = vld [vmem:[%s287 + $0x70] sm:$0xff]
        %v354 = vld [vmem:[%s287 + $0x78] sm:$0xff]
        %v355 = vld [vmem:[%s287 + $0x80] sm:$0xff]
        %v356 = vld [vmem:[%s287 + $0x88] sm:$0xff]
        %v357 = vld [vmem:[%s287 + $0x90] sm:$0xff]
        %v358 = vld [vmem:[%s287 + $0x98] sm:$0xff]
        %v359 = vld [vmem:[%s287 + $0xa0] sm:$0xff]
        %v360 = vld [vmem:[%s287 + $0xa8] sm:$0xff]
        %v361 = vld [vmem:[%s287 + $0xb0] sm:$0xff]
        %v362 = vld [vmem:[%s287 + $0xb8] sm:$0xff]
        %v363 = vld [vmem:[%s287 + $0xc0] sm:$0xff]
        %v364 = vld [vmem:[%s287 + $0xc8] sm:$0xff]
        %v365 = vld [vmem:[%s287 + $0xd0] sm:$0xff]
        %v366 = vld [vmem:[%s287 + $0xd8] sm:$0xff]
        %v367 = vld [vmem:[%s287 + $0xe0] sm:$0xff]
        %v368 = vld [vmem:[%s287 + $0xe8] sm:$0xff]
        %v369 = vld [vmem:[%s287 + $0xf0] sm:$0xff]
        %v370 = vld [vmem:[%s287 + $0xf8] sm:$0xff]
        %v371 = vld [vmem:[%s287 + $0x100] sm:$0xff]
        %v372 = vld [vmem:[%s287 + $0x108] sm:$0xff]
        %v373 = vld [vmem:[%s287 + $0x110] sm:$0xff]
        %v374 = vld [vmem:[%s287 + $0x118] sm:$0xff]
        %v375 = vld [vmem:[%s287 + $0x120] sm:$0xff]
        %v376 = vld [vmem:[%s287 + $0x128] sm:$0xff]
        %v377 = vld [vmem:[%s287 + $0x130] sm:$0xff]
        %v378 = vld [vmem:[%s287 + $0x138] sm:$0xff]
        %v379 = vld [vmem:[%s287 + $0x140] sm:$0xff]
        %v380 = vld [vmem:[%s287 + $0x148] sm:$0xff]
        %v381 = vld [vmem:[%s287 + $0x150] sm:$0xff]
        %v382 = vld [vmem:[%s287 + $0x158] sm:$0xff]
        %v383 = vld [vmem:[%s287 + $0x160] sm:$0xff]
        %v384 = vld [vmem:[%s287 + $0x168] sm:$0xff]
        %v385 = vld [vmem:[%s287 + $0x170] sm:$0xff]
        %v386 = vld [vmem:[%s287 + $0x178] sm:$0xff]
        %v435 = vunpack.c.l.b16 %v339
        %v436 = vunpack.c.h.b16 %v339
        %v437 = vunpack.c.l.b16 %v340
        %v438 = vunpack.c.h.b16 %v340
        %v439 = vunpack.c.l.b16 %v341
        %v440 = vunpack.c.h.b16 %v341
        %v441 = vunpack.c.l.b16 %v342
        %v442 = vunpack.c.h.b16 %v342
        %v443 = vunpack.c.l.b16 %v343
        %v444 = vunpack.c.h.b16 %v343
        %v445 = vunpack.c.l.b16 %v344
        %v446 = vunpack.c.h.b16 %v344
        %v447 = vunpack.c.l.b16 %v345
        %v448 = vunpack.c.h.b16 %v345
        %v449 = vunpack.c.l.b16 %v346
        %v450 = vunpack.c.h.b16 %v346
        %v451 = vunpack.c.l.b16 %v347
        %v452 = vunpack.c.h.b16 %v347
        %v453 = vunpack.c.l.b16 %v348
        %v454 = vunpack.c.h.b16 %v348
        %v455 = vunpack.c.l.b16 %v349
        %v456 = vunpack.c.h.b16 %v349
        %v457 = vunpack.c.l.b16 %v350
        %v458 = vunpack.c.h.b16 %v350
        %v459 = vunpack.c.l.b16 %v351
        %v460 = vunpack.c.h.b16 %v351
        %v461 = vunpack.c.l.b16 %v352
        %v462 = vunpack.c.h.b16 %v352
        %v463 = vunpack.c.l.b16 %v353
        %v464 = vunpack.c.h.b16 %v353
        %v465 = vunpack.c.l.b16 %v354
        %v466 = vunpack.c.h.b16 %v354
        %v467 = vunpack.c.l.b16 %v355
        %v468 = vunpack.c.h.b16 %v355
        %v469 = vunpack.c.l.b16 %v356
        %v470 = vunpack.c.h.b16 %v356
        %v471 = vunpack.c.l.b16 %v357
        %v472 = vunpack.c.h.b16 %v357
        %v473 = vunpack.c.l.b16 %v358
        %v474 = vunpack.c.h.b16 %v358
        %v475 = vunpack.c.l.b16 %v359
        %v476 = vunpack.c.h.b16 %v359
        %v477 = vunpack.c.l.b16 %v360
        %v478 = vunpack.c.h.b16 %v360
        %v479 = vunpack.c.l.b16 %v361
        %v480 = vunpack.c.h.b16 %v361
        %v481 = vunpack.c.l.b16 %v362
        %v482 = vunpack.c.h.b16 %v362
        %v483 = vunpack.c.l.b16 %v363
        %v484 = vunpack.c.h.b16 %v363
        %v485 = vunpack.c.l.b16 %v364
        %v486 = vunpack.c.h.b16 %v364
        %v487 = vunpack.c.l.b16 %v365
        %v488 = vunpack.c.h.b16 %v365
        %v489 = vunpack.c.l.b16 %v366
        %v490 = vunpack.c.h.b16 %v366
        %v491 = vunpack.c.l.b16 %v367
        %v492 = vunpack.c.h.b16 %v367
        %v493 = vunpack.c.l.b16 %v368
        %v494 = vunpack.c.h.b16 %v368
        %v495 = vunpack.c.l.b16 %v369
        %v496 = vunpack.c.h.b16 %v369
        %v497 = vunpack.c.l.b16 %v370
        %v498 = vunpack.c.h.b16 %v370
        %v499 = vunpack.c.l.b16 %v371
        %v500 = vunpack.c.h.b16 %v371
        %v501 = vunpack.c.l.b16 %v372
        %v502 = vunpack.c.h.b16 %v372
        %v503 = vunpack.c.l.b16 %v373
        %v504 = vunpack.c.h.b16 %v373
        %v505 = vunpack.c.l.b16 %v374
        %v506 = vunpack.c.h.b16 %v374
        %v507 = vunpack.c.l.b16 %v375
        %v508 = vunpack.c.h.b16 %v375
        %v509 = vunpack.c.l.b16 %v376
        %v510 = vunpack.c.h.b16 %v376
        %v511 = vunpack.c.l.b16 %v377
        %v512 = vunpack.c.h.b16 %v377
        %v513 = vunpack.c.l.b16 %v378
        %v514 = vunpack.c.h.b16 %v378
        %v515 = vunpack.c.l.b16 %v379
        %v516 = vunpack.c.h.b16 %v379
        %v517 = vunpack.c.l.b16 %v380
        %v518 = vunpack.c.h.b16 %v380
        %v519 = vunpack.c.l.b16 %v381
        %v520 = vunpack.c.h.b16 %v381
        %v521 = vunpack.c.l.b16 %v382
        %v522 = vunpack.c.h.b16 %v382
        %v523 = vunpack.c.l.b16 %v383
        %v524 = vunpack.c.h.b16 %v383
        %v525 = vunpack.c.l.b16 %v384
        %v526 = vunpack.c.h.b16 %v384
        %v527 = vunpack.c.l.b16 %v385
        %v528 = vunpack.c.h.b16 %v385
        %v529 = vunpack.c.l.b16 %v386
        %v530 = vunpack.c.h.b16 %v386
        %v531 = vpack.c.b16 %v437, %v435
        %v532 = vpack.c.b16 %v438, %v436
        %v533 = vpack.c.b16 %v441, %v439
        %v534 = vpack.c.b16 %v442, %v440
        %v535 = vpack.c.b16 %v445, %v443
        %v536 = vpack.c.b16 %v446, %v444
        %v537 = vpack.c.b16 %v449, %v447
        %v538 = vpack.c.b16 %v450, %v448
        %v539 = vpack.c.b16 %v453, %v451
        %v540 = vpack.c.b16 %v454, %v452
        %v541 = vpack.c.b16 %v457, %v455
        %v542 = vpack.c.b16 %v458, %v456
        %v543 = vpack.c.b16 %v461, %v459
        %v544 = vpack.c.b16 %v462, %v460
        %v545 = vpack.c.b16 %v465, %v463
        %v546 = vpack.c.b16 %v466, %v464
        %v547 = vpack.c.b16 %v469, %v467
        %v548 = vpack.c.b16 %v470, %v468
        %v549 = vpack.c.b16 %v473, %v471
        %v550 = vpack.c.b16 %v474, %v472
        %v551 = vpack.c.b16 %v477, %v475
        %v552 = vpack.c.b16 %v478, %v476
        %v553 = vpack.c.b16 %v481, %v479
        %v554 = vpack.c.b16 %v482, %v480
        %v555 = vpack.c.b16 %v485, %v483
        %v556 = vpack.c.b16 %v486, %v484
        %v557 = vpack.c.b16 %v489, %v487
        %v558 = vpack.c.b16 %v490, %v488
        %v559 = vpack.c.b16 %v493, %v491
        %v560 = vpack.c.b16 %v494, %v492
        %v561 = vpack.c.b16 %v497, %v495
        %v562 = vpack.c.b16 %v498, %v496
        %v563 = vpack.c.b16 %v501, %v499
        %v564 = vpack.c.b16 %v502, %v500
        %v565 = vpack.c.b16 %v505, %v503
        %v566 = vpack.c.b16 %v506, %v504
        %v567 = vpack.c.b16 %v509, %v507
        %v568 = vpack.c.b16 %v510, %v508
        %v569 = vpack.c.b16 %v513, %v511
        %v570 = vpack.c.b16 %v514, %v512
        %v571 = vpack.c.b16 %v517, %v515
        %v572 = vpack.c.b16 %v518, %v516
        %v573 = vpack.c.b16 %v521, %v519
        %v574 = vpack.c.b16 %v522, %v520
        %v575 = vpack.c.b16 %v525, %v523
        %v576 = vpack.c.b16 %v526, %v524
        %v577 = vpack.c.b16 %v529, %v527
        %v578 = vpack.c.b16 %v530, %v528
        %627 = vmatprep.subr.bf16.mxu0 %v532
        %628 = vmatpush1.bf16.msra.mxu0 %v531
        %629 = vmatprep.subr.bf16.mxu0 %v534
        %630 = vmatpush1.bf16.msra.mxu0 %v533
        %631 = vmatprep.subr.bf16.mxu0 %v536
        %632 = vmatpush1.bf16.msra.mxu0 %v535
        %633 = vmatprep.subr.bf16.mxu0 %v538
        %634 = vmatpush1.bf16.msra.mxu0 %v537
        %635 = vmatprep.subr.bf16.mxu0 %v540
        %636 = vmatpush1.bf16.msra.mxu0 %v539
        %637 = vmatprep.subr.bf16.mxu0 %v542
        %638 = vmatpush1.bf16.msra.mxu0 %v541
        %639 = vmatprep.subr.bf16.mxu0 %v544
        %640 = vmatpush1.bf16.msra.mxu0 %v543
        %641 = vmatprep.subr.bf16.mxu0 %v546
        %642 = vmatpush1.bf16.msra.mxu0 %v545
        %643 = vmatprep.subr.bf16.mxu0 %v548
        %644 = vmatpush1.bf16.msra.mxu0 %v547
        %645 = vmatprep.subr.bf16.mxu0 %v550
        %646 = vmatpush1.bf16.msra.mxu0 %v549
        %647 = vmatprep.subr.bf16.mxu0 %v552
        %648 = vmatpush1.bf16.msra.mxu0 %v551
        %649 = vmatprep.subr.bf16.mxu0 %v554
        %650 = vmatpush1.bf16.msra.mxu0 %v553
        %651 = vmatprep.subr.bf16.mxu0 %v556
        %652 = vmatpush1.bf16.msra.mxu0 %v555
        %653 = vmatprep.subr.bf16.mxu0 %v558
        %654 = vmatpush1.bf16.msra.mxu0 %v557
        %655 = vmatprep.subr.bf16.mxu0 %v560
        %656 = vmatpush1.bf16.msra.mxu0 %v559
        %657 = vmatprep.subr.bf16.mxu0 %v562
        %658 = vmatpush1.bf16.msra.mxu0 %v561
        %659 = vmatprep.mubr.bf16.mxu0 %v334
        %660 = vmatmul.mubr.bf16.gmra.mrb[0].mxu0 %v333
        %v661 = vpop.f32.mrb[0].mxu0
        %v662 = vadd.f32 0.0, %v661
        %v663 = vpop.f32.mrb[0].mxu0
        %v664 = vadd.f32 0.0, %v663
        %v665 = vpop.f32.mrb[0].mxu0
        %v666 = vadd.f32 0.0, %v665
        %v667 = vpop.f32.mrb[0].mxu0
        %v668 = vadd.f32 0.0, %v667
        %669 = vmatprep.mubr.bf16.mxu0 %v337
        %670 = vmatmul.mubr.bf16.gmra.mrb[0].mxu0 %v336
        %v671 = vpop.f32.mrb[0].mxu0
        %v672 = vadd.f32 0.0, %v671
        %v673 = vpop.f32.mrb[0].mxu0
        %v674 = vadd.f32 0.0, %v673
        %v675 = vpop.f32.mrb[0].mxu0
        %v676 = vpop.f32.mrb[0].mxu0
        %677 = vdwg.mxu0
        %678 = vmatprep.subr.bf16.mxu0 %v564
        %679 = vmatpush1.bf16.msra.mxu0 %v563
        %680 = vmatprep.subr.bf16.mxu0 %v566
        %681 = vmatpush1.bf16.msra.mxu0 %v565
        %682 = vmatprep.subr.bf16.mxu0 %v568
        %683 = vmatpush1.bf16.msra.mxu0 %v567
        %684 = vmatprep.subr.bf16.mxu0 %v570
        %685 = vmatpush1.bf16.msra.mxu0 %v569
        %686 = vmatprep.subr.bf16.mxu0 %v572
        %687 = vmatpush1.bf16.msra.mxu0 %v571
        %688 = vmatprep.subr.bf16.mxu0 %v574
        %689 = vmatpush1.bf16.msra.mxu0 %v573
        %690 = vmatprep.subr.bf16.mxu0 %v576
        %691 = vmatpush1.bf16.msra.mxu0 %v575
        %692 = vmatprep.subr.bf16.mxu0 %v578
        %693 = vmatpush1.bf16.msra.mxu0 %v577
        %694 = vmatprep.subr.bf16.mxu0 0
        %695 = vmatpush1.bf16.msra.mxu0 0
        %696 = vmatprep.subr.bf16.mxu0 0
        %697 = vmatpush1.bf16.msra.mxu0 0
        %698 = vmatprep.subr.bf16.mxu0 0
        %699 = vmatpush1.bf16.msra.mxu0 0
        %700 = vmatprep.subr.bf16.mxu0 0
        %701 = vmatpush1.bf16.msra.mxu0 0
        %702 = vmatprep.subr.bf16.mxu0 0
        %703 = vmatpush1.bf16.msra.mxu0 0
        %704 = vmatprep.subr.bf16.mxu0 0
        %705 = vmatpush1.bf16.msra.mxu0 0
        %706 = vmatprep.subr.bf16.mxu0 0
        %707 = vmatpush1.bf16.msra.mxu0 0
        %708 = vmatprep.subr.bf16.mxu0 0
        %709 = vmatpush1.bf16.msra.mxu0 0
        %710 = vmatprep.mubr.bf16.mxu0 0
        %711 = vmatmul.mubr.bf16.gmra.mrb[0].mxu0 %v335
        %v712 = vpop.f32.mrb[0].mxu0
        %v713 = vadd.f32 %v662, %v712
        %v714 = vpop.f32.mrb[0].mxu0
        %v715 = vadd.f32 %v664, %v714
        %v716 = vpop.f32.mrb[0].mxu0
        %v717 = vadd.f32 %v666, %v716
        %v718 = vpop.f32.mrb[0].mxu0
        %v719 = vadd.f32 %v668, %v718
        %720 = vmatprep.mubr.bf16.mxu0 0
        %721 = vmatmul.mubr.bf16.gmra.mrb[0].mxu0 %v338
        %v722 = vpop.f32.mrb[0].mxu0
        %v723 = vadd.f32 %v672, %v722
        %v724 = vpop.f32.mrb[0].mxu0
        %v725 = vadd.f32 %v674, %v724
        %v726 = vpop.f32.mrb[0].mxu0
        %v727 = vpop.f32.mrb[0].mxu0
        %728 = vdwg.mxu0
        %v729 = vadd.f32 %v318, %v713
        %v730 = vadd.f32 %v319, %v715
        %v731 = vadd.f32 %v320, %v717
        %v732 = vadd.f32 %v321, %v719
        %v733 = vadd.f32 %v322, %v723
        %v734 = vadd.f32 %v323, %v725
        %735 = vst [vmem:[#allocation2] sm:$0xff] %v729
        %736 = vst [vmem:[#allocation2 + $0x8] sm:$0xff] %v730
        %737 = vst [vmem:[#allocation2 + $0x10] sm:$0xff] %v731
        %738 = vst [vmem:[#allocation2 + $0x18] sm:$0xff] %v732
        %739 = vst [vmem:[#allocation2 + $0x20] sm:$0xff] %v733
        %740 = vst [vmem:[#allocation2 + $0x28] sm:$0xff] %v734
        %p741 = scmp.eq.s32.totalorder %s21, 8
        // Predicated region
        $region60: #{alexnet_forward.11} parent=50 // pred_check
          %p742 = pneg %p741
        $region61: #{alexnet_forward.11} parent=50 // pred_check_branch
          %744 = sbr.rel (%p742) target = $region63
        $region62: #{alexnet_forward.11} parent=50 // pred_region
          %v745 = vld [vmem:[#allocation2] sm:$0xff]
          %v746 = vld [vmem:[#allocation2 + $0x8] sm:$0xff]
          %v747 = vld [vmem:[#allocation2 + $0x10] sm:$0xff]
          %v748 = vld [vmem:[#allocation2 + $0x18] sm:$0xff]
          %v749 = vld [vmem:[#allocation2 + $0x20] sm:$0xff]
          %v750 = vld [vmem:[#allocation2 + $0x28] sm:$0xff]
          %v751 = vld [vmem:[%s293] sm:$0x3]
          %v753 = vlaneseq
          %v754 = vshrl.u32 %v753, 7
          %v755 = vsub.s32 0, %v754
          %v756 = vrot.slane %v751, %v755
          %v757 = vlaneseq
          %v758 = vshrl.u32 %v757, 7
          %v759 = vsub.s32 1, %v758
          %v760 = vrot.slane %v751, %v759
          %v763 = vadd.f32 %v745, %v756
          %v764 = vadd.f32 %v746, %v760
          %v765 = vadd.f32 %v747, %v756
          %v766 = vadd.f32 %v748, %v760
          %v767 = vadd.f32 %v749, %v756
          %v768 = vadd.f32 %v750, %v760
          %v769 = vmax.f32 %v763, 0.0
          %v770 = vmax.f32 %v764, 0.0
          %v771 = vmax.f32 %v765, 0.0
          %v772 = vmax.f32 %v766, 0.0
          %v773 = vmax.f32 %v767, 0.0
          %v774 = vmax.f32 %v768, 0.0
          %775 = vst [vmem:[%s304] sm:$0xff] %v769
          %776 = vst [vmem:[%s304 + $0x8] sm:$0xff] %v770
          %777 = vst [vmem:[%s304 + $0x10] sm:$0xff] %v771
          %778 = vst [vmem:[%s304 + $0x18] sm:$0xff] %v772
          %779 = vst [vmem:[%s304 + $0x20] sm:$0xff] %v773
          %780 = vst [vmem:[%s304 + $0x28] sm:$0xff] %v774
        $region63: #{alexnet_forward.11} parent=50 // pred_fallthru
          _
        %s781 = smul.u32 3, %s19
        %s782 = smul.u32 2, %s20
        %p783 = scmp.lt.s32.totalorder %s781, 2
        %s784 = scalar_select %p783, %s781, 2
        %p785 = scmp.lt.s32.totalorder %s782, 1
        %s786 = scalar_select %p785, %s782, 1
        %s787 = smul.addr %s784, 2
        %s788 = sadd.s32 %s786, %s787
        %s789 = smul.addr %s788, 8
        %s790 = scalar_lea.vmem %s3, %s789
        // Predicated region
        $region64: #{alexnet_forward.11} parent=50 // pred_check
          %p791 = pneg %p135
        $region65: #{alexnet_forward.11} parent=50 // pred_check_branch
          %793 = sbr.rel (%p791) target = $region67
        $region66: #{alexnet_forward.11} parent=50 // pred_region
          %s794 = smul.u32 3, %s19
          %s795 = smul.u32 2, %s20
        $region67: #{alexnet_forward.11} parent=50 // pred_fallthru
          _
        // Predicated region
        $region68: #{alexnet_forward.11} parent=50 // pred_check
          %p796 = pneg %p135
        $region69: #{alexnet_forward.11} parent=50 // pred_check_branch
          %798 = sbr.rel (%p796) target = $region71
        $region70: #{alexnet_forward.11} parent=50 // pred_region
          %s799 = smul.u32 3, %s19
          %s800 = smul.u32 2, %s20
          %p801 = scmp.lt.s32.totalorder %s799, 2
          %s802 = scalar_select %p801, %s799, 2
          %p803 = scmp.lt.s32.totalorder %s800, 1
          %s804 = scalar_select %p803, %s800, 1
          %s805 = smul.addr %s802, 2
          %s806 = sadd.s32 %s804, %s805
          %s807 = smul.addr %s806, 8
          %s808 = scalar_lea.vmem %s3, %s807
        $region71: #{alexnet_forward.11} parent=50 // pred_fallthru
          _
      $region51: #{alexnet_forward.11} parent=5 // pred_fallthru
        _
      %p809 = scmp.le.s32.totalorder 2, %s9
      // Predicated region
      $region72: #{alexnet_forward.11} parent=5 // pred_check
        %p810 = pneg %p809
      $region73: #{alexnet_forward.11} parent=5 // pred_check_branch
        %812 = sbr.rel (%p810) target = $region75
      $region74: #{alexnet_forward.11} parent=5 // pred_region
        %s813 = ssub.s32 %s9, 2
      $region75: #{alexnet_forward.11} parent=5 // pred_fallthru
        _
    $region6: #{alexnet_forward.11} parent=1 // loop_footer
      %s13 = sadd.s32 1, %s9
    $region7: #{alexnet_forward.11} parent=1 // loop_footer_branch
      %8 = sbr.rel target = $region3
    $region8: #{alexnet_forward.11} parent=1 // loop_exit
      _

// kernel: alexnet_forward.12
$region0: #{alexnet_forward.12}
  #allocation0 [shape = 'u32[]', space=smem, size = 0x4, offset = 0x4, fixed_abs, tag = 'smem constant byte address 0x4 - core index']
  #allocation1 [shape = 'u32[144,128]{1,0:T(1,128)}', space=vmem, size = 0x12000, scoped, tag = 'internal scratch']
  #allocation2 [shape = 'f32[24,256]{1,0:T(8,128)}', space=vmem, size = 0x6000, scoped, tag = 'scratch operand']
  %s0 = inlined_call_operand.vmem [shape: f32[24,2304], index: 0, kind: input, shape index: {}]
  %s1 = inlined_call_operand.vmem [shape: bf16[2304,256], index: 1, kind: input, shape index: {}]
  %s2 = inlined_call_operand.vmem [shape: f32[1,256], index: 2, kind: input, shape index: {}]
  %s3 = inlined_call_operand.vmem [shape: f32[24,256], index: 3, kind: output, shape index: {}]
  %s4 = sld [smem:[#allocation0]]
  $region76: #{alexnet_forward.12} parent=0
    _
  %s6 = ssub.s32 1, %s4
  %s7 = scalar_select 0, %s6, %s4
  $region1: #{alexnet_forward.12} parent=0
    #allocation3 [shape = 'u8[73728]{0}', space=vmem, size = 0x12000, scoped, tag = 'input window, operand 0']
    loop: start=0, step=1, limit=8
    $region2: #{alexnet_forward.12} parent=1 // loop_pre_header
      _
    $region3: #{alexnet_forward.12} parent=1 // loop_header
      %s9 = sphi 0, %s13
      %p10 = scmp.ge.s32.totalorder %s9, 8
      %s16 = sphi 0, %s35
      %s17 = sphi 0, %s31
      %s18 = sphi 0, %s27
      %s19 = sphi 0, %s16
      %s20 = sphi 0, %s17
      %s21 = sphi 0, %s18
      %s22 = sphi 0, %s19
      %s23 = sphi 0, %s20
      %s24 = sphi 0, %s21
      %s40 = sphi 0, %s42
      %s43 = sphi 0, %s40
      %s44 = sphi 0, %s43
      %s60 = sphi 0, %s44
      %s68 = sphi 0, %s70
      %s71 = sphi 0, %s68
      %s72 = sphi 0, %s71
      %s88 = sphi 0, %s72
      %s94 = sphi 0, %s96
      %s97 = sphi 0, %s94
      %s98 = sphi 0, %s97
      %s114 = sphi 0, %s98
      %s122 = sphi 0, %s124
      %s125 = sphi 0, %s122
      %s126 = sphi 0, %s125
      %s142 = sphi 0, %s126
    $region4: #{alexnet_forward.12} parent=1 // loop_header_branch
      %12 = sbr.rel (%p10) target = $region8
    $region5: #{alexnet_forward.12} parent=1 // loop_body
      %s14 = ssub.s32 %s9, 1
      %s15 = ssub.s32 %s9, 2
      %s25 = sadd.s32 1, %s18
      %p26 = scmp.ge.s32.totalorder %s25, 6
      %s27 = scalar_select %p26, 0, %s25
      %s28 = sadd.s32 1, %s17
      %s29 = scalar_select %p26, %s28, %s17
      %p30 = scmp.ge.s32.totalorder %s29, 1
      %s31 = scalar_select %p30, 0, %s29
      %s32 = sadd.s32 1, %s16
      %s33 = scalar_select %p30, %s32, %s16
      %p34 = scmp.ge.s32.totalorder %s33, 1
      %s35 = scalar_select %p34, 0, %s33
      %s36 = ssub.s32 %s16, %s35
      %s37 = ssub.s32 %s18, %s27
      %s38 = sor.u32 %s36, %s37
      %p39 = scmp.eq.s32.totalorder %s38, 0
      %s41 = sadd.s32 %s40, 1
      %s42 = scalar_select %p39, %s40, %s41
      %p45 = pneg %p39
      %p46 = scmp.eq.s32.totalorder %s9, 5
      %p47 = por %p45, %p46
      %p48 = scmp.ne.s32.totalorder %s40, %s43
      %p49 = scmp.eq.s32.totalorder %s9, 0
      %p50 = por %p48, %p49
      %p51 = scmp.ne.s32.totalorder %s40, %s43
      %p52 = scmp.eq.s32.totalorder %s14, 5
      %p53 = por %p51, %p52
      %p54 = scmp.ne.s32.totalorder %s43, %s44
      %p55 = scmp.eq.s32.totalorder %s14, 0
      %p56 = por %p54, %p55
      %p57 = scmp.ne.s32.totalorder %s43, %s44
      %p58 = scmp.eq.s32.totalorder %s15, 5
      %p59 = por %p57, %p58
      %p61 = scmp.ne.s32.totalorder %s44, %s60
      %p62 = scmp.eq.s32.totalorder %s15, 0
      %p63 = por %p61, %p62
      %s64 = ssub.s32 %s18, %s27
      %s65 = ssub.s32 %s17, %s31
      %s66 = sor.u32 %s64, %s65
      %p67 = scmp.eq.s32.totalorder %s66, 0
      %s69 = sadd.s32 %s68, 1
      %s70 = scalar_select %p67, %s68, %s69
      %p73 = pneg %p67
      %p74 = scmp.eq.s32.totalorder %s9, 5
      %p75 = por %p73, %p74
      %p76 = scmp.ne.s32.totalorder %s68, %s71
      %p77 = scmp.eq.s32.totalorder %s9, 0
      %p78 = por %p76, %p77
      %p79 = scmp.ne.s32.totalorder %s68, %s71
      %p80 = scmp.eq.s32.totalorder %s14, 5
      %p81 = por %p79, %p80
      %p82 = scmp.ne.s32.totalorder %s71, %s72
      %p83 = scmp.eq.s32.totalorder %s14, 0
      %p84 = por %p82, %p83
      %p85 = scmp.ne.s32.totalorder %s71, %s72
      %p86 = scmp.eq.s32.totalorder %s15, 5
      %p87 = por %p85, %p86
      %p89 = scmp.ne.s32.totalorder %s72, %s88
      %p90 = scmp.eq.s32.totalorder %s15, 0
      %p91 = por %p89, %p90
      %s92 = ssub.s32 %s17, %s31
      %p93 = scmp.eq.s32.totalorder %s92, 0
      %s95 = sadd.s32 %s94, 1
      %s96 = scalar_select %p93, %s94, %s95
      %p99 = pneg %p93
      %p100 = scmp.eq.s32.totalorder %s9, 5
      %p101 = por %p99, %p100
      %p102 = scmp.ne.s32.totalorder %s94, %s97
      %p103 = scmp.eq.s32.totalorder %s9, 0
      %p104 = por %p102, %p103
      %p105 = scmp.ne.s32.totalorder %s94, %s97
      %p106 = scmp.eq.s32.totalorder %s14, 5
      %p107 = por %p105, %p106
      %p108 = scmp.ne.s32.totalorder %s97, %s98
      %p109 = scmp.eq.s32.totalorder %s14, 0
      %p110 = por %p108, %p109
      %p111 = scmp.ne.s32.totalorder %s97, %s98
      %p112 = scmp.eq.s32.totalorder %s15, 5
      %p113 = por %p111, %p112
      %p115 = scmp.ne.s32.totalorder %s98, %s114
      %p116 = scmp.eq.s32.totalorder %s15, 0
      %p117 = por %p115, %p116
      %s118 = ssub.s32 %s16, %s35
      %s119 = ssub.s32 %s17, %s31
      %s120 = sor.u32 %s118, %s119
      %p121 = scmp.eq.s32.totalorder %s120, 0
      %s123 = sadd.s32 %s122, 1
      %s124 = scalar_select %p121, %s122, %s123
      %p127 = pneg %p121
      %p128 = scmp.eq.s32.totalorder %s9, 5
      %p129 = por %p127, %p128
      %p130 = scmp.ne.s32.totalorder %s122, %s125
      %p131 = scmp.eq.s32.totalorder %s9, 0
      %p132 = por %p130, %p131
      %p133 = scmp.ne.s32.totalorder %s122, %s125
      %p134 = scmp.eq.s32.totalorder %s14, 5
      %p135 = por %p133, %p134
      %p136 = scmp.ne.s32.totalorder %s125, %s126
      %p137 = scmp.eq.s32.totalorder %s14, 0
      %p138 = por %p136, %p137
      %p139 = scmp.ne.s32.totalorder %s125, %s126
      %p140 = scmp.eq.s32.totalorder %s15, 5
      %p141 = por %p139, %p140
      %p143 = scmp.ne.s32.totalorder %s126, %s142
      %p144 = scmp.eq.s32.totalorder %s15, 0
      %p145 = por %p143, %p144
      %p146 = scmp.le.s32.totalorder 1, %s9
      %p147 = scmp.lt.s32.totalorder %s9, 7
      %p148 = pnand %p146, %p147
      %p149 = pneg %p148
      // Predicated region
      $region9: #{alexnet_forward.12} parent=5 // pred_check
        _
      $region10: #{alexnet_forward.12} parent=5 // pred_check_branch
        %151 = sbr.rel (%p148) target = $region12
      $region11: #{alexnet_forward.12} parent=5 // pred_region
        %s152 = ssub.s32 %s9, 1
        // Predicated region
        $region13: #{alexnet_forward.12} parent=11 // pred_check
          %p153 = pneg %p110
        $region14: #{alexnet_forward.12} parent=11 // pred_check_branch
          %155 = sbr.rel (%p153) target = $region16
        $region15: #{alexnet_forward.12} parent=11 // pred_region
          %s156 = smul.u32 2, %s20
          %p157 = scmp.lt.s32.totalorder %s156, 1
          %s158 = scalar_select %p157, %s156, 1
          %s159 = scalar_lea.vmem %s2, %s158
          %s160 = smul.u32 2, %s20
        $region16: #{alexnet_forward.12} parent=11 // pred_fallthru
          _
      $region12: #{alexnet_forward.12} parent=5 // pred_fallthru
        _
      %p161 = scmp.lt.s32.totalorder %s9, 6
      // Predicated region
      $region17: #{alexnet_forward.12} parent=5 // pred_check
        %p162 = pneg %p161
      $region18: #{alexnet_forward.12} parent=5 // pred_check_branch
        %164 = sbr.rel (%p162) target = $region20
      $region19: #{alexnet_forward.12} parent=5 // pred_region
        // Predicated region
        $region21: #{alexnet_forward.12} parent=19 // pred_check
          %p165 = pneg %p50
        $region22: #{alexnet_forward.12} parent=19 // pred_check_branch
          %167 = sbr.rel (%p165) target = $region24
        $region23: #{alexnet_forward.12} parent=19 // pred_region
          %s168 = sand.u32 %s40, 1
          %s169 = sand.u32 %s40, 1
          %s170 = smul.addr %s169, 72
          %s171 = scalar_lea.vmem [#allocation3], %s170
          %s172 = smul.u32 3, %s16
          %s173 = smul.u32 3, %s18
          %s174 = smul.addr %s172, 18
          %s175 = sadd.s32 %s173, %s174
          %s176 = smul.addr %s175, 8
          %s177 = scalar_lea.vmem %s0, %s176
          // Predicated region
          $region25: #{alexnet_forward.12} parent=23 // pred_check
            _
          $region26: #{alexnet_forward.12} parent=23 // pred_check_branch
            %179 = sbr.rel (0) target = $region28
          $region27: #{alexnet_forward.12} parent=23 // pred_region
            // Predicated region
            $region29: #{alexnet_forward.12} parent=27 // pred_check
              _
            $region30: #{alexnet_forward.12} parent=27 // pred_check_branch
              %181 = sbr.rel (0) target = $region32
            $region31: #{alexnet_forward.12} parent=27 // pred_region
              loop: start=0, step=1, limit=1
              $region33: #{alexnet_forward.12} parent=31 // loop_pre_header
                _
              $region34: #{alexnet_forward.12} parent=31 // loop_header
                %s183 = sphi 0, %s187
                %p184 = scmp.ge.s32.totalorder %s183, 1
                %s188 = sphi %s177, %s177
                %s189 = sphi %s171, %s171
              $region35: #{alexnet_forward.12} parent=31 // loop_header_branch
                %186 = sbr.rel (%p184) target = $region39
              $region36: #{alexnet_forward.12} parent=31 // loop_body
                %v190 = vld [vmem:[%s188] sm:$0xff]
                %191 = vst [vmem:[%s189] sm:$0xff] %v190
                %v192 = vld [vmem:[%s188 + $0x8] sm:$0xff]
                %193 = vst [vmem:[%s189 + $0x8] sm:$0xff] %v192
                %v194 = vld [vmem:[%s188 + $0x10] sm:$0xff]
                %195 = vst [vmem:[%s189 + $0x10] sm:$0xff] %v194
                %v196 = vld [vmem:[%s188 + $0x90] sm:$0xff]
                %197 = vst [vmem:[%s189 + $0x18] sm:$0xff] %v196
                %v198 = vld [vmem:[%s188 + $0x98] sm:$0xff]
                %199 = vst [vmem:[%s189 + $0x20] sm:$0xff] %v198
                %v200 = vld [vmem:[%s188 + $0xa0] sm:$0xff]
                %201 = vst [vmem:[%s189 + $0x28] sm:$0xff] %v200
                %v202 = vld [vmem:[%s188 + $0x120] sm:$0xff]
                %203 = vst [vmem:[%s189 + $0x30] sm:$0xff] %v202
                %v204 = vld [vmem:[%s188 + $0x128] sm:$0xff]
                %205 = vst [vmem:[%s189 + $0x38] sm:$0xff] %v204
                %v206 = vld [vmem:[%s188 + $0x130] sm:$0xff]
                %207 = vst [vmem:[%s189 + $0x40] sm:$0xff] %v206
              $region37: #{alexnet_forward.12} parent=31 // loop_footer
                %s187 = sadd.s32 1, %s183
              $region38: #{alexnet_forward.12} parent=31 // loop_footer_branch
                %182 = sbr.rel target = $region34
              $region39: #{alexnet_forward.12} parent=31 // loop_exit
                _
            $region32: #{alexnet_forward.12} parent=27 // pred_fallthru
              _
            // Predicated region
            $region40: #{alexnet_forward.12} parent=27 // pred_check
              _
            $region41: #{alexnet_forward.12} parent=27 // pred_check_branch
              %209 = sbr.rel target = $region43
            $region42: #{alexnet_forward.12} parent=27 // pred_region
              _
            $region43: #{alexnet_forward.12} parent=27 // pred_fallthru
              _
          $region28: #{alexnet_forward.12} parent=23 // pred_fallthru
            _
          %210 = vnop
        $region24: #{alexnet_forward.12} parent=19 // pred_fallthru
          _
        // Predicated region
        $region44: #{alexnet_forward.12} parent=19 // pred_check
          %p211 = pneg %p78
        $region45: #{alexnet_forward.12} parent=19 // pred_check_branch
          %213 = sbr.rel (%p211) target = $region47
        $region46: #{alexnet_forward.12} parent=19 // pred_region
          %s214 = smul.u32 48, %s18
          %s215 = smul.u32 2, %s17
          %p216 = scmp.lt.s32.totalorder %s214, 287
          %s217 = scalar_select %p216, %s214, 287
          %p218 = scmp.lt.s32.totalorder %s215, 1
          %s219 = scalar_select %p218, %s215, 1
          %s220 = smul.addr %s217, 2
          %s221 = sadd.s32 %s219, %s220
          %s222 = smul.addr %s221, 4
          %s223 = scalar_lea.vmem %s1, %s222
          %s224 = smul.u32 48, %s18
          %s225 = smul.u32 2, %s17
        $region47: #{alexnet_forward.12} parent=19 // pred_fallthru
          _
      $region20: #{alexnet_forward.12} parent=5 // pred_fallthru
        _
      %p226 = scmp.le.s32.totalorder 1, %s9
      %p227 = scmp.lt.s32.totalorder %s9, 7
      %p228 = pnand %p226, %p227
      %p229 = pneg %p228
      // Predicated region
      $region48: #{alexnet_forward.12} parent=5 // pred_check
        _
      $region49: #{alexnet_forward.12} parent=5 // pred_check_branch
        %231 = sbr.rel (%p228) target = $region51
      $region50: #{alexnet_forward.12} parent=5 // pred_region
        %s232 = ssub.s32 %s9, 1
        %s233 = sand.u32 %s43, 1
        %s234 = sand.u32 %s43, 1
        %s235 = smul.addr %s234, 72
        %s236 = scalar_lea.vmem [#allocation3], %s235
        // Predicated region
        $region52: #{alexnet_forward.12} parent=50 // pred_check
          %p237 = pneg %p56
        $region53: #{alexnet_forward.12} parent=50 // pred_check_branch
          %239 = sbr.rel (%p237) target = $region55
        $region54: #{alexnet_forward.12} parent=50 // pred_region
          _
        $region55: #{alexnet_forward.12} parent=50 // pred_fallthru
          _
        %s240 = sand.u32 %s43, 1
        %s241 = sand.u32 %s43, 1
        %s242 = smul.addr %s241, 72
        %s243 = scalar_lea.vmem [#allocation3], %s242
        %p244 = pneg %p56
        %p245 = pneg %p53
        %s246 = smul.u32 48, %s21
        %s247 = smul.u32 2, %s20
        %p248 = scmp.lt.s32.totalorder %s246, 287
        %s249 = scalar_select %p248, %s246, 287
        %p250 = scmp.lt.s32.totalorder %s247, 1
        %s251 = scalar_select %p250, %s247, 1
        %s252 = smul.addr %s249, 2
        %s253 = sadd.s32 %s251, %s252
        %s254 = smul.addr %s253, 4
        %s255 = scalar_lea.vmem %s1, %s254
        %p256 = pneg %p84
        %p257 = pneg %p81
        %s258 = smul.u32 2, %s20
        %p259 = scmp.lt.s32.totalorder %s258, 1
        %s260 = scalar_select %p259, %s258, 1
        %s261 = scalar_lea.vmem %s2, %s260
        %p262 = pneg %p110
        %p263 = pneg %p107
        %p264 = pneg %p138
        %p265 = pneg %p135
        %s266 = smul.u32 3, %s19
        %s267 = smul.u32 2, %s20
        %p268 = scmp.lt.s32.totalorder %s266, 2
        %s269 = scalar_select %p268, %s266, 2
        %p270 = scmp.lt.s32.totalorder %s267, 1
        %s271 = scalar_select %p270, %s267, 1
        %s272 = smul.addr %s269, 2
        %s273 = sadd.s32 %s271, %s272
        %s274 = smul.addr %s273, 8
        %s275 = scalar_lea.vmem %s3, %s274
        %s276 = smul.u32 3, %s19
        %s277 = smul.u32 3, %s21
        %s278 = smul.u32 48, %s21
        %s279 = smul.u32 2, %s20
        %p280 = scmp.lt.s32.totalorder %s278, 287
        %s281 = scalar_select %p280, %s278, 287
        %p282 = scmp.lt.s32.totalorder %s279, 1
        %s283 = scalar_select %p282, %s279, 1
        %s284 = smul.addr %s281, 2
        %s285 = sadd.s32 %s283, %s284
        %s286 = smul.addr %s285, 4
        %s287 = scalar_lea.vmem %s1, %s286
        %s288 = smul.u32 48, %s21
        %s289 = smul.u32 2, %s20
        %s290 = smul.u32 2, %s20
        %p291 = scmp.lt.s32.totalorder %s290, 1
        %s292 = scalar_select %p291, %s290, 1
        %s293 = scalar_lea.vmem %s2, %s292
        %s294 = smul.u32 2, %s20
        %s295 = smul.u32 3, %s19
        %s296 = smul.u32 2, %s20
        %p297 = scmp.lt.s32.totalorder %s295, 2
        %s298 = scalar_select %p297, %s295, 2
        %p299 = scmp.lt.s32.totalorder %s296, 1
        %s300 = scalar_select %p299, %s296, 1
        %s301 = smul.addr %s298, 2
        %s302 = sadd.s32 %s300, %s301
        %s303 = smul.addr %s302, 8
        %s304 = scalar_lea.vmem %s3, %s303
        %s305 = smul.u32 3, %s19
        %s306 = smul.u32 2, %s20
        %p308 = scmp.eq.s32.totalorder %s21, 0
        // Predicated region
        $region56: #{alexnet_forward.12} parent=50 // pred_check
          %p309 = pneg %p308
        $region57: #{alexnet_forward.12} parent=50 // pred_check_branch
          %311 = sbr.rel (%p309) target = $region59
        $region58: #{alexnet_forward.12} parent=50 // pred_region
          %312 = vst [vmem:[#allocation2] sm:$0xff] 0.0
          %313 = vst [vmem:[#allocation2 + $0x8] sm:$0xff] 0.0
          %314 = vst [vmem:[#allocation2 + $0x10] sm:$0xff] 0.0
          %315 = vst [vmem:[#allocation2 + $0x18] sm:$0xff] 0.0
          %316 = vst [vmem:[#allocation2 + $0x20] sm:$0xff] 0.0
          %317 = vst [vmem:[#allocation2 + $0x28] sm:$0xff] 0.0
        $region59: #{alexnet_forward.12} parent=50 // pred_fallthru
          _
        %v318 = vld [vmem:[#allocation2] sm:$0xff]
        %v319 = vld [vmem:[#allocation2 + $0x8] sm:$0xff]
        %v320 = vld [vmem:[#allocation2 + $0x10] sm:$0xff]
        %v321 = vld [vmem:[#allocation2 + $0x18] sm:$0xff]
        %v322 = vld [vmem:[#allocation2 + $0x20] sm:$0xff]
        %v323 = vld [vmem:[#allocation2 + $0x28] sm:$0xff]
        %v324 = vld [vmem:[%s236] sm:$0xff]
        %v325 = vld [vmem:[%s236 + $0x8] sm:$0xff]
        %v326 = vld [vmem:[%s236 + $0x10] sm:$0xff]
        %v327 = vld [vmem:[%s236 + $0x18] sm:$0xff]
        %v328 = vld [vmem:[%s236 + $0x20] sm:$0xff]
        %v329 = vld [vmem:[%s236 + $0x28] sm:$0xff]
        %v330 = vld [vmem:[%s236 + $0x30] sm:$0xff]
        %v331 = vld [vmem:[%s236 + $0x38] sm:$0xff]
        %v332 = vld [vmem:[%s236 + $0x40] sm:$0xff]
        %v333 = vpack.c.bf16 %v327, %v324
        %v334 = vpack.c.bf16 %v328, %v325
        %v335 = vpack.c.bf16 %v329, %v326
        %v336 = vpack.c.bf16 %v330, %v330
        %v337 = vpack.c.bf16 %v331, %v331
        %v338 = vpack.c.bf16 %v332, %v332
        %v339 = vld [vmem:[%s287] sm:$0xff]
        %v340 = vld [vmem:[%s287 + $0x8] sm:$0xff]
        %v341 = vld [vmem:[%s287 + $0x10] sm:$0xff]
        %v342 = vld [vmem:[%s287 + $0x18] sm:$0xff]
        %v343 = vld [vmem:[%s287 + $0x20] sm:$0xff]
        %v344 = vld [vmem:[%s287 + $0x28] sm:$0xff]
        %v345 = vld [vmem:[%s287 + $0x30] sm:$0xff]
        %v346 = vld [vmem:[%s287 + $0x38] sm:$0xff]
        %v347 = vld [vmem:[%s287 + $0x40] sm:$0xff]
        %v348 = vld [vmem:[%s287 + $0x48] sm:$0xff]
        %v349 = vld [vmem:[%s287 + $0x50] sm:$0xff]
        %v350 = vld [vmem:[%s287 + $0x58] sm:$0xff]
        %v351 = vld [vmem:[%s287 + $0x60] sm:$0xff]
        %v352 = vld [vmem:[%s287 + $0x68] sm:$0xff]
        %v353 = vld [vmem:[%s287 + $0x70] sm:$0xff]
        %v354 = vld [vmem:[%s287 + $0x78] sm:$0xff]
        %v355 = vld [vmem:[%s287 + $0x80] sm:$0xff]
        %v356 = vld [vmem:[%s287 + $0x88] sm:$0xff]
        %v357 = vld [vmem:[%s287 + $0x90] sm:$0xff]
        %v358 = vld [vmem:[%s287 + $0x98] sm:$0xff]
        %v359 = vld [vmem:[%s287 + $0xa0] sm:$0xff]
        %v360 = vld [vmem:[%s287 + $0xa8] sm:$0xff]
        %v361 = vld [vmem:[%s287 + $0xb0] sm:$0xff]
        %v362 = vld [vmem:[%s287 + $0xb8] sm:$0xff]
        %v363 = vld [vmem:[%s287 + $0xc0] sm:$0xff]
        %v364 = vld [vmem:[%s287 + $0xc8] sm:$0xff]
        %v365 = vld [vmem:[%s287 + $0xd0] sm:$0xff]
        %v366 = vld [vmem:[%s287 + $0xd8] sm:$0xff]
        %v367 = vld [vmem:[%s287 + $0xe0] sm:$0xff]
        %v368 = vld [vmem:[%s287 + $0xe8] sm:$0xff]
        %v369 = vld [vmem:[%s287 + $0xf0] sm:$0xff]
        %v370 = vld [vmem:[%s287 + $0xf8] sm:$0xff]
        %v371 = vld [vmem:[%s287 + $0x100] sm:$0xff]
        %v372 = vld [vmem:[%s287 + $0x108] sm:$0xff]
        %v373 = vld [vmem:[%s287 + $0x110] sm:$0xff]
        %v374 = vld [vmem:[%s287 + $0x118] sm:$0xff]
        %v375 = vld [vmem:[%s287 + $0x120] sm:$0xff]
        %v376 = vld [vmem:[%s287 + $0x128] sm:$0xff]
        %v377 = vld [vmem:[%s287 + $0x130] sm:$0xff]
        %v378 = vld [vmem:[%s287 + $0x138] sm:$0xff]
        %v379 = vld [vmem:[%s287 + $0x140] sm:$0xff]
        %v380 = vld [vmem:[%s287 + $0x148] sm:$0xff]
        %v381 = vld [vmem:[%s287 + $0x150] sm:$0xff]
        %v382 = vld [vmem:[%s287 + $0x158] sm:$0xff]
        %v383 = vld [vmem:[%s287 + $0x160] sm:$0xff]
        %v384 = vld [vmem:[%s287 + $0x168] sm:$0xff]
        %v385 = vld [vmem:[%s287 + $0x170] sm:$0xff]
        %v386 = vld [vmem:[%s287 + $0x178] sm:$0xff]
        %v435 = vunpack.c.l.b16 %v339
        %v436 = vunpack.c.h.b16 %v339
        %v437 = vunpack.c.l.b16 %v340
        %v438 = vunpack.c.h.b16 %v340
        %v439 = vunpack.c.l.b16 %v341
        %v440 = vunpack.c.h.b16 %v341
        %v441 = vunpack.c.l.b16 %v342
        %v442 = vunpack.c.h.b16 %v342
        %v443 = vunpack.c.l.b16 %v343
        %v444 = vunpack.c.h.b16 %v343
        %v445 = vunpack.c.l.b16 %v344
        %v446 = vunpack.c.h.b16 %v344
        %v447 = vunpack.c.l.b16 %v345
        %v448 = vunpack.c.h.b16 %v345
        %v449 = vunpack.c.l.b16 %v346
        %v450 = vunpack.c.h.b16 %v346
        %v451 = vunpack.c.l.b16 %v347
        %v452 = vunpack.c.h.b16 %v347
        %v453 = vunpack.c.l.b16 %v348
        %v454 = vunpack.c.h.b16 %v348
        %v455 = vunpack.c.l.b16 %v349
        %v456 = vunpack.c.h.b16 %v349
        %v457 = vunpack.c.l.b16 %v350
        %v458 = vunpack.c.h.b16 %v350
        %v459 = vunpack.c.l.b16 %v351
        %v460 = vunpack.c.h.b16 %v351
        %v461 = vunpack.c.l.b16 %v352
        %v462 = vunpack.c.h.b16 %v352
        %v463 = vunpack.c.l.b16 %v353
        %v464 = vunpack.c.h.b16 %v353
        %v465 = vunpack.c.l.b16 %v354
        %v466 = vunpack.c.h.b16 %v354
        %v467 = vunpack.c.l.b16 %v355
        %v468 = vunpack.c.h.b16 %v355
        %v469 = vunpack.c.l.b16 %v356
        %v470 = vunpack.c.h.b16 %v356
        %v471 = vunpack.c.l.b16 %v357
        %v472 = vunpack.c.h.b16 %v357
        %v473 = vunpack.c.l.b16 %v358
        %v474 = vunpack.c.h.b16 %v358
        %v475 = vunpack.c.l.b16 %v359
        %v476 = vunpack.c.h.b16 %v359
        %v477 = vunpack.c.l.b16 %v360
        %v478 = vunpack.c.h.b16 %v360
        %v479 = vunpack.c.l.b16 %v361
        %v480 = vunpack.c.h.b16 %v361
        %v481 = vunpack.c.l.b16 %v362
        %v482 = vunpack.c.h.b16 %v362
        %v483 = vunpack.c.l.b16 %v363
        %v484 = vunpack.c.h.b16 %v363
        %v485 = vunpack.c.l.b16 %v364
        %v486 = vunpack.c.h.b16 %v364
        %v487 = vunpack.c.l.b16 %v365
        %v488 = vunpack.c.h.b16 %v365
        %v489 = vunpack.c.l.b16 %v366
        %v490 = vunpack.c.h.b16 %v366
        %v491 = vunpack.c.l.b16 %v367
        %v492 = vunpack.c.h.b16 %v367
        %v493 = vunpack.c.l.b16 %v368
        %v494 = vunpack.c.h.b16 %v368
        %v495 = vunpack.c.l.b16 %v369
        %v496 = vunpack.c.h.b16 %v369
        %v497 = vunpack.c.l.b16 %v370
        %v498 = vunpack.c.h.b16 %v370
        %v499 = vunpack.c.l.b16 %v371
        %v500 = vunpack.c.h.b16 %v371
        %v501 = vunpack.c.l.b16 %v372
        %v502 = vunpack.c.h.b16 %v372
        %v503 = vunpack.c.l.b16 %v373
        %v504 = vunpack.c.h.b16 %v373
        %v505 = vunpack.c.l.b16 %v374
        %v506 = vunpack.c.h.b16 %v374
        %v507 = vunpack.c.l.b16 %v375
        %v508 = vunpack.c.h.b16 %v375
        %v509 = vunpack.c.l.b16 %v376
        %v510 = vunpack.c.h.b16 %v376
        %v511 = vunpack.c.l.b16 %v377
        %v512 = vunpack.c.h.b16 %v377
        %v513 = vunpack.c.l.b16 %v378
        %v514 = vunpack.c.h.b16 %v378
        %v515 = vunpack.c.l.b16 %v379
        %v516 = vunpack.c.h.b16 %v379
        %v517 = vunpack.c.l.b16 %v380
        %v518 = vunpack.c.h.b16 %v380
        %v519 = vunpack.c.l.b16 %v381
        %v520 = vunpack.c.h.b16 %v381
        %v521 = vunpack.c.l.b16 %v382
        %v522 = vunpack.c.h.b16 %v382
        %v523 = vunpack.c.l.b16 %v383
        %v524 = vunpack.c.h.b16 %v383
        %v525 = vunpack.c.l.b16 %v384
        %v526 = vunpack.c.h.b16 %v384
        %v527 = vunpack.c.l.b16 %v385
        %v528 = vunpack.c.h.b16 %v385
        %v529 = vunpack.c.l.b16 %v386
        %v530 = vunpack.c.h.b16 %v386
        %v531 = vpack.c.b16 %v437, %v435
        %v532 = vpack.c.b16 %v438, %v436
        %v533 = vpack.c.b16 %v441, %v439
        %v534 = vpack.c.b16 %v442, %v440
        %v535 = vpack.c.b16 %v445, %v443
        %v536 = vpack.c.b16 %v446, %v444
        %v537 = vpack.c.b16 %v449, %v447
        %v538 = vpack.c.b16 %v450, %v448
        %v539 = vpack.c.b16 %v453, %v451
        %v540 = vpack.c.b16 %v454, %v452
        %v541 = vpack.c.b16 %v457, %v455
        %v542 = vpack.c.b16 %v458, %v456
        %v543 = vpack.c.b16 %v461, %v459
        %v544 = vpack.c.b16 %v462, %v460
        %v545 = vpack.c.b16 %v465, %v463
        %v546 = vpack.c.b16 %v466, %v464
        %v547 = vpack.c.b16 %v469, %v467
        %v548 = vpack.c.b16 %v470, %v468
        %v549 = vpack.c.b16 %v473, %v471
        %v550 = vpack.c.b16 %v474, %v472
        %v551 = vpack.c.b16 %v477, %v475
        %v552 = vpack.c.b16 %v478, %v476
        %v553 = vpack.c.b16 %v481, %v479
        %v554 = vpack.c.b16 %v482, %v480
        %v555 = vpack.c.b16 %v485, %v483
        %v556 = vpack.c.b16 %v486, %v484
        %v557 = vpack.c.b16 %v489, %v487
        %v558 = vpack.c.b16 %v490, %v488
        %v559 = vpack.c.b16 %v493, %v491
        %v560 = vpack.c.b16 %v494, %v492
        %v561 = vpack.c.b16 %v497, %v495
        %v562 = vpack.c.b16 %v498, %v496
        %v563 = vpack.c.b16 %v501, %v499
        %v564 = vpack.c.b16 %v502, %v500
        %v565 = vpack.c.b16 %v505, %v503
        %v566 = vpack.c.b16 %v506, %v504
        %v567 = vpack.c.b16 %v509, %v507
        %v568 = vpack.c.b16 %v510, %v508
        %v569 = vpack.c.b16 %v513, %v511
        %v570 = vpack.c.b16 %v514, %v512
        %v571 = vpack.c.b16 %v517, %v515
        %v572 = vpack.c.b16 %v518, %v516
        %v573 = vpack.c.b16 %v521, %v519
        %v574 = vpack.c.b16 %v522, %v520
        %v575 = vpack.c.b16 %v525, %v523
        %v576 = vpack.c.b16 %v526, %v524
        %v577 = vpack.c.b16 %v529, %v527
        %v578 = vpack.c.b16 %v530, %v528
        %627 = vmatprep.subr.bf16.mxu0 %v532
        %628 = vmatpush1.bf16.msra.mxu0 %v531
        %629 = vmatprep.subr.bf16.mxu0 %v534
        %630 = vmatpush1.bf16.msra.mxu0 %v533
        %631 = vmatprep.subr.bf16.mxu0 %v536
        %632 = vmatpush1.bf16.msra.mxu0 %v535
        %633 = vmatprep.subr.bf16.mxu0 %v538
        %634 = vmatpush1.bf16.msra.mxu0 %v537
        %635 = vmatprep.subr.bf16.mxu0 %v540
        %636 = vmatpush1.bf16.msra.mxu0 %v539
        %637 = vmatprep.subr.bf16.mxu0 %v542
        %638 = vmatpush1.bf16.msra.mxu0 %v541
        %639 = vmatprep.subr.bf16.mxu0 %v544
        %640 = vmatpush1.bf16.msra.mxu0 %v543
        %641 = vmatprep.subr.bf16.mxu0 %v546
        %642 = vmatpush1.bf16.msra.mxu0 %v545
        %643 = vmatprep.subr.bf16.mxu0 %v548
        %644 = vmatpush1.bf16.msra.mxu0 %v547
        %645 = vmatprep.subr.bf16.mxu0 %v550
        %646 = vmatpush1.bf16.msra.mxu0 %v549
        %647 = vmatprep.subr.bf16.mxu0 %v552
        %648 = vmatpush1.bf16.msra.mxu0 %v551
        %649 = vmatprep.subr.bf16.mxu0 %v554
        %650 = vmatpush1.bf16.msra.mxu0 %v553
        %651 = vmatprep.subr.bf16.mxu0 %v556
        %652 = vmatpush1.bf16.msra.mxu0 %v555
        %653 = vmatprep.subr.bf16.mxu0 %v558
        %654 = vmatpush1.bf16.msra.mxu0 %v557
        %655 = vmatprep.subr.bf16.mxu0 %v560
        %656 = vmatpush1.bf16.msra.mxu0 %v559
        %657 = vmatprep.subr.bf16.mxu0 %v562
        %658 = vmatpush1.bf16.msra.mxu0 %v561
        %659 = vmatprep.mubr.bf16.mxu0 %v334
        %660 = vmatmul.mubr.bf16.gmra.mrb[0].mxu0 %v333
        %v661 = vpop.f32.mrb[0].mxu0
        %v662 = vadd.f32 0.0, %v661
        %v663 = vpop.f32.mrb[0].mxu0
        %v664 = vadd.f32 0.0, %v663
        %v665 = vpop.f32.mrb[0].mxu0
        %v666 = vadd.f32 0.0, %v665
        %v667 = vpop.f32.mrb[0].mxu0
        %v668 = vadd.f32 0.0, %v667
        %669 = vmatprep.mubr.bf16.mxu0 %v337
        %670 = vmatmul.mubr.bf16.gmra.mrb[0].mxu0 %v336
        %v671 = vpop.f32.mrb[0].mxu0
        %v672 = vadd.f32 0.0, %v671
        %v673 = vpop.f32.mrb[0].mxu0
        %v674 = vadd.f32 0.0, %v673
        %v675 = vpop.f32.mrb[0].mxu0
        %v676 = vpop.f32.mrb[0].mxu0
        %677 = vdwg.mxu0
        %678 = vmatprep.subr.bf16.mxu0 %v564
        %679 = vmatpush1.bf16.msra.mxu0 %v563
        %680 = vmatprep.subr.bf16.mxu0 %v566
        %681 = vmatpush1.bf16.msra.mxu0 %v565
        %682 = vmatprep.subr.bf16.mxu0 %v568
        %683 = vmatpush1.bf16.msra.mxu0 %v567
        %684 = vmatprep.subr.bf16.mxu0 %v570
        %685 = vmatpush1.bf16.msra.mxu0 %v569
        %686 = vmatprep.subr.bf16.mxu0 %v572
        %687 = vmatpush1.bf16.msra.mxu0 %v571
        %688 = vmatprep.subr.bf16.mxu0 %v574
        %689 = vmatpush1.bf16.msra.mxu0 %v573
        %690 = vmatprep.subr.bf16.mxu0 %v576
        %691 = vmatpush1.bf16.msra.mxu0 %v575
        %692 = vmatprep.subr.bf16.mxu0 %v578
        %693 = vmatpush1.bf16.msra.mxu0 %v577
        %694 = vmatprep.subr.bf16.mxu0 0
        %695 = vmatpush1.bf16.msra.mxu0 0
        %696 = vmatprep.subr.bf16.mxu0 0
        %697 = vmatpush1.bf16.msra.mxu0 0
        %698 = vmatprep.subr.bf16.mxu0 0
        %699 = vmatpush1.bf16.msra.mxu0 0
        %700 = vmatprep.subr.bf16.mxu0 0
        %701 = vmatpush1.bf16.msra.mxu0 0
        %702 = vmatprep.subr.bf16.mxu0 0
        %703 = vmatpush1.bf16.msra.mxu0 0
        %704 = vmatprep.subr.bf16.mxu0 0
        %705 = vmatpush1.bf16.msra.mxu0 0
        %706 = vmatprep.subr.bf16.mxu0 0
        %707 = vmatpush1.bf16.msra.mxu0 0
        %708 = vmatprep.subr.bf16.mxu0 0
        %709 = vmatpush1.bf16.msra.mxu0 0
        %710 = vmatprep.mubr.bf16.mxu0 0
        %711 = vmatmul.mubr.bf16.gmra.mrb[0].mxu0 %v335
        %v712 = vpop.f32.mrb[0].mxu0
        %v713 = vadd.f32 %v662, %v712
        %v714 = vpop.f32.mrb[0].mxu0
        %v715 = vadd.f32 %v664, %v714
        %v716 = vpop.f32.mrb[0].mxu0
        %v717 = vadd.f32 %v666, %v716
        %v718 = vpop.f32.mrb[0].mxu0
        %v719 = vadd.f32 %v668, %v718
        %720 = vmatprep.mubr.bf16.mxu0 0
        %721 = vmatmul.mubr.bf16.gmra.mrb[0].mxu0 %v338
        %v722 = vpop.f32.mrb[0].mxu0
        %v723 = vadd.f32 %v672, %v722
        %v724 = vpop.f32.mrb[0].mxu0
        %v725 = vadd.f32 %v674, %v724
        %v726 = vpop.f32.mrb[0].mxu0
        %v727 = vpop.f32.mrb[0].mxu0
        %728 = vdwg.mxu0
        %v729 = vadd.f32 %v318, %v713
        %v730 = vadd.f32 %v319, %v715
        %v731 = vadd.f32 %v320, %v717
        %v732 = vadd.f32 %v321, %v719
        %v733 = vadd.f32 %v322, %v723
        %v734 = vadd.f32 %v323, %v725
        %735 = vst [vmem:[#allocation2] sm:$0xff] %v729
        %736 = vst [vmem:[#allocation2 + $0x8] sm:$0xff] %v730
        %737 = vst [vmem:[#allocation2 + $0x10] sm:$0xff] %v731
        %738 = vst [vmem:[#allocation2 + $0x18] sm:$0xff] %v732
        %739 = vst [vmem:[#allocation2 + $0x20] sm:$0xff] %v733
        %740 = vst [vmem:[#allocation2 + $0x28] sm:$0xff] %v734
        %p741 = scmp.eq.s32.totalorder %s21, 5
        // Predicated region
        $region60: #{alexnet_forward.12} parent=50 // pred_check
          %p742 = pneg %p741
        $region61: #{alexnet_forward.12} parent=50 // pred_check_branch
          %744 = sbr.rel (%p742) target = $region63
        $region62: #{alexnet_forward.12} parent=50 // pred_region
          %v745 = vld [vmem:[#allocation2] sm:$0xff]
          %v746 = vld [vmem:[#allocation2 + $0x8] sm:$0xff]
          %v747 = vld [vmem:[#allocation2 + $0x10] sm:$0xff]
          %v748 = vld [vmem:[#allocation2 + $0x18] sm:$0xff]
          %v749 = vld [vmem:[#allocation2 + $0x20] sm:$0xff]
          %v750 = vld [vmem:[#allocation2 + $0x28] sm:$0xff]
          %v751 = vld [vmem:[%s293] sm:$0x3]
          %v753 = vlaneseq
          %v754 = vshrl.u32 %v753, 7
          %v755 = vsub.s32 0, %v754
          %v756 = vrot.slane %v751, %v755
          %v757 = vlaneseq
          %v758 = vshrl.u32 %v757, 7
          %v759 = vsub.s32 1, %v758
          %v760 = vrot.slane %v751, %v759
          %v763 = vadd.f32 %v745, %v756
          %v764 = vadd.f32 %v746, %v760
          %v765 = vadd.f32 %v747, %v756
          %v766 = vadd.f32 %v748, %v760
          %v767 = vadd.f32 %v749, %v756
          %v768 = vadd.f32 %v750, %v760
          %v769 = vmax.f32 %v763, 0.0
          %v770 = vmax.f32 %v764, 0.0
          %v771 = vmax.f32 %v765, 0.0
          %v772 = vmax.f32 %v766, 0.0
          %v773 = vmax.f32 %v767, 0.0
          %v774 = vmax.f32 %v768, 0.0
          %775 = vst [vmem:[%s304] sm:$0xff] %v769
          %776 = vst [vmem:[%s304 + $0x8] sm:$0xff] %v770
          %777 = vst [vmem:[%s304 + $0x10] sm:$0xff] %v771
          %778 = vst [vmem:[%s304 + $0x18] sm:$0xff] %v772
          %779 = vst [vmem:[%s304 + $0x20] sm:$0xff] %v773
          %780 = vst [vmem:[%s304 + $0x28] sm:$0xff] %v774
        $region63: #{alexnet_forward.12} parent=50 // pred_fallthru
          _
        %s781 = smul.u32 3, %s19
        %s782 = smul.u32 2, %s20
        %p783 = scmp.lt.s32.totalorder %s781, 2
        %s784 = scalar_select %p783, %s781, 2
        %p785 = scmp.lt.s32.totalorder %s782, 1
        %s786 = scalar_select %p785, %s782, 1
        %s787 = smul.addr %s784, 2
        %s788 = sadd.s32 %s786, %s787
        %s789 = smul.addr %s788, 8
        %s790 = scalar_lea.vmem %s3, %s789
        // Predicated region
        $region64: #{alexnet_forward.12} parent=50 // pred_check
          %p791 = pneg %p135
        $region65: #{alexnet_forward.12} parent=50 // pred_check_branch
          %793 = sbr.rel (%p791) target = $region67
        $region66: #{alexnet_forward.12} parent=50 // pred_region
          %s794 = smul.u32 3, %s19
          %s795 = smul.u32 2, %s20
        $region67: #{alexnet_forward.12} parent=50 // pred_fallthru
          _
        // Predicated region
        $region68: #{alexnet_forward.12} parent=50 // pred_check
          %p796 = pneg %p135
        $region69: #{alexnet_forward.12} parent=50 // pred_check_branch
          %798 = sbr.rel (%p796) target = $region71
        $region70: #{alexnet_forward.12} parent=50 // pred_region
          %s799 = smul.u32 3, %s19
          %s800 = smul.u32 2, %s20
          %p801 = scmp.lt.s32.totalorder %s799, 2
          %s802 = scalar_select %p801, %s799, 2
          %p803 = scmp.lt.s32.totalorder %s800, 1
          %s804 = scalar_select %p803, %s800, 1
          %s805 = smul.addr %s802, 2
          %s806 = sadd.s32 %s804, %s805
          %s807 = smul.addr %s806, 8
          %s808 = scalar_lea.vmem %s3, %s807
        $region71: #{alexnet_forward.12} parent=50 // pred_fallthru
          _
      $region51: #{alexnet_forward.12} parent=5 // pred_fallthru
        _
      %p809 = scmp.le.s32.totalorder 2, %s9
      // Predicated region
      $region72: #{alexnet_forward.12} parent=5 // pred_check
        %p810 = pneg %p809
      $region73: #{alexnet_forward.12} parent=5 // pred_check_branch
        %812 = sbr.rel (%p810) target = $region75
      $region74: #{alexnet_forward.12} parent=5 // pred_region
        %s813 = ssub.s32 %s9, 2
      $region75: #{alexnet_forward.12} parent=5 // pred_fallthru
        _
    $region6: #{alexnet_forward.12} parent=1 // loop_footer
      %s13 = sadd.s32 1, %s9
    $region7: #{alexnet_forward.12} parent=1 // loop_footer_branch
      %8 = sbr.rel target = $region3
    $region8: #{alexnet_forward.12} parent=1 // loop_exit
      _

// kernel: alexnet_forward.13
$region0: #{alexnet_forward.13}
  #allocation0 [shape = 'u32[]', space=smem, size = 0x4, offset = 0x4, fixed_abs, tag = 'smem constant byte address 0x4 - core index']
  #allocation1 [shape = 'u32[144,128]{1,0:T(1,128)}', space=vmem, size = 0x12000, scoped, tag = 'internal scratch']
  #allocation2 [shape = 'f32[8,512]{1,0:T(8,128)}', space=vmem, size = 0x4000, scoped, tag = 'scratch operand']
  %s0 = inlined_call_operand.hbm [shape: f32[8,9216], index: 0, kind: input, shape index: {}]
  %s1 = inlined_call_operand.hbm [shape: bf16[9216,4096], index: 1, kind: input, shape index: {}]
  %s2 = inlined_call_operand.hbm [shape: f32[1,4096], index: 2, kind: input, shape index: {}]
  %s3 = inlined_call_operand.hbm [shape: f32[8,4096], index: 3, kind: output, shape index: {}]
  %s4 = sld [smem:[#allocation0]]
  $region65: #{alexnet_forward.13} parent=0
    _
  %s6 = ssub.s32 1, %s4
  %s7 = scalar_select 0, %s6, %s4
  $region1: #{alexnet_forward.13} parent=0
    #allocation3 [shape = 'u8[32768]{0}', space=vmem, size = 0x8000, scoped, tag = 'input window, operand 0']
    #allocation4 [shape = 's32[2]{0}', space=sflag, size = 0x8, scoped, tag = 'scoped memory for alexnet_forward.13']
    #allocation5 [shape = 's32[2]{0}', space=sflag, size = 0x8, scoped, tag = 'scoped memory for alexnet_forward.13']
    #allocation6 [shape = 'u8[1048576]{0}', space=vmem, size = 0x100000, scoped, tag = 'input window, operand 1']
    #allocation7 [shape = 's32[2]{0}', space=sflag, size = 0x8, scoped, tag = 'scoped memory for alexnet_forward.13']
    #allocation8 [shape = 'u8[4096]{0}', space=vmem, size = 0x1000, scoped, tag = 'input window, operand 2']
    #allocation9 [shape = 'u8[32768]{0}', space=vmem, size = 0x8000, scoped, tag = 'output window, operand 0']
    %8 = vsyncpa [#allocation4], 0
    %s9 = scalar_lea.sflag [#allocation4], 1
    %10 = vsyncpa %s9, 0
    %11 = vsyncpa [#allocation7], 0
    %s12 = scalar_lea.sflag [#allocation7], 1
    %13 = vsyncpa %s12, 0
    %14 = vsyncpa [#allocation5], 0
    %s15 = scalar_lea.sflag [#allocation5], 1
    %16 = vsyncpa %s15, 0
    loop: start=0, step=1, limit=146
    $region2: #{alexnet_forward.13} parent=1 // loop_pre_header
      _
    $region3: #{alexnet_forward.13} parent=1 // loop_header
      %s18 = sphi 0, %s22
      %p19 = scmp.ge.s32.totalorder %s18, 146
      %s25 = sphi 0, %s44
      %s26 = sphi 0, %s40
      %s27 = sphi 0, %s36
      %s28 = sphi 0, %s25
      %s29 = sphi 0, %s26
      %s30 = sphi 0, %s27
      %s31 = sphi 0, %s28
      %s32 = sphi 0, %s29
      %s33 = sphi 0, %s30
      %s49 = sphi 0, %s51
      %s52 = sphi 0, %s49
      %s53 = sphi 0, %s52
      %s69 = sphi 0, %s53
      %s77 = sphi 0, %s79
      %s80 = sphi 0, %s77
      %s81 = sphi 0, %s80
      %s97 = sphi 0, %s81
      %s103 = sphi 0, %s105
      %s106 = sphi 0, %s103
      %s107 = sphi 0, %s106
      %s123 = sphi 0, %s107
      %s131 = sphi 0, %s133
      %s134 = sphi 0, %s131
      %s135 = sphi 0, %s134
      %s151 = sphi 0, %s135
    $region4: #{alexnet_forward.13} parent=1 // loop_header_branch
      %21 = sbr.rel (%p19) target = $region8
    $region5: #{alexnet_forward.13} parent=1 // loop_body
      %s23 = ssub.s32 %s18, 1
      %s24 = ssub.s32 %s18, 2
      %s34 = sadd.s32 1, %s27
      %p35 = scmp.ge.s32.totalorder %s34, 18
      %s36 = scalar_select %p35, 0, %s34
      %s37 = sadd.s32 1, %s26
      %s38 = scalar_select %p35, %s37, %s26
      %p39 = scmp.ge.s32.totalorder %s38, 8
      %s40 = scalar_select %p39, 0, %s38
      %s41 = sadd.s32 1, %s25
      %s42 = scalar_select %p39, %s41, %s25
      %p43 = scmp.ge.s32.totalorder %s42, 1
      %s44 = scalar_select %p43, 0, %s42
      %s45 = ssub.s32 %s25, %s44
      %s46 = ssub.s32 %s27, %s36
      %s47 = sor.u32 %s45, %s46
      %p48 = scmp.eq.s32.totalorder %s47, 0
      %s50 = sadd.s32 %s49, 1
      %s51 = scalar_select %p48, %s49, %s50
      %p54 = pneg %p48
      %p55 = scmp.eq.s32.totalorder %s18, 143
      %p56 = por %p54, %p55
      %p57 = scmp.ne.s32.totalorder %s49, %s52
      %p58 = scmp.eq.s32.totalorder %s18, 0
      %p59 = por %p57, %p58
      %p60 = scmp.ne.s32.totalorder %s49, %s52
      %p61 = scmp.eq.s32.totalorder %s23, 143
      %p62 = por %p60, %p61
      %p63 = scmp.ne.s32.totalorder %s52, %s53
      %p64 = scmp.eq.s32.totalorder %s23, 0
      %p65 = por %p63, %p64
      %p66 = scmp.ne.s32.totalorder %s52, %s53
      %p67 = scmp.eq.s32.totalorder %s24, 143
      %p68 = por %p66, %p67
      %p70 = scmp.ne.s32.totalorder %s53, %s69
      %p71 = scmp.eq.s32.totalorder %s24, 0
      %p72 = por %p70, %p71
      %s73 = ssub.s32 %s27, %s36
      %s74 = ssub.s32 %s26, %s40
      %s75 = sor.u32 %s73, %s74
      %p76 = scmp.eq.s32.totalorder %s75, 0
      %s78 = sadd.s32 %s77, 1
      %s79 = scalar_select %p76, %s77, %s78
      %p82 = pneg %p76
      %p83 = scmp.eq.s32.totalorder %s18, 143
      %p84 = por %p82, %p83
      %p85 = scmp.ne.s32.totalorder %s77, %s80
      %p86 = scmp.eq.s32.totalorder %s18, 0
      %p87 = por %p85, %p86
      %p88 = scmp.ne.s32.totalorder %s77, %s80
      %p89 = scmp.eq.s32.totalorder %s23, 143
      %p90 = por %p88, %p89
      %p91 = scmp.ne.s32.totalorder %s80, %s81
      %p92 = scmp.eq.s32.totalorder %s23, 0
      %p93 = por %p91, %p92
      %p94 = scmp.ne.s32.totalorder %s80, %s81
      %p95 = scmp.eq.s32.totalorder %s24, 143
      %p96 = por %p94, %p95
      %p98 = scmp.ne.s32.totalorder %s81, %s97
      %p99 = scmp.eq.s32.totalorder %s24, 0
      %p100 = por %p98, %p99
      %s101 = ssub.s32 %s26, %s40
      %p102 = scmp.eq.s32.totalorder %s101, 0
      %s104 = sadd.s32 %s103, 1
      %s105 = scalar_select %p102, %s103, %s104
      %p108 = pneg %p102
      %p109 = scmp.eq.s32.totalorder %s18, 143
      %p110 = por %p108, %p109
      %p111 = scmp.ne.s32.totalorder %s103, %s106
      %p112 = scmp.eq.s32.totalorder %s18, 0
      %p113 = por %p111, %p112
      %p114 = scmp.ne.s32.totalorder %s103, %s106
      %p115 = scmp.eq.s32.totalorder %s23, 143
      %p116 = por %p114, %p115
      %p117 = scmp.ne.s32.totalorder %s106, %s107
      %p118 = scmp.eq.s32.totalorder %s23, 0
      %p119 = por %p117, %p118
      %p120 = scmp.ne.s32.totalorder %s106, %s107
      %p121 = scmp.eq.s32.totalorder %s24, 143
      %p122 = por %p120, %p121
      %p124 = scmp.ne.s32.totalorder %s107, %s123
      %p125 = scmp.eq.s32.totalorder %s24, 0
      %p126 = por %p124, %p125
      %s127 = ssub.s32 %s25, %s44
      %s128 = ssub.s32 %s26, %s40
      %s129 = sor.u32 %s127, %s128
      %p130 = scmp.eq.s32.totalorder %s129, 0
      %s132 = sadd.s32 %s131, 1
      %s133 = scalar_select %p130, %s131, %s132
      %p136 = pneg %p130
      %p137 = scmp.eq.s32.totalorder %s18, 143
      %p138 = por %p136, %p137
      %p139 = scmp.ne.s32.totalorder %s131, %s134
      %p140 = scmp.eq.s32.totalorder %s18, 0
      %p141 = por %p139, %p140
      %p142 = scmp.ne.s32.totalorder %s131, %s134
      %p143 = scmp.eq.s32.totalorder %s23, 143
      %p144 = por %p142, %p143
      %p145 = scmp.ne.s32.totalorder %s134, %s135
      %p146 = scmp.eq.s32.totalorder %s23, 0
      %p147 = por %p145, %p146
      %p148 = scmp.ne.s32.totalorder %s134, %s135
      %p149 = scmp.eq.s32.totalorder %s24, 143
      %p150 = por %p148, %p149
      %p152 = scmp.ne.s32.totalorder %s135, %s151
      %p153 = scmp.eq.s32.totalorder %s24, 0
      %p154 = por %p152, %p153
      %p155 = scmp.le.s32.totalorder 1, %s18
      %p156 = scmp.lt.s32.totalorder %s18, 145
      %p157 = pnand %p155, %p156
      %p158 = pneg %p157
      // Predicated region
      $region9: #{alexnet_forward.13} parent=5 // pred_check
        _
      $region10: #{alexnet_forward.13} parent=5 // pred_check_branch
        %160 = sbr.rel (%p157) target = $region12
      $region11: #{alexnet_forward.13} parent=5 // pred_region
        %s161 = ssub.s32 %s18, 1
      $region12: #{alexnet_forward.13} parent=5 // pred_fallthru
        _
      %p162 = scmp.lt.s32.totalorder %s18, 144
      // Predicated region
      $region13: #{alexnet_forward.13} parent=5 // pred_check
        %p163 = pneg %p162
      $region14: #{alexnet_forward.13} parent=5 // pred_check_branch
        %165 = sbr.rel (%p163) target = $region16
      $region15: #{alexnet_forward.13} parent=5 // pred_region
        // Predicated region
        $region17: #{alexnet_forward.13} parent=15 // pred_check
          %p166 = pneg %p59
        $region18: #{alexnet_forward.13} parent=15 // pred_check_branch
          %168 = sbr.rel (%p166) target = $region20
        $region19: #{alexnet_forward.13} parent=15 // pred_region
          %s169 = sand.u32 %s49, 1
          %s170 = scalar_lea.sflag [#allocation4], %s169
          %s171 = sand.u32 %s49, 1
          %s172 = smul.addr %s171, 32
          %s173 = scalar_lea.vmem [#allocation3], %s172
          %s174 = smul.u32 4, %s27
          %s176 = ssub.s32 512, 512
          %177 = vsyncadd %s170, %s176
          %s178 = smul.addr %s25, 72
          %s179 = sadd.s32 %s174, %s178
          %s180 = smul.addr %s179, 128
          %s181 = scalar_lea.hbm %s0, %s180
          %s183 = sshll.u32 %s173, 4
          %s184 = int_to_ptr.vmem [resolvable:$true] %s183
          %186 = dma.hbm_to_vmem [thread:$0]  %s181, 512, %s184, %s170
        $region20: #{alexnet_forward.13} parent=15 // pred_fallthru
          _
        // Predicated region
        $region21: #{alexnet_forward.13} parent=15 // pred_check
          %p187 = pneg %p87
        $region22: #{alexnet_forward.13} parent=15 // pred_check_branch
          %189 = sbr.rel (%p187) target = $region24
        $region23: #{alexnet_forward.13} parent=15 // pred_region
          %s190 = sand.u32 %s18, 1
          %s191 = scalar_lea.sflag [#allocation7], %s190
          %s192 = sand.u32 %s77, 1
          %s193 = smul.addr %s192, 1024
          %s194 = scalar_lea.vmem [#allocation6], %s193
          %s195 = smul.u32 64, %s27
          %s196 = smul.u32 4, %s26
          %s198 = ssub.s32 16384, 16384
          %199 = vsyncadd %s191, %s198
          %s200 = smul.addr %s195, 32
          %s201 = sadd.s32 %s196, %s200
          %s202 = smul.addr %s201, 64
          %s203 = scalar_lea.hbm %s1, %s202
          %s204 = sshll.u32 %s194, 4
          %s205 = int_to_ptr.vmem [resolvable:$true] %s204
          %210 = dma.hbm_to_vmem [thread:$0]  %s203, 16384, %s205, %s191, 2048, 256, 16
        $region24: #{alexnet_forward.13} parent=15 // pred_fallthru
          _
        // Predicated region
        $region25: #{alexnet_forward.13} parent=15 // pred_check
          %p211 = pneg %p113
        $region26: #{alexnet_forward.13} parent=15 // pred_check_branch
          %213 = sbr.rel (%p211) target = $region28
        $region27: #{alexnet_forward.13} parent=15 // pred_region
          %s214 = sand.u32 %s18, 1
          %s215 = scalar_lea.sflag [#allocation7], %s214
          %s216 = sand.u32 %s103, 1
          %s217 = smul.addr %s216, 4
          %s218 = scalar_lea.vmem [#allocation8], %s217
          %s219 = smul.u32 4, %s26
          %s221 = ssub.s32 64, 64
          %222 = vsyncadd %s215, %s221
          %s223 = smul.addr %s219, 16
          %s224 = scalar_lea.hbm %s2, %s223
          %s226 = sshll.u32 %s218, 4
          %s227 = int_to_ptr.vmem [resolvable:$true] %s226
          %229 = dma.hbm_to_vmem [thread:$0]  %s224, 64, %s227, %s215
        $region28: #{alexnet_forward.13} parent=15 // pred_fallthru
          _
      $region16: #{alexnet_forward.13} parent=5 // pred_fallthru
        _
      %p230 = scmp.le.s32.totalorder 1, %s18
      %p231 = scmp.lt.s32.totalorder %s18, 145
      %p232 = pnand %p230, %p231
      %p233 = pneg %p232
      // Predicated region
      $region29: #{alexnet_forward.13} parent=5 // pred_check
        _
      $region30: #{alexnet_forward.13} parent=5 // pred_check_branch
        %235 = sbr.rel (%p232) target = $region32
      $region31: #{alexnet_forward.13} parent=5 // pred_region
        %s236 = ssub.s32 %s18, 1
        %s237 = sand.u32 %s52, 1
        %s238 = scalar_lea.sflag [#allocation4], %s237
        %s239 = sand.u32 %s52, 1
        %s240 = smul.addr %s239, 32
        %s241 = scalar_lea.vmem [#allocation3], %s240
        // Predicated region
        $region33: #{alexnet_forward.13} parent=31 // pred_check
          %p242 = pneg %p65
        $region34: #{alexnet_forward.13} parent=31 // pred_check_branch
          %244 = sbr.rel (%p242) target = $region36
        $region35: #{alexnet_forward.13} parent=31 // pred_region
          %245 = dma.done %s238, 512
        $region36: #{alexnet_forward.13} parent=31 // pred_fallthru
          _
        %s246 = sand.u32 %s23, 1
        %s247 = scalar_lea.sflag [#allocation7], %s246
        %s248 = sand.u32 %s80, 1
        %s249 = smul.addr %s248, 1024
        %s250 = scalar_lea.vmem [#allocation6], %s249
        // Predicated region
        $region37: #{alexnet_forward.13} parent=31 // pred_check
          %p251 = pneg %p93
        $region38: #{alexnet_forward.13} parent=31 // pred_check_branch
          %253 = sbr.rel (%p251) target = $region40
        $region39: #{alexnet_forward.13} parent=31 // pred_region
          %254 = dma.done %s247, 16384
        $region40: #{alexnet_forward.13} parent=31 // pred_fallthru
          _
        %s255 = sand.u32 %s23, 1
        %s256 = scalar_lea.sflag [#allocation7], %s255
        %s257 = sand.u32 %s106, 1
        %s258 = smul.addr %s257, 4
        %s259 = scalar_lea.vmem [#allocation8], %s258
        // Predicated region
        $region41: #{alexnet_forward.13} parent=31 // pred_check
          %p260 = pneg %p119
        $region42: #{alexnet_forward.13} parent=31 // pred_check_branch
          %262 = sbr.rel (%p260) target = $region44
        $region43: #{alexnet_forward.13} parent=31 // pred_region
          %263 = dma.done %s256, 64
        $region44: #{alexnet_forward.13} parent=31 // pred_fallthru
          _
        %s264 = sand.u32 %s52, 1
        %s265 = scalar_lea.sflag [#allocation4], %s264
        %s266 = sand.u32 %s52, 1
        %s267 = smul.addr %s266, 32
        %s268 = scalar_lea.vmem [#allocation3], %s267
        %p269 = pneg %p65
        %p270 = pneg %p62
        %s271 = sand.u32 %s23, 1
        %s272 = scalar_lea.sflag [#allocation7], %s271
        %s273 = sand.u32 %s80, 1
        %s274 = smul.addr %s273, 1024
        %s275 = scalar_lea.vmem [#allocation6], %s274
        %p276 = pneg %p93
        %p277 = pneg %p90
        %s278 = sand.u32 %s23, 1
        %s279 = scalar_lea.sflag [#allocation7], %s278
        %s280 = sand.u32 %s106, 1
        %s281 = smul.addr %s280, 4
        %s282 = scalar_lea.vmem [#allocation8], %s281
        %p283 = pneg %p119
        %p284 = pneg %p116
        %p285 = pneg %p147
        %p286 = pneg %p144
        %s287 = sand.u32 %s134, 1
        %s288 = scalar_lea.sflag [#allocation5], %s287
        %s289 = sand.u32 %s134, 1
        %s290 = smul.addr %s289, 32
        %s291 = scalar_lea.vmem [#allocation9], %s290
        %s292 = smul.u32 4, %s30
        %s293 = smul.u32 64, %s30
        %s294 = smul.u32 4, %s29
        %s295 = smul.u32 4, %s29
        %s296 = smul.u32 4, %s29
        %p297 = scmp.eq.s32.totalorder %s30, 0
        // Predicated region
        $region45: #{alexnet_forward.13} parent=31 // pred_check
          %p298 = pneg %p297
        $region46: #{alexnet_forward.13} parent=31 // pred_check_branch
          %300 = sbr.rel (%p298) target = $region48
        $region47: #{alexnet_forward.13} parent=31 // pred_region
          %301 = vst [vmem:[#allocation2] sm:$0xff] 0.0
          %302 = vst [vmem:[#allocation2 + $0x8] sm:$0xff] 0.0
          %303 = vst [vmem:[#allocation2 + $0x10] sm:$0xff] 0.0
          %304 = vst [vmem:[#allocation2 + $0x18] sm:$0xff] 0.0
        $region48: #{alexnet_forward.13} parent=31 // pred_fallthru
          _
        %v305 = vld [vmem:[#allocation2] sm:$0xff]
        %v306 = vld [vmem:[#allocation2 + $0x8] sm:$0xff]
        %v307 = vld [vmem:[#allocation2 + $0x10] sm:$0xff]
        %v308 = vld [vmem:[#allocation2 + $0x18] sm:$0xff]
        %v309 = vld [vmem:[%s241] sm:$0xff]
        %v310 = vld [vmem:[%s241 + $0x8] sm:$0xff]
        %v311 = vld [vmem:[%s241 + $0x10] sm:$0xff]
        %v312 = vld [vmem:[%s241 + $0x18] sm:$0xff]
        %v313 = vpack.c.bf16 %v309, %v309
        %v314 = vpack.c.bf16 %v310, %v310
        %v315 = vpack.c.bf16 %v311, %v311
        %v316 = vpack.c.bf16 %v312, %v312
        %v317 = vld [vmem:[%s250] sm:$0xff]
        %v318 = vld [vmem:[%s250 + $0x8] sm:$0xff]
        %v319 = vld [vmem:[%s250 + $0x10] sm:$0xff]
        %v320 = vld [vmem:[%s250 + $0x18] sm:$0xff]
        %v321 = vld [vmem:[%s250 + $0x20] sm:$0xff]
        %v322 = vld [vmem:[%s250 + $0x28] sm:$0xff]
        %v323 = vld [vmem:[%s250 + $0x30] sm:$0xff]
        %v324 = vld [vmem:[%s250 + $0x38] sm:$0xff]
        %v325 = vld [vmem:[%s250 + $0x40] sm:$0xff]
        %v326 = vld [vmem:[%s250 + $0x48] sm:$0xff]
        %v327 = vld [vmem:[%s250 + $0x50] sm:$0xff]
        %v328 = vld [vmem:[%s250 + $0x58] sm:$0xff]
        %v329 = vld [vmem:[%s250 + $0x60] sm:$0xff]
        %v330 = vld [vmem:[%s250 + $0x68] sm:$0xff]
        %v331 = vld [vmem:[%s250 + $0x70] sm:$0xff]
        %v332 = vld [vmem:[%s250 + $0x78] sm:$0xff]
        %v333 = vld [vmem:[%s250 + $0x80] sm:$0xff]
        %v334 = vld [vmem:[%s250 + $0x88] sm:$0xff]
        %v335 = vld [vmem:[%s250 + $0x90] sm:$0xff]
        %v336 = vld [vmem:[%s250 + $0x98] sm:$0xff]
        %v337 = vld [vmem:[%s250 + $0xa0] sm:$0xff]
        %v338 = vld [vmem:[%s250 + $0xa8] sm:$0xff]
        %v339 = vld [vmem:[%s250 + $0xb0] sm:$0xff]
        %v340 = vld [vmem:[%s250 + $0xb8] sm:$0xff]
        %v341 = vld [vmem:[%s250 + $0xc0] sm:$0xff]
        %v342 = vld [vmem:[%s250 + $0xc8] sm:$0xff]
        %v343 = vld [vmem:[%s250 + $0xd0] sm:$0xff]
        %v344 = vld [vmem:[%s250 + $0xd8] sm:$0xff]
        %v345 = vld [vmem:[%s250 + $0xe0] sm:$0xff]
        %v346 = vld [vmem:[%s250 + $0xe8] sm:$0xff]
        %v347 = vld [vmem:[%s250 + $0xf0] sm:$0xff]
        %v348 = vld [vmem:[%s250 + $0xf8] sm:$0xff]
        %v349 = vld [vmem:[%s250 + $0x100] sm:$0xff]
        %v350 = vld [vmem:[%s250 + $0x108] sm:$0xff]
        %v351 = vld [vmem:[%s250 + $0x110] sm:$0xff]
        %v352 = vld [vmem:[%s250 + $0x118] sm:$0xff]
        %v353 = vld [vmem:[%s250 + $0x120] sm:$0xff]
        %v354 = vld [vmem:[%s250 + $0x128] sm:$0xff]
        %v355 = vld [vmem:[%s250 + $0x130] sm:$0xff]
        %v356 = vld [vmem:[%s250 + $0x138] sm:$0xff]
        %v357 = vld [vmem:[%s250 + $0x140] sm:$0xff]
        %v358 = vld [vmem:[%s250 + $0x148] sm:$0xff]
        %v359 = vld [vmem:[%s250 + $0x150] sm:$0xff]
        %v360 = vld [vmem:[%s250 + $0x158] sm:$0xff]
        %v361 = vld [vmem:[%s250 + $0x160] sm:$0xff]
        %v362 = vld [vmem:[%s250 + $0x168] sm:$0xff]
        %v363 = vld [vmem:[%s250 + $0x170] sm:$0xff]
        %v364 = vld [vmem:[%s250 + $0x178] sm:$0xff]
        %v365 = vld [vmem:[%s250 + $0x180] sm:$0xff]
        %v366 = vld [vmem:[%s250 + $0x188] sm:$0xff]
        %v367 = vld [vmem:[%s250 + $0x190] sm:$0xff]
        %v368 = vld [vmem:[%s250 + $0x198] sm:$0xff]
        %v369 = vld [vmem:[%s250 + $0x1a0] sm:$0xff]
        %v370 = vld [vmem:[%s250 + $0x1a8] sm:$0xff]
        %v371 = vld [vmem:[%s250 + $0x1b0] sm:$0xff]
        %v372 = vld [vmem:[%s250 + $0x1b8] sm:$0xff]
        %v373 = vld [vmem:[%s250 + $0x1c0] sm:$0xff]
        %v374 = vld [vmem:[%s250 + $0x1c8] sm:$0xff]
        %v375 = vld [vmem:[%s250 + $0x1d0] sm:$0xff]
        %v376 = vld [vmem:[%s250 + $0x1d8] sm:$0xff]
        %v377 = vld [vmem:[%s250 + $0x1e0] sm:$0xff]
        %v378 = vld [vmem:[%s250 + $0x1e8] sm:$0xff]
        %v379 = vld [vmem:[%s250 + $0x1f0] sm:$0xff]
        %v380 = vld [vmem:[%s250 + $0x1f8] sm:$0xff]
        %v381 = vld [vmem:[%s250 + $0x200] sm:$0xff]
        %v382 = vld [vmem:[%s250 + $0x208] sm:$0xff]
        %v383 = vld [vmem:[%s250 + $0x210] sm:$0xff]
        %v384 = vld [vmem:[%s250 + $0x218] sm:$0xff]
        %v385 = vld [vmem:[%s250 + $0x220] sm:$0xff]
        %v386 = vld [vmem:[%s250 + $0x228] sm:$0xff]
        %v387 = vld [vmem:[%s250 + $0x230] sm:$0xff]
        %v388 = vld [vmem:[%s250 + $0x238] sm:$0xff]
        %v389 = vld [vmem:[%s250 + $0x240] sm:$0xff]
        %v390 = vld [vmem:[%s250 + $0x248] sm:$0xff]
        %v391 = vld [vmem:[%s250 + $0x250] sm:$0xff]
        %v392 = vld [vmem:[%s250 + $0x258] sm:$0xff]
        %v393 = vld [vmem:[%s250 + $0x260] sm:$0xff]
        %v394 = vld [vmem:[%s250 + $0x268] sm:$0xff]
        %v395 = vld [vmem:[%s250 + $0x270] sm:$0xff]
        %v396 = vld [vmem:[%s250 + $0x278] sm:$0xff]
        %v397 = vld [vmem:[%s250 + $0x280] sm:$0xff]
        %v398 = vld [vmem:[%s250 + $0x288] sm:$0xff]
        %v399 = vld [vmem:[%s250 + $0x290] sm:$0xff]
        %v400 = vld [vmem:[%s250 + $0x298] sm:$0xff]
        %v401 = vld [vmem:[%s250 + $0x2a0] sm:$0xff]
        %v402 = vld [vmem:[%s250 + $0x2a8] sm:$0xff]
        %v403 = vld [vmem:[%s250 + $0x2b0] sm:$0xff]
        %v404 = vld [vmem:[%s250 + $0x2b8] sm:$0xff]
        %v405 = vld [vmem:[%s250 + $0x2c0] sm:$0xff]
        %v406 = vld [vmem:[%s250 + $0x2c8] sm:$0xff]
        %v407 = vld [vmem:[%s250 + $0x2d0] sm:$0xff]
        %v408 = vld [vmem:[%s250 + $0x2d8] sm:$0xff]
        %v409 = vld [vmem:[%s250 + $0x2e0] sm:$0xff]
        %v410 = vld [vmem:[%s250 + $0x2e8] sm:$0xff]
        %v411 = vld [vmem:[%s250 + $0x2f0] sm:$0xff]
        %v412 = vld [vmem:[%s250 + $0x2f8] sm:$0xff]
        %v413 = vld [vmem:[%s250 + $0x300] sm:$0xff]
        %v414 = vld [vmem:[%s250 + $0x308] sm:$0xff]
        %v415 = vld [vmem:[%s250 + $0x310] sm:$0xff]
        %v416 = vld [vmem:[%s250 + $0x318] sm:$0xff]
        %v417 = vld [vmem:[%s250 + $0x320] sm:$0xff]
        %v418 = vld [vmem:[%s250 + $0x328] sm:$0xff]
        %v419 = vld [vmem:[%s250 + $0x330] sm:$0xff]
        %v420 = vld [vmem:[%s250 + $0x338] sm:$0xff]
        %v421 = vld [vmem:[%s250 + $0x340] sm:$0xff]
        %v422 = vld [vmem:[%s250 + $0x348] sm:$0xff]
        %v423 = vld [vmem:[%s250 + $0x350] sm:$0xff]
        %v424 = vld [vmem:[%s250 + $0x358] sm:$0xff]
        %v425 = vld [vmem:[%s250 + $0x360] sm:$0xff]
        %v426 = vld [vmem:[%s250 + $0x368] sm:$0xff]
        %v427 = vld [vmem:[%s250 + $0x370] sm:$0xff]
        %v428 = vld [vmem:[%s250 + $0x378] sm:$0xff]
        %v429 = vld [vmem:[%s250 + $0x380] sm:$0xff]
        %v430 = vld [vmem:[%s250 + $0x388] sm:$0xff]
        %v431 = vld [vmem:[%s250 + $0x390] sm:$0xff]
        %v432 = vld [vmem:[%s250 + $0x398] sm:$0xff]
        %v433 = vld [vmem:[%s250 + $0x3a0] sm:$0xff]
        %v434 = vld [vmem:[%s250 + $0x3a8] sm:$0xff]
        %v435 = vld [vmem:[%s250 + $0x3b0] sm:$0xff]
        %v436 = vld [vmem:[%s250 + $0x3b8] sm:$0xff]
        %v437 = vld [vmem:[%s250 + $0x3c0] sm:$0xff]
        %v438 = vld [vmem:[%s250 + $0x3c8] sm:$0xff]
        %v439 = vld [vmem:[%s250 + $0x3d0] sm:$0xff]
        %v440 = vld [vmem:[%s250 + $0x3d8] sm:$0xff]
        %v441 = vld [vmem:[%s250 + $0x3e0] sm:$0xff]
        %v442 = vld [vmem:[%s250 + $0x3e8] sm:$0xff]
        %v443 = vld [vmem:[%s250 + $0x3f0] sm:$0xff]
        %v444 = vld [vmem:[%s250 + $0x3f8] sm:$0xff]
        %v573 = vunpack.c.l.b16 %v317
        %v574 = vunpack.c.h.b16 %v317
        %v575 = vunpack.c.l.b16 %v318
        %v576 = vunpack.c.h.b16 %v318
        %v577 = vunpack.c.l.b16 %v319
        %v578 = vunpack.c.h.b16 %v319
        %v579 = vunpack.c.l.b16 %v320
        %v580 = vunpack.c.h.b16 %v320
        %v581 = vunpack.c.l.b16 %v321
        %v582 = vunpack.c.h.b16 %v321
        %v583 = vunpack.c.l.b16 %v322
        %v584 = vunpack.c.h.b16 %v322
        %v585 = vunpack.c.l.b16 %v323
        %v586 = vunpack.c.h.b16 %v323
        %v587 = vunpack.c.l.b16 %v324
        %v588 = vunpack.c.h.b16 %v324
        %v589 = vunpack.c.l.b16 %v325
        %v590 = vunpack.c.h.b16 %v325
        %v591 = vunpack.c.l.b16 %v326
        %v592 = vunpack.c.h.b16 %v326
        %v593 = vunpack.c.l.b16 %v327
        %v594 = vunpack.c.h.b16 %v327
        %v595 = vunpack.c.l.b16 %v328
        %v596 = vunpack.c.h.b16 %v328
        %v597 = vunpack.c.l.b16 %v329
        %v598 = vunpack.c.h.b16 %v329
        %v599 = vunpack.c.l.b16 %v330
        %v600 = vunpack.c.h.b16 %v330
        %v601 = vunpack.c.l.b16 %v331
        %v602 = vunpack.c.h.b16 %v331
        %v603 = vunpack.c.l.b16 %v332
        %v604 = vunpack.c.h.b16 %v332
        %v605 = vunpack.c.l.b16 %v333
        %v606 = vunpack.c.h.b16 %v333
        %v607 = vunpack.c.l.b16 %v334
        %v608 = vunpack.c.h.b16 %v334
        %v609 = vunpack.c.l.b16 %v335
        %v610 = vunpack.c.h.b16 %v335
        %v611 = vunpack.c.l.b16 %v336
        %v612 = vunpack.c.h.b16 %v336
        %v613 = vunpack.c.l.b16 %v337
        %v614 = vunpack.c.h.b16 %v337
        %v615 = vunpack.c.l.b16 %v338
        %v616 = vunpack.c.h.b16 %v338
        %v617 = vunpack.c.l.b16 %v339
        %v618 = vunpack.c.h.b16 %v339
        %v619 = vunpack.c.l.b16 %v340
        %v620 = vunpack.c.h.b16 %v340
        %v621 = vunpack.c.l.b16 %v341
        %v622 = vunpack.c.h.b16 %v341
        %v623 = vunpack.c.l.b16 %v342
        %v624 = vunpack.c.h.b16 %v342
        %v625 = vunpack.c.l.b16 %v343
        %v626 = vunpack.c.h.b16 %v343
        %v627 = vunpack.c.l.b16 %v344
        %v628 = vunpack.c.h.b16 %v344
        %v629 = vunpack.c.l.b16 %v345
        %v630 = vunpack.c.h.b16 %v345
        %v631 = vunpack.c.l.b16 %v346
        %v632 = vunpack.c.h.b16 %v346
        %v633 = vunpack.c.l.b16 %v347
        %v634 = vunpack.c.h.b16 %v347
        %v635 = vunpack.c.l.b16 %v348
        %v636 = vunpack.c.h.b16 %v348
        %v637 = vunpack.c.l.b16 %v349
        %v638 = vunpack.c.h.b16 %v349
        %v639 = vunpack.c.l.b16 %v350
        %v640 = vunpack.c.h.b16 %v350
        %v641 = vunpack.c.l.b16 %v351
        %v642 = vunpack.c.h.b16 %v351
        %v643 = vunpack.c.l.b16 %v352
        %v644 = vunpack.c.h.b16 %v352
        %v645 = vunpack.c.l.b16 %v353
        %v646 = vunpack.c.h.b16 %v353
        %v647 = vunpack.c.l.b16 %v354
        %v648 = vunpack.c.h.b16 %v354
        %v649 = vunpack.c.l.b16 %v355
        %v650 = vunpack.c.h.b16 %v355
        %v651 = vunpack.c.l.b16 %v356
        %v652 = vunpack.c.h.b16 %v356
        %v653 = vunpack.c.l.b16 %v357
        %v654 = vunpack.c.h.b16 %v357
        %v655 = vunpack.c.l.b16 %v358
        %v656 = vunpack.c.h.b16 %v358
        %v657 = vunpack.c.l.b16 %v359
        %v658 = vunpack.c.h.b16 %v359
        %v659 = vunpack.c.l.b16 %v360
        %v660 = vunpack.c.h.b16 %v360
        %v661 = vunpack.c.l.b16 %v361
        %v662 = vunpack.c.h.b16 %v361
        %v663 = vunpack.c.l.b16 %v362
        %v664 = vunpack.c.h.b16 %v362
        %v665 = vunpack.c.l.b16 %v363
        %v666 = vunpack.c.h.b16 %v363
        %v667 = vunpack.c.l.b16 %v364
        %v668 = vunpack.c.h.b16 %v364
        %v669 = vunpack.c.l.b16 %v365
        %v670 = vunpack.c.h.b16 %v365
        %v671 = vunpack.c.l.b16 %v366
        %v672 = vunpack.c.h.b16 %v366
        %v673 = vunpack.c.l.b16 %v367
        %v674 = vunpack.c.h.b16 %v367
        %v675 = vunpack.c.l.b16 %v368
        %v676 = vunpack.c.h.b16 %v368
        %v677 = vunpack.c.l.b16 %v369
        %v678 = vunpack.c.h.b16 %v369
        %v679 = vunpack.c.l.b16 %v370
        %v680 = vunpack.c.h.b16 %v370
        %v681 = vunpack.c.l.b16 %v371
        %v682 = vunpack.c.h.b16 %v371
        %v683 = vunpack.c.l.b16 %v372
        %v684 = vunpack.c.h.b16 %v372
        %v685 = vunpack.c.l.b16 %v373
        %v686 = vunpack.c.h.b16 %v373
        %v687 = vunpack.c.l.b16 %v374
        %v688 = vunpack.c.h.b16 %v374
        %v689 = vunpack.c.l.b16 %v375
        %v690 = vunpack.c.h.b16 %v375
        %v691 = vunpack.c.l.b16 %v376
        %v692 = vunpack.c.h.b16 %v376
        %v693 = vunpack.c.l.b16 %v377
        %v694 = vunpack.c.h.b16 %v377
        %v695 = vunpack.c.l.b16 %v378
        %v696 = vunpack.c.h.b16 %v378
        %v697 = vunpack.c.l.b16 %v379
        %v698 = vunpack.c.h.b16 %v379
        %v699 = vunpack.c.l.b16 %v380
        %v700 = vunpack.c.h.b16 %v380
        %v701 = vunpack.c.l.b16 %v381
        %v702 = vunpack.c.h.b16 %v381
        %v703 = vunpack.c.l.b16 %v382
        %v704 = vunpack.c.h.b16 %v382
        %v705 = vunpack.c.l.b16 %v383
        %v706 = vunpack.c.h.b16 %v383
        %v707 = vunpack.c.l.b16 %v384
        %v708 = vunpack.c.h.b16 %v384
        %v709 = vunpack.c.l.b16 %v385
        %v710 = vunpack.c.h.b16 %v385
        %v711 = vunpack.c.l.b16 %v386
        %v712 = vunpack.c.h.b16 %v386
        %v713 = vunpack.c.l.b16 %v387
        %v714 = vunpack.c.h.b16 %v387
        %v715 = vunpack.c.l.b16 %v388
        %v716 = vunpack.c.h.b16 %v388
        %v717 = vunpack.c.l.b16 %v389
        %v718 = vunpack.c.h.b16 %v389
        %v719 = vunpack.c.l.b16 %v390
        %v720 = vunpack.c.h.b16 %v390
        %v721 = vunpack.c.l.b16 %v391
        %v722 = vunpack.c.h.b16 %v391
        %v723 = vunpack.c.l.b16 %v392
        %v724 = vunpack.c.h.b16 %v392
        %v725 = vunpack.c.l.b16 %v393
        %v726 = vunpack.c.h.b16 %v393
        %v727 = vunpack.c.l.b16 %v394
        %v728 = vunpack.c.h.b16 %v394
        %v729 = vunpack.c.l.b16 %v395
        %v730 = vunpack.c.h.b16 %v395
        %v731 = vunpack.c.l.b16 %v396
        %v732 = vunpack.c.h.b16 %v396
        %v733 = vunpack.c.l.b16 %v397
        %v734 = vunpack.c.h.b16 %v397
        %v735 = vunpack.c.l.b16 %v398
        %v736 = vunpack.c.h.b16 %v398
        %v737 = vunpack.c.l.b16 %v399
        %v738 = vunpack.c.h.b16 %v399
        %v739 = vunpack.c.l.b16 %v400
        %v740 = vunpack.c.h.b16 %v400
        %v741 = vunpack.c.l.b16 %v401
        %v742 = vunpack.c.h.b16 %v401
        %v743 = vunpack.c.l.b16 %v402
        %v744 = vunpack.c.h.b16 %v402
        %v745 = vunpack.c.l.b16 %v403
        %v746 = vunpack.c.h.b16 %v403
        %v747 = vunpack.c.l.b16 %v404
        %v748 = vunpack.c.h.b16 %v404
        %v749 = vunpack.c.l.b16 %v405
        %v750 = vunpack.c.h.b16 %v405
        %v751 = vunpack.c.l.b16 %v406
        %v752 = vunpack.c.h.b16 %v406
        %v753 = vunpack.c.l.b16 %v407
        %v754 = vunpack.c.h.b16 %v407
        %v755 = vunpack.c.l.b16 %v408
        %v756 = vunpack.c.h.b16 %v408
        %v757 = vunpack.c.l.b16 %v409
        %v758 = vunpack.c.h.b16 %v409
        %v759 = vunpack.c.l.b16 %v410
        %v760 = vunpack.c.h.b16 %v410
        %v761 = vunpack.c.l.b16 %v411
        %v762 = vunpack.c.h.b16 %v411
        %v763 = vunpack.c.l.b16 %v412
        %v764 = vunpack.c.h.b16 %v412
        %v765 = vunpack.c.l.b16 %v413
        %v766 = vunpack.c.h.b16 %v413
        %v767 = vunpack.c.l.b16 %v414
        %v768 = vunpack.c.h.b16 %v414
        %v769 = vunpack.c.l.b16 %v415
        %v770 = vunpack.c.h.b16 %v415
        %v771 = vunpack.c.l.b16 %v416
        %v772 = vunpack.c.h.b16 %v416
        %v773 = vunpack.c.l.b16 %v417
        %v774 = vunpack.c.h.b16 %v417
        %v775 = vunpack.c.l.b16 %v418
        %v776 = vunpack.c.h.b16 %v418
        %v777 = vunpack.c.l.b16 %v419
        %v778 = vunpack.c.h.b16 %v419
        %v779 = vunpack.c.l.b16 %v420
        %v780 = vunpack.c.h.b16 %v420
        %v781 = vunpack.c.l.b16 %v421
        %v782 = vunpack.c.h.b16 %v421
        %v783 = vunpack.c.l.b16 %v422
        %v784 = vunpack.c.h.b16 %v422
        %v785 = vunpack.c.l.b16 %v423
        %v786 = vunpack.c.h.b16 %v423
        %v787 = vunpack.c.l.b16 %v424
        %v788 = vunpack.c.h.b16 %v424
        %v789 = vunpack.c.l.b16 %v425
        %v790 = vunpack.c.h.b16 %v425
        %v791 = vunpack.c.l.b16 %v426
        %v792 = vunpack.c.h.b16 %v426
        %v793 = vunpack.c.l.b16 %v427
        %v794 = vunpack.c.h.b16 %v427
        %v795 = vunpack.c.l.b16 %v428
        %v796 = vunpack.c.h.b16 %v428
        %v797 = vunpack.c.l.b16 %v429
        %v798 = vunpack.c.h.b16 %v429
        %v799 = vunpack.c.l.b16 %v430
        %v800 = vunpack.c.h.b16 %v430
        %v801 = vunpack.c.l.b16 %v431
        %v802 = vunpack.c.h.b16 %v431
        %v803 = vunpack.c.l.b16 %v432
        %v804 = vunpack.c.h.b16 %v432
        %v805 = vunpack.c.l.b16 %v433
        %v806 = vunpack.c.h.b16 %v433
        %v807 = vunpack.c.l.b16 %v434
        %v808 = vunpack.c.h.b16 %v434
        %v809 = vunpack.c.l.b16 %v435
        %v810 = vunpack.c.h.b16 %v435
        %v811 = vunpack.c.l.b16 %v436
        %v812 = vunpack.c.h.b16 %v436
        %v813 = vunpack.c.l.b16 %v437
        %v814 = vunpack.c.h.b16 %v437
        %v815 = vunpack.c.l.b16 %v438
        %v816 = vunpack.c.h.b16 %v438
        %v817 = vunpack.c.l.b16 %v439
        %v818 = vunpack.c.h.b16 %v439
        %v819 = vunpack.c.l.b16 %v440
        %v820 = vunpack.c.h.b16 %v440
        %v821 = vunpack.c.l.b16 %v441
        %v822 = vunpack.c.h.b16 %v441
        %v823 = vunpack.c.l.b16 %v442
        %v824 = vunpack.c.h.b16 %v442
        %v825 = vunpack.c.l.b16 %v443
        %v826 = vunpack.c.h.b16 %v443
        %v827 = vunpack.c.l.b16 %v444
        %v828 = vunpack.c.h.b16 %v444
        %v829 = vpack.c.b16 %v577, %v573
        %v830 = vpack.c.b16 %v578, %v574
        %v831 = vpack.c.b16 %v579, %v575
        %v832 = vpack.c.b16 %v580, %v576
        %v833 = vpack.c.b16 %v585, %v581
        %v834 = vpack.c.b16 %v586, %v582
        %v835 = vpack.c.b16 %v587, %v583
        %v836 = vpack.c.b16 %v588, %v584
        %v837 = vpack.c.b16 %v593, %v589
        %v838 = vpack.c.b16 %v594, %v590
        %v839 = vpack.c.b16 %v595, %v591
        %v840 = vpack.c.b16 %v596, %v592
        %v841 = vpack.c.b16 %v601, %v597
        %v842 = vpack.c.b16 %v602, %v598
        %v843 = vpack.c.b16 %v603, %v599
        %v844 = vpack.c.b16 %v604, %v600
        %v845 = vpack.c.b16 %v609, %v605
        %v846 = vpack.c.b16 %v610, %v606
        %v847 = vpack.c.b16 %v611, %v607
        %v848 = vpack.c.b16 %v612, %v608
        %v849 = vpack.c.b16 %v617, %v613
        %v850 = vpack.c.b16 %v618, %v614
        %v851 = vpack.c.b16 %v619, %v615
        %v852 = vpack.c.b16 %v620, %v616
        %v853 = vpack.c.b16 %v625, %v621
        %v854 = vpack.c.b16 %v626, %v622
        %v855 = vpack.c.b16 %v627, %v623
        %v856 = vpack.c.b16 %v628, %v624
        %v857 = vpack.c.b16 %v633, %v629
        %v858 = vpack.c.b16 %v634, %v630
        %v859 = vpack.c.b16 %v635, %v631
        %v860 = vpack.c.b16 %v636, %v632
        %v861 = vpack.c.b16 %v641, %v637
        %v862 = vpack.c.b16 %v642, %v638
        %v863 = vpack.c.b16 %v643, %v639
        %v864 = vpack.c.b16 %v644, %v640
        %v865 = vpack.c.b16 %v649, %v645
        %v866 = vpack.c.b16 %v650, %v646
        %v867 = vpack.c.b16 %v651, %v647
        %v868 = vpack.c.b16 %v652, %v648
        %v869 = vpack.c.b16 %v657, %v653
        %v870 = vpack.c.b16 %v658, %v654
        %v871 = vpack.c.b16 %v659, %v655
        %v872 = vpack.c.b16 %v660, %v656
        %v873 = vpack.c.b16 %v665, %v661
        %v874 = vpack.c.b16 %v666, %v662
        %v875 = vpack.c.b16 %v667, %v663
        %v876 = vpack.c.b16 %v668, %v664
        %v877 = vpack.c.b16 %v673, %v669
        %v878 = vpack.c.b16 %v674, %v670
        %v879 = vpack.c.b16 %v675, %v671
        %v880 = vpack.c.b16 %v676, %v672
        %v881 = vpack.c.b16 %v681, %v677
        %v882 = vpack.c.b16 %v682, %v678
        %v883 = vpack.c.b16 %v683, %v679
        %v884 = vpack.c.b16 %v684, %v680
        %v885 = vpack.c.b16 %v689, %v685
        %v886 = vpack.c.b16 %v690, %v686
        %v887 = vpack.c.b16 %v691, %v687
        %v888 = vpack.c.b16 %v692, %v688
        %v889 = vpack.c.b16 %v697, %v693
        %v890 = vpack.c.b16 %v698, %v694
        %v891 = vpack.c.b16 %v699, %v695
        %v892 = vpack.c.b16 %v700, %v696
        %v893 = vpack.c.b16 %v705, %v701
        %v894 = vpack.c.b16 %v706, %v702
        %v895 = vpack.c.b16 %v707, %v703
        %v896 = vpack.c.b16 %v708, %v704
        %v897 = vpack.c.b16 %v713, %v709
        %v898 = vpack.c.b16 %v714, %v710
        %v899 = vpack.c.b16 %v715, %v711
        %v900 = vpack.c.b16 %v716, %v712
        %v901 = vpack.c.b16 %v721, %v717
        %v902 = vpack.c.b16 %v722, %v718
        %v903 = vpack.c.b16 %v723, %v719
        %v904 = vpack.c.b16 %v724, %v720
        %v905 = vpack.c.b16 %v729, %v725
        %v906 = vpack.c.b16 %v730, %v726
        %v907 = vpack.c.b16 %v731, %v727
        %v908 = vpack.c.b16 %v732, %v728
        %v909 = vpack.c.b16 %v737, %v733
        %v910 = vpack.c.b16 %v738, %v734
        %v911 = vpack.c.b16 %v739, %v735
        %v912 = vpack.c.b16 %v740, %v736
        %v913 = vpack.c.b16 %v745, %v741
        %v914 = vpack.c.b16 %v746, %v742
        %v915 = vpack.c.b16 %v747, %v743
        %v916 = vpack.c.b16 %v748, %v744
        %v917 = vpack.c.b16 %v753, %v749
        %v918 = vpack.c.b16 %v754, %v750
        %v919 = vpack.c.b16 %v755, %v751
        %v920 = vpack.c.b16 %v756, %v752
        %v921 = vpack.c.b16 %v761, %v757
        %v922 = vpack.c.b16 %v762, %v758
        %v923 = vpack.c.b16 %v763, %v759
        %v924 = vpack.c.b16 %v764, %v760
        %v925 = vpack.c.b16 %v769, %v765
        %v926 = vpack.c.b16 %v770, %v766
        %v927 = vpack.c.b16 %v771, %v767
        %v928 = vpack.c.b16 %v772, %v768
        %v929 = vpack.c.b16 %v777, %v773
        %v930 = vpack.c.b16 %v778, %v774
        %v931 = vpack.c.b16 %v779, %v775
        %v932 = vpack.c.b16 %v780, %v776
        %v933 = vpack.c.b16 %v785, %v781
        %v934 = vpack.c.b16 %v786, %v782
        %v935 = vpack.c.b16 %v787, %v783
        %v936 = vpack.c.b16 %v788, %v784
        %v937 = vpack.c.b16 %v793, %v789
        %v938 = vpack.c.b16 %v794, %v790
        %v939 = vpack.c.b16 %v795, %v791
        %v940 = vpack.c.b16 %v796, %v792
        %v941 = vpack.c.b16 %v801, %v797
        %v942 = vpack.c.b16 %v802, %v798
        %v943 = vpack.c.b16 %v803, %v799
        %v944 = vpack.c.b16 %v804, %v800
        %v945 = vpack.c.b16 %v809, %v805
        %v946 = vpack.c.b16 %v810, %v806
        %v947 = vpack.c.b16 %v811, %v807
        %v948 = vpack.c.b16 %v812, %v808
        %v949 = vpack.c.b16 %v817, %v813
        %v950 = vpack.c.b16 %v818, %v814
        %v951 = vpack.c.b16 %v819, %v815
        %v952 = vpack.c.b16 %v820, %v816
        %v953 = vpack.c.b16 %v825, %v821
        %v954 = vpack.c.b16 %v826, %v822
        %v955 = vpack.c.b16 %v827, %v823
        %v956 = vpack.c.b16 %v828, %v824
        %1085 = vmatprep.subr.bf16.mxu0 %v830
        %1086 = vmatpush1.bf16.msra.mxu0 %v829
        %1087 = vmatprep.subr.bf16.mxu0 %v834
        %1088 = vmatpush1.bf16.msra.mxu0 %v833
        %1089 = vmatprep.subr.bf16.mxu0 %v838
        %1090 = vmatpush1.bf16.msra.mxu0 %v837
        %1091 = vmatprep.subr.bf16.mxu0 %v842
        %1092 = vmatpush1.bf16.msra.mxu0 %v841
        %1093 = vmatprep.subr.bf16.mxu0 %v846
        %1094 = vmatpush1.bf16.msra.mxu0 %v845
        %1095 = vmatprep.subr.bf16.mxu0 %v850
        %1096 = vmatpush1.bf16.msra.mxu0 %v849
        %1097 = vmatprep.subr.bf16.mxu0 %v854
        %1098 = vmatpush1.bf16.msra.mxu0 %v853
        %1099 = vmatprep.subr.bf16.mxu0 %v858
        %1100 = vmatpush1.bf16.msra.mxu0 %v857
        %1101 = vmatprep.subr.bf16.mxu0 %v862
        %1102 = vmatpush1.bf16.msra.mxu0 %v861
        %1103 = vmatprep.subr.bf16.mxu0 %v866
        %1104 = vmatpush1.bf16.msra.mxu0 %v865
        %1105 = vmatprep.subr.bf16.mxu0 %v870
        %1106 = vmatpush1.bf16.msra.mxu0 %v869
        %1107 = vmatprep.subr.bf16.mxu0 %v874
        %1108 = vmatpush1.bf16.msra.mxu0 %v873
        %1109 = vmatprep.subr.bf16.mxu0 %v878
        %1110 = vmatpush1.bf16.msra.mxu0 %v877
        %1111 = vmatprep.subr.bf16.mxu0 %v882
        %1112 = vmatpush1.bf16.msra.mxu0 %v881
        %1113 = vmatprep.subr.bf16.mxu0 %v886
        %1114 = vmatpush1.bf16.msra.mxu0 %v885
        %1115 = vmatprep.subr.bf16.mxu0 %v890
        %1116 = vmatpush1.bf16.msra.mxu0 %v889
        %1117 = vmatprep.mubr.bf16.mxu0 %v314
        %1118 = vmatmul.mubr.bf16.gmra.mrb[0].mxu0 %v313
        %v1119 = vpop.f32.mrb[0].mxu0
        %v1120 = vadd.f32 0.0, %v1119
        %v1121 = vpop.f32.mrb[0].mxu0
        %v1122 = vadd.f32 0.0, %v1121
        %v1123 = vpop.f32.mrb[0].mxu0
        %v1124 = vpop.f32.mrb[0].mxu0
        %1125 = vdwg.mxu0
        %1126 = vmatprep.subr.bf16.mxu0 %v894
        %1127 = vmatpush1.bf16.msra.mxu0 %v893
        %1128 = vmatprep.subr.bf16.mxu0 %v898
        %1129 = vmatpush1.bf16.msra.mxu0 %v897
        %1130 = vmatprep.subr.bf16.mxu0 %v902
        %1131 = vmatpush1.bf16.msra.mxu0 %v901
        %1132 = vmatprep.subr.bf16.mxu0 %v906
        %1133 = vmatpush1.bf16.msra.mxu0 %v905
        %1134 = vmatprep.subr.bf16.mxu0 %v910
        %1135 = vmatpush1.bf16.msra.mxu0 %v909
        %1136 = vmatprep.subr.bf16.mxu0 %v914
        %1137 = vmatpush1.bf16.msra.mxu0 %v913
        %1138 = vmatprep.subr.bf16.mxu0 %v918
        %1139 = vmatpush1.bf16.msra.mxu0 %v917
        %1140 = vmatprep.subr.bf16.mxu0 %v922
        %1141 = vmatpush1.bf16.msra.mxu0 %v921
        %1142 = vmatprep.subr.bf16.mxu0 %v926
        %1143 = vmatpush1.bf16.msra.mxu0 %v925
        %1144 = vmatprep.subr.bf16.mxu0 %v930
        %1145 = vmatpush1.bf16.msra.mxu0 %v929
        %1146 = vmatprep.subr.bf16.mxu0 %v934
        %1147 = vmatpush1.bf16.msra.mxu0 %v933
        %1148 = vmatprep.subr.bf16.mxu0 %v938
        %1149 = vmatpush1.bf16.msra.mxu0 %v937
        %1150 = vmatprep.subr.bf16.mxu0 %v942
        %1151 = vmatpush1.bf16.msra.mxu0 %v941
        %1152 = vmatprep.subr.bf16.mxu0 %v946
        %1153 = vmatpush1.bf16.msra.mxu0 %v945
        %1154 = vmatprep.subr.bf16.mxu0 %v950
        %1155 = vmatpush1.bf16.msra.mxu0 %v949
        %1156 = vmatprep.subr.bf16.mxu0 %v954
        %1157 = vmatpush1.bf16.msra.mxu0 %v953
        %1158 = vmatprep.mubr.bf16.mxu0 %v316
        %1159 = vmatmul.mubr.bf16.gmra.mrb[0].mxu0 %v315
        %v1160 = vpop.f32.mrb[0].mxu0
        %v1161 = vadd.f32 %v1120, %v1160
        %v1162 = vpop.f32.mrb[0].mxu0
        %v1163 = vadd.f32 %v1122, %v1162
        %v1164 = vpop.f32.mrb[0].mxu0
        %v1165 = vpop.f32.mrb[0].mxu0
        %1166 = vdwg.mxu0
        %1167 = vmatprep.subr.bf16.mxu0 %v832
        %1168 = vmatpush1.bf16.msra.mxu0 %v831
        %1169 = vmatprep.subr.bf16.mxu0 %v836
        %1170 = vmatpush1.bf16.msra.mxu0 %v835
        %1171 = vmatprep.subr.bf16.mxu0 %v840
        %1172 = vmatpush1.bf16.msra.mxu0 %v839
        %1173 = vmatprep.subr.bf16.mxu0 %v844
        %1174 = vmatpush1.bf16.msra.mxu0 %v843
        %1175 = vmatprep.subr.bf16.mxu0 %v848
        %1176 = vmatpush1.bf16.msra.mxu0 %v847
        %1177 = vmatprep.subr.bf16.mxu0 %v852
        %1178 = vmatpush1.bf16.msra.mxu0 %v851
        %1179 = vmatprep.subr.bf16.mxu0 %v856
        %1180 = vmatpush1.bf16.msra.mxu0 %v855
        %1181 = vmatprep.subr.bf16.mxu0 %v860
        %1182 = vmatpush1.bf16.msra.mxu0 %v859
        %1183 = vmatprep.subr.bf16.mxu0 %v864
        %1184 = vmatpush1.bf16.msra.mxu0 %v863
        %1185 = vmatprep.subr.bf16.mxu0 %v868
        %1186 = vmatpush1.bf16.msra.mxu0 %v867
        %1187 = vmatprep.subr.bf16.mxu0 %v872
        %1188 = vmatpush1.bf16.msra.mxu0 %v871
        %1189 = vmatprep.subr.bf16.mxu0 %v876
        %1190 = vmatpush1.bf16.msra.mxu0 %v875
        %1191 = vmatprep.subr.bf16.mxu0 %v880
        %1192 = vmatpush1.bf16.msra.mxu0 %v879
        %1193 = vmatprep.subr.bf16.mxu0 %v884
        %1194 = vmatpush1.bf16.msra.mxu0 %v883
        %1195 = vmatprep.subr.bf16.mxu0 %v888
        %1196 = vmatpush1.bf16.msra.mxu0 %v887
        %1197 = vmatprep.subr.bf16.mxu0 %v892
        %1198 = vmatpush1.bf16.msra.mxu0 %v891
        %1199 = vmatprep.mubr.bf16.mxu0 %v314
        %1200 = vmatmul.mubr.bf16.gmra.mrb[0].mxu0 %v313
        %v1201 = vpop.f32.mrb[0].mxu0
        %v1202 = vadd.f32 0.0, %v1201
        %v1203 = vpop.f32.mrb[0].mxu0
        %v1204 = vadd.f32 0.0, %v1203
        %v1205 = vpop.f32.mrb[0].mxu0
        %v1206 = vpop.f32.mrb[0].mxu0
        %1207 = vdwg.mxu0
        %1208 = vmatprep.subr.bf16.mxu0 %v896
        %1209 = vmatpush1.bf16.msra.mxu0 %v895
        %1210 = vmatprep.subr.bf16.mxu0 %v900
        %1211 = vmatpush1.bf16.msra.mxu0 %v899
        %1212 = vmatprep.subr.bf16.mxu0 %v904
        %1213 = vmatpush1.bf16.msra.mxu0 %v903
        %1214 = vmatprep.subr.bf16.mxu0 %v908
        %1215 = vmatpush1.bf16.msra.mxu0 %v907
        %1216 = vmatprep.subr.bf16.mxu0 %v912
        %1217 = vmatpush1.bf16.msra.mxu0 %v911
        %1218 = vmatprep.subr.bf16.mxu0 %v916
        %1219 = vmatpush1.bf16.msra.mxu0 %v915
        %1220 = vmatprep.subr.bf16.mxu0 %v920
        %1221 = vmatpush1.bf16.msra.mxu0 %v919
        %1222 = vmatprep.subr.bf16.mxu0 %v924
        %1223 = vmatpush1.bf16.msra.mxu0 %v923
        %1224 = vmatprep.subr.bf16.mxu0 %v928
        %1225 = vmatpush1.bf16.msra.mxu0 %v927
        %1226 = vmatprep.subr.bf16.mxu0 %v932
        %1227 = vmatpush1.bf16.msra.mxu0 %v931
        %1228 = vmatprep.subr.bf16.mxu0 %v936
        %1229 = vmatpush1.bf16.msra.mxu0 %v935
        %1230 = vmatprep.subr.bf16.mxu0 %v940
        %1231 = vmatpush1.bf16.msra.mxu0 %v939
        %1232 = vmatprep.subr.bf16.mxu0 %v944
        %1233 = vmatpush1.bf16.msra.mxu0 %v943
        %1234 = vmatprep.subr.bf16.mxu0 %v948
        %1235 = vmatpush1.bf16.msra.mxu0 %v947
        %1236 = vmatprep.subr.bf16.mxu0 %v952
        %1237 = vmatpush1.bf16.msra.mxu0 %v951
        %1238 = vmatprep.subr.bf16.mxu0 %v956
        %1239 = vmatpush1.bf16.msra.mxu0 %v955
        %1240 = vmatprep.mubr.bf16.mxu0 %v316
        %1241 = vmatmul.mubr.bf16.gmra.mrb[0].mxu0 %v315
        %v1242 = vpop.f32.mrb[0].mxu0
        %v1243 = vadd.f32 %v1202, %v1242
        %v1244 = vpop.f32.mrb[0].mxu0
        %v1245 = vadd.f32 %v1204, %v1244
        %v1246 = vpop.f32.mrb[0].mxu0
        %v1247 = vpop.f32.mrb[0].mxu0
        %1248 = vdwg.mxu0
        %v1249 = vadd.f32 %v305, %v1161
        %v1250 = vadd.f32 %v306, %v1163
        %v1251 = vadd.f32 %v307, %v1243
        %v1252 = vadd.f32 %v308, %v1245
        %1253 = vst [vmem:[#allocation2] sm:$0xff] %v1249
        %1254 = vst [vmem:[#allocation2 + $0x8] sm:$0xff] %v1250
        %1255 = vst [vmem:[#allocation2 + $0x10] sm:$0xff] %v1251
        %1256 = vst [vmem:[#allocation2 + $0x18] sm:$0xff] %v1252
        %p1257 = scmp.eq.s32.totalorder %s30, 17
        // Predicated region
        $region49: #{alexnet_forward.13} parent=31 // pred_check
          %p1258 = pneg %p1257
        $region50: #{alexnet_forward.13} parent=31 // pred_check_branch
          %1260 = sbr.rel (%p1258) target = $region52
        $region51: #{alexnet_forward.13} parent=31 // pred_region
          %v1261 = vld [vmem:[#allocation2] sm:$0xff]
          %v1262 = vld [vmem:[#allocation2 + $0x8] sm:$0xff]
          %v1263 = vld [vmem:[#allocation2 + $0x10] sm:$0xff]
          %v1264 = vld [vmem:[#allocation2 + $0x18] sm:$0xff]
          %v1265 = vld [vmem:[%s259] sm:$0xf]
          %v1267 = vlaneseq
          %v1268 = vshrl.u32 %v1267, 7
          %v1269 = vsub.s32 0, %v1268
          %v1270 = vrot.slane %v1265, %v1269
          %v1271 = vlaneseq
          %v1272 = vshrl.u32 %v1271, 7
          %v1273 = vsub.s32 1, %v1272
          %v1274 = vrot.slane %v1265, %v1273
          %v1275 = vlaneseq
          %v1276 = vshrl.u32 %v1275, 7
          %v1277 = vsub.s32 2, %v1276
          %v1278 = vrot.slane %v1265, %v1277
          %v1279 = vlaneseq
          %v1280 = vshrl.u32 %v1279, 7
          %v1281 = vsub.s32 3, %v1280
          %v1282 = vrot.slane %v1265, %v1281
          %v1287 = vadd.f32 %v1261, %v1270
          %v1288 = vadd.f32 %v1262, %v1274
          %v1289 = vadd.f32 %v1263, %v1278
          %v1290 = vadd.f32 %v1264, %v1282
          %v1291 = vmax.f32 %v1287, 0.0
          %v1292 = vmax.f32 %v1288, 0.0
          %v1293 = vmax.f32 %v1289, 0.0
          %v1294 = vmax.f32 %v1290, 0.0
          %1295 = vst [vmem:[%s291] sm:$0xff] %v1291
          %1296 = vst [vmem:[%s291 + $0x8] sm:$0xff] %v1292
          %1297 = vst [vmem:[%s291 + $0x10] sm:$0xff] %v1293
          %1298 = vst [vmem:[%s291 + $0x18] sm:$0xff] %v1294
        $region52: #{alexnet_forward.13} parent=31 // pred_fallthru
          _
        %s1299 = sand.u32 %s134, 1
        %s1300 = scalar_lea.sflag [#allocation5], %s1299
        %s1301 = sand.u32 %s134, 1
        %s1302 = smul.addr %s1301, 32
        %s1303 = scalar_lea.vmem [#allocation9], %s1302
        // Predicated region
        $region53: #{alexnet_forward.13} parent=31 // pred_check
          %p1304 = pneg %p144
        $region54: #{alexnet_forward.13} parent=31 // pred_check_branch
          %1306 = sbr.rel (%p1304) target = $region56
        $region55: #{alexnet_forward.13} parent=31 // pred_region
          %s1307 = smul.u32 4, %s29
          %s1309 = ssub.s32 512, 512
          %1310 = vsyncadd %s1300, %s1309
          %s1311 = smul.addr %s28, 32
          %s1312 = sadd.s32 %s1307, %s1311
          %s1313 = smul.addr %s1312, 128
          %s1314 = scalar_lea.hbm %s3, %s1313
          %s1316 = sshll.u32 %s1303, 4
          %s1317 = int_to_ptr.vmem [resolvable:$true] %s1316
          %1319 = dma.vmem_to_hbm [thread:$0]  %s1317, 512, %s1314, %s1300
        $region56: #{alexnet_forward.13} parent=31 // pred_fallthru
          _
      $region32: #{alexnet_forward.13} parent=5 // pred_fallthru
        _
      %p1320 = scmp.le.s32.totalorder 2, %s18
      // Predicated region
      $region57: #{alexnet_forward.13} parent=5 // pred_check
        %p1321 = pneg %p1320
      $region58: #{alexnet_forward.13} parent=5 // pred_check_branch
        %1323 = sbr.rel (%p1321) target = $region60
      $region59: #{alexnet_forward.13} parent=5 // pred_region
        %s1324 = ssub.s32 %s18, 2
        // Predicated region
        $region61: #{alexnet_forward.13} parent=59 // pred_check
          %p1325 = pneg %p150
        $region62: #{alexnet_forward.13} parent=59 // pred_check_branch
          %1327 = sbr.rel (%p1325) target = $region64
        $region63: #{alexnet_forward.13} parent=59 // pred_region
          %s1328 = sand.u32 %s135, 1
          %s1329 = scalar_lea.sflag [#allocation5], %s1328
          %s1330 = sand.u32 %s135, 1
          %s1331 = smul.addr %s1330, 32
          %s1332 = scalar_lea.vmem [#allocation9], %s1331
          %1333 = dma.done %s1329, 512
        $region64: #{alexnet_forward.13} parent=59 // pred_fallthru
          _
      $region60: #{alexnet_forward.13} parent=5 // pred_fallthru
        _
    $region6: #{alexnet_forward.13} parent=1 // loop_footer
      %s22 = sadd.s32 1, %s18
    $region7: #{alexnet_forward.13} parent=1 // loop_footer_branch
      %17 = sbr.rel target = $region3
    $region8: #{alexnet_forward.13} parent=1 // loop_exit
      _
    %1334 = vsyncpa [#allocation4], 1
    %s1335 = scalar_lea.sflag [#allocation4], 1
    %1336 = vsyncpa %s1335, 1
    %1337 = vsyncpa [#allocation7], 1
    %s1338 = scalar_lea.sflag [#allocation7], 1
    %1339 = vsyncpa %s1338, 1
    %1340 = vsyncpa [#allocation5], 1
    %s1341 = scalar_lea.sflag [#allocation5], 1
    %1342 = vsyncpa %s1341, 1

// kernel: alexnet_forward.14
$region0: #{alexnet_forward.14}
  #allocation0 [shape = 'u32[]', space=smem, size = 0x4, offset = 0x4, fixed_abs, tag = 'smem constant byte address 0x4 - core index']
  #allocation1 [shape = 'u32[144,128]{1,0:T(1,128)}', space=vmem, size = 0x12000, scoped, tag = 'internal scratch']
  #allocation2 [shape = 'f32[8,512]{1,0:T(8,128)}', space=vmem, size = 0x4000, scoped, tag = 'scratch operand']
  %s0 = inlined_call_operand.hbm [shape: f32[8,4096], index: 0, kind: input, shape index: {}]
  %s1 = inlined_call_operand.vmem [shape: bf16[4096,4096], index: 1, kind: input, shape index: {}]
  %s2 = inlined_call_operand.hbm [shape: f32[1,4096], index: 2, kind: input, shape index: {}]
  %s3 = inlined_call_operand.hbm [shape: f32[8,4096], index: 3, kind: output, shape index: {}]
  %s4 = sld [smem:[#allocation0]]
  $region84: #{alexnet_forward.14} parent=0
    _
  %s6 = ssub.s32 1, %s4
  %s7 = scalar_select 0, %s6, %s4
  $region1: #{alexnet_forward.14} parent=0
    #allocation3 [shape = 'u8[32768]{0}', space=vmem, size = 0x8000, scoped, tag = 'input window, operand 0']
    #allocation4 [shape = 's32[2]{0}', space=sflag, size = 0x8, scoped, tag = 'scoped memory for alexnet_forward.14']
    #allocation5 [shape = 's32[2]{0}', space=sflag, size = 0x8, scoped, tag = 'scoped memory for alexnet_forward.14']
    #allocation6 [shape = 'u8[1048576]{0}', space=vmem, size = 0x100000, scoped, tag = 'input window, operand 1']
    #allocation7 [shape = 'u8[4096]{0}', space=vmem, size = 0x1000, scoped, tag = 'input window, operand 2']
    #allocation8 [shape = 's32[2]{0}', space=sflag, size = 0x8, scoped, tag = 'scoped memory for alexnet_forward.14']
    #allocation9 [shape = 'u8[32768]{0}', space=vmem, size = 0x8000, scoped, tag = 'output window, operand 0']
    %8 = vsyncpa [#allocation4], 0
    %s9 = scalar_lea.sflag [#allocation4], 1
    %10 = vsyncpa %s9, 0
    %11 = vsyncpa [#allocation8], 0
    %s12 = scalar_lea.sflag [#allocation8], 1
    %13 = vsyncpa %s12, 0
    %14 = vsyncpa [#allocation5], 0
    %s15 = scalar_lea.sflag [#allocation5], 1
    %16 = vsyncpa %s15, 0
    loop: start=0, step=1, limit=66
    $region2: #{alexnet_forward.14} parent=1 // loop_pre_header
      _
    $region3: #{alexnet_forward.14} parent=1 // loop_header
      %s18 = sphi 0, %s22
      %p19 = scmp.ge.s32.totalorder %s18, 66
      %s25 = sphi 0, %s44
      %s26 = sphi 0, %s40
      %s27 = sphi 0, %s36
      %s28 = sphi 0, %s25
      %s29 = sphi 0, %s26
      %s30 = sphi 0, %s27
      %s31 = sphi 0, %s28
      %s32 = sphi 0, %s29
      %s33 = sphi 0, %s30
      %s49 = sphi 0, %s51
      %s52 = sphi 0, %s49
      %s53 = sphi 0, %s52
      %s69 = sphi 0, %s53
      %s77 = sphi 0, %s79
      %s80 = sphi 0, %s77
      %s81 = sphi 0, %s80
      %s97 = sphi 0, %s81
      %s103 = sphi 0, %s105
      %s106 = sphi 0, %s103
      %s107 = sphi 0, %s106
      %s123 = sphi 0, %s107
      %s131 = sphi 0, %s133
      %s134 = sphi 0, %s131
      %s135 = sphi 0, %s134
      %s151 = sphi 0, %s135
    $region4: #{alexnet_forward.14} parent=1 // loop_header_branch
      %21 = sbr.rel (%p19) target = $region8
    $region5: #{alexnet_forward.14} parent=1 // loop_body
      %s23 = ssub.s32 %s18, 1
      %s24 = ssub.s32 %s18, 2
      %s34 = sadd.s32 1, %s27
      %p35 = scmp.ge.s32.totalorder %s34, 8
      %s36 = scalar_select %p35, 0, %s34
      %s37 = sadd.s32 1, %s26
      %s38 = scalar_select %p35, %s37, %s26
      %p39 = scmp.ge.s32.totalorder %s38, 8
      %s40 = scalar_select %p39, 0, %s38
      %s41 = sadd.s32 1, %s25
      %s42 = scalar_select %p39, %s41, %s25
      %p43 = scmp.ge.s32.totalorder %s42, 1
      %s44 = scalar_select %p43, 0, %s42
      %s45 = ssub.s32 %s25, %s44
      %s46 = ssub.s32 %s27, %s36
      %s47 = sor.u32 %s45, %s46
      %p48 = scmp.eq.s32.totalorder %s47, 0
      %s50 = sadd.s32 %s49, 1
      %s51 = scalar_select %p48, %s49, %s50
      %p54 = pneg %p48
      %p55 = scmp.eq.s32.totalorder %s18, 63
      %p56 = por %p54, %p55
      %p57 = scmp.ne.s32.totalorder %s49, %s52
      %p58 = scmp.eq.s32.totalorder %s18, 0
      %p59 = por %p57, %p58
      %p60 = scmp.ne.s32.totalorder %s49, %s52
      %p61 = scmp.eq.s32.totalorder %s23, 63
      %p62 = por %p60, %p61
      %p63 = scmp.ne.s32.totalorder %s52, %s53
      %p64 = scmp.eq.s32.totalorder %s23, 0
      %p65 = por %p63, %p64
      %p66 = scmp.ne.s32.totalorder %s52, %s53
      %p67 = scmp.eq.s32.totalorder %s24, 63
      %p68 = por %p66, %p67
      %p70 = scmp.ne.s32.totalorder %s53, %s69
      %p71 = scmp.eq.s32.totalorder %s24, 0
      %p72 = por %p70, %p71
      %s73 = ssub.s32 %s27, %s36
      %s74 = ssub.s32 %s26, %s40
      %s75 = sor.u32 %s73, %s74
      %p76 = scmp.eq.s32.totalorder %s75, 0
      %s78 = sadd.s32 %s77, 1
      %s79 = scalar_select %p76, %s77, %s78
      %p82 = pneg %p76
      %p83 = scmp.eq.s32.totalorder %s18, 63
      %p84 = por %p82, %p83
      %p85 = scmp.ne.s32.totalorder %s77, %s80
      %p86 = scmp.eq.s32.totalorder %s18, 0
      %p87 = por %p85, %p86
      %p88 = scmp.ne.s32.totalorder %s77, %s80
      %p89 = scmp.eq.s32.totalorder %s23, 63
      %p90 = por %p88, %p89
      %p91 = scmp.ne.s32.totalorder %s80, %s81
      %p92 = scmp.eq.s32.totalorder %s23, 0
      %p93 = por %p91, %p92
      %p94 = scmp.ne.s32.totalorder %s80, %s81
      %p95 = scmp.eq.s32.totalorder %s24, 63
      %p96 = por %p94, %p95
      %p98 = scmp.ne.s32.totalorder %s81, %s97
      %p99 = scmp.eq.s32.totalorder %s24, 0
      %p100 = por %p98, %p99
      %s101 = ssub.s32 %s26, %s40
      %p102 = scmp.eq.s32.totalorder %s101, 0
      %s104 = sadd.s32 %s103, 1
      %s105 = scalar_select %p102, %s103, %s104
      %p108 = pneg %p102
      %p109 = scmp.eq.s32.totalorder %s18, 63
      %p110 = por %p108, %p109
      %p111 = scmp.ne.s32.totalorder %s103, %s106
      %p112 = scmp.eq.s32.totalorder %s18, 0
      %p113 = por %p111, %p112
      %p114 = scmp.ne.s32.totalorder %s103, %s106
      %p115 = scmp.eq.s32.totalorder %s23, 63
      %p116 = por %p114, %p115
      %p117 = scmp.ne.s32.totalorder %s106, %s107
      %p118 = scmp.eq.s32.totalorder %s23, 0
      %p119 = por %p117, %p118
      %p120 = scmp.ne.s32.totalorder %s106, %s107
      %p121 = scmp.eq.s32.totalorder %s24, 63
      %p122 = por %p120, %p121
      %p124 = scmp.ne.s32.totalorder %s107, %s123
      %p125 = scmp.eq.s32.totalorder %s24, 0
      %p126 = por %p124, %p125
      %s127 = ssub.s32 %s25, %s44
      %s128 = ssub.s32 %s26, %s40
      %s129 = sor.u32 %s127, %s128
      %p130 = scmp.eq.s32.totalorder %s129, 0
      %s132 = sadd.s32 %s131, 1
      %s133 = scalar_select %p130, %s131, %s132
      %p136 = pneg %p130
      %p137 = scmp.eq.s32.totalorder %s18, 63
      %p138 = por %p136, %p137
      %p139 = scmp.ne.s32.totalorder %s131, %s134
      %p140 = scmp.eq.s32.totalorder %s18, 0
      %p141 = por %p139, %p140
      %p142 = scmp.ne.s32.totalorder %s131, %s134
      %p143 = scmp.eq.s32.totalorder %s23, 63
      %p144 = por %p142, %p143
      %p145 = scmp.ne.s32.totalorder %s134, %s135
      %p146 = scmp.eq.s32.totalorder %s23, 0
      %p147 = por %p145, %p146
      %p148 = scmp.ne.s32.totalorder %s134, %s135
      %p149 = scmp.eq.s32.totalorder %s24, 63
      %p150 = por %p148, %p149
      %p152 = scmp.ne.s32.totalorder %s135, %s151
      %p153 = scmp.eq.s32.totalorder %s24, 0
      %p154 = por %p152, %p153
      %p155 = scmp.le.s32.totalorder 1, %s18
      %p156 = scmp.lt.s32.totalorder %s18, 65
      %p157 = pnand %p155, %p156
      %p158 = pneg %p157
      // Predicated region
      $region9: #{alexnet_forward.14} parent=5 // pred_check
        _
      $region10: #{alexnet_forward.14} parent=5 // pred_check_branch
        %160 = sbr.rel (%p157) target = $region12
      $region11: #{alexnet_forward.14} parent=5 // pred_region
        %s161 = ssub.s32 %s18, 1
      $region12: #{alexnet_forward.14} parent=5 // pred_fallthru
        _
      %p162 = scmp.lt.s32.totalorder %s18, 64
      // Predicated region
      $region13: #{alexnet_forward.14} parent=5 // pred_check
        %p163 = pneg %p162
      $region14: #{alexnet_forward.14} parent=5 // pred_check_branch
        %165 = sbr.rel (%p163) target = $region16
      $region15: #{alexnet_forward.14} parent=5 // pred_region
        // Predicated region
        $region17: #{alexnet_forward.14} parent=15 // pred_check
          %p166 = pneg %p59
        $region18: #{alexnet_forward.14} parent=15 // pred_check_branch
          %168 = sbr.rel (%p166) target = $region20
        $region19: #{alexnet_forward.14} parent=15 // pred_region
          %s169 = sand.u32 %s49, 1
          %s170 = scalar_lea.sflag [#allocation4], %s169
          %s171 = sand.u32 %s49, 1
          %s172 = smul.addr %s171, 32
          %s173 = scalar_lea.vmem [#allocation3], %s172
          %s174 = smul.u32 4, %s27
          %s176 = ssub.s32 512, 512
          %177 = vsyncadd %s170, %s176
          %s178 = smul.addr %s25, 32
          %s179 = sadd.s32 %s174, %s178
          %s180 = smul.addr %s179, 128
          %s181 = scalar_lea.hbm %s0, %s180
          %s183 = sshll.u32 %s173, 4
          %s184 = int_to_ptr.vmem [resolvable:$true] %s183
          %186 = dma.hbm_to_vmem [thread:$0]  %s181, 512, %s184, %s170
        $region20: #{alexnet_forward.14} parent=15 // pred_fallthru
          _
        // Predicated region
        $region21: #{alexnet_forward.14} parent=15 // pred_check
          %p187 = pneg %p87
        $region22: #{alexnet_forward.14} parent=15 // pred_check_branch
          %189 = sbr.rel (%p187) target = $region24
        $region23: #{alexnet_forward.14} parent=15 // pred_region
          %s190 = sand.u32 %s77, 1
          %s191 = sand.u32 %s77, 1
          %s192 = smul.addr %s191, 1024
          %s193 = scalar_lea.vmem [#allocation6], %s192
          %s194 = smul.u32 64, %s27
          %s195 = smul.u32 4, %s26
          %s196 = smul.addr %s194, 32
          %s197 = sadd.s32 %s195, %s196
          %s198 = smul.addr %s197, 4
          %s199 = scalar_lea.vmem %s1, %s198
          // Predicated region
          $region25: #{alexnet_forward.14} parent=23 // pred_check
            _
          $region26: #{alexnet_forward.14} parent=23 // pred_check_branch
            %201 = sbr.rel (0) target = $region28
          $region27: #{alexnet_forward.14} parent=23 // pred_region
            // Predicated region
            $region29: #{alexnet_forward.14} parent=27 // pred_check
              _
            $region30: #{alexnet_forward.14} parent=27 // pred_check_branch
              %203 = sbr.rel (0) target = $region32
            $region31: #{alexnet_forward.14} parent=27 // pred_region
              loop: start=0, step=1, limit=1
              $region33: #{alexnet_forward.14} parent=31 // loop_pre_header
                _
              $region34: #{alexnet_forward.14} parent=31 // loop_header
                %s205 = sphi 0, %s209
                %p206 = scmp.ge.s32.totalorder %s205, 1
                %s210 = sphi %s199, %s199
                %s211 = sphi %s193, %s193
              $region35: #{alexnet_forward.14} parent=31 // loop_header_branch
                %208 = sbr.rel (%p206) target = $region39
              $region36: #{alexnet_forward.14} parent=31 // loop_body
                %v212 = vld [vmem:[%s210] sm:$0xff]
                %213 = vst [vmem:[%s211] sm:$0xff] %v212
                %v214 = vld [vmem:[%s210 + $0x8] sm:$0xff]
                %215 = vst [vmem:[%s211 + $0x8] sm:$0xff] %v214
                %v216 = vld [vmem:[%s210 + $0x80] sm:$0xff]
                %217 = vst [vmem:[%s211 + $0x10] sm:$0xff] %v216
                %v218 = vld [vmem:[%s210 + $0x88] sm:$0xff]
                %219 = vst [vmem:[%s211 + $0x18] sm:$0xff] %v218
                %v220 = vld [vmem:[%s210 + $0x100] sm:$0xff]
                %221 = vst [vmem:[%s211 + $0x20] sm:$0xff] %v220
                %v222 = vld [vmem:[%s210 + $0x108] sm:$0xff]
                %223 = vst [vmem:[%s211 + $0x28] sm:$0xff] %v222
                %v224 = vld [vmem:[%s210 + $0x180] sm:$0xff]
                %225 = vst [vmem:[%s211 + $0x30] sm:$0xff] %v224
                %v226 = vld [vmem:[%s210 + $0x188] sm:$0xff]
                %227 = vst [vmem:[%s211 + $0x38] sm:$0xff] %v226
                %v228 = vld [vmem:[%s210 + $0x200] sm:$0xff]
                %229 = vst [vmem:[%s211 + $0x40] sm:$0xff] %v228
                %v230 = vld [vmem:[%s210 + $0x208] sm:$0xff]
                %231 = vst [vmem:[%s211 + $0x48] sm:$0xff] %v230
                %v232 = vld [vmem:[%s210 + $0x280] sm:$0xff]
                %233 = vst [vmem:[%s211 + $0x50] sm:$0xff] %v232
                %v234 = vld [vmem:[%s210 + $0x288] sm:$0xff]
                %235 = vst [vmem:[%s211 + $0x58] sm:$0xff] %v234
                %v236 = vld [vmem:[%s210 + $0x300] sm:$0xff]
                %237 = vst [vmem:[%s211 + $0x60] sm:$0xff] %v236
                %v238 = vld [vmem:[%s210 + $0x308] sm:$0xff]
                %239 = vst [vmem:[%s211 + $0x68] sm:$0xff] %v238
                %v240 = vld [vmem:[%s210 + $0x380] sm:$0xff]
                %241 = vst [vmem:[%s211 + $0x70] sm:$0xff] %v240
                %v242 = vld [vmem:[%s210 + $0x388] sm:$0xff]
                %243 = vst [vmem:[%s211 + $0x78] sm:$0xff] %v242
                %v244 = vld [vmem:[%s210 + $0x400] sm:$0xff]
                %245 = vst [vmem:[%s211 + $0x80] sm:$0xff] %v244
                %v246 = vld [vmem:[%s210 + $0x408] sm:$0xff]
                %247 = vst [vmem:[%s211 + $0x88] sm:$0xff] %v246
                %v248 = vld [vmem:[%s210 + $0x480] sm:$0xff]
                %249 = vst [vmem:[%s211 + $0x90] sm:$0xff] %v248
                %v250 = vld [vmem:[%s210 + $0x488] sm:$0xff]
                %251 = vst [vmem:[%s211 + $0x98] sm:$0xff] %v250
                %v252 = vld [vmem:[%s210 + $0x500] sm:$0xff]
                %253 = vst [vmem:[%s211 + $0xa0] sm:$0xff] %v252
                %v254 = vld [vmem:[%s210 + $0x508] sm:$0xff]
                %255 = vst [vmem:[%s211 + $0xa8] sm:$0xff] %v254
                %v256 = vld [vmem:[%s210 + $0x580] sm:$0xff]
                %257 = vst [vmem:[%s211 + $0xb0] sm:$0xff] %v256
                %v258 = vld [vmem:[%s210 + $0x588] sm:$0xff]
                %259 = vst [vmem:[%s211 + $0xb8] sm:$0xff] %v258
                %v260 = vld [vmem:[%s210 + $0x600] sm:$0xff]
                %261 = vst [vmem:[%s211 + $0xc0] sm:$0xff] %v260
                %v262 = vld [vmem:[%s210 + $0x608] sm:$0xff]
                %263 = vst [vmem:[%s211 + $0xc8] sm:$0xff] %v262
                %v264 = vld [vmem:[%s210 + $0x680] sm:$0xff]
                %265 = vst [vmem:[%s211 + $0xd0] sm:$0xff] %v264
                %v266 = vld [vmem:[%s210 + $0x688] sm:$0xff]
                %267 = vst [vmem:[%s211 + $0xd8] sm:$0xff] %v266
                %v268 = vld [vmem:[%s210 + $0x700] sm:$0xff]
                %269 = vst [vmem:[%s211 + $0xe0] sm:$0xff] %v268
                %v270 = vld [vmem:[%s210 + $0x708] sm:$0xff]
                %271 = vst [vmem:[%s211 + $0xe8] sm:$0xff] %v270
                %v272 = vld [vmem:[%s210 + $0x780] sm:$0xff]
                %273 = vst [vmem:[%s211 + $0xf0] sm:$0xff] %v272
                %v274 = vld [vmem:[%s210 + $0x788] sm:$0xff]
                %275 = vst [vmem:[%s211 + $0xf8] sm:$0xff] %v274
                %v276 = vld [vmem:[%s210 + $0x800] sm:$0xff]
                %277 = vst [vmem:[%s211 + $0x100] sm:$0xff] %v276
                %v278 = vld [vmem:[%s210 + $0x808] sm:$0xff]
                %279 = vst [vmem:[%s211 + $0x108] sm:$0xff] %v278
                %v280 = vld [vmem:[%s210 + $0x880] sm:$0xff]
                %281 = vst [vmem:[%s211 + $0x110] sm:$0xff] %v280
                %v282 = vld [vmem:[%s210 + $0x888] sm:$0xff]
                %283 = vst [vmem:[%s211 + $0x118] sm:$0xff] %v282
                %v284 = vld [vmem:[%s210 + $0x900] sm:$0xff]
                %285 = vst [vmem:[%s211 + $0x120] sm:$0xff] %v284
                %v286 = vld [vmem:[%s210 + $0x908] sm:$0xff]
                %287 = vst [vmem:[%s211 + $0x128] sm:$0xff] %v286
                %v288 = vld [vmem:[%s210 + $0x980] sm:$0xff]
                %289 = vst [vmem:[%s211 + $0x130] sm:$0xff] %v288
                %v290 = vld [vmem:[%s210 + $0x988] sm:$0xff]
                %291 = vst [vmem:[%s211 + $0x138] sm:$0xff] %v290
                %v292 = vld [vmem:[%s210 + $0xa00] sm:$0xff]
                %293 = vst [vmem:[%s211 + $0x140] sm:$0xff] %v292
                %v294 = vld [vmem:[%s210 + $0xa08] sm:$0xff]
                %295 = vst [vmem:[%s211 + $0x148] sm:$0xff] %v294
                %v296 = vld [vmem:[%s210 + $0xa80] sm:$0xff]
                %297 = vst [vmem:[%s211 + $0x150] sm:$0xff] %v296
                %v298 = vld [vmem:[%s210 + $0xa88] sm:$0xff]
                %299 = vst [vmem:[%s211 + $0x158] sm:$0xff] %v298
                %v300 = vld [vmem:[%s210 + $0xb00] sm:$0xff]
                %301 = vst [vmem:[%s211 + $0x160] sm:$0xff] %v300
                %v302 = vld [vmem:[%s210 + $0xb08] sm:$0xff]
                %303 = vst [vmem:[%s211 + $0x168] sm:$0xff] %v302
                %v304 = vld [vmem:[%s210 + $0xb80] sm:$0xff]
                %305 = vst [vmem:[%s211 + $0x170] sm:$0xff] %v304
                %v306 = vld [vmem:[%s210 + $0xb88] sm:$0xff]
                %307 = vst [vmem:[%s211 + $0x178] sm:$0xff] %v306
                %v308 = vld [vmem:[%s210 + $0xc00] sm:$0xff]
                %309 = vst [vmem:[%s211 + $0x180] sm:$0xff] %v308
                %v310 = vld [vmem:[%s210 + $0xc08] sm:$0xff]
                %311 = vst [vmem:[%s211 + $0x188] sm:$0xff] %v310
                %v312 = vld [vmem:[%s210 + $0xc80] sm:$0xff]
                %313 = vst [vmem:[%s211 + $0x190] sm:$0xff] %v312
                %v314 = vld [vmem:[%s210 + $0xc88] sm:$0xff]
                %315 = vst [vmem:[%s211 + $0x198] sm:$0xff] %v314
                %v316 = vld [vmem:[%s210 + $0xd00] sm:$0xff]
                %317 = vst [vmem:[%s211 + $0x1a0] sm:$0xff] %v316
                %v318 = vld [vmem:[%s210 + $0xd08] sm:$0xff]
                %319 = vst [vmem:[%s211 + $0x1a8] sm:$0xff] %v318
                %v320 = vld [vmem:[%s210 + $0xd80] sm:$0xff]
                %321 = vst [vmem:[%s211 + $0x1b0] sm:$0xff] %v320
                %v322 = vld [vmem:[%s210 + $0xd88] sm:$0xff]
                %323 = vst [vmem:[%s211 + $0x1b8] sm:$0xff] %v322
                %v324 = vld [vmem:[%s210 + $0xe00] sm:$0xff]
                %325 = vst [vmem:[%s211 + $0x1c0] sm:$0xff] %v324
                %v326 = vld [vmem:[%s210 + $0xe08] sm:$0xff]
                %327 = vst [vmem:[%s211 + $0x1c8] sm:$0xff] %v326
                %v328 = vld [vmem:[%s210 + $0xe80] sm:$0xff]
                %329 = vst [vmem:[%s211 + $0x1d0] sm:$0xff] %v328
                %v330 = vld [vmem:[%s210 + $0xe88] sm:$0xff]
                %331 = vst [vmem:[%s211 + $0x1d8] sm:$0xff] %v330
                %v332 = vld [vmem:[%s210 + $0xf00] sm:$0xff]
                %333 = vst [vmem:[%s211 + $0x1e0] sm:$0xff] %v332
                %v334 = vld [vmem:[%s210 + $0xf08] sm:$0xff]
                %335 = vst [vmem:[%s211 + $0x1e8] sm:$0xff] %v334
                %v336 = vld [vmem:[%s210 + $0xf80] sm:$0xff]
                %337 = vst [vmem:[%s211 + $0x1f0] sm:$0xff] %v336
                %v338 = vld [vmem:[%s210 + $0xf88] sm:$0xff]
                %339 = vst [vmem:[%s211 + $0x1f8] sm:$0xff] %v338
                %v340 = vld [vmem:[%s210 + $0x1000] sm:$0xff]
                %341 = vst [vmem:[%s211 + $0x200] sm:$0xff] %v340
                %v342 = vld [vmem:[%s210 + $0x1008] sm:$0xff]
                %343 = vst [vmem:[%s211 + $0x208] sm:$0xff] %v342
                %v344 = vld [vmem:[%s210 + $0x1080] sm:$0xff]
                %345 = vst [vmem:[%s211 + $0x210] sm:$0xff] %v344
                %v346 = vld [vmem:[%s210 + $0x1088] sm:$0xff]
                %347 = vst [vmem:[%s211 + $0x218] sm:$0xff] %v346
                %v348 = vld [vmem:[%s210 + $0x1100] sm:$0xff]
                %349 = vst [vmem:[%s211 + $0x220] sm:$0xff] %v348
                %v350 = vld [vmem:[%s210 + $0x1108] sm:$0xff]
                %351 = vst [vmem:[%s211 + $0x228] sm:$0xff] %v350
                %v352 = vld [vmem:[%s210 + $0x1180] sm:$0xff]
                %353 = vst [vmem:[%s211 + $0x230] sm:$0xff] %v352
                %v354 = vld [vmem:[%s210 + $0x1188] sm:$0xff]
                %355 = vst [vmem:[%s211 + $0x238] sm:$0xff] %v354
                %v356 = vld [vmem:[%s210 + $0x1200] sm:$0xff]
                %357 = vst [vmem:[%s211 + $0x240] sm:$0xff] %v356
                %v358 = vld [vmem:[%s210 + $0x1208] sm:$0xff]
                %359 = vst [vmem:[%s211 + $0x248] sm:$0xff] %v358
                %v360 = vld [vmem:[%s210 + $0x1280] sm:$0xff]
                %361 = vst [vmem:[%s211 + $0x250] sm:$0xff] %v360
                %v362 = vld [vmem:[%s210 + $0x1288] sm:$0xff]
                %363 = vst [vmem:[%s211 + $0x258] sm:$0xff] %v362
                %v364 = vld [vmem:[%s210 + $0x1300] sm:$0xff]
                %365 = vst [vmem:[%s211 + $0x260] sm:$0xff] %v364
                %v366 = vld [vmem:[%s210 + $0x1308] sm:$0xff]
                %367 = vst [vmem:[%s211 + $0x268] sm:$0xff] %v366
                %v368 = vld [vmem:[%s210 + $0x1380] sm:$0xff]
                %369 = vst [vmem:[%s211 + $0x270] sm:$0xff] %v368
                %v370 = vld [vmem:[%s210 + $0x1388] sm:$0xff]
                %371 = vst [vmem:[%s211 + $0x278] sm:$0xff] %v370
                %v372 = vld [vmem:[%s210 + $0x1400] sm:$0xff]
                %373 = vst [vmem:[%s211 + $0x280] sm:$0xff] %v372
                %v374 = vld [vmem:[%s210 + $0x1408] sm:$0xff]
                %375 = vst [vmem:[%s211 + $0x288] sm:$0xff] %v374
                %v376 = vld [vmem:[%s210 + $0x1480] sm:$0xff]
                %377 = vst [vmem:[%s211 + $0x290] sm:$0xff] %v376
                %v378 = vld [vmem:[%s210 + $0x1488] sm:$0xff]
                %379 = vst [vmem:[%s211 + $0x298] sm:$0xff] %v378
                %v380 = vld [vmem:[%s210 + $0x1500] sm:$0xff]
                %381 = vst [vmem:[%s211 + $0x2a0] sm:$0xff] %v380
                %v382 = vld [vmem:[%s210 + $0x1508] sm:$0xff]
                %383 = vst [vmem:[%s211 + $0x2a8] sm:$0xff] %v382
                %v384 = vld [vmem:[%s210 + $0x1580] sm:$0xff]
                %385 = vst [vmem:[%s211 + $0x2b0] sm:$0xff] %v384
                %v386 = vld [vmem:[%s210 + $0x1588] sm:$0xff]
                %387 = vst [vmem:[%s211 + $0x2b8] sm:$0xff] %v386
                %v388 = vld [vmem:[%s210 + $0x1600] sm:$0xff]
                %389 = vst [vmem:[%s211 + $0x2c0] sm:$0xff] %v388
                %v390 = vld [vmem:[%s210 + $0x1608] sm:$0xff]
                %391 = vst [vmem:[%s211 + $0x2c8] sm:$0xff] %v390
                %v392 = vld [vmem:[%s210 + $0x1680] sm:$0xff]
                %393 = vst [vmem:[%s211 + $0x2d0] sm:$0xff] %v392
                %v394 = vld [vmem:[%s210 + $0x1688] sm:$0xff]
                %395 = vst [vmem:[%s211 + $0x2d8] sm:$0xff] %v394
                %v396 = vld [vmem:[%s210 + $0x1700] sm:$0xff]
                %397 = vst [vmem:[%s211 + $0x2e0] sm:$0xff] %v396
                %v398 = vld [vmem:[%s210 + $0x1708] sm:$0xff]
                %399 = vst [vmem:[%s211 + $0x2e8] sm:$0xff] %v398
                %v400 = vld [vmem:[%s210 + $0x1780] sm:$0xff]
                %401 = vst [vmem:[%s211 + $0x2f0] sm:$0xff] %v400
                %v402 = vld [vmem:[%s210 + $0x1788] sm:$0xff]
                %403 = vst [vmem:[%s211 + $0x2f8] sm:$0xff] %v402
                %v404 = vld [vmem:[%s210 + $0x1800] sm:$0xff]
                %405 = vst [vmem:[%s211 + $0x300] sm:$0xff] %v404
                %v406 = vld [vmem:[%s210 + $0x1808] sm:$0xff]
                %407 = vst [vmem:[%s211 + $0x308] sm:$0xff] %v406
                %v408 = vld [vmem:[%s210 + $0x1880] sm:$0xff]
                %409 = vst [vmem:[%s211 + $0x310] sm:$0xff] %v408
                %v410 = vld [vmem:[%s210 + $0x1888] sm:$0xff]
                %411 = vst [vmem:[%s211 + $0x318] sm:$0xff] %v410
                %v412 = vld [vmem:[%s210 + $0x1900] sm:$0xff]
                %413 = vst [vmem:[%s211 + $0x320] sm:$0xff] %v412
                %v414 = vld [vmem:[%s210 + $0x1908] sm:$0xff]
                %415 = vst [vmem:[%s211 + $0x328] sm:$0xff] %v414
                %v416 = vld [vmem:[%s210 + $0x1980] sm:$0xff]
                %417 = vst [vmem:[%s211 + $0x330] sm:$0xff] %v416
                %v418 = vld [vmem:[%s210 + $0x1988] sm:$0xff]
                %419 = vst [vmem:[%s211 + $0x338] sm:$0xff] %v418
                %v420 = vld [vmem:[%s210 + $0x1a00] sm:$0xff]
                %421 = vst [vmem:[%s211 + $0x340] sm:$0xff] %v420
                %v422 = vld [vmem:[%s210 + $0x1a08] sm:$0xff]
                %423 = vst [vmem:[%s211 + $0x348] sm:$0xff] %v422
                %v424 = vld [vmem:[%s210 + $0x1a80] sm:$0xff]
                %425 = vst [vmem:[%s211 + $0x350] sm:$0xff] %v424
                %v426 = vld [vmem:[%s210 + $0x1a88] sm:$0xff]
                %427 = vst [vmem:[%s211 + $0x358] sm:$0xff] %v426
                %v428 = vld [vmem:[%s210 + $0x1b00] sm:$0xff]
                %429 = vst [vmem:[%s211 + $0x360] sm:$0xff] %v428
                %v430 = vld [vmem:[%s210 + $0x1b08] sm:$0xff]
                %431 = vst [vmem:[%s211 + $0x368] sm:$0xff] %v430
                %v432 = vld [vmem:[%s210 + $0x1b80] sm:$0xff]
                %433 = vst [vmem:[%s211 + $0x370] sm:$0xff] %v432
                %v434 = vld [vmem:[%s210 + $0x1b88] sm:$0xff]
                %435 = vst [vmem:[%s211 + $0x378] sm:$0xff] %v434
                %v436 = vld [vmem:[%s210 + $0x1c00] sm:$0xff]
                %437 = vst [vmem:[%s211 + $0x380] sm:$0xff] %v436
                %v438 = vld [vmem:[%s210 + $0x1c08] sm:$0xff]
                %439 = vst [vmem:[%s211 + $0x388] sm:$0xff] %v438
                %v440 = vld [vmem:[%s210 + $0x1c80] sm:$0xff]
                %441 = vst [vmem:[%s211 + $0x390] sm:$0xff] %v440
                %v442 = vld [vmem:[%s210 + $0x1c88] sm:$0xff]
                %443 = vst [vmem:[%s211 + $0x398] sm:$0xff] %v442
                %v444 = vld [vmem:[%s210 + $0x1d00] sm:$0xff]
                %445 = vst [vmem:[%s211 + $0x3a0] sm:$0xff] %v444
                %v446 = vld [vmem:[%s210 + $0x1d08] sm:$0xff]
                %447 = vst [vmem:[%s211 + $0x3a8] sm:$0xff] %v446
                %v448 = vld [vmem:[%s210 + $0x1d80] sm:$0xff]
                %449 = vst [vmem:[%s211 + $0x3b0] sm:$0xff] %v448
                %v450 = vld [vmem:[%s210 + $0x1d88] sm:$0xff]
                %451 = vst [vmem:[%s211 + $0x3b8] sm:$0xff] %v450
                %v452 = vld [vmem:[%s210 + $0x1e00] sm:$0xff]
                %453 = vst [vmem:[%s211 + $0x3c0] sm:$0xff] %v452
                %v454 = vld [vmem:[%s210 + $0x1e08] sm:$0xff]
                %455 = vst [vmem:[%s211 + $0x3c8] sm:$0xff] %v454
                %v456 = vld [vmem:[%s210 + $0x1e80] sm:$0xff]
                %457 = vst [vmem:[%s211 + $0x3d0] sm:$0xff] %v456
                %v458 = vld [vmem:[%s210 + $0x1e88] sm:$0xff]
                %459 = vst [vmem:[%s211 + $0x3d8] sm:$0xff] %v458
                %v460 = vld [vmem:[%s210 + $0x1f00] sm:$0xff]
                %461 = vst [vmem:[%s211 + $0x3e0] sm:$0xff] %v460
                %v462 = vld [vmem:[%s210 + $0x1f08] sm:$0xff]
                %463 = vst [vmem:[%s211 + $0x3e8] sm:$0xff] %v462
                %v464 = vld [vmem:[%s210 + $0x1f80] sm:$0xff]
                %465 = vst [vmem:[%s211 + $0x3f0] sm:$0xff] %v464
                %v466 = vld [vmem:[%s210 + $0x1f88] sm:$0xff]
                %467 = vst [vmem:[%s211 + $0x3f8] sm:$0xff] %v466
              $region37: #{alexnet_forward.14} parent=31 // loop_footer
                %s209 = sadd.s32 1, %s205
              $region38: #{alexnet_forward.14} parent=31 // loop_footer_branch
                %204 = sbr.rel target = $region34
              $region39: #{alexnet_forward.14} parent=31 // loop_exit
                _
            $region32: #{alexnet_forward.14} parent=27 // pred_fallthru
              _
            // Predicated region
            $region40: #{alexnet_forward.14} parent=27 // pred_check
              _
            $region41: #{alexnet_forward.14} parent=27 // pred_check_branch
              %469 = sbr.rel target = $region43
            $region42: #{alexnet_forward.14} parent=27 // pred_region
              _
            $region43: #{alexnet_forward.14} parent=27 // pred_fallthru
              _
          $region28: #{alexnet_forward.14} parent=23 // pred_fallthru
            _
          %470 = vnop
        $region24: #{alexnet_forward.14} parent=15 // pred_fallthru
          _
        // Predicated region
        $region44: #{alexnet_forward.14} parent=15 // pred_check
          %p471 = pneg %p113
        $region45: #{alexnet_forward.14} parent=15 // pred_check_branch
          %473 = sbr.rel (%p471) target = $region47
        $region46: #{alexnet_forward.14} parent=15 // pred_region
          %s474 = sand.u32 %s103, 1
          %s475 = scalar_lea.sflag [#allocation8], %s474
          %s476 = sand.u32 %s103, 1
          %s477 = smul.addr %s476, 4
          %s478 = scalar_lea.vmem [#allocation7], %s477
          %s479 = smul.u32 4, %s26
          %s481 = ssub.s32 64, 64
          %482 = vsyncadd %s475, %s481
          %s483 = smul.addr %s479, 16
          %s484 = scalar_lea.hbm %s2, %s483
          %s486 = sshll.u32 %s478, 4
          %s487 = int_to_ptr.vmem [resolvable:$true] %s486
          %489 = dma.hbm_to_vmem [thread:$0]  %s484, 64, %s487, %s475
        $region47: #{alexnet_forward.14} parent=15 // pred_fallthru
          _
      $region16: #{alexnet_forward.14} parent=5 // pred_fallthru
        _
      %p490 = scmp.le.s32.totalorder 1, %s18
      %p491 = scmp.lt.s32.totalorder %s18, 65
      %p492 = pnand %p490, %p491
      %p493 = pneg %p492
      // Predicated region
      $region48: #{alexnet_forward.14} parent=5 // pred_check
        _
      $region49: #{alexnet_forward.14} parent=5 // pred_check_branch
        %495 = sbr.rel (%p492) target = $region51
      $region50: #{alexnet_forward.14} parent=5 // pred_region
        %s496 = ssub.s32 %s18, 1
        %s497 = sand.u32 %s52, 1
        %s498 = scalar_lea.sflag [#allocation4], %s497
        %s499 = sand.u32 %s52, 1
        %s500 = smul.addr %s499, 32
        %s501 = scalar_lea.vmem [#allocation3], %s500
        // Predicated region
        $region52: #{alexnet_forward.14} parent=50 // pred_check
          %p502 = pneg %p65
        $region53: #{alexnet_forward.14} parent=50 // pred_check_branch
          %504 = sbr.rel (%p502) target = $region55
        $region54: #{alexnet_forward.14} parent=50 // pred_region
          %505 = dma.done %s498, 512
        $region55: #{alexnet_forward.14} parent=50 // pred_fallthru
          _
        %s506 = sand.u32 %s80, 1
        %s507 = sand.u32 %s80, 1
        %s508 = smul.addr %s507, 1024
        %s509 = scalar_lea.vmem [#allocation6], %s508
        // Predicated region
        $region56: #{alexnet_forward.14} parent=50 // pred_check
          %p510 = pneg %p93
        $region57: #{alexnet_forward.14} parent=50 // pred_check_branch
          %512 = sbr.rel (%p510) target = $region59
        $region58: #{alexnet_forward.14} parent=50 // pred_region
          _
        $region59: #{alexnet_forward.14} parent=50 // pred_fallthru
          _
        %s513 = sand.u32 %s106, 1
        %s514 = scalar_lea.sflag [#allocation8], %s513
        %s515 = sand.u32 %s106, 1
        %s516 = smul.addr %s515, 4
        %s517 = scalar_lea.vmem [#allocation7], %s516
        // Predicated region
        $region60: #{alexnet_forward.14} parent=50 // pred_check
          %p518 = pneg %p119
        $region61: #{alexnet_forward.14} parent=50 // pred_check_branch
          %520 = sbr.rel (%p518) target = $region63
        $region62: #{alexnet_forward.14} parent=50 // pred_region
          %521 = dma.done %s514, 64
        $region63: #{alexnet_forward.14} parent=50 // pred_fallthru
          _
        %s522 = sand.u32 %s52, 1
        %s523 = scalar_lea.sflag [#allocation4], %s522
        %s524 = sand.u32 %s52, 1
        %s525 = smul.addr %s524, 32
        %s526 = scalar_lea.vmem [#allocation3], %s525
        %p527 = pneg %p65
        %p528 = pneg %p62
        %s529 = sand.u32 %s80, 1
        %s530 = sand.u32 %s80, 1
        %s531 = smul.addr %s530, 1024
        %s532 = scalar_lea.vmem [#allocation6], %s531
        %p533 = pneg %p93
        %p534 = pneg %p90
        %s535 = sand.u32 %s106, 1
        %s536 = scalar_lea.sflag [#allocation8], %s535
        %s537 = sand.u32 %s106, 1
        %s538 = smul.addr %s537, 4
        %s539 = scalar_lea.vmem [#allocation7], %s538
        %p540 = pneg %p119
        %p541 = pneg %p116
        %p542 = pneg %p147
        %p543 = pneg %p144
        %s544 = sand.u32 %s134, 1
        %s545 = scalar_lea.sflag [#allocation5], %s544
        %s546 = sand.u32 %s134, 1
        %s547 = smul.addr %s546, 32
        %s548 = scalar_lea.vmem [#allocation9], %s547
        %s549 = smul.u32 4, %s30
        %s550 = smul.u32 64, %s30
        %s551 = smul.u32 4, %s29
        %s552 = smul.u32 4, %s29
        %s553 = smul.u32 4, %s29
        %p554 = scmp.eq.s32.totalorder %s30, 0
        // Predicated region
        $region64: #{alexnet_forward.14} parent=50 // pred_check
          %p555 = pneg %p554
        $region65: #{alexnet_forward.14} parent=50 // pred_check_branch
          %557 = sbr.rel (%p555) target = $region67
        $region66: #{alexnet_forward.14} parent=50 // pred_region
          %558 = vst [vmem:[#allocation2] sm:$0xff] 0.0
          %559 = vst [vmem:[#allocation2 + $0x8] sm:$0xff] 0.0
          %560 = vst [vmem:[#allocation2 + $0x10] sm:$0xff] 0.0
          %561 = vst [vmem:[#allocation2 + $0x18] sm:$0xff] 0.0
        $region67: #{alexnet_forward.14} parent=50 // pred_fallthru
          _
        %v562 = vld [vmem:[#allocation2] sm:$0xff]
        %v563 = vld [vmem:[#allocation2 + $0x8] sm:$0xff]
        %v564 = vld [vmem:[#allocation2 + $0x10] sm:$0xff]
        %v565 = vld [vmem:[#allocation2 + $0x18] sm:$0xff]
        %v566 = vld [vmem:[%s501] sm:$0xff]
        %v567 = vld [vmem:[%s501 + $0x8] sm:$0xff]
        %v568 = vld [vmem:[%s501 + $0x10] sm:$0xff]
        %v569 = vld [vmem:[%s501 + $0x18] sm:$0xff]
        %v570 = vpack.c.bf16 %v566, %v566
        %v571 = vpack.c.bf16 %v567, %v567
        %v572 = vpack.c.bf16 %v568, %v568
        %v573 = vpack.c.bf16 %v569, %v569
        %v574 = vld [vmem:[%s509] sm:$0xff]
        %v575 = vld [vmem:[%s509 + $0x8] sm:$0xff]
        %v576 = vld [vmem:[%s509 + $0x10] sm:$0xff]
        %v577 = vld [vmem:[%s509 + $0x18] sm:$0xff]
        %v578 = vld [vmem:[%s509 + $0x20] sm:$0xff]
        %v579 = vld [vmem:[%s509 + $0x28] sm:$0xff]
        %v580 = vld [vmem:[%s509 + $0x30] sm:$0xff]
        %v581 = vld [vmem:[%s509 + $0x38] sm:$0xff]
        %v582 = vld [vmem:[%s509 + $0x40] sm:$0xff]
        %v583 = vld [vmem:[%s509 + $0x48] sm:$0xff]
        %v584 = vld [vmem:[%s509 + $0x50] sm:$0xff]
        %v585 = vld [vmem:[%s509 + $0x58] sm:$0xff]
        %v586 = vld [vmem:[%s509 + $0x60] sm:$0xff]
        %v587 = vld [vmem:[%s509 + $0x68] sm:$0xff]
        %v588 = vld [vmem:[%s509 + $0x70] sm:$0xff]
        %v589 = vld [vmem:[%s509 + $0x78] sm:$0xff]
        %v590 = vld [vmem:[%s509 + $0x80] sm:$0xff]
        %v591 = vld [vmem:[%s509 + $0x88] sm:$0xff]
        %v592 = vld [vmem:[%s509 + $0x90] sm:$0xff]
        %v593 = vld [vmem:[%s509 + $0x98] sm:$0xff]
        %v594 = vld [vmem:[%s509 + $0xa0] sm:$0xff]
        %v595 = vld [vmem:[%s509 + $0xa8] sm:$0xff]
        %v596 = vld [vmem:[%s509 + $0xb0] sm:$0xff]
        %v597 = vld [vmem:[%s509 + $0xb8] sm:$0xff]
        %v598 = vld [vmem:[%s509 + $0xc0] sm:$0xff]
        %v599 = vld [vmem:[%s509 + $0xc8] sm:$0xff]
        %v600 = vld [vmem:[%s509 + $0xd0] sm:$0xff]
        %v601 = vld [vmem:[%s509 + $0xd8] sm:$0xff]
        %v602 = vld [vmem:[%s509 + $0xe0] sm:$0xff]
        %v603 = vld [vmem:[%s509 + $0xe8] sm:$0xff]
        %v604 = vld [vmem:[%s509 + $0xf0] sm:$0xff]
        %v605 = vld [vmem:[%s509 + $0xf8] sm:$0xff]
        %v606 = vld [vmem:[%s509 + $0x100] sm:$0xff]
        %v607 = vld [vmem:[%s509 + $0x108] sm:$0xff]
        %v608 = vld [vmem:[%s509 + $0x110] sm:$0xff]
        %v609 = vld [vmem:[%s509 + $0x118] sm:$0xff]
        %v610 = vld [vmem:[%s509 + $0x120] sm:$0xff]
        %v611 = vld [vmem:[%s509 + $0x128] sm:$0xff]
        %v612 = vld [vmem:[%s509 + $0x130] sm:$0xff]
        %v613 = vld [vmem:[%s509 + $0x138] sm:$0xff]
        %v614 = vld [vmem:[%s509 + $0x140] sm:$0xff]
        %v615 = vld [vmem:[%s509 + $0x148] sm:$0xff]
        %v616 = vld [vmem:[%s509 + $0x150] sm:$0xff]
        %v617 = vld [vmem:[%s509 + $0x158] sm:$0xff]
        %v618 = vld [vmem:[%s509 + $0x160] sm:$0xff]
        %v619 = vld [vmem:[%s509 + $0x168] sm:$0xff]
        %v620 = vld [vmem:[%s509 + $0x170] sm:$0xff]
        %v621 = vld [vmem:[%s509 + $0x178] sm:$0xff]
        %v622 = vld [vmem:[%s509 + $0x180] sm:$0xff]
        %v623 = vld [vmem:[%s509 + $0x188] sm:$0xff]
        %v624 = vld [vmem:[%s509 + $0x190] sm:$0xff]
        %v625 = vld [vmem:[%s509 + $0x198] sm:$0xff]
        %v626 = vld [vmem:[%s509 + $0x1a0] sm:$0xff]
        %v627 = vld [vmem:[%s509 + $0x1a8] sm:$0xff]
        %v628 = vld [vmem:[%s509 + $0x1b0] sm:$0xff]
        %v629 = vld [vmem:[%s509 + $0x1b8] sm:$0xff]
        %v630 = vld [vmem:[%s509 + $0x1c0] sm:$0xff]
        %v631 = vld [vmem:[%s509 + $0x1c8] sm:$0xff]
        %v632 = vld [vmem:[%s509 + $0x1d0] sm:$0xff]
        %v633 = vld [vmem:[%s509 + $0x1d8] sm:$0xff]
        %v634 = vld [vmem:[%s509 + $0x1e0] sm:$0xff]
        %v635 = vld [vmem:[%s509 + $0x1e8] sm:$0xff]
        %v636 = vld [vmem:[%s509 + $0x1f0] sm:$0xff]
        %v637 = vld [vmem:[%s509 + $0x1f8] sm:$0xff]
        %v638 = vld [vmem:[%s509 + $0x200] sm:$0xff]
        %v639 = vld [vmem:[%s509 + $0x208] sm:$0xff]
        %v640 = vld [vmem:[%s509 + $0x210] sm:$0xff]
        %v641 = vld [vmem:[%s509 + $0x218] sm:$0xff]
        %v642 = vld [vmem:[%s509 + $0x220] sm:$0xff]
        %v643 = vld [vmem:[%s509 + $0x228] sm:$0xff]
        %v644 = vld [vmem:[%s509 + $0x230] sm:$0xff]
        %v645 = vld [vmem:[%s509 + $0x238] sm:$0xff]
        %v646 = vld [vmem:[%s509 + $0x240] sm:$0xff]
        %v647 = vld [vmem:[%s509 + $0x248] sm:$0xff]
        %v648 = vld [vmem:[%s509 + $0x250] sm:$0xff]
        %v649 = vld [vmem:[%s509 + $0x258] sm:$0xff]
        %v650 = vld [vmem:[%s509 + $0x260] sm:$0xff]
        %v651 = vld [vmem:[%s509 + $0x268] sm:$0xff]
        %v652 = vld [vmem:[%s509 + $0x270] sm:$0xff]
        %v653 = vld [vmem:[%s509 + $0x278] sm:$0xff]
        %v654 = vld [vmem:[%s509 + $0x280] sm:$0xff]
        %v655 = vld [vmem:[%s509 + $0x288] sm:$0xff]
        %v656 = vld [vmem:[%s509 + $0x290] sm:$0xff]
        %v657 = vld [vmem:[%s509 + $0x298] sm:$0xff]
        %v658 = vld [vmem:[%s509 + $0x2a0] sm:$0xff]
        %v659 = vld [vmem:[%s509 + $0x2a8] sm:$0xff]
        %v660 = vld [vmem:[%s509 + $0x2b0] sm:$0xff]
        %v661 = vld [vmem:[%s509 + $0x2b8] sm:$0xff]
        %v662 = vld [vmem:[%s509 + $0x2c0] sm:$0xff]
        %v663 = vld [vmem:[%s509 + $0x2c8] sm:$0xff]
        %v664 = vld [vmem:[%s509 + $0x2d0] sm:$0xff]
        %v665 = vld [vmem:[%s509 + $0x2d8] sm:$0xff]
        %v666 = vld [vmem:[%s509 + $0x2e0] sm:$0xff]
        %v667 = vld [vmem:[%s509 + $0x2e8] sm:$0xff]
        %v668 = vld [vmem:[%s509 + $0x2f0] sm:$0xff]
        %v669 = vld [vmem:[%s509 + $0x2f8] sm:$0xff]
        %v670 = vld [vmem:[%s509 + $0x300] sm:$0xff]
        %v671 = vld [vmem:[%s509 + $0x308] sm:$0xff]
        %v672 = vld [vmem:[%s509 + $0x310] sm:$0xff]
        %v673 = vld [vmem:[%s509 + $0x318] sm:$0xff]
        %v674 = vld [vmem:[%s509 + $0x320] sm:$0xff]
        %v675 = vld [vmem:[%s509 + $0x328] sm:$0xff]
        %v676 = vld [vmem:[%s509 + $0x330] sm:$0xff]
        %v677 = vld [vmem:[%s509 + $0x338] sm:$0xff]
        %v678 = vld [vmem:[%s509 + $0x340] sm:$0xff]
        %v679 = vld [vmem:[%s509 + $0x348] sm:$0xff]
        %v680 = vld [vmem:[%s509 + $0x350] sm:$0xff]
        %v681 = vld [vmem:[%s509 + $0x358] sm:$0xff]
        %v682 = vld [vmem:[%s509 + $0x360] sm:$0xff]
        %v683 = vld [vmem:[%s509 + $0x368] sm:$0xff]
        %v684 = vld [vmem:[%s509 + $0x370] sm:$0xff]
        %v685 = vld [vmem:[%s509 + $0x378] sm:$0xff]
        %v686 = vld [vmem:[%s509 + $0x380] sm:$0xff]
        %v687 = vld [vmem:[%s509 + $0x388] sm:$0xff]
        %v688 = vld [vmem:[%s509 + $0x390] sm:$0xff]
        %v689 = vld [vmem:[%s509 + $0x398] sm:$0xff]
        %v690 = vld [vmem:[%s509 + $0x3a0] sm:$0xff]
        %v691 = vld [vmem:[%s509 + $0x3a8] sm:$0xff]
        %v692 = vld [vmem:[%s509 + $0x3b0] sm:$0xff]
        %v693 = vld [vmem:[%s509 + $0x3b8] sm:$0xff]
        %v694 = vld [vmem:[%s509 + $0x3c0] sm:$0xff]
        %v695 = vld [vmem:[%s509 + $0x3c8] sm:$0xff]
        %v696 = vld [vmem:[%s509 + $0x3d0] sm:$0xff]
        %v697 = vld [vmem:[%s509 + $0x3d8] sm:$0xff]
        %v698 = vld [vmem:[%s509 + $0x3e0] sm:$0xff]
        %v699 = vld [vmem:[%s509 + $0x3e8] sm:$0xff]
        %v700 = vld [vmem:[%s509 + $0x3f0] sm:$0xff]
        %v701 = vld [vmem:[%s509 + $0x3f8] sm:$0xff]
        %v830 = vunpack.c.l.b16 %v574
        %v831 = vunpack.c.h.b16 %v574
        %v832 = vunpack.c.l.b16 %v575
        %v833 = vunpack.c.h.b16 %v575
        %v834 = vunpack.c.l.b16 %v576
        %v835 = vunpack.c.h.b16 %v576
        %v836 = vunpack.c.l.b16 %v577
        %v837 = vunpack.c.h.b16 %v577
        %v838 = vunpack.c.l.b16 %v578
        %v839 = vunpack.c.h.b16 %v578
        %v840 = vunpack.c.l.b16 %v579
        %v841 = vunpack.c.h.b16 %v579
        %v842 = vunpack.c.l.b16 %v580
        %v843 = vunpack.c.h.b16 %v580
        %v844 = vunpack.c.l.b16 %v581
        %v845 = vunpack.c.h.b16 %v581
        %v846 = vunpack.c.l.b16 %v582
        %v847 = vunpack.c.h.b16 %v582
        %v848 = vunpack.c.l.b16 %v583
        %v849 = vunpack.c.h.b16 %v583
        %v850 = vunpack.c.l.b16 %v584
        %v851 = vunpack.c.h.b16 %v584
        %v852 = vunpack.c.l.b16 %v585
        %v853 = vunpack.c.h.b16 %v585
        %v854 = vunpack.c.l.b16 %v586
        %v855 = vunpack.c.h.b16 %v586
        %v856 = vunpack.c.l.b16 %v587
        %v857 = vunpack.c.h.b16 %v587
        %v858 = vunpack.c.l.b16 %v588
        %v859 = vunpack.c.h.b16 %v588
        %v860 = vunpack.c.l.b16 %v589
        %v861 = vunpack.c.h.b16 %v589
        %v862 = vunpack.c.l.b16 %v590
        %v863 = vunpack.c.h.b16 %v590
        %v864 = vunpack.c.l.b16 %v591
        %v865 = vunpack.c.h.b16 %v591
        %v866 = vunpack.c.l.b16 %v592
        %v867 = vunpack.c.h.b16 %v592
        %v868 = vunpack.c.l.b16 %v593
        %v869 = vunpack.c.h.b16 %v593
        %v870 = vunpack.c.l.b16 %v594
        %v871 = vunpack.c.h.b16 %v594
        %v872 = vunpack.c.l.b16 %v595
        %v873 = vunpack.c.h.b16 %v595
        %v874 = vunpack.c.l.b16 %v596
        %v875 = vunpack.c.h.b16 %v596
        %v876 = vunpack.c.l.b16 %v597
        %v877 = vunpack.c.h.b16 %v597
        %v878 = vunpack.c.l.b16 %v598
        %v879 = vunpack.c.h.b16 %v598
        %v880 = vunpack.c.l.b16 %v599
        %v881 = vunpack.c.h.b16 %v599
        %v882 = vunpack.c.l.b16 %v600
        %v883 = vunpack.c.h.b16 %v600
        %v884 = vunpack.c.l.b16 %v601
        %v885 = vunpack.c.h.b16 %v601
        %v886 = vunpack.c.l.b16 %v602
        %v887 = vunpack.c.h.b16 %v602
        %v888 = vunpack.c.l.b16 %v603
        %v889 = vunpack.c.h.b16 %v603
        %v890 = vunpack.c.l.b16 %v604
        %v891 = vunpack.c.h.b16 %v604
        %v892 = vunpack.c.l.b16 %v605
        %v893 = vunpack.c.h.b16 %v605
        %v894 = vunpack.c.l.b16 %v606
        %v895 = vunpack.c.h.b16 %v606
        %v896 = vunpack.c.l.b16 %v607
        %v897 = vunpack.c.h.b16 %v607
        %v898 = vunpack.c.l.b16 %v608
        %v899 = vunpack.c.h.b16 %v608
        %v900 = vunpack.c.l.b16 %v609
        %v901 = vunpack.c.h.b16 %v609
        %v902 = vunpack.c.l.b16 %v610
        %v903 = vunpack.c.h.b16 %v610
        %v904 = vunpack.c.l.b16 %v611
        %v905 = vunpack.c.h.b16 %v611
        %v906 = vunpack.c.l.b16 %v612
        %v907 = vunpack.c.h.b16 %v612
        %v908 = vunpack.c.l.b16 %v613
        %v909 = vunpack.c.h.b16 %v613
        %v910 = vunpack.c.l.b16 %v614
        %v911 = vunpack.c.h.b16 %v614
        %v912 = vunpack.c.l.b16 %v615
        %v913 = vunpack.c.h.b16 %v615
        %v914 = vunpack.c.l.b16 %v616
        %v915 = vunpack.c.h.b16 %v616
        %v916 = vunpack.c.l.b16 %v617
        %v917 = vunpack.c.h.b16 %v617
        %v918 = vunpack.c.l.b16 %v618
        %v919 = vunpack.c.h.b16 %v618
        %v920 = vunpack.c.l.b16 %v619
        %v921 = vunpack.c.h.b16 %v619
        %v922 = vunpack.c.l.b16 %v620
        %v923 = vunpack.c.h.b16 %v620
        %v924 = vunpack.c.l.b16 %v621
        %v925 = vunpack.c.h.b16 %v621
        %v926 = vunpack.c.l.b16 %v622
        %v927 = vunpack.c.h.b16 %v622
        %v928 = vunpack.c.l.b16 %v623
        %v929 = vunpack.c.h.b16 %v623
        %v930 = vunpack.c.l.b16 %v624
        %v931 = vunpack.c.h.b16 %v624
        %v932 = vunpack.c.l.b16 %v625
        %v933 = vunpack.c.h.b16 %v625
        %v934 = vunpack.c.l.b16 %v626
        %v935 = vunpack.c.h.b16 %v626
        %v936 = vunpack.c.l.b16 %v627
        %v937 = vunpack.c.h.b16 %v627
        %v938 = vunpack.c.l.b16 %v628
        %v939 = vunpack.c.h.b16 %v628
        %v940 = vunpack.c.l.b16 %v629
        %v941 = vunpack.c.h.b16 %v629
        %v942 = vunpack.c.l.b16 %v630
        %v943 = vunpack.c.h.b16 %v630
        %v944 = vunpack.c.l.b16 %v631
        %v945 = vunpack.c.h.b16 %v631
        %v946 = vunpack.c.l.b16 %v632
        %v947 = vunpack.c.h.b16 %v632
        %v948 = vunpack.c.l.b16 %v633
        %v949 = vunpack.c.h.b16 %v633
        %v950 = vunpack.c.l.b16 %v634
        %v951 = vunpack.c.h.b16 %v634
        %v952 = vunpack.c.l.b16 %v635
        %v953 = vunpack.c.h.b16 %v635
        %v954 = vunpack.c.l.b16 %v636
        %v955 = vunpack.c.h.b16 %v636
        %v956 = vunpack.c.l.b16 %v637
        %v957 = vunpack.c.h.b16 %v637
        %v958 = vunpack.c.l.b16 %v638
        %v959 = vunpack.c.h.b16 %v638
        %v960 = vunpack.c.l.b16 %v639
        %v961 = vunpack.c.h.b16 %v639
        %v962 = vunpack.c.l.b16 %v640
        %v963 = vunpack.c.h.b16 %v640
        %v964 = vunpack.c.l.b16 %v641
        %v965 = vunpack.c.h.b16 %v641
        %v966 = vunpack.c.l.b16 %v642
        %v967 = vunpack.c.h.b16 %v642
        %v968 = vunpack.c.l.b16 %v643
        %v969 = vunpack.c.h.b16 %v643
        %v970 = vunpack.c.l.b16 %v644
        %v971 = vunpack.c.h.b16 %v644
        %v972 = vunpack.c.l.b16 %v645
        %v973 = vunpack.c.h.b16 %v645
        %v974 = vunpack.c.l.b16 %v646
        %v975 = vunpack.c.h.b16 %v646
        %v976 = vunpack.c.l.b16 %v647
        %v977 = vunpack.c.h.b16 %v647
        %v978 = vunpack.c.l.b16 %v648
        %v979 = vunpack.c.h.b16 %v648
        %v980 = vunpack.c.l.b16 %v649
        %v981 = vunpack.c.h.b16 %v649
        %v982 = vunpack.c.l.b16 %v650
        %v983 = vunpack.c.h.b16 %v650
        %v984 = vunpack.c.l.b16 %v651
        %v985 = vunpack.c.h.b16 %v651
        %v986 = vunpack.c.l.b16 %v652
        %v987 = vunpack.c.h.b16 %v652
        %v988 = vunpack.c.l.b16 %v653
        %v989 = vunpack.c.h.b16 %v653
        %v990 = vunpack.c.l.b16 %v654
        %v991 = vunpack.c.h.b16 %v654
        %v992 = vunpack.c.l.b16 %v655
        %v993 = vunpack.c.h.b16 %v655
        %v994 = vunpack.c.l.b16 %v656
        %v995 = vunpack.c.h.b16 %v656
        %v996 = vunpack.c.l.b16 %v657
        %v997 = vunpack.c.h.b16 %v657
        %v998 = vunpack.c.l.b16 %v658
        %v999 = vunpack.c.h.b16 %v658
        %v1000 = vunpack.c.l.b16 %v659
        %v1001 = vunpack.c.h.b16 %v659
        %v1002 = vunpack.c.l.b16 %v660
        %v1003 = vunpack.c.h.b16 %v660
        %v1004 = vunpack.c.l.b16 %v661
        %v1005 = vunpack.c.h.b16 %v661
        %v1006 = vunpack.c.l.b16 %v662
        %v1007 = vunpack.c.h.b16 %v662
        %v1008 = vunpack.c.l.b16 %v663
        %v1009 = vunpack.c.h.b16 %v663
        %v1010 = vunpack.c.l.b16 %v664
        %v1011 = vunpack.c.h.b16 %v664
        %v1012 = vunpack.c.l.b16 %v665
        %v1013 = vunpack.c.h.b16 %v665
        %v1014 = vunpack.c.l.b16 %v666
        %v1015 = vunpack.c.h.b16 %v666
        %v1016 = vunpack.c.l.b16 %v667
        %v1017 = vunpack.c.h.b16 %v667
        %v1018 = vunpack.c.l.b16 %v668
        %v1019 = vunpack.c.h.b16 %v668
        %v1020 = vunpack.c.l.b16 %v669
        %v1021 = vunpack.c.h.b16 %v669
        %v1022 = vunpack.c.l.b16 %v670
        %v1023 = vunpack.c.h.b16 %v670
        %v1024 = vunpack.c.l.b16 %v671
        %v1025 = vunpack.c.h.b16 %v671
        %v1026 = vunpack.c.l.b16 %v672
        %v1027 = vunpack.c.h.b16 %v672
        %v1028 = vunpack.c.l.b16 %v673
        %v1029 = vunpack.c.h.b16 %v673
        %v1030 = vunpack.c.l.b16 %v674
        %v1031 = vunpack.c.h.b16 %v674
        %v1032 = vunpack.c.l.b16 %v675
        %v1033 = vunpack.c.h.b16 %v675
        %v1034 = vunpack.c.l.b16 %v676
        %v1035 = vunpack.c.h.b16 %v676
        %v1036 = vunpack.c.l.b16 %v677
        %v1037 = vunpack.c.h.b16 %v677
        %v1038 = vunpack.c.l.b16 %v678
        %v1039 = vunpack.c.h.b16 %v678
        %v1040 = vunpack.c.l.b16 %v679
        %v1041 = vunpack.c.h.b16 %v679
        %v1042 = vunpack.c.l.b16 %v680
        %v1043 = vunpack.c.h.b16 %v680
        %v1044 = vunpack.c.l.b16 %v681
        %v1045 = vunpack.c.h.b16 %v681
        %v1046 = vunpack.c.l.b16 %v682
        %v1047 = vunpack.c.h.b16 %v682
        %v1048 = vunpack.c.l.b16 %v683
        %v1049 = vunpack.c.h.b16 %v683
        %v1050 = vunpack.c.l.b16 %v684
        %v1051 = vunpack.c.h.b16 %v684
        %v1052 = vunpack.c.l.b16 %v685
        %v1053 = vunpack.c.h.b16 %v685
        %v1054 = vunpack.c.l.b16 %v686
        %v1055 = vunpack.c.h.b16 %v686
        %v1056 = vunpack.c.l.b16 %v687
        %v1057 = vunpack.c.h.b16 %v687
        %v1058 = vunpack.c.l.b16 %v688
        %v1059 = vunpack.c.h.b16 %v688
        %v1060 = vunpack.c.l.b16 %v689
        %v1061 = vunpack.c.h.b16 %v689
        %v1062 = vunpack.c.l.b16 %v690
        %v1063 = vunpack.c.h.b16 %v690
        %v1064 = vunpack.c.l.b16 %v691
        %v1065 = vunpack.c.h.b16 %v691
        %v1066 = vunpack.c.l.b16 %v692
        %v1067 = vunpack.c.h.b16 %v692
        %v1068 = vunpack.c.l.b16 %v693
        %v1069 = vunpack.c.h.b16 %v693
        %v1070 = vunpack.c.l.b16 %v694
        %v1071 = vunpack.c.h.b16 %v694
        %v1072 = vunpack.c.l.b16 %v695
        %v1073 = vunpack.c.h.b16 %v695
        %v1074 = vunpack.c.l.b16 %v696
        %v1075 = vunpack.c.h.b16 %v696
        %v1076 = vunpack.c.l.b16 %v697
        %v1077 = vunpack.c.h.b16 %v697
        %v1078 = vunpack.c.l.b16 %v698
        %v1079 = vunpack.c.h.b16 %v698
        %v1080 = vunpack.c.l.b16 %v699
        %v1081 = vunpack.c.h.b16 %v699
        %v1082 = vunpack.c.l.b16 %v700
        %v1083 = vunpack.c.h.b16 %v700
        %v1084 = vunpack.c.l.b16 %v701
        %v1085 = vunpack.c.h.b16 %v701
        %v1086 = vpack.c.b16 %v834, %v830
        %v1087 = vpack.c.b16 %v835, %v831
        %v1088 = vpack.c.b16 %v836, %v832
        %v1089 = vpack.c.b16 %v837, %v833
        %v1090 = vpack.c.b16 %v842, %v838
        %v1091 = vpack.c.b16 %v843, %v839
        %v1092 = vpack.c.b16 %v844, %v840
        %v1093 = vpack.c.b16 %v845, %v841
        %v1094 = vpack.c.b16 %v850, %v846
        %v1095 = vpack.c.b16 %v851, %v847
        %v1096 = vpack.c.b16 %v852, %v848
        %v1097 = vpack.c.b16 %v853, %v849
        %v1098 = vpack.c.b16 %v858, %v854
        %v1099 = vpack.c.b16 %v859, %v855
        %v1100 = vpack.c.b16 %v860, %v856
        %v1101 = vpack.c.b16 %v861, %v857
        %v1102 = vpack.c.b16 %v866, %v862
        %v1103 = vpack.c.b16 %v867, %v863
        %v1104 = vpack.c.b16 %v868, %v864
        %v1105 = vpack.c.b16 %v869, %v865
        %v1106 = vpack.c.b16 %v874, %v870
        %v1107 = vpack.c.b16 %v875, %v871
        %v1108 = vpack.c.b16 %v876, %v872
        %v1109 = vpack.c.b16 %v877, %v873
        %v1110 = vpack.c.b16 %v882, %v878
        %v1111 = vpack.c.b16 %v883, %v879
        %v1112 = vpack.c.b16 %v884, %v880
        %v1113 = vpack.c.b16 %v885, %v881
        %v1114 = vpack.c.b16 %v890, %v886
        %v1115 = vpack.c.b16 %v891, %v887
        %v1116 = vpack.c.b16 %v892, %v888
        %v1117 = vpack.c.b16 %v893, %v889
        %v1118 = vpack.c.b16 %v898, %v894
        %v1119 = vpack.c.b16 %v899, %v895
        %v1120 = vpack.c.b16 %v900, %v896
        %v1121 = vpack.c.b16 %v901, %v897
        %v1122 = vpack.c.b16 %v906, %v902
        %v1123 = vpack.c.b16 %v907, %v903
        %v1124 = vpack.c.b16 %v908, %v904
        %v1125 = vpack.c.b16 %v909, %v905
        %v1126 = vpack.c.b16 %v914, %v910
        %v1127 = vpack.c.b16 %v915, %v911
        %v1128 = vpack.c.b16 %v916, %v912
        %v1129 = vpack.c.b16 %v917, %v913
        %v1130 = vpack.c.b16 %v922, %v918
        %v1131 = vpack.c.b16 %v923, %v919
        %v1132 = vpack.c.b16 %v924, %v920
        %v1133 = vpack.c.b16 %v925, %v921
        %v1134 = vpack.c.b16 %v930, %v926
        %v1135 = vpack.c.b16 %v931, %v927
        %v1136 = vpack.c.b16 %v932, %v928
        %v1137 = vpack.c.b16 %v933, %v929
        %v1138 = vpack.c.b16 %v938, %v934
        %v1139 = vpack.c.b16 %v939, %v935
        %v1140 = vpack.c.b16 %v940, %v936
        %v1141 = vpack.c.b16 %v941, %v937
        %v1142 = vpack.c.b16 %v946, %v942
        %v1143 = vpack.c.b16 %v947, %v943
        %v1144 = vpack.c.b16 %v948, %v944
        %v1145 = vpack.c.b16 %v949, %v945
        %v1146 = vpack.c.b16 %v954, %v950
        %v1147 = vpack.c.b16 %v955, %v951
        %v1148 = vpack.c.b16 %v956, %v952
        %v1149 = vpack.c.b16 %v957, %v953
        %v1150 = vpack.c.b16 %v962, %v958
        %v1151 = vpack.c.b16 %v963, %v959
        %v1152 = vpack.c.b16 %v964, %v960
        %v1153 = vpack.c.b16 %v965, %v961
        %v1154 = vpack.c.b16 %v970, %v966
        %v1155 = vpack.c.b16 %v971, %v967
        %v1156 = vpack.c.b16 %v972, %v968
        %v1157 = vpack.c.b16 %v973, %v969
        %v1158 = vpack.c.b16 %v978, %v974
        %v1159 = vpack.c.b16 %v979, %v975
        %v1160 = vpack.c.b16 %v980, %v976
        %v1161 = vpack.c.b16 %v981, %v977
        %v1162 = vpack.c.b16 %v986, %v982
        %v1163 = vpack.c.b16 %v987, %v983
        %v1164 = vpack.c.b16 %v988, %v984
        %v1165 = vpack.c.b16 %v989, %v985
        %v1166 = vpack.c.b16 %v994, %v990
        %v1167 = vpack.c.b16 %v995, %v991
        %v1168 = vpack.c.b16 %v996, %v992
        %v1169 = vpack.c.b16 %v997, %v993
        %v1170 = vpack.c.b16 %v1002, %v998
        %v1171 = vpack.c.b16 %v1003, %v999
        %v1172 = vpack.c.b16 %v1004, %v1000
        %v1173 = vpack.c.b16 %v1005, %v1001
        %v1174 = vpack.c.b16 %v1010, %v1006
        %v1175 = vpack.c.b16 %v1011, %v1007
        %v1176 = vpack.c.b16 %v1012, %v1008
        %v1177 = vpack.c.b16 %v1013, %v1009
        %v1178 = vpack.c.b16 %v1018, %v1014
        %v1179 = vpack.c.b16 %v1019, %v1015
        %v1180 = vpack.c.b16 %v1020, %v1016
        %v1181 = vpack.c.b16 %v1021, %v1017
        %v1182 = vpack.c.b16 %v1026, %v1022
        %v1183 = vpack.c.b16 %v1027, %v1023
        %v1184 = vpack.c.b16 %v1028, %v1024
        %v1185 = vpack.c.b16 %v1029, %v1025
        %v1186 = vpack.c.b16 %v1034, %v1030
        %v1187 = vpack.c.b16 %v1035, %v1031
        %v1188 = vpack.c.b16 %v1036, %v1032
        %v1189 = vpack.c.b16 %v1037, %v1033
        %v1190 = vpack.c.b16 %v1042, %v1038
        %v1191 = vpack.c.b16 %v1043, %v1039
        %v1192 = vpack.c.b16 %v1044, %v1040
        %v1193 = vpack.c.b16 %v1045, %v1041
        %v1194 = vpack.c.b16 %v1050, %v1046
        %v1195 = vpack.c.b16 %v1051, %v1047
        %v1196 = vpack.c.b16 %v1052, %v1048
        %v1197 = vpack.c.b16 %v1053, %v1049
        %v1198 = vpack.c.b16 %v1058, %v1054
        %v1199 = vpack.c.b16 %v1059, %v1055
        %v1200 = vpack.c.b16 %v1060, %v1056
        %v1201 = vpack.c.b16 %v1061, %v1057
        %v1202 = vpack.c.b16 %v1066, %v1062
        %v1203 = vpack.c.b16 %v1067, %v1063
        %v1204 = vpack.c.b16 %v1068, %v1064
        %v1205 = vpack.c.b16 %v1069, %v1065
        %v1206 = vpack.c.b16 %v1074, %v1070
        %v1207 = vpack.c.b16 %v1075, %v1071
        %v1208 = vpack.c.b16 %v1076, %v1072
        %v1209 = vpack.c.b16 %v1077, %v1073
        %v1210 = vpack.c.b16 %v1082, %v1078
        %v1211 = vpack.c.b16 %v1083, %v1079
        %v1212 = vpack.c.b16 %v1084, %v1080
        %v1213 = vpack.c.b16 %v1085, %v1081
        %1342 = vmatprep.subr.bf16.mxu0 %v1087
        %1343 = vmatpush1.bf16.msra.mxu0 %v1086
        %1344 = vmatprep.subr.bf16.mxu0 %v1091
        %1345 = vmatpush1.bf16.msra.mxu0 %v1090
        %1346 = vmatprep.subr.bf16.mxu0 %v1095
        %1347 = vmatpush1.bf16.msra.mxu0 %v1094
        %1348 = vmatprep.subr.bf16.mxu0 %v1099
        %1349 = vmatpush1.bf16.msra.mxu0 %v1098
        %1350 = vmatprep.subr.bf16.mxu0 %v1103
        %1351 = vmatpush1.bf16.msra.mxu0 %v1102
        %1352 = vmatprep.subr.bf16.mxu0 %v1107
        %1353 = vmatpush1.bf16.msra.mxu0 %v1106
        %1354 = vmatprep.subr.bf16.mxu0 %v1111
        %1355 = vmatpush1.bf16.msra.mxu0 %v1110
        %1356 = vmatprep.subr.bf16.mxu0 %v1115
        %1357 = vmatpush1.bf16.msra.mxu0 %v1114
        %1358 = vmatprep.subr.bf16.mxu0 %v1119
        %1359 = vmatpush1.bf16.msra.mxu0 %v1118
        %1360 = vmatprep.subr.bf16.mxu0 %v1123
        %1361 = vmatpush1.bf16.msra.mxu0 %v1122
        %1362 = vmatprep.subr.bf16.mxu0 %v1127
        %1363 = vmatpush1.bf16.msra.mxu0 %v1126
        %1364 = vmatprep.subr.bf16.mxu0 %v1131
        %1365 = vmatpush1.bf16.msra.mxu0 %v1130
        %1366 = vmatprep.subr.bf16.mxu0 %v1135
        %1367 = vmatpush1.bf16.msra.mxu0 %v1134
        %1368 = vmatprep.subr.bf16.mxu0 %v1139
        %1369 = vmatpush1.bf16.msra.mxu0 %v1138
        %1370 = vmatprep.subr.bf16.mxu0 %v1143
        %1371 = vmatpush1.bf16.msra.mxu0 %v1142
        %1372 = vmatprep.subr.bf16.mxu0 %v1147
        %1373 = vmatpush1.bf16.msra.mxu0 %v1146
        %1374 = vmatprep.mubr.bf16.mxu0 %v571
        %1375 = vmatmul.mubr.bf16.gmra.mrb[0].mxu0 %v570
        %v1376 = vpop.f32.mrb[0].mxu0
        %v1377 = vadd.f32 0.0, %v1376
        %v1378 = vpop.f32.mrb[0].mxu0
        %v1379 = vadd.f32 0.0, %v1378
        %v1380 = vpop.f32.mrb[0].mxu0
        %v1381 = vpop.f32.mrb[0].mxu0
        %1382 = vdwg.mxu0
        %1383 = vmatprep.subr.bf16.mxu0 %v1151
        %1384 = vmatpush1.bf16.msra.mxu0 %v1150
        %1385 = vmatprep.subr.bf16.mxu0 %v1155
        %1386 = vmatpush1.bf16.msra.mxu0 %v1154
        %1387 = vmatprep.subr.bf16.mxu0 %v1159
        %1388 = vmatpush1.bf16.msra.mxu0 %v1158
        %1389 = vmatprep.subr.bf16.mxu0 %v1163
        %1390 = vmatpush1.bf16.msra.mxu0 %v1162
        %1391 = vmatprep.subr.bf16.mxu0 %v1167
        %1392 = vmatpush1.bf16.msra.mxu0 %v1166
        %1393 = vmatprep.subr.bf16.mxu0 %v1171
        %1394 = vmatpush1.bf16.msra.mxu0 %v1170
        %1395 = vmatprep.subr.bf16.mxu0 %v1175
        %1396 = vmatpush1.bf16.msra.mxu0 %v1174
        %1397 = vmatprep.subr.bf16.mxu0 %v1179
        %1398 = vmatpush1.bf16.msra.mxu0 %v1178
        %1399 = vmatprep.subr.bf16.mxu0 %v1183
        %1400 = vmatpush1.bf16.msra.mxu0 %v1182
        %1401 = vmatprep.subr.bf16.mxu0 %v1187
        %1402 = vmatpush1.bf16.msra.mxu0 %v1186
        %1403 = vmatprep.subr.bf16.mxu0 %v1191
        %1404 = vmatpush1.bf16.msra.mxu0 %v1190
        %1405 = vmatprep.subr.bf16.mxu0 %v1195
        %1406 = vmatpush1.bf16.msra.mxu0 %v1194
        %1407 = vmatprep.subr.bf16.mxu0 %v1199
        %1408 = vmatpush1.bf16.msra.mxu0 %v1198
        %1409 = vmatprep.subr.bf16.mxu0 %v1203
        %1410 = vmatpush1.bf16.msra.mxu0 %v1202
        %1411 = vmatprep.subr.bf16.mxu0 %v1207
        %1412 = vmatpush1.bf16.msra.mxu0 %v1206
        %1413 = vmatprep.subr.bf16.mxu0 %v1211
        %1414 = vmatpush1.bf16.msra.mxu0 %v1210
        %1415 = vmatprep.mubr.bf16.mxu0 %v573
        %1416 = vmatmul.mubr.bf16.gmra.mrb[0].mxu0 %v572
        %v1417 = vpop.f32.mrb[0].mxu0
        %v1418 = vadd.f32 %v1377, %v1417
        %v1419 = vpop.f32.mrb[0].mxu0
        %v1420 = vadd.f32 %v1379, %v1419
        %v1421 = vpop.f32.mrb[0].mxu0
        %v1422 = vpop.f32.mrb[0].mxu0
        %1423 = vdwg.mxu0
        %1424 = vmatprep.subr.bf16.mxu0 %v1089
        %1425 = vmatpush1.bf16.msra.mxu0 %v1088
        %1426 = vmatprep.subr.bf16.mxu0 %v1093
        %1427 = vmatpush1.bf16.msra.mxu0 %v1092
        %1428 = vmatprep.subr.bf16.mxu0 %v1097
        %1429 = vmatpush1.bf16.msra.mxu0 %v1096
        %1430 = vmatprep.subr.bf16.mxu0 %v1101
        %1431 = vmatpush1.bf16.msra.mxu0 %v1100
        %1432 = vmatprep.subr.bf16.mxu0 %v1105
        %1433 = vmatpush1.bf16.msra.mxu0 %v1104
        %1434 = vmatprep.subr.bf16.mxu0 %v1109
        %1435 = vmatpush1.bf16.msra.mxu0 %v1108
        %1436 = vmatprep.subr.bf16.mxu0 %v1113
        %1437 = vmatpush1.bf16.msra.mxu0 %v1112
        %1438 = vmatprep.subr.bf16.mxu0 %v1117
        %1439 = vmatpush1.bf16.msra.mxu0 %v1116
        %1440 = vmatprep.subr.bf16.mxu0 %v1121
        %1441 = vmatpush1.bf16.msra.mxu0 %v1120
        %1442 = vmatprep.subr.bf16.mxu0 %v1125
        %1443 = vmatpush1.bf16.msra.mxu0 %v1124
        %1444 = vmatprep.subr.bf16.mxu0 %v1129
        %1445 = vmatpush1.bf16.msra.mxu0 %v1128
        %1446 = vmatprep.subr.bf16.mxu0 %v1133
        %1447 = vmatpush1.bf16.msra.mxu0 %v1132
        %1448 = vmatprep.subr.bf16.mxu0 %v1137
        %1449 = vmatpush1.bf16.msra.mxu0 %v1136
        %1450 = vmatprep.subr.bf16.mxu0 %v1141
        %1451 = vmatpush1.bf16.msra.mxu0 %v1140
        %1452 = vmatprep.subr.bf16.mxu0 %v1145
        %1453 = vmatpush1.bf16.msra.mxu0 %v1144
        %1454 = vmatprep.subr.bf16.mxu0 %v1149
        %1455 = vmatpush1.bf16.msra.mxu0 %v1148
        %1456 = vmatprep.mubr.bf16.mxu0 %v571
        %1457 = vmatmul.mubr.bf16.gmra.mrb[0].mxu0 %v570
        %v1458 = vpop.f32.mrb[0].mxu0
        %v1459 = vadd.f32 0.0, %v1458
        %v1460 = vpop.f32.mrb[0].mxu0
        %v1461 = vadd.f32 0.0, %v1460
        %v1462 = vpop.f32.mrb[0].mxu0
        %v1463 = vpop.f32.mrb[0].mxu0
        %1464 = vdwg.mxu0
        %1465 = vmatprep.subr.bf16.mxu0 %v1153
        %1466 = vmatpush1.bf16.msra.mxu0 %v1152
        %1467 = vmatprep.subr.bf16.mxu0 %v1157
        %1468 = vmatpush1.bf16.msra.mxu0 %v1156
        %1469 = vmatprep.subr.bf16.mxu0 %v1161
        %1470 = vmatpush1.bf16.msra.mxu0 %v1160
        %1471 = vmatprep.subr.bf16.mxu0 %v1165
        %1472 = vmatpush1.bf16.msra.mxu0 %v1164
        %1473 = vmatprep.subr.bf16.mxu0 %v1169
        %1474 = vmatpush1.bf16.msra.mxu0 %v1168
        %1475 = vmatprep.subr.bf16.mxu0 %v1173
        %1476 = vmatpush1.bf16.msra.mxu0 %v1172
        %1477 = vmatprep.subr.bf16.mxu0 %v1177
        %1478 = vmatpush1.bf16.msra.mxu0 %v1176
        %1479 = vmatprep.subr.bf16.mxu0 %v1181
        %1480 = vmatpush1.bf16.msra.mxu0 %v1180
        %1481 = vmatprep.subr.bf16.mxu0 %v1185
        %1482 = vmatpush1.bf16.msra.mxu0 %v1184
        %1483 = vmatprep.subr.bf16.mxu0 %v1189
        %1484 = vmatpush1.bf16.msra.mxu0 %v1188
        %1485 = vmatprep.subr.bf16.mxu0 %v1193
        %1486 = vmatpush1.bf16.msra.mxu0 %v1192
        %1487 = vmatprep.subr.bf16.mxu0 %v1197
        %1488 = vmatpush1.bf16.msra.mxu0 %v1196
        %1489 = vmatprep.subr.bf16.mxu0 %v1201
        %1490 = vmatpush1.bf16.msra.mxu0 %v1200
        %1491 = vmatprep.subr.bf16.mxu0 %v1205
        %1492 = vmatpush1.bf16.msra.mxu0 %v1204
        %1493 = vmatprep.subr.bf16.mxu0 %v1209
        %1494 = vmatpush1.bf16.msra.mxu0 %v1208
        %1495 = vmatprep.subr.bf16.mxu0 %v1213
        %1496 = vmatpush1.bf16.msra.mxu0 %v1212
        %1497 = vmatprep.mubr.bf16.mxu0 %v573
        %1498 = vmatmul.mubr.bf16.gmra.mrb[0].mxu0 %v572
        %v1499 = vpop.f32.mrb[0].mxu0
        %v1500 = vadd.f32 %v1459, %v1499
        %v1501 = vpop.f32.mrb[0].mxu0
        %v1502 = vadd.f32 %v1461, %v1501
        %v1503 = vpop.f32.mrb[0].mxu0
        %v1504 = vpop.f32.mrb[0].mxu0
        %1505 = vdwg.mxu0
        %v1506 = vadd.f32 %v562, %v1418
        %v1507 = vadd.f32 %v563, %v1420
        %v1508 = vadd.f32 %v564, %v1500
        %v1509 = vadd.f32 %v565, %v1502
        %1510 = vst [vmem:[#allocation2] sm:$0xff] %v1506
        %1511 = vst [vmem:[#allocation2 + $0x8] sm:$0xff] %v1507
        %1512 = vst [vmem:[#allocation2 + $0x10] sm:$0xff] %v1508
        %1513 = vst [vmem:[#allocation2 + $0x18] sm:$0xff] %v1509
        %p1514 = scmp.eq.s32.totalorder %s30, 7
        // Predicated region
        $region68: #{alexnet_forward.14} parent=50 // pred_check
          %p1515 = pneg %p1514
        $region69: #{alexnet_forward.14} parent=50 // pred_check_branch
          %1517 = sbr.rel (%p1515) target = $region71
        $region70: #{alexnet_forward.14} parent=50 // pred_region
          %v1518 = vld [vmem:[#allocation2] sm:$0xff]
          %v1519 = vld [vmem:[#allocation2 + $0x8] sm:$0xff]
          %v1520 = vld [vmem:[#allocation2 + $0x10] sm:$0xff]
          %v1521 = vld [vmem:[#allocation2 + $0x18] sm:$0xff]
          %v1522 = vld [vmem:[%s517] sm:$0xf]
          %v1524 = vlaneseq
          %v1525 = vshrl.u32 %v1524, 7
          %v1526 = vsub.s32 0, %v1525
          %v1527 = vrot.slane %v1522, %v1526
          %v1528 = vlaneseq
          %v1529 = vshrl.u32 %v1528, 7
          %v1530 = vsub.s32 1, %v1529
          %v1531 = vrot.slane %v1522, %v1530
          %v1532 = vlaneseq
          %v1533 = vshrl.u32 %v1532, 7
          %v1534 = vsub.s32 2, %v1533
          %v1535 = vrot.slane %v1522, %v1534
          %v1536 = vlaneseq
          %v1537 = vshrl.u32 %v1536, 7
          %v1538 = vsub.s32 3, %v1537
          %v1539 = vrot.slane %v1522, %v1538
          %v1544 = vadd.f32 %v1518, %v1527
          %v1545 = vadd.f32 %v1519, %v1531
          %v1546 = vadd.f32 %v1520, %v1535
          %v1547 = vadd.f32 %v1521, %v1539
          %v1548 = vmax.f32 %v1544, 0.0
          %v1549 = vmax.f32 %v1545, 0.0
          %v1550 = vmax.f32 %v1546, 0.0
          %v1551 = vmax.f32 %v1547, 0.0
          %1552 = vst [vmem:[%s548] sm:$0xff] %v1548
          %1553 = vst [vmem:[%s548 + $0x8] sm:$0xff] %v1549
          %1554 = vst [vmem:[%s548 + $0x10] sm:$0xff] %v1550
          %1555 = vst [vmem:[%s548 + $0x18] sm:$0xff] %v1551
        $region71: #{alexnet_forward.14} parent=50 // pred_fallthru
          _
        %s1556 = sand.u32 %s134, 1
        %s1557 = scalar_lea.sflag [#allocation5], %s1556
        %s1558 = sand.u32 %s134, 1
        %s1559 = smul.addr %s1558, 32
        %s1560 = scalar_lea.vmem [#allocation9], %s1559
        // Predicated region
        $region72: #{alexnet_forward.14} parent=50 // pred_check
          %p1561 = pneg %p144
        $region73: #{alexnet_forward.14} parent=50 // pred_check_branch
          %1563 = sbr.rel (%p1561) target = $region75
        $region74: #{alexnet_forward.14} parent=50 // pred_region
          %s1564 = smul.u32 4, %s29
          %s1566 = ssub.s32 512, 512
          %1567 = vsyncadd %s1557, %s1566
          %s1568 = smul.addr %s28, 32
          %s1569 = sadd.s32 %s1564, %s1568
          %s1570 = smul.addr %s1569, 128
          %s1571 = scalar_lea.hbm %s3, %s1570
          %s1573 = sshll.u32 %s1560, 4
          %s1574 = int_to_ptr.vmem [resolvable:$true] %s1573
          %1576 = dma.vmem_to_hbm [thread:$0]  %s1574, 512, %s1571, %s1557
        $region75: #{alexnet_forward.14} parent=50 // pred_fallthru
          _
      $region51: #{alexnet_forward.14} parent=5 // pred_fallthru
        _
      %p1577 = scmp.le.s32.totalorder 2, %s18
      // Predicated region
      $region76: #{alexnet_forward.14} parent=5 // pred_check
        %p1578 = pneg %p1577
      $region77: #{alexnet_forward.14} parent=5 // pred_check_branch
        %1580 = sbr.rel (%p1578) target = $region79
      $region78: #{alexnet_forward.14} parent=5 // pred_region
        %s1581 = ssub.s32 %s18, 2
        // Predicated region
        $region80: #{alexnet_forward.14} parent=78 // pred_check
          %p1582 = pneg %p150
        $region81: #{alexnet_forward.14} parent=78 // pred_check_branch
          %1584 = sbr.rel (%p1582) target = $region83
        $region82: #{alexnet_forward.14} parent=78 // pred_region
          %s1585 = sand.u32 %s135, 1
          %s1586 = scalar_lea.sflag [#allocation5], %s1585
          %s1587 = sand.u32 %s135, 1
          %s1588 = smul.addr %s1587, 32
          %s1589 = scalar_lea.vmem [#allocation9], %s1588
          %1590 = dma.done %s1586, 512
        $region83: #{alexnet_forward.14} parent=78 // pred_fallthru
          _
      $region79: #{alexnet_forward.14} parent=5 // pred_fallthru
        _
    $region6: #{alexnet_forward.14} parent=1 // loop_footer
      %s22 = sadd.s32 1, %s18
    $region7: #{alexnet_forward.14} parent=1 // loop_footer_branch
      %17 = sbr.rel target = $region3
    $region8: #{alexnet_forward.14} parent=1 // loop_exit
      _
    %1591 = vsyncpa [#allocation4], 1
    %s1592 = scalar_lea.sflag [#allocation4], 1
    %1593 = vsyncpa %s1592, 1
    %1594 = vsyncpa [#allocation8], 1
    %s1595 = scalar_lea.sflag [#allocation8], 1
    %1596 = vsyncpa %s1595, 1
    %1597 = vsyncpa [#allocation5], 1
    %s1598 = scalar_lea.sflag [#allocation5], 1
    %1599 = vsyncpa %s1598, 1

// kernel: alexnet_forward.15
$region0: #{alexnet_forward.15}
  #allocation0 [shape = 'u32[]', space=smem, size = 0x4, offset = 0x4, fixed_abs, tag = 'smem constant byte address 0x4 - core index']
  #allocation1 [shape = 'u32[144,128]{1,0:T(1,128)}', space=vmem, size = 0x12000, scoped, tag = 'internal scratch']
  #allocation2 [shape = 'f32[8,128]{1,0:T(8,128)}', space=vmem, size = 0x1000, scoped, tag = 'scratch operand']
  %s0 = inlined_call_operand.vmem [shape: f32[8,4096], index: 0, kind: input, shape index: {}]
  %s1 = inlined_call_operand.hbm [shape: bf16[4096,128], index: 1, kind: input, shape index: {}]
  %s2 = inlined_call_operand.vmem [shape: f32[1,128], index: 2, kind: input, shape index: {}]
  %s3 = inlined_call_operand.vmem [shape: f32[8,128], index: 3, kind: output, shape index: {}]
  %s4 = sld [smem:[#allocation0]]
  $region57: #{alexnet_forward.15} parent=0
    _
  %s6 = ssub.s32 1, %s4
  %s7 = scalar_select 0, %s6, %s4
  $region1: #{alexnet_forward.15} parent=0
    #allocation3 [shape = 'u8[262144]{0}', space=vmem, size = 0x40000, scoped, tag = 'input window, operand 1']
    #allocation4 [shape = 's32[2]{0}', space=sflag, size = 0x8, scoped, tag = 'scoped memory for alexnet_forward.15']
    %8 = vsyncpa [#allocation4], 0
    %s9 = scalar_lea.sflag [#allocation4], 1
    %10 = vsyncpa %s9, 0
    loop: start=0, step=1, limit=10
    $region2: #{alexnet_forward.15} parent=1 // loop_pre_header
      _
    $region3: #{alexnet_forward.15} parent=1 // loop_header
      %s12 = sphi 0, %s16
      %p13 = scmp.ge.s32.totalorder %s12, 10
      %s19 = sphi 0, %s38
      %s20 = sphi 0, %s34
      %s21 = sphi 0, %s30
      %s22 = sphi 0, %s19
      %s23 = sphi 0, %s20
      %s24 = sphi 0, %s21
      %s25 = sphi 0, %s22
      %s26 = sphi 0, %s23
      %s27 = sphi 0, %s24
      %s43 = sphi 0, %s45
      %s46 = sphi 0, %s43
      %s47 = sphi 0, %s46
      %s63 = sphi 0, %s47
      %s71 = sphi 0, %s73
      %s74 = sphi 0, %s71
      %s75 = sphi 0, %s74
      %s91 = sphi 0, %s75
      %s97 = sphi 0, %s99
      %s100 = sphi 0, %s97
      %s101 = sphi 0, %s100
      %s117 = sphi 0, %s101
      %s125 = sphi 0, %s127
      %s128 = sphi 0, %s125
      %s129 = sphi 0, %s128
      %s145 = sphi 0, %s129
    $region4: #{alexnet_forward.15} parent=1 // loop_header_branch
      %15 = sbr.rel (%p13) target = $region8
    $region5: #{alexnet_forward.15} parent=1 // loop_body
      %s17 = ssub.s32 %s12, 1
      %s18 = ssub.s32 %s12, 2
      %s28 = sadd.s32 1, %s21
      %p29 = scmp.ge.s32.totalorder %s28, 8
      %s30 = scalar_select %p29, 0, %s28
      %s31 = sadd.s32 1, %s20
      %s32 = scalar_select %p29, %s31, %s20
      %p33 = scmp.ge.s32.totalorder %s32, 1
      %s34 = scalar_select %p33, 0, %s32
      %s35 = sadd.s32 1, %s19
      %s36 = scalar_select %p33, %s35, %s19
      %p37 = scmp.ge.s32.totalorder %s36, 1
      %s38 = scalar_select %p37, 0, %s36
      %s39 = ssub.s32 %s19, %s38
      %s40 = ssub.s32 %s21, %s30
      %s41 = sor.u32 %s39, %s40
      %p42 = scmp.eq.s32.totalorder %s41, 0
      %s44 = sadd.s32 %s43, 1
      %s45 = scalar_select %p42, %s43, %s44
      %p48 = pneg %p42
      %p49 = scmp.eq.s32.totalorder %s12, 7
      %p50 = por %p48, %p49
      %p51 = scmp.ne.s32.totalorder %s43, %s46
      %p52 = scmp.eq.s32.totalorder %s12, 0
      %p53 = por %p51, %p52
      %p54 = scmp.ne.s32.totalorder %s43, %s46
      %p55 = scmp.eq.s32.totalorder %s17, 7
      %p56 = por %p54, %p55
      %p57 = scmp.ne.s32.totalorder %s46, %s47
      %p58 = scmp.eq.s32.totalorder %s17, 0
      %p59 = por %p57, %p58
      %p60 = scmp.ne.s32.totalorder %s46, %s47
      %p61 = scmp.eq.s32.totalorder %s18, 7
      %p62 = por %p60, %p61
      %p64 = scmp.ne.s32.totalorder %s47, %s63
      %p65 = scmp.eq.s32.totalorder %s18, 0
      %p66 = por %p64, %p65
      %s67 = ssub.s32 %s21, %s30
      %s68 = ssub.s32 %s20, %s34
      %s69 = sor.u32 %s67, %s68
      %p70 = scmp.eq.s32.totalorder %s69, 0
      %s72 = sadd.s32 %s71, 1
      %s73 = scalar_select %p70, %s71, %s72
      %p76 = pneg %p70
      %p77 = scmp.eq.s32.totalorder %s12, 7
      %p78 = por %p76, %p77
      %p79 = scmp.ne.s32.totalorder %s71, %s74
      %p80 = scmp.eq.s32.totalorder %s12, 0
      %p81 = por %p79, %p80
      %p82 = scmp.ne.s32.totalorder %s71, %s74
      %p83 = scmp.eq.s32.totalorder %s17, 7
      %p84 = por %p82, %p83
      %p85 = scmp.ne.s32.totalorder %s74, %s75
      %p86 = scmp.eq.s32.totalorder %s17, 0
      %p87 = por %p85, %p86
      %p88 = scmp.ne.s32.totalorder %s74, %s75
      %p89 = scmp.eq.s32.totalorder %s18, 7
      %p90 = por %p88, %p89
      %p92 = scmp.ne.s32.totalorder %s75, %s91
      %p93 = scmp.eq.s32.totalorder %s18, 0
      %p94 = por %p92, %p93
      %s95 = ssub.s32 %s20, %s34
      %p96 = scmp.eq.s32.totalorder %s95, 0
      %s98 = sadd.s32 %s97, 1
      %s99 = scalar_select %p96, %s97, %s98
      %p102 = pneg %p96
      %p103 = scmp.eq.s32.totalorder %s12, 7
      %p104 = por %p102, %p103
      %p105 = scmp.ne.s32.totalorder %s97, %s100
      %p106 = scmp.eq.s32.totalorder %s12, 0
      %p107 = por %p105, %p106
      %p108 = scmp.ne.s32.totalorder %s97, %s100
      %p109 = scmp.eq.s32.totalorder %s17, 7
      %p110 = por %p108, %p109
      %p111 = scmp.ne.s32.totalorder %s100, %s101
      %p112 = scmp.eq.s32.totalorder %s17, 0
      %p113 = por %p111, %p112
      %p114 = scmp.ne.s32.totalorder %s100, %s101
      %p115 = scmp.eq.s32.totalorder %s18, 7
      %p116 = por %p114, %p115
      %p118 = scmp.ne.s32.totalorder %s101, %s117
      %p119 = scmp.eq.s32.totalorder %s18, 0
      %p120 = por %p118, %p119
      %s121 = ssub.s32 %s19, %s38
      %s122 = ssub.s32 %s20, %s34
      %s123 = sor.u32 %s121, %s122
      %p124 = scmp.eq.s32.totalorder %s123, 0
      %s126 = sadd.s32 %s125, 1
      %s127 = scalar_select %p124, %s125, %s126
      %p130 = pneg %p124
      %p131 = scmp.eq.s32.totalorder %s12, 7
      %p132 = por %p130, %p131
      %p133 = scmp.ne.s32.totalorder %s125, %s128
      %p134 = scmp.eq.s32.totalorder %s12, 0
      %p135 = por %p133, %p134
      %p136 = scmp.ne.s32.totalorder %s125, %s128
      %p137 = scmp.eq.s32.totalorder %s17, 7
      %p138 = por %p136, %p137
      %p139 = scmp.ne.s32.totalorder %s128, %s129
      %p140 = scmp.eq.s32.totalorder %s17, 0
      %p141 = por %p139, %p140
      %p142 = scmp.ne.s32.totalorder %s128, %s129
      %p143 = scmp.eq.s32.totalorder %s18, 7
      %p144 = por %p142, %p143
      %p146 = scmp.ne.s32.totalorder %s129, %s145
      %p147 = scmp.eq.s32.totalorder %s18, 0
      %p148 = por %p146, %p147
      %p149 = scmp.le.s32.totalorder 1, %s12
      %p150 = scmp.lt.s32.totalorder %s12, 9
      %p151 = pnand %p149, %p150
      %p152 = pneg %p151
      // Predicated region
      $region9: #{alexnet_forward.15} parent=5 // pred_check
        _
      $region10: #{alexnet_forward.15} parent=5 // pred_check_branch
        %154 = sbr.rel (%p151) target = $region12
      $region11: #{alexnet_forward.15} parent=5 // pred_region
        %s155 = ssub.s32 %s12, 1
        // Predicated region
        $region13: #{alexnet_forward.15} parent=11 // pred_check
          %p156 = pneg %p113
        $region14: #{alexnet_forward.15} parent=11 // pred_check_branch
          %158 = sbr.rel (%p156) target = $region16
        $region15: #{alexnet_forward.15} parent=11 // pred_region
          %p159 = scmp.lt.s32.totalorder %s23, 0
          %s160 = scalar_select %p159, %s23, 0
          %s161 = scalar_lea.vmem %s2, %s160
        $region16: #{alexnet_forward.15} parent=11 // pred_fallthru
          _
      $region12: #{alexnet_forward.15} parent=5 // pred_fallthru
        _
      %p162 = scmp.lt.s32.totalorder %s12, 8
      // Predicated region
      $region17: #{alexnet_forward.15} parent=5 // pred_check
        %p163 = pneg %p162
      $region18: #{alexnet_forward.15} parent=5 // pred_check_branch
        %165 = sbr.rel (%p163) target = $region20
      $region19: #{alexnet_forward.15} parent=5 // pred_region
        // Predicated region
        $region21: #{alexnet_forward.15} parent=19 // pred_check
          %p166 = pneg %p53
        $region22: #{alexnet_forward.15} parent=19 // pred_check_branch
          %168 = sbr.rel (%p166) target = $region24
        $region23: #{alexnet_forward.15} parent=19 // pred_region
          %s169 = smul.u32 4, %s21
          %p170 = scmp.lt.s32.totalorder %s19, 0
          %s171 = scalar_select %p170, %s19, 0
          %p172 = scmp.lt.s32.totalorder %s169, 31
          %s173 = scalar_select %p172, %s169, 31
          %s174 = smul.addr %s171, 32
          %s175 = sadd.s32 %s173, %s174
          %s176 = smul.addr %s175, 8
          %s177 = scalar_lea.vmem %s0, %s176
          %s178 = smul.u32 4, %s21
        $region24: #{alexnet_forward.15} parent=19 // pred_fallthru
          _
        // Predicated region
        $region25: #{alexnet_forward.15} parent=19 // pred_check
          %p179 = pneg %p81
        $region26: #{alexnet_forward.15} parent=19 // pred_check_branch
          %181 = sbr.rel (%p179) target = $region28
        $region27: #{alexnet_forward.15} parent=19 // pred_region
          %s182 = sand.u32 %s71, 1
          %s183 = scalar_lea.sflag [#allocation4], %s182
          %s184 = sand.u32 %s71, 1
          %s185 = smul.addr %s184, 256
          %s186 = scalar_lea.vmem [#allocation3], %s185
          %s187 = smul.u32 64, %s21
          %s189 = ssub.s32 4096, 4096
          %190 = vsyncadd %s183, %s189
          %s191 = sadd.s32 %s20, %s187
          %s192 = smul.addr %s191, 64
          %s193 = scalar_lea.hbm %s1, %s192
          %s194 = sshll.u32 %s186, 4
          %s195 = int_to_ptr.vmem [resolvable:$true] %s194
          %200 = dma.hbm_to_vmem [thread:$0]  %s193, 4096, %s195, %s183, 64, 64, 4
        $region28: #{alexnet_forward.15} parent=19 // pred_fallthru
          _
      $region20: #{alexnet_forward.15} parent=5 // pred_fallthru
        _
      %p201 = scmp.le.s32.totalorder 1, %s12
      %p202 = scmp.lt.s32.totalorder %s12, 9
      %p203 = pnand %p201, %p202
      %p204 = pneg %p203
      // Predicated region
      $region29: #{alexnet_forward.15} parent=5 // pred_check
        _
      $region30: #{alexnet_forward.15} parent=5 // pred_check_branch
        %206 = sbr.rel (%p203) target = $region32
      $region31: #{alexnet_forward.15} parent=5 // pred_region
        %s207 = ssub.s32 %s12, 1
        %s208 = sand.u32 %s74, 1
        %s209 = scalar_lea.sflag [#allocation4], %s208
        %s210 = sand.u32 %s74, 1
        %s211 = smul.addr %s210, 256
        %s212 = scalar_lea.vmem [#allocation3], %s211
        // Predicated region
        $region33: #{alexnet_forward.15} parent=31 // pred_check
          %p213 = pneg %p87
        $region34: #{alexnet_forward.15} parent=31 // pred_check_branch
          %215 = sbr.rel (%p213) target = $region36
        $region35: #{alexnet_forward.15} parent=31 // pred_region
          %216 = dma.done %s209, 4096
        $region36: #{alexnet_forward.15} parent=31 // pred_fallthru
          _
        %s217 = smul.u32 4, %s24
        %p218 = scmp.lt.s32.totalorder %s22, 0
        %s219 = scalar_select %p218, %s22, 0
        %p220 = scmp.lt.s32.totalorder %s217, 31
        %s221 = scalar_select %p220, %s217, 31
        %s222 = smul.addr %s219, 32
        %s223 = sadd.s32 %s221, %s222
        %s224 = smul.addr %s223, 8
        %s225 = scalar_lea.vmem %s0, %s224
        %p226 = pneg %p59
        %p227 = pneg %p56
        %s228 = sand.u32 %s74, 1
        %s229 = scalar_lea.sflag [#allocation4], %s228
        %s230 = sand.u32 %s74, 1
        %s231 = smul.addr %s230, 256
        %s232 = scalar_lea.vmem [#allocation3], %s231
        %p233 = pneg %p87
        %p234 = pneg %p84
        %p235 = scmp.lt.s32.totalorder %s23, 0
        %s236 = scalar_select %p235, %s23, 0
        %s237 = scalar_lea.vmem %s2, %s236
        %p238 = pneg %p113
        %p239 = pneg %p110
        %p240 = pneg %p141
        %p241 = pneg %p138
        %p242 = scmp.lt.s32.totalorder %s22, 0
        %s243 = scalar_select %p242, %s22, 0
        %p244 = scmp.lt.s32.totalorder %s23, 0
        %s245 = scalar_select %p244, %s23, 0
        %s246 = sadd.s32 %s245, %s243
        %s247 = smul.addr %s246, 8
        %s248 = scalar_lea.vmem %s3, %s247
        %s249 = smul.u32 4, %s24
        %p250 = scmp.lt.s32.totalorder %s22, 0
        %s251 = scalar_select %p250, %s22, 0
        %p252 = scmp.lt.s32.totalorder %s249, 31
        %s253 = scalar_select %p252, %s249, 31
        %s254 = smul.addr %s251, 32
        %s255 = sadd.s32 %s253, %s254
        %s256 = smul.addr %s255, 8
        %s257 = scalar_lea.vmem %s0, %s256
        %s258 = smul.u32 4, %s24
        %s259 = smul.u32 64, %s24
        %p260 = scmp.lt.s32.totalorder %s23, 0
        %s261 = scalar_select %p260, %s23, 0
        %s262 = scalar_lea.vmem %s2, %s261
        %p263 = scmp.lt.s32.totalorder %s22, 0
        %s264 = scalar_select %p263, %s22, 0
        %p265 = scmp.lt.s32.totalorder %s23, 0
        %s266 = scalar_select %p265, %s23, 0
        %s267 = sadd.s32 %s266, %s264
        %s268 = smul.addr %s267, 8
        %s269 = scalar_lea.vmem %s3, %s268
        %p271 = scmp.eq.s32.totalorder %s24, 0
        // Predicated region
        $region37: #{alexnet_forward.15} parent=31 // pred_check
          %p272 = pneg %p271
        $region38: #{alexnet_forward.15} parent=31 // pred_check_branch
          %274 = sbr.rel (%p272) target = $region40
        $region39: #{alexnet_forward.15} parent=31 // pred_region
          %275 = vst [vmem:[#allocation2] sm:$0xff] 0.0
        $region40: #{alexnet_forward.15} parent=31 // pred_fallthru
          _
        %v276 = vld [vmem:[#allocation2] sm:$0xff]
        %v277 = vld [vmem:[%s257] sm:$0xff]
        %v278 = vld [vmem:[%s257 + $0x8] sm:$0xff]
        %v279 = vld [vmem:[%s257 + $0x10] sm:$0xff]
        %v280 = vld [vmem:[%s257 + $0x18] sm:$0xff]
        %v281 = vpack.c.bf16 %v277, %v277
        %v282 = vpack.c.bf16 %v278, %v278
        %v283 = vpack.c.bf16 %v279, %v279
        %v284 = vpack.c.bf16 %v280, %v280
        %v285 = vld [vmem:[%s212] sm:$0xf]
        %v286 = vld [vmem:[%s212 + $0x4] sm:$0xf]
        %v287 = vld [vmem:[%s212 + $0x8] sm:$0xf]
        %v288 = vld [vmem:[%s212 + $0xc] sm:$0xf]
        %v289 = vld [vmem:[%s212 + $0x10] sm:$0xf]
        %v290 = vld [vmem:[%s212 + $0x14] sm:$0xf]
        %v291 = vld [vmem:[%s212 + $0x18] sm:$0xf]
        %v292 = vld [vmem:[%s212 + $0x1c] sm:$0xf]
        %v293 = vld [vmem:[%s212 + $0x20] sm:$0xf]
        %v294 = vld [vmem:[%s212 + $0x24] sm:$0xf]
        %v295 = vld [vmem:[%s212 + $0x28] sm:$0xf]
        %v296 = vld [vmem:[%s212 + $0x2c] sm:$0xf]
        %v297 = vld [vmem:[%s212 + $0x30] sm:$0xf]
        %v298 = vld [vmem:[%s212 + $0x34] sm:$0xf]
        %v299 = vld [vmem:[%s212 + $0x38] sm:$0xf]
        %v300 = vld [vmem:[%s212 + $0x3c] sm:$0xf]
        %v301 = vld [vmem:[%s212 + $0x40] sm:$0xf]
        %v302 = vld [vmem:[%s212 + $0x44] sm:$0xf]
        %v303 = vld [vmem:[%s212 + $0x48] sm:$0xf]
        %v304 = vld [vmem:[%s212 + $0x4c] sm:$0xf]
        %v305 = vld [vmem:[%s212 + $0x50] sm:$0xf]
        %v306 = vld [vmem:[%s212 + $0x54] sm:$0xf]
        %v307 = vld [vmem:[%s212 + $0x58] sm:$0xf]
        %v308 = vld [vmem:[%s212 + $0x5c] sm:$0xf]
        %v309 = vld [vmem:[%s212 + $0x60] sm:$0xf]
        %v310 = vld [vmem:[%s212 + $0x64] sm:$0xf]
        %v311 = vld [vmem:[%s212 + $0x68] sm:$0xf]
        %v312 = vld [vmem:[%s212 + $0x6c] sm:$0xf]
        %v313 = vld [vmem:[%s212 + $0x70] sm:$0xf]
        %v314 = vld [vmem:[%s212 + $0x74] sm:$0xf]
        %v315 = vld [vmem:[%s212 + $0x78] sm:$0xf]
        %v316 = vld [vmem:[%s212 + $0x7c] sm:$0xf]
        %v317 = vld [vmem:[%s212 + $0x80] sm:$0xf]
        %v318 = vld [vmem:[%s212 + $0x84] sm:$0xf]
        %v319 = vld [vmem:[%s212 + $0x88] sm:$0xf]
        %v320 = vld [vmem:[%s212 + $0x8c] sm:$0xf]
        %v321 = vld [vmem:[%s212 + $0x90] sm:$0xf]
        %v322 = vld [vmem:[%s212 + $0x94] sm:$0xf]
        %v323 = vld [vmem:[%s212 + $0x98] sm:$0xf]
        %v324 = vld [vmem:[%s212 + $0x9c] sm:$0xf]
        %v325 = vld [vmem:[%s212 + $0xa0] sm:$0xf]
        %v326 = vld [vmem:[%s212 + $0xa4] sm:$0xf]
        %v327 = vld [vmem:[%s212 + $0xa8] sm:$0xf]
        %v328 = vld [vmem:[%s212 + $0xac] sm:$0xf]
        %v329 = vld [vmem:[%s212 + $0xb0] sm:$0xf]
        %v330 = vld [vmem:[%s212 + $0xb4] sm:$0xf]
        %v331 = vld [vmem:[%s212 + $0xb8] sm:$0xf]
        %v332 = vld [vmem:[%s212 + $0xbc] sm:$0xf]
        %v333 = vld [vmem:[%s212 + $0xc0] sm:$0xf]
        %v334 = vld [vmem:[%s212 + $0xc4] sm:$0xf]
        %v335 = vld [vmem:[%s212 + $0xc8] sm:$0xf]
        %v336 = vld [vmem:[%s212 + $0xcc] sm:$0xf]
        %v337 = vld [vmem:[%s212 + $0xd0] sm:$0xf]
        %v338 = vld [vmem:[%s212 + $0xd4] sm:$0xf]
        %v339 = vld [vmem:[%s212 + $0xd8] sm:$0xf]
        %v340 = vld [vmem:[%s212 + $0xdc] sm:$0xf]
        %v341 = vld [vmem:[%s212 + $0xe0] sm:$0xf]
        %v342 = vld [vmem:[%s212 + $0xe4] sm:$0xf]
        %v343 = vld [vmem:[%s212 + $0xe8] sm:$0xf]
        %v344 = vld [vmem:[%s212 + $0xec] sm:$0xf]
        %v345 = vld [vmem:[%s212 + $0xf0] sm:$0xf]
        %v346 = vld [vmem:[%s212 + $0xf4] sm:$0xf]
        %v347 = vld [vmem:[%s212 + $0xf8] sm:$0xf]
        %v348 = vld [vmem:[%s212 + $0xfc] sm:$0xf]
        %v413 = vunpack.c.l.b16 %v285
        %v414 = vunpack.c.l.b16 %v286
        %v415 = vunpack.c.l.b16 %v287
        %v416 = vunpack.c.l.b16 %v288
        %v417 = vunpack.c.l.b16 %v289
        %v418 = vunpack.c.l.b16 %v290
        %v419 = vunpack.c.l.b16 %v291
        %v420 = vunpack.c.l.b16 %v292
        %v421 = vunpack.c.l.b16 %v293
        %v422 = vunpack.c.l.b16 %v294
        %v423 = vunpack.c.l.b16 %v295
        %v424 = vunpack.c.l.b16 %v296
        %v425 = vunpack.c.l.b16 %v297
        %v426 = vunpack.c.l.b16 %v298
        %v427 = vunpack.c.l.b16 %v299
        %v428 = vunpack.c.l.b16 %v300
        %v429 = vunpack.c.l.b16 %v301
        %v430 = vunpack.c.l.b16 %v302
        %v431 = vunpack.c.l.b16 %v303
        %v432 = vunpack.c.l.b16 %v304
        %v433 = vunpack.c.l.b16 %v305
        %v434 = vunpack.c.l.b16 %v306
        %v435 = vunpack.c.l.b16 %v307
        %v436 = vunpack.c.l.b16 %v308
        %v437 = vunpack.c.l.b16 %v309
        %v438 = vunpack.c.l.b16 %v310
        %v439 = vunpack.c.l.b16 %v311
        %v440 = vunpack.c.l.b16 %v312
        %v441 = vunpack.c.l.b16 %v313
        %v442 = vunpack.c.l.b16 %v314
        %v443 = vunpack.c.l.b16 %v315
        %v444 = vunpack.c.l.b16 %v316
        %v445 = vunpack.c.l.b16 %v317
        %v446 = vunpack.c.l.b16 %v318
        %v447 = vunpack.c.l.b16 %v319
        %v448 = vunpack.c.l.b16 %v320
        %v449 = vunpack.c.l.b16 %v321
        %v450 = vunpack.c.l.b16 %v322
        %v451 = vunpack.c.l.b16 %v323
        %v452 = vunpack.c.l.b16 %v324
        %v453 = vunpack.c.l.b16 %v325
        %v454 = vunpack.c.l.b16 %v326
        %v455 = vunpack.c.l.b16 %v327
        %v456 = vunpack.c.l.b16 %v328
        %v457 = vunpack.c.l.b16 %v329
        %v458 = vunpack.c.l.b16 %v330
        %v459 = vunpack.c.l.b16 %v331
        %v460 = vunpack.c.l.b16 %v332
        %v461 = vunpack.c.l.b16 %v333
        %v462 = vunpack.c.l.b16 %v334
        %v463 = vunpack.c.l.b16 %v335
        %v464 = vunpack.c.l.b16 %v336
        %v465 = vunpack.c.l.b16 %v337
        %v466 = vunpack.c.l.b16 %v338
        %v467 = vunpack.c.l.b16 %v339
        %v468 = vunpack.c.l.b16 %v340
        %v469 = vunpack.c.l.b16 %v341
        %v470 = vunpack.c.l.b16 %v342
        %v471 = vunpack.c.l.b16 %v343
        %v472 = vunpack.c.l.b16 %v344
        %v473 = vunpack.c.l.b16 %v345
        %v474 = vunpack.c.l.b16 %v346
        %v475 = vunpack.c.l.b16 %v347
        %v476 = vunpack.c.l.b16 %v348
        %v477 = vpack.c.b16 %v414, %v413
        %v478 = vpack.c.b16 %v416, %v415
        %v479 = vpack.c.b16 %v418, %v417
        %v480 = vpack.c.b16 %v420, %v419
        %v481 = vpack.c.b16 %v422, %v421
        %v482 = vpack.c.b16 %v424, %v423
        %v483 = vpack.c.b16 %v426, %v425
        %v484 = vpack.c.b16 %v428, %v427
        %v485 = vpack.c.b16 %v430, %v429
        %v486 = vpack.c.b16 %v432, %v431
        %v487 = vpack.c.b16 %v434, %v433
        %v488 = vpack.c.b16 %v436, %v435
        %v489 = vpack.c.b16 %v438, %v437
        %v490 = vpack.c.b16 %v440, %v439
        %v491 = vpack.c.b16 %v442, %v441
        %v492 = vpack.c.b16 %v444, %v443
        %v493 = vpack.c.b16 %v446, %v445
        %v494 = vpack.c.b16 %v448, %v447
        %v495 = vpack.c.b16 %v450, %v449
        %v496 = vpack.c.b16 %v452, %v451
        %v497 = vpack.c.b16 %v454, %v453
        %v498 = vpack.c.b16 %v456, %v455
        %v499 = vpack.c.b16 %v458, %v457
        %v500 = vpack.c.b16 %v460, %v459
        %v501 = vpack.c.b16 %v462, %v461
        %v502 = vpack.c.b16 %v464, %v463
        %v503 = vpack.c.b16 %v466, %v465
        %v504 = vpack.c.b16 %v468, %v467
        %v505 = vpack.c.b16 %v470, %v469
        %v506 = vpack.c.b16 %v472, %v471
        %v507 = vpack.c.b16 %v474, %v473
        %v508 = vpack.c.b16 %v476, %v475
        %541 = vmatprep.subr.bf16.mxu0 0
        %542 = vmatpush1.bf16.msra.mxu0 %v477
        %543 = vmatprep.subr.bf16.mxu0 0
        %544 = vmatpush1.bf16.msra.mxu0 %v478
        %545 = vmatprep.subr.bf16.mxu0 0
        %546 = vmatpush1.bf16.msra.mxu0 %v479
        %547 = vmatprep.subr.bf16.mxu0 0
        %548 = vmatpush1.bf16.msra.mxu0 %v480
        %549 = vmatprep.subr.bf16.mxu0 0
        %550 = vmatpush1.bf16.msra.mxu0 %v481
        %551 = vmatprep.subr.bf16.mxu0 0
        %552 = vmatpush1.bf16.msra.mxu0 %v482
        %553 = vmatprep.subr.bf16.mxu0 0
        %554 = vmatpush1.bf16.msra.mxu0 %v483
        %555 = vmatprep.subr.bf16.mxu0 0
        %556 = vmatpush1.bf16.msra.mxu0 %v484
        %557 = vmatprep.subr.bf16.mxu0 0
        %558 = vmatpush1.bf16.msra.mxu0 %v485
        %559 = vmatprep.subr.bf16.mxu0 0
        %560 = vmatpush1.bf16.msra.mxu0 %v486
        %561 = vmatprep.subr.bf16.mxu0 0
        %562 = vmatpush1.bf16.msra.mxu0 %v487
        %563 = vmatprep.subr.bf16.mxu0 0
        %564 = vmatpush1.bf16.msra.mxu0 %v488
        %565 = vmatprep.subr.bf16.mxu0 0
        %566 = vmatpush1.bf16.msra.mxu0 %v489
        %567 = vmatprep.subr.bf16.mxu0 0
        %568 = vmatpush1.bf16.msra.mxu0 %v490
        %569 = vmatprep.subr.bf16.mxu0 0
        %570 = vmatpush1.bf16.msra.mxu0 %v491
        %571 = vmatprep.subr.bf16.mxu0 0
        %572 = vmatpush1.bf16.msra.mxu0 %v492
        %573 = vmatprep.mubr.bf16.mxu0 %v282
        %574 = vmatmul.mubr.bf16.gmra.mrb[0].mxu0 %v281
        %v575 = vpop.f32.mrb[0].mxu0
        %v576 = vadd.f32 0.0, %v575
        %v577 = vpop.f32.mrb[0].mxu0
        %v578 = vpop.f32.mrb[0].mxu0
        %v579 = vpop.f32.mrb[0].mxu0
        %580 = vdwg.mxu0
        %581 = vmatprep.subr.bf16.mxu0 0
        %582 = vmatpush1.bf16.msra.mxu0 %v493
        %583 = vmatprep.subr.bf16.mxu0 0
        %584 = vmatpush1.bf16.msra.mxu0 %v494
        %585 = vmatprep.subr.bf16.mxu0 0
        %586 = vmatpush1.bf16.msra.mxu0 %v495
        %587 = vmatprep.subr.bf16.mxu0 0
        %588 = vmatpush1.bf16.msra.mxu0 %v496
        %589 = vmatprep.subr.bf16.mxu0 0
        %590 = vmatpush1.bf16.msra.mxu0 %v497
        %591 = vmatprep.subr.bf16.mxu0 0
        %592 = vmatpush1.bf16.msra.mxu0 %v498
        %593 = vmatprep.subr.bf16.mxu0 0
        %594 = vmatpush1.bf16.msra.mxu0 %v499
        %595 = vmatprep.subr.bf16.mxu0 0
        %596 = vmatpush1.bf16.msra.mxu0 %v500
        %597 = vmatprep.subr.bf16.mxu0 0
        %598 = vmatpush1.bf16.msra.mxu0 %v501
        %599 = vmatprep.subr.bf16.mxu0 0
        %600 = vmatpush1.bf16.msra.mxu0 %v502
        %601 = vmatprep.subr.bf16.mxu0 0
        %602 = vmatpush1.bf16.msra.mxu0 %v503
        %603 = vmatprep.subr.bf16.mxu0 0
        %604 = vmatpush1.bf16.msra.mxu0 %v504
        %605 = vmatprep.subr.bf16.mxu0 0
        %606 = vmatpush1.bf16.msra.mxu0 %v505
        %607 = vmatprep.subr.bf16.mxu0 0
        %608 = vmatpush1.bf16.msra.mxu0 %v506
        %609 = vmatprep.subr.bf16.mxu0 0
        %610 = vmatpush1.bf16.msra.mxu0 %v507
        %611 = vmatprep.subr.bf16.mxu0 0
        %612 = vmatpush1.bf16.msra.mxu0 %v508
        %613 = vmatprep.mubr.bf16.mxu0 %v284
        %614 = vmatmul.mubr.bf16.gmra.mrb[0].mxu0 %v283
        %v615 = vpop.f32.mrb[0].mxu0
        %v616 = vadd.f32 %v576, %v615
        %v617 = vpop.f32.mrb[0].mxu0
        %v618 = vpop.f32.mrb[0].mxu0
        %v619 = vpop.f32.mrb[0].mxu0
        %620 = vdwg.mxu0
        %v621 = vadd.f32 %v276, %v616
        %622 = vst [vmem:[#allocation2] sm:$0xff] %v621
        %p623 = scmp.eq.s32.totalorder %s24, 7
        // Predicated region
        $region41: #{alexnet_forward.15} parent=31 // pred_check
          %p624 = pneg %p623
        $region42: #{alexnet_forward.15} parent=31 // pred_check_branch
          %626 = sbr.rel (%p624) target = $region44
        $region43: #{alexnet_forward.15} parent=31 // pred_region
          %v627 = vld [vmem:[#allocation2] sm:$0xff]
          %v628 = vld [vmem:[%s262] sm:$0x1]
          %v630 = vlaneseq
          %v631 = vshrl.u32 %v630, 7
          %v632 = vsub.s32 0, %v631
          %v633 = vrot.slane %v628, %v632
          %v635 = vadd.f32 %v627, %v633
          %636 = vst [vmem:[%s269] sm:$0xff] %v635
        $region44: #{alexnet_forward.15} parent=31 // pred_fallthru
          _
        %p637 = scmp.lt.s32.totalorder %s22, 0
        %s638 = scalar_select %p637, %s22, 0
        %p639 = scmp.lt.s32.totalorder %s23, 0
        %s640 = scalar_select %p639, %s23, 0
        %s641 = sadd.s32 %s640, %s638
        %s642 = smul.addr %s641, 8
        %s643 = scalar_lea.vmem %s3, %s642
        // Predicated region
        $region45: #{alexnet_forward.15} parent=31 // pred_check
          %p644 = pneg %p138
        $region46: #{alexnet_forward.15} parent=31 // pred_check_branch
          %646 = sbr.rel (%p644) target = $region48
        $region47: #{alexnet_forward.15} parent=31 // pred_region
          _
        $region48: #{alexnet_forward.15} parent=31 // pred_fallthru
          _
        // Predicated region
        $region49: #{alexnet_forward.15} parent=31 // pred_check
          %p647 = pneg %p138
        $region50: #{alexnet_forward.15} parent=31 // pred_check_branch
          %649 = sbr.rel (%p647) target = $region52
        $region51: #{alexnet_forward.15} parent=31 // pred_region
          %p650 = scmp.lt.s32.totalorder %s22, 0
          %s651 = scalar_select %p650, %s22, 0
          %p652 = scmp.lt.s32.totalorder %s23, 0
          %s653 = scalar_select %p652, %s23, 0
          %s654 = sadd.s32 %s653, %s651
          %s655 = smul.addr %s654, 8
          %s656 = scalar_lea.vmem %s3, %s655
        $region52: #{alexnet_forward.15} parent=31 // pred_fallthru
          _
      $region32: #{alexnet_forward.15} parent=5 // pred_fallthru
        _
      %p657 = scmp.le.s32.totalorder 2, %s12
      // Predicated region
      $region53: #{alexnet_forward.15} parent=5 // pred_check
        %p658 = pneg %p657
      $region54: #{alexnet_forward.15} parent=5 // pred_check_branch
        %660 = sbr.rel (%p658) target = $region56
      $region55: #{alexnet_forward.15} parent=5 // pred_region
        %s661 = ssub.s32 %s12, 2
      $region56: #{alexnet_forward.15} parent=5 // pred_fallthru
        _
    $region6: #{alexnet_forward.15} parent=1 // loop_footer
      %s16 = sadd.s32 1, %s12
    $region7: #{alexnet_forward.15} parent=1 // loop_footer_branch
      %11 = sbr.rel target = $region3
    $region8: #{alexnet_forward.15} parent=1 // loop_exit
      _
    %662 = vsyncpa [#allocation4], 1
    %s663 = scalar_lea.sflag [#allocation4], 1
    %664 = vsyncpa %s663, 1

</llo_original>
